<compile_context>
chip_gen: v6e
topology: v6e:2x2x1
jax: 0.10.0
libtpu: 0.0.40
codegen_flags: <defaults>
</compile_context>

<pallas_src>
import functools

import numpy as np
import jax
import jax.numpy as jnp
from jax.experimental import pallas as pl
from jax.experimental.pallas import tpu as pltpu

_MIB = 1024 * 1024


def _compiler_params(dims, needed_bytes):
    """dimension_semantics + a scoped-VMEM limit comfortably above the working set."""
    limit = int(min(max(2 * int(needed_bytes) + 4 * _MIB, 32 * _MIB), 64 * _MIB))
    return pltpu.CompilerParams(dimension_semantics=dims, vmem_limit_bytes=limit)


# --------------------------------------------------------------------------------------
# Static parameter construction (numpy at trace time -> baked constants)
# --------------------------------------------------------------------------------------
def dft_mats_np(n, inverse=False, shift=False):
    """Real/imag parts of the (optionally fftshift-ed) DFT / inverse-DFT matrix."""
    k = np.arange(n)
    sign = 1.0 if inverse else -1.0
    F = np.exp(sign * 2j * np.pi * np.outer(k, k) / n)
    if inverse:
        F = F / n
    if shift:
        # fftshift(F @ x) == roll(F, n//2, axis=0) @ x
        F = np.roll(F, n // 2, axis=0)
    return F.real.astype(np.float32), F.imag.astype(np.float32)


def highpass_filter_np(H, W):
    """Fourier–Mellin high-pass emphasis window, centred like fftshift."""
    fy = (np.arange(H) - H // 2) / H
    fx = (np.arange(W) - W // 2) / W
    c = np.cos(np.pi * fy)[:, None] * np.cos(np.pi * fx)[None, :]
    return ((1.0 - c) * (2.0 - c)).astype(np.float32)


def bilinear_matrix_np(sy, sx, H, W):
    """(P, H*W) bilinear interpolation matrix for static source coords (numpy)."""
    P = sy.shape[0]
    out = np.zeros((P, H * W), np.float32)
    y0 = np.floor(sy)
    x0 = np.floor(sx)
    dy = (sy - y0).astype(np.float32)
    dx = (sx - x0).astype(np.float32)
    rows = np.arange(P)
    for oy, ox, w in [(0, 0, (1 - dy) * (1 - dx)), (0, 1, (1 - dy) * dx),
                      (1, 0, dy * (1 - dx)), (1, 1, dy * dx)]:
        yi = y0.astype(np.int64) + oy
        xi = x0.astype(np.int64) + ox
        valid = (yi >= 0) & (yi < H) & (xi >= 0) & (xi < W)
        idx = np.clip(yi, 0, H - 1) * W + np.clip(xi, 0, W - 1)
        np.add.at(out, (rows, idx), w * valid.astype(np.float32))
    return out


def bilinear_matrix(sy, sx, H, W):
    """(P, H*W) bilinear interpolation matrix for traced source coords (JAX)."""
    sy = jnp.asarray(sy, jnp.float32)
    sx = jnp.asarray(sx, jnp.float32)
    y0 = jnp.floor(sy)
    x0 = jnp.floor(sx)
    dy = sy - y0
    dx = sx - x0
    y0i = y0.astype(jnp.int32)
    x0i = x0.astype(jnp.int32)
    out = jnp.zeros((sy.shape[0], H * W), jnp.float32)
    for oy, ox, w in [(0, 0, (1 - dy) * (1 - dx)), (0, 1, (1 - dy) * dx),
                      (1, 0, dy * (1 - dx)), (1, 1, dy * dx)]:
        yi = y0i + oy
        xi = x0i + ox
        valid = (yi >= 0) & (yi < H) & (xi >= 0) & (xi < W)
        idx = jnp.clip(yi, 0, H - 1) * W + jnp.clip(xi, 0, W - 1)
        out = out + (w * valid.astype(jnp.float32))[:, None] * \
            jax.nn.one_hot(idx, H * W, dtype=jnp.float32)
    return out


def logpolar_coords_np(H, W, A, R):
    """Log-polar sample coordinates for A angles (1 deg) x R log-spaced radii."""
    radius = min(H, W) // 2
    theta = np.deg2rad(np.arange(A, dtype=np.float64))
    rr = radius ** (np.arange(R, dtype=np.float64) / R)
    cy, cx = H // 2, W // 2
    sy = cy + rr[None, :] * np.sin(theta)[:, None]
    sx = cx + rr[None, :] * np.cos(theta)[:, None]
    return sy.ravel(), sx.ravel()


def rigid_warp_matrices(scale, rot_deg, H, W):
    """Per-batch (HW, HW) bilinear resampling matrices for RigidTransform(scale,0,0,rot)."""
    th = jnp.deg2rad(rot_deg.astype(jnp.float32))
    cy, cx = float(H // 2), float(W // 2)
    yy, xx = jnp.meshgrid(jnp.arange(H, dtype=jnp.float32),
                          jnp.arange(W, dtype=jnp.float32), indexing="ij")
    yc = (yy - cy).ravel()
    xc = (xx - cx).ravel()
    cos = jnp.cos(th)[:, None]
    sin = jnp.sin(th)[:, None]
    s = scale.astype(jnp.float32)[:, None]
    sy = (cos * yc[None, :] - sin * xc[None, :]) / s + cy
    sx = (sin * yc[None, :] + cos * xc[None, :]) / s + cx
    return jax.vmap(lambda a, b: bilinear_matrix(a, b, H, W))(sy, sx)   # (B, HW, HW)


def _const_spec(shape):
    """BlockSpec for a constant operand (block index never changes -> stays VMEM resident)."""
    n = len(shape)
    return pl.BlockSpec(shape, lambda *_: (0,) * n)


def _largest_divisor(n, cap):
    if n <= cap:
        return n
    for d in (cap, 2048, 1024, 512, 256, 128):
        if d <= cap and n % d == 0:
            return d
    return n


def _pick_pack(n_images, W, target_lanes=256):
    """Images packed side-by-side along lanes; prefer 256 lanes (v6e/v7x MXU width),
    but keep >= 2 grid steps (megacore) as long as that does not drop below 128 lanes."""
    nb = max(1, target_lanes // W)
    while nb > 1 and nb * W > 128 and -(-n_images // nb) < 2:
        nb //= 2
    return nb


# --------------------------------------------------------------------------------------
# Pallas kernels
# --------------------------------------------------------------------------------------
def _specmag_kernel(x_ref, ar_ref, ai_ref, br_ref, bi_ref, bs_ref, hp_ref, o_ref):
    """|fftshift(fft2(x))| * highpass for NB lane-packed images.

    Row DFT: (H,H) @ (H, NB*W) (real input -> 2 matmuls); column DFT: block-diagonal
    (NB*W, NB*W), complex x complex via Karatsuba (3 matmuls)."""
    bf16 = jnp.bfloat16
    x = x_ref[0].astype(bf16)
    tr = jnp.dot(ar_ref[...], x, preferred_element_type=jnp.float32)
    ti = jnp.dot(ai_ref[...], x, preferred_element_type=jnp.float32)
    t1 = jnp.dot(tr.astype(bf16), br_ref[...], preferred_element_type=jnp.float32)
    t2 = jnp.dot(ti.astype(bf16), bi_ref[...], preferred_element_type=jnp.float32)
    t3 = jnp.dot((tr + ti).astype(bf16), bs_ref[...], preferred_element_type=jnp.float32)
    yr = t1 - t2
    yi = t3 - t1 - t2
    # elementwise path stays f32 (v5e has no bf16 VPU)
    o_ref[0] = jnp.sqrt(yr * yr + yi * yi) * hp_ref[...]


def _lp_kernel(m_ref, w_ref, o_ref):
    """Log-polar resample: streamed (tk, tn) weight blocks, k-accumulation into o_ref."""
    @pl.when(pl.program_id(1) == 0)
    def _init():
        o_ref[...] = jnp.zeros_like(o_ref)
    o_ref[...] += jnp.dot(m_ref[...].astype(jnp.bfloat16), w_ref[...],
                          preferred_element_type=jnp.float32)


def _pc_kernel(z_ref, ar_ref, ai_ref, br_ref, bi_ref, bs_ref,
               iar_ref, iai_ref, ias_ref, icr_ref, ici_ref, o_ref, *, lin):
    """Lane-packed phase correlation.

    z packs Q image/template pairs: lanes [0, lin) hold the Q "a" images, lanes
    [lin, 2*lin) the matching "b" images.  One forward 2D DFT handles all of them;
    the cross power is a per-lane elementwise product; the inverse column-DFT matrix
    (icr/ici) folds in the group (channel) sum and the output fftshift when requested."""
    bf16 = jnp.bfloat16
    z = z_ref[0].astype(bf16)
    # forward row DFT (real input -> 2 matmuls)
    tr = jnp.dot(ar_ref[...], z, preferred_element_type=jnp.float32)
    ti = jnp.dot(ai_ref[...], z, preferred_element_type=jnp.float32)
    # forward column DFT (block-diagonal, complex x complex, Karatsuba)
    t1 = jnp.dot(tr.astype(bf16), br_ref[...], preferred_element_type=jnp.float32)
    t2 = jnp.dot(ti.astype(bf16), bi_ref[...], preferred_element_type=jnp.float32)
    t3 = jnp.dot((tr + ti).astype(bf16), bs_ref[...], preferred_element_type=jnp.float32)
    yr = t1 - t2
    yi = t3 - t1 - t2
    # split packed halves (per-pair lane blocks are aligned between the halves)
    a_r, a_i = yr[:, :lin], yi[:, :lin]
    b_r, b_i = yr[:, lin:], yi[:, lin:]
    # normalised cross power A * conj(B); rsqrt -> EUP slot, eps on the squared magnitude
    rr = a_r * b_r + a_i * b_i
    ri = a_i * b_r - a_r * b_i
    inv = jax.lax.rsqrt(rr * rr + ri * ri + 1e-16)
    rr = rr * inv
    ri = ri * inv
    # inverse row DFT (complex x complex, Karatsuba; fftshift baked into the matrices)
    u1 = jnp.dot(iar_ref[...], rr.astype(bf16), preferred_element_type=jnp.float32)
    u2 = jnp.dot(iai_ref[...], ri.astype(bf16), preferred_element_type=jnp.float32)
    u3 = jnp.dot(ias_ref[...], (rr + ri).astype(bf16), preferred_element_type=jnp.float32)
    ur = u1 - u2
    ui = u3 - u1 - u2
    # inverse column DFT, real part only (group/channel sum folded into icr/ici)
    o_ref[0] = (jnp.dot(ur.astype(jnp.bfloat16), icr_ref[...],
                        preferred_element_type=jnp.float32) -
                jnp.dot(ui.astype(jnp.bfloat16), ici_ref[...],
                        preferred_element_type=jnp.float32))


def _warp_kernel(x_ref, w_ref, o_ref):
    """Rigid-warp resample: (C, tk) @ (tk, tn), k-accumulation directly into o_ref."""
    @pl.when(pl.program_id(2) == 0)
    def _init():
        o_ref[...] = jnp.zeros_like(o_ref)
    o_ref[0] += jnp.dot(x_ref[0].astype(jnp.bfloat16), w_ref[0],
                        preferred_element_type=jnp.float32)


# --------------------------------------------------------------------------------------
# Pallas wrappers
# --------------------------------------------------------------------------------------
def specmag_packed(x):
    """x: (M, H, W) real -> |fftshift(fft2)| * highpass, lane-packed NB images/step."""
    M, H, W = x.shape
    NB = _pick_pack(M, W)
    G = -(-M // NB)
    Mp = G * NB
    if Mp != M:
        x = jnp.concatenate([x, jnp.zeros((Mp - M, H, W), x.dtype)], axis=0)
    L = NB * W
    # TODO(synk): fold this pack/unpack transpose into the BlockSpec + in-kernel einshape.
    xp = jnp.transpose(x.reshape(G, NB, H, W), (0, 2, 1, 3)).reshape(G, H, L)

    ar_np, ai_np = dft_mats_np(H, shift=True)
    wr_np, wi_np = dft_mats_np(W, shift=True)
    eye = np.eye(NB, dtype=np.float32)
    br_np = np.kron(eye, wr_np.T)
    bi_np = np.kron(eye, wi_np.T)
    hp_np = np.tile(highpass_filter_np(H, W), (1, NB))

    bf16 = jnp.bfloat16
    consts = [jnp.asarray(ar_np, bf16), jnp.asarray(ai_np, bf16),
              jnp.asarray(br_np, bf16), jnp.asarray(bi_np, bf16),
              jnp.asarray(br_np + bi_np, bf16),
              jnp.asarray(hp_np, jnp.float32)]

    needed = (2 * H * H * 2 + 3 * L * L * 2 + H * L * 4    # resident constants
              + 4 * H * L * 4)                             # double-buffered in/out blocks
    mag = pl.pallas_call(
        _specmag_kernel,
        out_shape=jax.ShapeDtypeStruct((G, H, L), jnp.float32),
        grid=(G,),
        in_specs=[pl.BlockSpec((1, H, L), lambda g: (g, 0, 0)),
                  _const_spec((H, H)), _const_spec((H, H)),
                  _const_spec((L, L)), _const_spec((L, L)), _const_spec((L, L)),
                  _const_spec((H, L))],
        out_specs=pl.BlockSpec((1, H, L), lambda g: (g, 0, 0)),
        compiler_params=_compiler_params(("parallel",), needed),
    )(xp, *consts)

    mag = jnp.transpose(mag.reshape(G, H, NB, W), (0, 2, 1, 3)).reshape(Mp, H, W)
    return mag[:M]


def logpolar_resample(mag_flat, wlp_t):
    """mag_flat: (M, HW) f32; wlp_t: (HW, Pout) bf16 -> (M, Pout) f32.

    The log-polar weight is streamed in (tk, tn) blocks (never fully VMEM-resident);
    the contraction axis accumulates directly into the f32 output block and the output
    axis is padded to a lane-aligned tile so all stores are dense."""
    M, HW = mag_flat.shape
    Pout = wlp_t.shape[1]
    tk = _largest_divisor(HW, 2048)
    K = HW // tk
    tn = min(512, -(-Pout // 128) * 128)
    Ppad = -(-Pout // tn) * tn
    if Ppad != Pout:
        wlp_t = jnp.pad(wlp_t, ((0, 0), (0, Ppad - Pout)))
    Nt = Ppad // tn

    needed = 2 * M * tk * 4 + 2 * tk * tn * 2 + M * tn * 4
    out = pl.pallas_call(
        _lp_kernel,
        out_shape=jax.ShapeDtypeStruct((M, Ppad), jnp.float32),
        grid=(Nt, K),
        in_specs=[pl.BlockSpec((M, tk), lambda n, k: (0, k)),
                  pl.BlockSpec((tk, tn), lambda n, k: (k, n))],
        out_specs=pl.BlockSpec((M, tn), lambda n, k: (0, n)),
        compiler_params=_compiler_params(("parallel", "arbitrary"), needed),
    )(mag_flat, wlp_t)
    return out[:, :Pout]


def packed_phase_correlation(a, b, *, shift, group):
    """a, b: (S, Q, Hc, Wc) real pairs.  Phase correlation per pair; consecutive groups
    of `group` pairs are summed (the sum is folded into the inverse column-DFT matrix).
    Returns (S, Q // group, Hc, Wc) float32."""
    S, Q, Hc, Wc = a.shape
    assert Q % group == 0
    nG = Q // group
    Lz = 2 * Q * Wc
    Lin = Q * Wc
    Lout = nG * Wc

    # pack a & b side-by-side along lanes
    z = jnp.concatenate([a, b], axis=1)                       # (S, 2Q, Hc, Wc)
    z = jnp.transpose(z, (0, 2, 1, 3)).reshape(S, Hc, Lz)     # (S, Hc, 2Q*Wc)

    ar_np, ai_np = dft_mats_np(Hc)
    wr_np, wi_np = dft_mats_np(Wc)
    iar_np, iai_np = dft_mats_np(Hc, inverse=True, shift=shift)
    iwr_np, iwi_np = dft_mats_np(Wc, inverse=True, shift=shift)

    br_np = np.kron(np.eye(2 * Q, dtype=np.float32), wr_np.T)
    bi_np = np.kron(np.eye(2 * Q, dtype=np.float32), wi_np.T)
    icr_np = np.kron(np.eye(nG, dtype=np.float32), np.tile(iwr_np.T, (group, 1)))
    ici_np = np.kron(np.eye(nG, dtype=np.float32), np.tile(iwi_np.T, (group, 1)))

    bf16 = jnp.bfloat16
    consts = [jnp.asarray(ar_np, bf16), jnp.asarray(ai_np, bf16),
              jnp.asarray(br_np, bf16), jnp.asarray(bi_np, bf16),
              jnp.asarray(br_np + bi_np, bf16),
              jnp.asarray(iar_np, bf16), jnp.asarray(iai_np, bf16),
              jnp.asarray(iar_np + iai_np, bf16),
              jnp.asarray(icr_np, bf16), jnp.asarray(ici_np, bf16)]

    needed = (5 * Hc * Hc * 2 + 3 * Lz * Lz * 2 + 2 * Lin * Lout * 2
              + 2 * Hc * Lz * 4 + 2 * Hc * Lout * 4)
    out = pl.pallas_call(
        functools.partial(_pc_kernel, lin=Lin),
        out_shape=jax.ShapeDtypeStruct((S, Hc, Lout), jnp.float32),
        grid=(S,),
        in_specs=[pl.BlockSpec((1, Hc, Lz), lambda s: (s, 0, 0)),
                  _const_spec((Hc, Hc)), _const_spec((Hc, Hc)),
                  _const_spec((Lz, Lz)), _const_spec((Lz, Lz)), _const_spec((Lz, Lz)),
                  _const_spec((Hc, Hc)), _const_spec((Hc, Hc)), _const_spec((Hc, Hc)),
                  _const_spec((Lin, Lout)), _const_spec((Lin, Lout))],
        out_specs=pl.BlockSpec((1, Hc, Lout), lambda s: (s, 0, 0)),
        compiler_params=_compiler_params(("parallel",), needed),
    )(z, *consts)

    out = out.reshape(S, Hc, nG, Wc)
    return jnp.transpose(out, (0, 2, 1, 3))                   # (S, nG, Hc, Wc)


def warp_apply(templ_flat, warp_t):
    """templ_flat: (B, C, HW) f32; warp_t: (B, HW, HW) bf16 -> (B, C, HW) f32.

    Output-N and contraction-K tiled; the K axis accumulates directly into the f32
    output block (its block index is constant over k) — no scratch buffer needed."""
    B, C, HW = templ_flat.shape
    tk = _largest_divisor(HW, 2048)
    tn = _largest_divisor(HW, 2048)
    K = HW // tk
    Nt = HW // tn
    needed = 2 * C * tk * 4 + 2 * tk * tn * 2 + C * tn * 4
    return pl.pallas_call(
        _warp_kernel,
        out_shape=jax.ShapeDtypeStruct((B, C, HW), jnp.float32),
        grid=(B, Nt, K),
        in_specs=[pl.BlockSpec((1, C, tk), lambda b, n, k: (b, 0, k)),
                  pl.BlockSpec((1, tk, tn), lambda b, n, k: (b, k, n))],
        out_specs=pl.BlockSpec((1, C, tn), lambda b, n, k: (b, 0, n)),
        compiler_params=_compiler_params(("parallel", "parallel", "arbitrary"), needed),
    )(templ_flat, warp_t)


# --------------------------------------------------------------------------------------
# Forward pass (mirrors MellinFourierRegistration.forward)
# --------------------------------------------------------------------------------------
@jax.jit
def mellin_fourier_forward(image, template):
    B, C, H, W = image.shape
    N = B * C
    image = image.astype(jnp.float32)
    template = template.astype(jnp.float32)

    # ---- |fftshift(fft2(.))| * highpass (lane-packed; spatial shift baked into DFT) --
    x_all = jnp.concatenate([image, template], axis=0).reshape(2 * N, H, W)
    mag = specmag_packed(x_all)                                          # (2N, H, W)

    # ---- log-polar resampling (only the 180 angles consumed downstream) -------------
    A = 180
    radius = min(H, W) // 2
    R = radius
    sy, sx = logpolar_coords_np(H, W, A, R)
    wlp_t = jnp.asarray(bilinear_matrix_np(sy, sx, H, W).T, jnp.bfloat16)  # (HW, A*R)
    lp = logpolar_resample(mag.reshape(2 * N, H * W), wlp_t)             # (2N, A*R)
    lp = lp.reshape(2, B, C, A, R)
    imageLogPolar, templateLogPolar = lp[0], lp[1]

    # ---- phase correlation over rotation/scale (shift=True, channel sum fused) ------
    # pack Bp batches per grid step so packed lanes approach the MXU width, while
    # keeping >= 2 grid steps when that does not cost output-lane density.
    Bp = 1
    for cand in range(B, 0, -1):
        if B % cand == 0 and 2 * cand * C * R <= 512:
            Bp = cand
            break
    while Bp > 1 and B // Bp < 2 and (Bp // 2) * R >= 128 and B % (Bp // 2) == 0:
        Bp //= 2
    Srs = B // Bp
    pcRS = packed_phase_correlation(
        imageLogPolar.reshape(Srs, Bp * C, A, R),
        templateLogPolar.reshape(Srs, Bp * C, A, R),
        shift=True, group=C).reshape(B, A, R)
    # torch.fft.fftshift(dim=None) also rolls the batch/channel axes of the Mellin
    # branch; the channel roll cancels in the fused channel sum, and the batch roll is
    # applied here on the small PC surface instead of the full-size magnitude tensor.
    pcRotScale = jnp.roll(pcRS, B // 2, axis=0)

    # ---- get_rot_scale (tiny scalar reduction kept in plain JAX) ---------------------
    flat = jnp.abs(pcRotScale).reshape(B, A * R)
    idx = jnp.argmax(flat, axis=-1)
    rotIdx = idx // R
    scaleIdx = idx % R
    estRot = (-rotIdx + 90).astype(jnp.int32)                  # transform_rot_parameter
    estScale = jnp.power(jnp.float32(radius),
                         -(scaleIdx.astype(jnp.float32) - R // 2) / radius)

    # ---- RigidTransform(1/estScale, 0, 0, -estRot)(template) -------------------------
    Wwarp = rigid_warp_matrices(1.0 / estScale, -estRot.astype(jnp.float32), H, W)
    warp_t = jnp.transpose(Wwarp, (0, 2, 1)).astype(jnp.bfloat16)        # (B, HW, HW)
    templateUnrotUnscaled = warp_apply(template.reshape(B, C, H * W), warp_t)
    templateUnrotUnscaled = templateUnrotUnscaled.reshape(B, C, H, W)

    # ---- phase correlation over translation (shift=False, 128-lane-dense output) ----
    a = image.reshape(N, H, W)
    b = templateUnrotUnscaled.reshape(N, H, W)
    Pp = max(1, 128 // W)                                      # Lout = Pp*W = 128 lanes
    St = -(-N // Pp)
    Np = St * Pp
    if Np != N:
        pad = jnp.zeros((Np - N, H, W), jnp.float32)
        a = jnp.concatenate([a, pad], axis=0)
        b = jnp.concatenate([b, pad], axis=0)
    pcT = packed_phase_correlation(a.reshape(St, Pp, H, W), b.reshape(St, Pp, H, W),
                                   shift=False, group=1)                 # (St, Pp, H, W)
    pcTranslat = pcT.reshape(Np, H, W)[:N].reshape(B, C, H, W)

    # ---- get_translations (tiny scalar reduction kept in plain JAX) ------------------
    summed = pcTranslat.sum(axis=1).reshape(B, H * W)
    tidx = jnp.argmax(summed, axis=-1)
    iMax = tidx // W
    jMax = tidx % W
    ty = jnp.where(iMax < H // 2, iMax, iMax - H)
    tx = jnp.where(jMax < W // 2, jMax, jMax - W)
    estTrans = jnp.stack([ty, tx], axis=-1).astype(jnp.int32)

    return dict(estRot=estRot, estScale=estScale, estTrans=estTrans,
                pcRotScale=pcRotScale, pcTranslat=pcTranslat)


# --------------------------------------------------------------------------------------
if __name__ == "__main__":
    key = jax.random.PRNGKey(0)
    B, C, H, W = 2, 4, 16, 16
    k1, k2 = jax.random.split(key)
    image = jax.random.normal(k1, (B, C, H, W), jnp.float32)
    template = jax.random.normal(k2, (B, C, H, W), jnp.float32)

    out = mellin_fourier_forward(image, template)
    out = jax.tree_util.tree_map(jax.block_until_ready, out)

    assert out["estRot"].shape == (B,)
    assert out["estScale"].shape == (B,)
    assert out["estTrans"].shape == (B, 2)
    assert out["pcRotScale"].shape == (B, 180, min(H, W) // 2)
    assert out["pcTranslat"].shape == (B, C, H, W)
    assert bool(jnp.all(jnp.isfinite(out["pcRotScale"])))
    assert bool(jnp.all(jnp.isfinite(out["pcTranslat"])))
    assert bool(jnp.all(jnp.isfinite(out["estScale"])))
    print("KERNEL_OK")
</pallas_src>

<mosaic_0001>
module attributes {stable_mosaic.version = 11 : i64} {
  func.func @_specmag_kernel(%arg0: i32, %arg1: memref<1x16x128xf32, #tpu.memory_space<vmem>>, %arg2: memref<16x16xbf16, #tpu.memory_space<vmem>>, %arg3: memref<16x16xbf16, #tpu.memory_space<vmem>>, %arg4: memref<128x128xbf16, #tpu.memory_space<vmem>>, %arg5: memref<128x128xbf16, #tpu.memory_space<vmem>>, %arg6: memref<128x128xbf16, #tpu.memory_space<vmem>>, %arg7: memref<16x128xf32, #tpu.memory_space<vmem>>, %arg8: memref<1x16x128xf32, #tpu.memory_space<vmem>>) attributes {dimension_semantics = [#tpu.dimension_semantics<parallel>], iteration_bounds = array<i64: 2>, scalar_prefetch = 0 : i64, scratch_operands = 0 : i64, tpu.core_type = #tpu.core_type<tc>, window_params = [{transform_indices = @transform_0, window_bounds = array<i64: 1, 16, 128>}, {pipeline_mode = #tpu.pipeline_mode<synchronous>, transform_indices = @transform_1, window_bounds = array<i64: 16, 16>}, {pipeline_mode = #tpu.pipeline_mode<synchronous>, transform_indices = @transform_2, window_bounds = array<i64: 16, 16>}, {pipeline_mode = #tpu.pipeline_mode<synchronous>, transform_indices = @transform_3, window_bounds = array<i64: 128, 128>}, {pipeline_mode = #tpu.pipeline_mode<synchronous>, transform_indices = @transform_4, window_bounds = array<i64: 128, 128>}, {pipeline_mode = #tpu.pipeline_mode<synchronous>, transform_indices = @transform_5, window_bounds = array<i64: 128, 128>}, {pipeline_mode = #tpu.pipeline_mode<synchronous>, transform_indices = @transform_6, window_bounds = array<i64: 16, 128>}, {transform_indices = @transform_7, window_bounds = array<i64: 1, 16, 128>}]} {
    %c0 = arith.constant 0 : index
    %c0_0 = arith.constant 0 : index
    %c0_1 = arith.constant 0 : index
    %0 = vector.load %arg1[%c0, %c0_0, %c0_1] : memref<1x16x128xf32, #tpu.memory_space<vmem>>, vector<1x16x128xf32>
    %1 = vector.shape_cast %0 : vector<1x16x128xf32> to vector<16x128xf32>
    %2 = arith.truncf %1 : vector<16x128xf32> to vector<16x128xbf16>
    %c0_2 = arith.constant 0 : index
    %c0_3 = arith.constant 0 : index
    %3 = vector.load %arg2[%c0_2, %c0_3] : memref<16x16xbf16, #tpu.memory_space<vmem>>, vector<16x16xbf16>
    %cst = arith.constant dense<0.000000e+00> : vector<16x128xf32>
    %4 = tpu.matmul %3, %2, %cst {dimension_numbers = #tpu.dot_dimension_numbers<[1], [0], [0], [1], [0, 0, 1, 1], [], []>} : vector<16x16xbf16>, vector<16x128xbf16>, vector<16x128xf32> -> vector<16x128xf32>
    %c0_4 = arith.constant 0 : index
    %c0_5 = arith.constant 0 : index
    %5 = vector.load %arg3[%c0_4, %c0_5] : memref<16x16xbf16, #tpu.memory_space<vmem>>, vector<16x16xbf16>
    %cst_6 = arith.constant dense<0.000000e+00> : vector<16x128xf32>
    %6 = tpu.matmul %5, %2, %cst_6 {dimension_numbers = #tpu.dot_dimension_numbers<[1], [0], [0], [1], [0, 0, 1, 1], [], []>} : vector<16x16xbf16>, vector<16x128xbf16>, vector<16x128xf32> -> vector<16x128xf32>
    %7 = arith.truncf %4 : vector<16x128xf32> to vector<16x128xbf16>
    %c0_7 = arith.constant 0 : index
    %c0_8 = arith.constant 0 : index
    %8 = vector.load %arg4[%c0_7, %c0_8] : memref<128x128xbf16, #tpu.memory_space<vmem>>, vector<128x128xbf16>
    %cst_9 = arith.constant dense<0.000000e+00> : vector<16x128xf32>
    %9 = tpu.matmul %7, %8, %cst_9 {dimension_numbers = #tpu.dot_dimension_numbers<[1], [0], [0], [1], [0, 0, 1, 1], [], []>} : vector<16x128xbf16>, vector<128x128xbf16>, vector<16x128xf32> -> vector<16x128xf32>
    %10 = arith.truncf %6 : vector<16x128xf32> to vector<16x128xbf16>
    %c0_10 = arith.constant 0 : index
    %c0_11 = arith.constant 0 : index
    %11 = vector.load %arg5[%c0_10, %c0_11] : memref<128x128xbf16, #tpu.memory_space<vmem>>, vector<128x128xbf16>
    %cst_12 = arith.constant dense<0.000000e+00> : vector<16x128xf32>
    %12 = tpu.matmul %10, %11, %cst_12 {dimension_numbers = #tpu.dot_dimension_numbers<[1], [0], [0], [1], [0, 0, 1, 1], [], []>} : vector<16x128xbf16>, vector<128x128xbf16>, vector<16x128xf32> -> vector<16x128xf32>
    %13 = arith.addf %4, %6 : vector<16x128xf32>
    %14 = arith.truncf %13 : vector<16x128xf32> to vector<16x128xbf16>
    %c0_13 = arith.constant 0 : index
    %c0_14 = arith.constant 0 : index
    %15 = vector.load %arg6[%c0_13, %c0_14] : memref<128x128xbf16, #tpu.memory_space<vmem>>, vector<128x128xbf16>
    %cst_15 = arith.constant dense<0.000000e+00> : vector<16x128xf32>
    %16 = tpu.matmul %14, %15, %cst_15 {dimension_numbers = #tpu.dot_dimension_numbers<[1], [0], [0], [1], [0, 0, 1, 1], [], []>} : vector<16x128xbf16>, vector<128x128xbf16>, vector<16x128xf32> -> vector<16x128xf32>
    %17 = arith.subf %9, %12 : vector<16x128xf32>
    %18 = arith.subf %16, %9 : vector<16x128xf32>
    %19 = arith.subf %18, %12 : vector<16x128xf32>
    %20 = arith.mulf %17, %17 : vector<16x128xf32>
    %21 = arith.mulf %19, %19 : vector<16x128xf32>
    %22 = arith.addf %20, %21 : vector<16x128xf32>
    %23 = math.sqrt %22 : vector<16x128xf32>
    %c0_16 = arith.constant 0 : index
    %c0_17 = arith.constant 0 : index
    %24 = vector.load %arg7[%c0_16, %c0_17] : memref<16x128xf32, #tpu.memory_space<vmem>>, vector<16x128xf32>
    %25 = arith.mulf %23, %24 : vector<16x128xf32>
    %c0_18 = arith.constant 0 : index
    %c0_19 = arith.constant 0 : index
    %c0_20 = arith.constant 0 : index
    %26 = vector.load %arg8[%c0_18, %c0_19, %c0_20] : memref<1x16x128xf32, #tpu.memory_space<vmem>>, vector<1x16x128xf32>
    %27 = vector.shape_cast %26 : vector<1x16x128xf32> to vector<16x128xf32>
    %28 = vector.shape_cast %25 : vector<16x128xf32> to vector<1x16x128xf32>
    tpu.vector_store %arg8[%c0_18, %c0_19, %c0_20], %28 {strides = array<i32>} : memref<1x16x128xf32, #tpu.memory_space<vmem>>, vector<1x16x128xf32>,
    return
  }
  func.func @transform_0(%arg0: i32) -> (i32, i32, i32) {
    %c0_i32 = arith.constant 0 : i32
    %c0_i32_0 = arith.constant 0 : i32
    %c0_i32_1 = arith.constant 0 : i32
    return %arg0, %c0_i32, %c0_i32_0 : i32, i32, i32
  }
  func.func @transform_1(%arg0: i32) -> (i32, i32) {
    %c0_i32 = arith.constant 0 : i32
    %c0_i32_0 = arith.constant 0 : i32
    %c0_i32_1 = arith.constant 0 : i32
    return %c0_i32, %c0_i32_0 : i32, i32
  }
  func.func @transform_2(%arg0: i32) -> (i32, i32) {
    %c0_i32 = arith.constant 0 : i32
    %c0_i32_0 = arith.constant 0 : i32
    %c0_i32_1 = arith.constant 0 : i32
    return %c0_i32, %c0_i32_0 : i32, i32
  }
  func.func @transform_3(%arg0: i32) -> (i32, i32) {
    %c0_i32 = arith.constant 0 : i32
    %c0_i32_0 = arith.constant 0 : i32
    %c0_i32_1 = arith.constant 0 : i32
    return %c0_i32, %c0_i32_0 : i32, i32
  }
  func.func @transform_4(%arg0: i32) -> (i32, i32) {
    %c0_i32 = arith.constant 0 : i32
    %c0_i32_0 = arith.constant 0 : i32
    %c0_i32_1 = arith.constant 0 : i32
    return %c0_i32, %c0_i32_0 : i32, i32
  }
  func.func @transform_5(%arg0: i32) -> (i32, i32) {
    %c0_i32 = arith.constant 0 : i32
    %c0_i32_0 = arith.constant 0 : i32
    %c0_i32_1 = arith.constant 0 : i32
    return %c0_i32, %c0_i32_0 : i32, i32
  }
  func.func @transform_6(%arg0: i32) -> (i32, i32) {
    %c0_i32 = arith.constant 0 : i32
    %c0_i32_0 = arith.constant 0 : i32
    %c0_i32_1 = arith.constant 0 : i32
    return %c0_i32, %c0_i32_0 : i32, i32
  }
  func.func @transform_7(%arg0: i32) -> (i32, i32, i32) {
    %c0_i32 = arith.constant 0 : i32
    %c0_i32_0 = arith.constant 0 : i32
    %c0_i32_1 = arith.constant 0 : i32
    return %arg0, %c0_i32, %c0_i32_0 : i32, i32, i32
  }
}

module attributes {stable_mosaic.version = 11 : i64} {
  func.func @_lp_kernel(%arg0: i32, %arg1: i32, %arg2: memref<16x256xf32, #tpu.memory_space<vmem>>, %arg3: memref<256x512xbf16, #tpu.memory_space<vmem>>, %arg4: memref<16x512xf32, #tpu.memory_space<vmem>>) attributes {dimension_semantics = [#tpu.dimension_semantics<parallel>, #tpu.dimension_semantics<arbitrary>], iteration_bounds = array<i64: 3, 1>, scalar_prefetch = 0 : i64, scratch_operands = 0 : i64, tpu.core_type = #tpu.core_type<tc>, window_params = [{transform_indices = @transform_0, window_bounds = array<i64: 16, 256>}, {transform_indices = @transform_1, window_bounds = array<i64: 256, 512>}, {transform_indices = @transform_2, window_bounds = array<i64: 16, 512>}]} {
    %c0_i32 = arith.constant 0 : i32
    %0 = arith.cmpi eq, %arg1, %c0_i32 : i32
    %1 = arith.extui %0 : i1 to i32
    %c0_i32_0 = arith.constant 0 : i32
    %2 = arith.cmpi ne, %1, %c0_i32_0 : i32
    scf.if %2 {
      %cst_8 = arith.constant 0.000000e+00 : f32
      %10 = vector.broadcast %cst_8 : f32 to vector<16x512xf32>
      %c0_9 = arith.constant 0 : index
      %c0_10 = arith.constant 0 : index
      %11 = vector.load %arg4[%c0_9, %c0_10] : memref<16x512xf32, #tpu.memory_space<vmem>>, vector<16x512xf32>
      tpu.vector_store %arg4[%c0_9, %c0_10], %10 {strides = array<i32>} : memref<16x512xf32, #tpu.memory_space<vmem>>, vector<16x512xf32>,
    } else {
    }
    %c0 = arith.constant 0 : index
    %c0_1 = arith.constant 0 : index
    %3 = vector.load %arg4[%c0, %c0_1] : memref<16x512xf32, #tpu.memory_space<vmem>>, vector<16x512xf32>
    %c0_2 = arith.constant 0 : index
    %c0_3 = arith.constant 0 : index
    %4 = vector.load %arg2[%c0_2, %c0_3] : memref<16x256xf32, #tpu.memory_space<vmem>>, vector<16x256xf32>
    %5 = arith.truncf %4 : vector<16x256xf32> to vector<16x256xbf16>
    %c0_4 = arith.constant 0 : index
    %c0_5 = arith.constant 0 : index
    %6 = vector.load %arg3[%c0_4, %c0_5] : memref<256x512xbf16, #tpu.memory_space<vmem>>, vector<256x512xbf16>
    %cst = arith.constant dense<0.000000e+00> : vector<16x512xf32>
    %7 = tpu.matmul %5, %6, %cst {dimension_numbers = #tpu.dot_dimension_numbers<[1], [0], [0], [1], [0, 0, 1, 1], [], []>} : vector<16x256xbf16>, vector<256x512xbf16>, vector<16x512xf32> -> vector<16x512xf32>
    %8 = arith.addf %3, %7 : vector<16x512xf32>
    %c0_6 = arith.constant 0 : index
    %c0_7 = arith.constant 0 : index
    %9 = vector.load %arg4[%c0_6, %c0_7] : memref<16x512xf32, #tpu.memory_space<vmem>>, vector<16x512xf32>
    tpu.vector_store %arg4[%c0_6, %c0_7], %8 {strides = array<i32>} : memref<16x512xf32, #tpu.memory_space<vmem>>, vector<16x512xf32>,
    return
  }
  func.func @transform_0(%arg0: i32, %arg1: i32) -> (i32, i32) {
    %c0_i32 = arith.constant 0 : i32
    %c0_i32_0 = arith.constant 0 : i32
    return %c0_i32, %arg1 : i32, i32
  }
  func.func @transform_1(%arg0: i32, %arg1: i32) -> (i32, i32) {
    %c0_i32 = arith.constant 0 : i32
    return %arg1, %arg0 : i32, i32
  }
  func.func @transform_2(%arg0: i32, %arg1: i32) -> (i32, i32) {
    %c0_i32 = arith.constant 0 : i32
    %c0_i32_0 = arith.constant 0 : i32
    return %c0_i32, %arg0 : i32, i32
  }
}

module attributes {stable_mosaic.version = 11 : i64} {
  func.func @_pc_kernel(%arg0: i32, %arg1: memref<1x180x128xf32, #tpu.memory_space<vmem>>, %arg2: memref<180x180xbf16, #tpu.memory_space<vmem>>, %arg3: memref<180x180xbf16, #tpu.memory_space<vmem>>, %arg4: memref<128x128xbf16, #tpu.memory_space<vmem>>, %arg5: memref<128x128xbf16, #tpu.memory_space<vmem>>, %arg6: memref<128x128xbf16, #tpu.memory_space<vmem>>, %arg7: memref<180x180xbf16, #tpu.memory_space<vmem>>, %arg8: memref<180x180xbf16, #tpu.memory_space<vmem>>, %arg9: memref<180x180xbf16, #tpu.memory_space<vmem>>, %arg10: memref<64x16xbf16, #tpu.memory_space<vmem>>, %arg11: memref<64x16xbf16, #tpu.memory_space<vmem>>, %arg12: memref<1x180x16xf32, #tpu.memory_space<vmem>>) attributes {dimension_semantics = [#tpu.dimension_semantics<parallel>], iteration_bounds = array<i64: 1>, scalar_prefetch = 0 : i64, scratch_operands = 0 : i64, tpu.core_type = #tpu.core_type<tc>, window_params = [{transform_indices = @transform_0, window_bounds = array<i64: 1, 180, 128>}, {pipeline_mode = #tpu.pipeline_mode<synchronous>, transform_indices = @transform_1, window_bounds = array<i64: 180, 180>}, {pipeline_mode = #tpu.pipeline_mode<synchronous>, transform_indices = @transform_2, window_bounds = array<i64: 180, 180>}, {pipeline_mode = #tpu.pipeline_mode<synchronous>, transform_indices = @transform_3, window_bounds = array<i64: 128, 128>}, {pipeline_mode = #tpu.pipeline_mode<synchronous>, transform_indices = @transform_4, window_bounds = array<i64: 128, 128>}, {pipeline_mode = #tpu.pipeline_mode<synchronous>, transform_indices = @transform_5, window_bounds = array<i64: 128, 128>}, {pipeline_mode = #tpu.pipeline_mode<synchronous>, transform_indices = @transform_6, window_bounds = array<i64: 180, 180>}, {pipeline_mode = #tpu.pipeline_mode<synchronous>, transform_indices = @transform_7, window_bounds = array<i64: 180, 180>}, {pipeline_mode = #tpu.pipeline_mode<synchronous>, transform_indices = @transform_8, window_bounds = array<i64: 180, 180>}, {pipeline_mode = #tpu.pipeline_mode<synchronous>, transform_indices = @transform_9, window_bounds = array<i64: 64, 16>}, {pipeline_mode = #tpu.pipeline_mode<synchronous>, transform_indices = @transform_10, window_bounds = array<i64: 64, 16>}, {transform_indices = @transform_11, window_bounds = array<i64: 1, 180, 16>}]} {
    %c0 = arith.constant 0 : index
    %c0_0 = arith.constant 0 : index
    %c0_1 = arith.constant 0 : index
    %0 = vector.load %arg1[%c0, %c0_0, %c0_1] : memref<1x180x128xf32, #tpu.memory_space<vmem>>, vector<1x180x128xf32>
    %1 = vector.shape_cast %0 : vector<1x180x128xf32> to vector<180x128xf32>
    %2 = arith.truncf %1 : vector<180x128xf32> to vector<180x128xbf16>
    %c0_2 = arith.constant 0 : index
    %c0_3 = arith.constant 0 : index
    %3 = vector.load %arg2[%c0_2, %c0_3] : memref<180x180xbf16, #tpu.memory_space<vmem>>, vector<180x180xbf16>
    %cst = arith.constant dense<0.000000e+00> : vector<180x128xf32>
    %4 = tpu.matmul %3, %2, %cst {dimension_numbers = #tpu.dot_dimension_numbers<[1], [0], [0], [1], [0, 0, 1, 1], [], []>} : vector<180x180xbf16>, vector<180x128xbf16>, vector<180x128xf32> -> vector<180x128xf32>
    %c0_4 = arith.constant 0 : index
    %c0_5 = arith.constant 0 : index
    %5 = vector.load %arg3[%c0_4, %c0_5] : memref<180x180xbf16, #tpu.memory_space<vmem>>, vector<180x180xbf16>
    %cst_6 = arith.constant dense<0.000000e+00> : vector<180x128xf32>
    %6 = tpu.matmul %5, %2, %cst_6 {dimension_numbers = #tpu.dot_dimension_numbers<[1], [0], [0], [1], [0, 0, 1, 1], [], []>} : vector<180x180xbf16>, vector<180x128xbf16>, vector<180x128xf32> -> vector<180x128xf32>
    %7 = arith.truncf %4 : vector<180x128xf32> to vector<180x128xbf16>
    %c0_7 = arith.constant 0 : index
    %c0_8 = arith.constant 0 : index
    %8 = vector.load %arg4[%c0_7, %c0_8] : memref<128x128xbf16, #tpu.memory_space<vmem>>, vector<128x128xbf16>
    %cst_9 = arith.constant dense<0.000000e+00> : vector<180x128xf32>
    %9 = tpu.matmul %7, %8, %cst_9 {dimension_numbers = #tpu.dot_dimension_numbers<[1], [0], [0], [1], [0, 0, 1, 1], [], []>} : vector<180x128xbf16>, vector<128x128xbf16>, vector<180x128xf32> -> vector<180x128xf32>
    %10 = arith.truncf %6 : vector<180x128xf32> to vector<180x128xbf16>
    %c0_10 = arith.constant 0 : index
    %c0_11 = arith.constant 0 : index
    %11 = vector.load %arg5[%c0_10, %c0_11] : memref<128x128xbf16, #tpu.memory_space<vmem>>, vector<128x128xbf16>
    %cst_12 = arith.constant dense<0.000000e+00> : vector<180x128xf32>
    %12 = tpu.matmul %10, %11, %cst_12 {dimension_numbers = #tpu.dot_dimension_numbers<[1], [0], [0], [1], [0, 0, 1, 1], [], []>} : vector<180x128xbf16>, vector<128x128xbf16>, vector<180x128xf32> -> vector<180x128xf32>
    %13 = arith.addf %4, %6 : vector<180x128xf32>
    %14 = arith.truncf %13 : vector<180x128xf32> to vector<180x128xbf16>
    %c0_13 = arith.constant 0 : index
    %c0_14 = arith.constant 0 : index
    %15 = vector.load %arg6[%c0_13, %c0_14] : memref<128x128xbf16, #tpu.memory_space<vmem>>, vector<128x128xbf16>
    %cst_15 = arith.constant dense<0.000000e+00> : vector<180x128xf32>
    %16 = tpu.matmul %14, %15, %cst_15 {dimension_numbers = #tpu.dot_dimension_numbers<[1], [0], [0], [1], [0, 0, 1, 1], [], []>} : vector<180x128xbf16>, vector<128x128xbf16>, vector<180x128xf32> -> vector<180x128xf32>
    %17 = arith.subf %9, %12 : vector<180x128xf32>
    %18 = arith.subf %16, %9 : vector<180x128xf32>
    %19 = arith.subf %18, %12 : vector<180x128xf32>
    %20 = vector.extract_strided_slice %17 {offsets = [0, 0], sizes = [180, 64], strides = [1, 1]} : vector<180x128xf32> to vector<180x64xf32>
    %21 = vector.extract_strided_slice %19 {offsets = [0, 0], sizes = [180, 64], strides = [1, 1]} : vector<180x128xf32> to vector<180x64xf32>
    %22 = vector.extract_strided_slice %17 {offsets = [0, 64], sizes = [180, 64], strides = [1, 1]} : vector<180x128xf32> to vector<180x64xf32>
    %23 = vector.extract_strided_slice %19 {offsets = [0, 64], sizes = [180, 64], strides = [1, 1]} : vector<180x128xf32> to vector<180x64xf32>
    %24 = arith.mulf %20, %22 : vector<180x64xf32>
    %25 = arith.mulf %21, %23 : vector<180x64xf32>
    %26 = arith.addf %24, %25 : vector<180x64xf32>
    %27 = arith.mulf %21, %22 : vector<180x64xf32>
    %28 = arith.mulf %20, %23 : vector<180x64xf32>
    %29 = arith.subf %27, %28 : vector<180x64xf32>
    %30 = arith.mulf %26, %26 : vector<180x64xf32>
    %31 = arith.mulf %29, %29 : vector<180x64xf32>
    %32 = arith.addf %30, %31 : vector<180x64xf32>
    %cst_16 = arith.constant 1.000000e-16 : f32
    %33 = vector.broadcast %cst_16 : f32 to vector<180x64xf32>
    %34 = arith.addf %32, %33 : vector<180x64xf32>
    %35 = math.rsqrt %34 : vector<180x64xf32>
    %36 = arith.mulf %26, %35 : vector<180x64xf32>
    %37 = arith.mulf %29, %35 : vector<180x64xf32>
    %c0_17 = arith.constant 0 : index
    %c0_18 = arith.constant 0 : index
    %38 = vector.load %arg7[%c0_17, %c0_18] : memref<180x180xbf16, #tpu.memory_space<vmem>>, vector<180x180xbf16>
    %39 = arith.truncf %36 : vector<180x64xf32> to vector<180x64xbf16>
    %cst_19 = arith.constant dense<0.000000e+00> : vector<180x64xf32>
    %40 = tpu.matmul %38, %39, %cst_19 {dimension_numbers = #tpu.dot_dimension_numbers<[1], [0], [0], [1], [0, 0, 1, 1], [], []>} : vector<180x180xbf16>, vector<180x64xbf16>, vector<180x64xf32> -> vector<180x64xf32>
    %c0_20 = arith.constant 0 : index
    %c0_21 = arith.constant 0 : index
    %41 = vector.load %arg8[%c0_20, %c0_21] : memref<180x180xbf16, #tpu.memory_space<vmem>>, vector<180x180xbf16>
    %42 = arith.truncf %37 : vector<180x64xf32> to vector<180x64xbf16>
    %cst_22 = arith.constant dense<0.000000e+00> : vector<180x64xf32>
    %43 = tpu.matmul %41, %42, %cst_22 {dimension_numbers = #tpu.dot_dimension_numbers<[1], [0], [0], [1], [0, 0, 1, 1], [], []>} : vector<180x180xbf16>, vector<180x64xbf16>, vector<180x64xf32> -> vector<180x64xf32>
    %c0_23 = arith.constant 0 : index
    %c0_24 = arith.constant 0 : index
    %44 = vector.load %arg9[%c0_23, %c0_24] : memref<180x180xbf16, #tpu.memory_space<vmem>>, vector<180x180xbf16>
    %45 = arith.addf %36, %37 : vector<180x64xf32>
    %46 = arith.truncf %45 : vector<180x64xf32> to vector<180x64xbf16>
    %cst_25 = arith.constant dense<0.000000e+00> : vector<180x64xf32>
    %47 = tpu.matmul %44, %46, %cst_25 {dimension_numbers = #tpu.dot_dimension_numbers<[1], [0], [0], [1], [0, 0, 1, 1], [], []>} : vector<180x180xbf16>, vector<180x64xbf16>, vector<180x64xf32> -> vector<180x64xf32>
    %48 = arith.subf %40, %43 : vector<180x64xf32>
    %49 = arith.subf %47, %40 : vector<180x64xf32>
    %50 = arith.subf %49, %43 : vector<180x64xf32>
    %51 = arith.truncf %48 : vector<180x64xf32> to vector<180x64xbf16>
    %c0_26 = arith.constant 0 : index
    %c0_27 = arith.constant 0 : index
    %52 = vector.load %arg10[%c0_26, %c0_27] : memref<64x16xbf16, #tpu.memory_space<vmem>>, vector<64x16xbf16>
    %cst_28 = arith.constant dense<0.000000e+00> : vector<180x16xf32>
    %53 = tpu.matmul %51, %52, %cst_28 {dimension_numbers = #tpu.dot_dimension_numbers<[1], [0], [0], [1], [0, 0, 1, 1], [], []>} : vector<180x64xbf16>, vector<64x16xbf16>, vector<180x16xf32> -> vector<180x16xf32>
    %54 = arith.truncf %50 : vector<180x64xf32> to vector<180x64xbf16>
    %c0_29 = arith.constant 0 : index
    %c0_30 = arith.constant 0 : index
    %55 = vector.load %arg11[%c0_29, %c0_30] : memref<64x16xbf16, #tpu.memory_space<vmem>>, vector<64x16xbf16>
    %cst_31 = arith.constant dense<0.000000e+00> : vector<180x16xf32>
    %56 = tpu.matmul %54, %55, %cst_31 {dimension_numbers = #tpu.dot_dimension_numbers<[1], [0], [0], [1], [0, 0, 1, 1], [], []>} : vector<180x64xbf16>, vector<64x16xbf16>, vector<180x16xf32> -> vector<180x16xf32>
    %57 = arith.subf %53, %56 : vector<180x16xf32>
    %c0_32 = arith.constant 0 : index
    %c0_33 = arith.constant 0 : index
    %c0_34 = arith.constant 0 : index
    %58 = vector.load %arg12[%c0_32, %c0_33, %c0_34] : memref<1x180x16xf32, #tpu.memory_space<vmem>>, vector<1x180x16xf32>
    %59 = vector.shape_cast %58 : vector<1x180x16xf32> to vector<180x16xf32>
    %60 = vector.shape_cast %57 : vector<180x16xf32> to vector<1x180x16xf32>
    tpu.vector_store %arg12[%c0_32, %c0_33, %c0_34], %60 {strides = array<i32>} : memref<1x180x16xf32, #tpu.memory_space<vmem>>, vector<1x180x16xf32>,
    return
  }
  func.func @transform_0(%arg0: i32) -> (i32, i32, i32) {
    %c0_i32 = arith.constant 0 : i32
    %c0_i32_0 = arith.constant 0 : i32
    %c0_i32_1 = arith.constant 0 : i32
    return %arg0, %c0_i32, %c0_i32_0 : i32, i32, i32
  }
  func.func @transform_1(%arg0: i32) -> (i32, i32) {
    %c0_i32 = arith.constant 0 : i32
    %c0_i32_0 = arith.constant 0 : i32
    %c0_i32_1 = arith.constant 0 : i32
    return %c0_i32, %c0_i32_0 : i32, i32
  }
  func.func @transform_2(%arg0: i32) -> (i32, i32) {
    %c0_i32 = arith.constant 0 : i32
    %c0_i32_0 = arith.constant 0 : i32
    %c0_i32_1 = arith.constant 0 : i32
    return %c0_i32, %c0_i32_0 : i32, i32
  }
  func.func @transform_3(%arg0: i32) -> (i32, i32) {
    %c0_i32 = arith.constant 0 : i32
    %c0_i32_0 = arith.constant 0 : i32
    %c0_i32_1 = arith.constant 0 : i32
    return %c0_i32, %c0_i32_0 : i32, i32
  }
  func.func @transform_4(%arg0: i32) -> (i32, i32) {
    %c0_i32 = arith.constant 0 : i32
    %c0_i32_0 = arith.constant 0 : i32
    %c0_i32_1 = arith.constant 0 : i32
    return %c0_i32, %c0_i32_0 : i32, i32
  }
  func.func @transform_5(%arg0: i32) -> (i32, i32) {
    %c0_i32 = arith.constant 0 : i32
    %c0_i32_0 = arith.constant 0 : i32
    %c0_i32_1 = arith.constant 0 : i32
    return %c0_i32, %c0_i32_0 : i32, i32
  }
  func.func @transform_6(%arg0: i32) -> (i32, i32) {
    %c0_i32 = arith.constant 0 : i32
    %c0_i32_0 = arith.constant 0 : i32
    %c0_i32_1 = arith.constant 0 : i32
    return %c0_i32, %c0_i32_0 : i32, i32
  }
  func.func @transform_7(%arg0: i32) -> (i32, i32) {
    %c0_i32 = arith.constant 0 : i32
    %c0_i32_0 = arith.constant 0 : i32
    %c0_i32_1 = arith.constant 0 : i32
    return %c0_i32, %c0_i32_0 : i32, i32
  }
  func.func @transform_8(%arg0: i32) -> (i32, i32) {
    %c0_i32 = arith.constant 0 : i32
    %c0_i32_0 = arith.constant 0 : i32
    %c0_i32_1 = arith.constant 0 : i32
    return %c0_i32, %c0_i32_0 : i32, i32
  }
  func.func @transform_9(%arg0: i32) -> (i32, i32) {
    %c0_i32 = arith.constant 0 : i32
    %c0_i32_0 = arith.constant 0 : i32
    %c0_i32_1 = arith.constant 0 : i32
    return %c0_i32, %c0_i32_0 : i32, i32
  }
  func.func @transform_10(%arg0: i32) -> (i32, i32) {
    %c0_i32 = arith.constant 0 : i32
    %c0_i32_0 = arith.constant 0 : i32
    %c0_i32_1 = arith.constant 0 : i32
    return %c0_i32, %c0_i32_0 : i32, i32
  }
  func.func @transform_11(%arg0: i32) -> (i32, i32, i32) {
    %c0_i32 = arith.constant 0 : i32
    %c0_i32_0 = arith.constant 0 : i32
    %c0_i32_1 = arith.constant 0 : i32
    return %arg0, %c0_i32, %c0_i32_0 : i32, i32, i32
  }
}

module attributes {stable_mosaic.version = 11 : i64} {
  func.func @_warp_kernel(%arg0: i32, %arg1: i32, %arg2: i32, %arg3: memref<1x4x256xf32, #tpu.memory_space<vmem>>, %arg4: memref<1x256x256xbf16, #tpu.memory_space<vmem>>, %arg5: memref<1x4x256xf32, #tpu.memory_space<vmem>>) attributes {dimension_semantics = [#tpu.dimension_semantics<parallel>, #tpu.dimension_semantics<parallel>, #tpu.dimension_semantics<arbitrary>], iteration_bounds = array<i64: 2, 1, 1>, scalar_prefetch = 0 : i64, scratch_operands = 0 : i64, tpu.core_type = #tpu.core_type<tc>, window_params = [{transform_indices = @transform_0, window_bounds = array<i64: 1, 4, 256>}, {transform_indices = @transform_1, window_bounds = array<i64: 1, 256, 256>}, {transform_indices = @transform_2, window_bounds = array<i64: 1, 4, 256>}]} {
    %c0_i32 = arith.constant 0 : i32
    %0 = arith.cmpi eq, %arg2, %c0_i32 : i32
    %1 = arith.extui %0 : i1 to i32
    %c0_i32_0 = arith.constant 0 : i32
    %2 = arith.cmpi ne, %1, %c0_i32_0 : i32
    scf.if %2 {
      %cst_12 = arith.constant 0.000000e+00 : f32
      %15 = vector.broadcast %cst_12 : f32 to vector<1x4x256xf32>
      %c0_13 = arith.constant 0 : index
      %c0_14 = arith.constant 0 : index
      %c0_15 = arith.constant 0 : index
      %16 = vector.load %arg5[%c0_13, %c0_14, %c0_15] : memref<1x4x256xf32, #tpu.memory_space<vmem>>, vector<1x4x256xf32>
      tpu.vector_store %arg5[%c0_13, %c0_14, %c0_15], %15 {strides = array<i32>} : memref<1x4x256xf32, #tpu.memory_space<vmem>>, vector<1x4x256xf32>,
    } else {
    }
    %c0 = arith.constant 0 : index
    %c0_1 = arith.constant 0 : index
    %c0_2 = arith.constant 0 : index
    %3 = vector.load %arg5[%c0, %c0_1, %c0_2] : memref<1x4x256xf32, #tpu.memory_space<vmem>>, vector<1x4x256xf32>
    %4 = vector.shape_cast %3 : vector<1x4x256xf32> to vector<4x256xf32>
    %c0_3 = arith.constant 0 : index
    %c0_4 = arith.constant 0 : index
    %c0_5 = arith.constant 0 : index
    %5 = vector.load %arg3[%c0_3, %c0_4, %c0_5] : memref<1x4x256xf32, #tpu.memory_space<vmem>>, vector<1x4x256xf32>
    %6 = vector.shape_cast %5 : vector<1x4x256xf32> to vector<4x256xf32>
    %7 = arith.truncf %6 : vector<4x256xf32> to vector<4x256xbf16>
    %c0_6 = arith.constant 0 : index
    %c0_7 = arith.constant 0 : index
    %c0_8 = arith.constant 0 : index
    %8 = vector.load %arg4[%c0_6, %c0_7, %c0_8] : memref<1x256x256xbf16, #tpu.memory_space<vmem>>, vector<1x256x256xbf16>
    %9 = vector.shape_cast %8 : vector<1x256x256xbf16> to vector<256x256xbf16>
    %cst = arith.constant dense<0.000000e+00> : vector<4x256xf32>
    %10 = tpu.matmul %7, %9, %cst {dimension_numbers = #tpu.dot_dimension_numbers<[1], [0], [0], [1], [0, 0, 1, 1], [], []>} : vector<4x256xbf16>, vector<256x256xbf16>, vector<4x256xf32> -> vector<4x256xf32>
    %11 = arith.addf %4, %10 : vector<4x256xf32>
    %c0_9 = arith.constant 0 : index
    %c0_10 = arith.constant 0 : index
    %c0_11 = arith.constant 0 : index
    %12 = vector.load %arg5[%c0_9, %c0_10, %c0_11] : memref<1x4x256xf32, #tpu.memory_space<vmem>>, vector<1x4x256xf32>
    %13 = vector.shape_cast %12 : vector<1x4x256xf32> to vector<4x256xf32>
    %14 = vector.shape_cast %11 : vector<4x256xf32> to vector<1x4x256xf32>
    tpu.vector_store %arg5[%c0_9, %c0_10, %c0_11], %14 {strides = array<i32>} : memref<1x4x256xf32, #tpu.memory_space<vmem>>, vector<1x4x256xf32>,
    return
  }
  func.func @transform_0(%arg0: i32, %arg1: i32, %arg2: i32) -> (i32, i32, i32) {
    %c0_i32 = arith.constant 0 : i32
    %c0_i32_0 = arith.constant 0 : i32
    return %arg0, %c0_i32, %arg2 : i32, i32, i32
  }
  func.func @transform_1(%arg0: i32, %arg1: i32, %arg2: i32) -> (i32, i32, i32) {
    %c0_i32 = arith.constant 0 : i32
    return %arg0, %arg2, %arg1 : i32, i32, i32
  }
  func.func @transform_2(%arg0: i32, %arg1: i32, %arg2: i32) -> (i32, i32, i32) {
    %c0_i32 = arith.constant 0 : i32
    %c0_i32_0 = arith.constant 0 : i32
    return %arg0, %c0_i32, %arg1 : i32, i32, i32
  }
}

module attributes {stable_mosaic.version = 11 : i64} {
  func.func @_pc_kernel(%arg0: i32, %arg1: memref<1x16x256xf32, #tpu.memory_space<vmem>>, %arg2: memref<16x16xbf16, #tpu.memory_space<vmem>>, %arg3: memref<16x16xbf16, #tpu.memory_space<vmem>>, %arg4: memref<256x256xbf16, #tpu.memory_space<vmem>>, %arg5: memref<256x256xbf16, #tpu.memory_space<vmem>>, %arg6: memref<256x256xbf16, #tpu.memory_space<vmem>>, %arg7: memref<16x16xbf16, #tpu.memory_space<vmem>>, %arg8: memref<16x16xbf16, #tpu.memory_space<vmem>>, %arg9: memref<16x16xbf16, #tpu.memory_space<vmem>>, %arg10: memref<128x128xbf16, #tpu.memory_space<vmem>>, %arg11: memref<128x128xbf16, #tpu.memory_space<vmem>>, %arg12: memref<1x16x128xf32, #tpu.memory_space<vmem>>) attributes {dimension_semantics = [#tpu.dimension_semantics<parallel>], iteration_bounds = array<i64: 1>, scalar_prefetch = 0 : i64, scratch_operands = 0 : i64, tpu.core_type = #tpu.core_type<tc>, window_params = [{transform_indices = @transform_0, window_bounds = array<i64: 1, 16, 256>}, {pipeline_mode = #tpu.pipeline_mode<synchronous>, transform_indices = @transform_1, window_bounds = array<i64: 16, 16>}, {pipeline_mode = #tpu.pipeline_mode<synchronous>, transform_indices = @transform_2, window_bounds = array<i64: 16, 16>}, {pipeline_mode = #tpu.pipeline_mode<synchronous>, transform_indices = @transform_3, window_bounds = array<i64: 256, 256>}, {pipeline_mode = #tpu.pipeline_mode<synchronous>, transform_indices = @transform_4, window_bounds = array<i64: 256, 256>}, {pipeline_mode = #tpu.pipeline_mode<synchronous>, transform_indices = @transform_5, window_bounds = array<i64: 256, 256>}, {pipeline_mode = #tpu.pipeline_mode<synchronous>, transform_indices = @transform_6, window_bounds = array<i64: 16, 16>}, {pipeline_mode = #tpu.pipeline_mode<synchronous>, transform_indices = @transform_7, window_bounds = array<i64: 16, 16>}, {pipeline_mode = #tpu.pipeline_mode<synchronous>, transform_indices = @transform_8, window_bounds = array<i64: 16, 16>}, {pipeline_mode = #tpu.pipeline_mode<synchronous>, transform_indices = @transform_9, window_bounds = array<i64: 128, 128>}, {pipeline_mode = #tpu.pipeline_mode<synchronous>, transform_indices = @transform_10, window_bounds = array<i64: 128, 128>}, {transform_indices = @transform_11, window_bounds = array<i64: 1, 16, 128>}]} {
    %c0 = arith.constant 0 : index
    %c0_0 = arith.constant 0 : index
    %c0_1 = arith.constant 0 : index
    %0 = vector.load %arg1[%c0, %c0_0, %c0_1] : memref<1x16x256xf32, #tpu.memory_space<vmem>>, vector<1x16x256xf32>
    %1 = vector.shape_cast %0 : vector<1x16x256xf32> to vector<16x256xf32>
    %2 = arith.truncf %1 : vector<16x256xf32> to vector<16x256xbf16>
    %c0_2 = arith.constant 0 : index
    %c0_3 = arith.constant 0 : index
    %3 = vector.load %arg2[%c0_2, %c0_3] : memref<16x16xbf16, #tpu.memory_space<vmem>>, vector<16x16xbf16>
    %cst = arith.constant dense<0.000000e+00> : vector<16x256xf32>
    %4 = tpu.matmul %3, %2, %cst {dimension_numbers = #tpu.dot_dimension_numbers<[1], [0], [0], [1], [0, 0, 1, 1], [], []>} : vector<16x16xbf16>, vector<16x256xbf16>, vector<16x256xf32> -> vector<16x256xf32>
    %c0_4 = arith.constant 0 : index
    %c0_5 = arith.constant 0 : index
    %5 = vector.load %arg3[%c0_4, %c0_5] : memref<16x16xbf16, #tpu.memory_space<vmem>>, vector<16x16xbf16>
    %cst_6 = arith.constant dense<0.000000e+00> : vector<16x256xf32>
    %6 = tpu.matmul %5, %2, %cst_6 {dimension_numbers = #tpu.dot_dimension_numbers<[1], [0], [0], [1], [0, 0, 1, 1], [], []>} : vector<16x16xbf16>, vector<16x256xbf16>, vector<16x256xf32> -> vector<16x256xf32>
    %7 = arith.truncf %4 : vector<16x256xf32> to vector<16x256xbf16>
    %c0_7 = arith.constant 0 : index
    %c0_8 = arith.constant 0 : index
    %8 = vector.load %arg4[%c0_7, %c0_8] : memref<256x256xbf16, #tpu.memory_space<vmem>>, vector<256x256xbf16>
    %cst_9 = arith.constant dense<0.000000e+00> : vector<16x256xf32>
    %9 = tpu.matmul %7, %8, %cst_9 {dimension_numbers = #tpu.dot_dimension_numbers<[1], [0], [0], [1], [0, 0, 1, 1], [], []>} : vector<16x256xbf16>, vector<256x256xbf16>, vector<16x256xf32> -> vector<16x256xf32>
    %10 = arith.truncf %6 : vector<16x256xf32> to vector<16x256xbf16>
    %c0_10 = arith.constant 0 : index
    %c0_11 = arith.constant 0 : index
    %11 = vector.load %arg5[%c0_10, %c0_11] : memref<256x256xbf16, #tpu.memory_space<vmem>>, vector<256x256xbf16>
    %cst_12 = arith.constant dense<0.000000e+00> : vector<16x256xf32>
    %12 = tpu.matmul %10, %11, %cst_12 {dimension_numbers = #tpu.dot_dimension_numbers<[1], [0], [0], [1], [0, 0, 1, 1], [], []>} : vector<16x256xbf16>, vector<256x256xbf16>, vector<16x256xf32> -> vector<16x256xf32>
    %13 = arith.addf %4, %6 : vector<16x256xf32>
    %14 = arith.truncf %13 : vector<16x256xf32> to vector<16x256xbf16>
    %c0_13 = arith.constant 0 : index
    %c0_14 = arith.constant 0 : index
    %15 = vector.load %arg6[%c0_13, %c0_14] : memref<256x256xbf16, #tpu.memory_space<vmem>>, vector<256x256xbf16>
    %cst_15 = arith.constant dense<0.000000e+00> : vector<16x256xf32>
    %16 = tpu.matmul %14, %15, %cst_15 {dimension_numbers = #tpu.dot_dimension_numbers<[1], [0], [0], [1], [0, 0, 1, 1], [], []>} : vector<16x256xbf16>, vector<256x256xbf16>, vector<16x256xf32> -> vector<16x256xf32>
    %17 = arith.subf %9, %12 : vector<16x256xf32>
    %18 = arith.subf %16, %9 : vector<16x256xf32>
    %19 = arith.subf %18, %12 : vector<16x256xf32>
    %20 = vector.extract_strided_slice %17 {offsets = [0, 0], sizes = [16, 128], strides = [1, 1]} : vector<16x256xf32> to vector<16x128xf32>
    %21 = vector.extract_strided_slice %19 {offsets = [0, 0], sizes = [16, 128], strides = [1, 1]} : vector<16x256xf32> to vector<16x128xf32>
    %22 = vector.extract_strided_slice %17 {offsets = [0, 128], sizes = [16, 128], strides = [1, 1]} : vector<16x256xf32> to vector<16x128xf32>
    %23 = vector.extract_strided_slice %19 {offsets = [0, 128], sizes = [16, 128], strides = [1, 1]} : vector<16x256xf32> to vector<16x128xf32>
    %24 = arith.mulf %20, %22 : vector<16x128xf32>
    %25 = arith.mulf %21, %23 : vector<16x128xf32>
    %26 = arith.addf %24, %25 : vector<16x128xf32>
    %27 = arith.mulf %21, %22 : vector<16x128xf32>
    %28 = arith.mulf %20, %23 : vector<16x128xf32>
    %29 = arith.subf %27, %28 : vector<16x128xf32>
    %30 = arith.mulf %26, %26 : vector<16x128xf32>
    %31 = arith.mulf %29, %29 : vector<16x128xf32>
    %32 = arith.addf %30, %31 : vector<16x128xf32>
    %cst_16 = arith.constant 1.000000e-16 : f32
    %33 = vector.broadcast %cst_16 : f32 to vector<16x128xf32>
    %34 = arith.addf %32, %33 : vector<16x128xf32>
    %35 = math.rsqrt %34 : vector<16x128xf32>
    %36 = arith.mulf %26, %35 : vector<16x128xf32>
    %37 = arith.mulf %29, %35 : vector<16x128xf32>
    %c0_17 = arith.constant 0 : index
    %c0_18 = arith.constant 0 : index
    %38 = vector.load %arg7[%c0_17, %c0_18] : memref<16x16xbf16, #tpu.memory_space<vmem>>, vector<16x16xbf16>
    %39 = arith.truncf %36 : vector<16x128xf32> to vector<16x128xbf16>
    %cst_19 = arith.constant dense<0.000000e+00> : vector<16x128xf32>
    %40 = tpu.matmul %38, %39, %cst_19 {dimension_numbers = #tpu.dot_dimension_numbers<[1], [0], [0], [1], [0, 0, 1, 1], [], []>} : vector<16x16xbf16>, vector<16x128xbf16>, vector<16x128xf32> -> vector<16x128xf32>
    %c0_20 = arith.constant 0 : index
    %c0_21 = arith.constant 0 : index
    %41 = vector.load %arg8[%c0_20, %c0_21] : memref<16x16xbf16, #tpu.memory_space<vmem>>, vector<16x16xbf16>
    %42 = arith.truncf %37 : vector<16x128xf32> to vector<16x128xbf16>
    %cst_22 = arith.constant dense<0.000000e+00> : vector<16x128xf32>
    %43 = tpu.matmul %41, %42, %cst_22 {dimension_numbers = #tpu.dot_dimension_numbers<[1], [0], [0], [1], [0, 0, 1, 1], [], []>} : vector<16x16xbf16>, vector<16x128xbf16>, vector<16x128xf32> -> vector<16x128xf32>
    %c0_23 = arith.constant 0 : index
    %c0_24 = arith.constant 0 : index
    %44 = vector.load %arg9[%c0_23, %c0_24] : memref<16x16xbf16, #tpu.memory_space<vmem>>, vector<16x16xbf16>
    %45 = arith.addf %36, %37 : vector<16x128xf32>
    %46 = arith.truncf %45 : vector<16x128xf32> to vector<16x128xbf16>
    %cst_25 = arith.constant dense<0.000000e+00> : vector<16x128xf32>
    %47 = tpu.matmul %44, %46, %cst_25 {dimension_numbers = #tpu.dot_dimension_numbers<[1], [0], [0], [1], [0, 0, 1, 1], [], []>} : vector<16x16xbf16>, vector<16x128xbf16>, vector<16x128xf32> -> vector<16x128xf32>
    %48 = arith.subf %40, %43 : vector<16x128xf32>
    %49 = arith.subf %47, %40 : vector<16x128xf32>
    %50 = arith.subf %49, %43 : vector<16x128xf32>
    %51 = arith.truncf %48 : vector<16x128xf32> to vector<16x128xbf16>
    %c0_26 = arith.constant 0 : index
    %c0_27 = arith.constant 0 : index
    %52 = vector.load %arg10[%c0_26, %c0_27] : memref<128x128xbf16, #tpu.memory_space<vmem>>, vector<128x128xbf16>
    %cst_28 = arith.constant dense<0.000000e+00> : vector<16x128xf32>
    %53 = tpu.matmul %51, %52, %cst_28 {dimension_numbers = #tpu.dot_dimension_numbers<[1], [0], [0], [1], [0, 0, 1, 1], [], []>} : vector<16x128xbf16>, vector<128x128xbf16>, vector<16x128xf32> -> vector<16x128xf32>
    %54 = arith.truncf %50 : vector<16x128xf32> to vector<16x128xbf16>
    %c0_29 = arith.constant 0 : index
    %c0_30 = arith.constant 0 : index
    %55 = vector.load %arg11[%c0_29, %c0_30] : memref<128x128xbf16, #tpu.memory_space<vmem>>, vector<128x128xbf16>
    %cst_31 = arith.constant dense<0.000000e+00> : vector<16x128xf32>
    %56 = tpu.matmul %54, %55, %cst_31 {dimension_numbers = #tpu.dot_dimension_numbers<[1], [0], [0], [1], [0, 0, 1, 1], [], []>} : vector<16x128xbf16>, vector<128x128xbf16>, vector<16x128xf32> -> vector<16x128xf32>
    %57 = arith.subf %53, %56 : vector<16x128xf32>
    %c0_32 = arith.constant 0 : index
    %c0_33 = arith.constant 0 : index
    %c0_34 = arith.constant 0 : index
    %58 = vector.load %arg12[%c0_32, %c0_33, %c0_34] : memref<1x16x128xf32, #tpu.memory_space<vmem>>, vector<1x16x128xf32>
    %59 = vector.shape_cast %58 : vector<1x16x128xf32> to vector<16x128xf32>
    %60 = vector.shape_cast %57 : vector<16x128xf32> to vector<1x16x128xf32>
    tpu.vector_store %arg12[%c0_32, %c0_33, %c0_34], %60 {strides = array<i32>} : memref<1x16x128xf32, #tpu.memory_space<vmem>>, vector<1x16x128xf32>,
    return
  }
  func.func @transform_0(%arg0: i32) -> (i32, i32, i32) {
    %c0_i32 = arith.constant 0 : i32
    %c0_i32_0 = arith.constant 0 : i32
    %c0_i32_1 = arith.constant 0 : i32
    return %arg0, %c0_i32, %c0_i32_0 : i32, i32, i32
  }
  func.func @transform_1(%arg0: i32) -> (i32, i32) {
    %c0_i32 = arith.constant 0 : i32
    %c0_i32_0 = arith.constant 0 : i32
    %c0_i32_1 = arith.constant 0 : i32
    return %c0_i32, %c0_i32_0 : i32, i32
  }
  func.func @transform_2(%arg0: i32) -> (i32, i32) {
    %c0_i32 = arith.constant 0 : i32
    %c0_i32_0 = arith.constant 0 : i32
    %c0_i32_1 = arith.constant 0 : i32
    return %c0_i32, %c0_i32_0 : i32, i32
  }
  func.func @transform_3(%arg0: i32) -> (i32, i32) {
    %c0_i32 = arith.constant 0 : i32
    %c0_i32_0 = arith.constant 0 : i32
    %c0_i32_1 = arith.constant 0 : i32
    return %c0_i32, %c0_i32_0 : i32, i32
  }
  func.func @transform_4(%arg0: i32) -> (i32, i32) {
    %c0_i32 = arith.constant 0 : i32
    %c0_i32_0 = arith.constant 0 : i32
    %c0_i32_1 = arith.constant 0 : i32
    return %c0_i32, %c0_i32_0 : i32, i32
  }
  func.func @transform_5(%arg0: i32) -> (i32, i32) {
    %c0_i32 = arith.constant 0 : i32
    %c0_i32_0 = arith.constant 0 : i32
    %c0_i32_1 = arith.constant 0 : i32
    return %c0_i32, %c0_i32_0 : i32, i32
  }
  func.func @transform_6(%arg0: i32) -> (i32, i32) {
    %c0_i32 = arith.constant 0 : i32
    %c0_i32_0 = arith.constant 0 : i32
    %c0_i32_1 = arith.constant 0 : i32
    return %c0_i32, %c0_i32_0 : i32, i32
  }
  func.func @transform_7(%arg0: i32) -> (i32, i32) {
    %c0_i32 = arith.constant 0 : i32
    %c0_i32_0 = arith.constant 0 : i32
    %c0_i32_1 = arith.constant 0 : i32
    return %c0_i32, %c0_i32_0 : i32, i32
  }
  func.func @transform_8(%arg0: i32) -> (i32, i32) {
    %c0_i32 = arith.constant 0 : i32
    %c0_i32_0 = arith.constant 0 : i32
    %c0_i32_1 = arith.constant 0 : i32
    return %c0_i32, %c0_i32_0 : i32, i32
  }
  func.func @transform_9(%arg0: i32) -> (i32, i32) {
    %c0_i32 = arith.constant 0 : i32
    %c0_i32_0 = arith.constant 0 : i32
    %c0_i32_1 = arith.constant 0 : i32
    return %c0_i32, %c0_i32_0 : i32, i32
  }
  func.func @transform_10(%arg0: i32) -> (i32, i32) {
    %c0_i32 = arith.constant 0 : i32
    %c0_i32_0 = arith.constant 0 : i32
    %c0_i32_1 = arith.constant 0 : i32
    return %c0_i32, %c0_i32_0 : i32, i32
  }
  func.func @transform_11(%arg0: i32) -> (i32, i32, i32) {
    %c0_i32 = arith.constant 0 : i32
    %c0_i32_0 = arith.constant 0 : i32
    %c0_i32_1 = arith.constant 0 : i32
    return %arg0, %c0_i32, %c0_i32_0 : i32, i32, i32
  }
}

</mosaic_0001>

<llo_original>
// kernel: mellin_fourier_forward.6
$region0: #{mellin_fourier_forward.6}
  #allocation0 [shape = 'u32[]', space=smem, size = 0x4, offset = 0x4, fixed_abs, tag = 'smem constant byte address 0x4 - core index']
  #allocation1 [shape = 'u32[144,128]{1,0:T(1,128)}', space=vmem, size = 0x12000, scoped, tag = 'internal scratch']
  %s0 = inlined_call_operand.vmem [shape: f32[16,256], index: 0, kind: input, shape index: {}]
  %s1 = inlined_call_operand.vmem [shape: bf16[256,1536], index: 1, kind: input, shape index: {}]
  %s2 = inlined_call_operand.vmem [shape: f32[16,1536], index: 2, kind: output, shape index: {}]
  %s3 = sld [smem:[#allocation0]]
  $region87: #{mellin_fourier_forward.6} parent=0
    _
  %s5 = ssub.s32 1, %s3
  %s6 = scalar_select 0, %s5, %s3
  $region1: #{mellin_fourier_forward.6} parent=0
    #allocation2 [shape = 'u8[524288]{0}', space=vmem, size = 0x80000, scoped, tag = 'input window, operand 1']
    #allocation3 [shape = 'u8[65536]{0}', space=vmem, size = 0x10000, scoped, tag = 'output window, operand 0']
    loop: start=0, step=1, limit=5
    $region2: #{mellin_fourier_forward.6} parent=1 // loop_pre_header
      _
    $region3: #{mellin_fourier_forward.6} parent=1 // loop_header
      %s8 = sphi 0, %s12
      %p9 = scmp.ge.s32.totalorder %s8, 5
      %s15 = sphi 0, %s27
      %s16 = sphi 0, %s23
      %s17 = sphi 0, %s15
      %s18 = sphi 0, %s16
      %s19 = sphi 0, %s17
      %s20 = sphi 0, %s18
      %s30 = sphi 0, %s32
      %s33 = sphi 0, %s30
      %s34 = sphi 0, %s33
      %s50 = sphi 0, %s34
      %s58 = sphi 0, %s60
      %s61 = sphi 0, %s58
      %s62 = sphi 0, %s61
      %s78 = sphi 0, %s62
      %s84 = sphi 0, %s86
      %s87 = sphi 0, %s84
      %s88 = sphi 0, %s87
      %s104 = sphi 0, %s88
    $region4: #{mellin_fourier_forward.6} parent=1 // loop_header_branch
      %11 = sbr.rel (%p9) target = $region8
    $region5: #{mellin_fourier_forward.6} parent=1 // loop_body
      %s13 = ssub.s32 %s8, 1
      %s14 = ssub.s32 %s8, 2
      %s21 = sadd.s32 1, %s16
      %p22 = scmp.ge.s32.totalorder %s21, 1
      %s23 = scalar_select %p22, 0, %s21
      %s24 = sadd.s32 1, %s15
      %s25 = scalar_select %p22, %s24, %s15
      %p26 = scmp.ge.s32.totalorder %s25, 3
      %s27 = scalar_select %p26, 0, %s25
      %s28 = ssub.s32 %s16, %s23
      %p29 = scmp.eq.s32.totalorder %s28, 0
      %s31 = sadd.s32 %s30, 1
      %s32 = scalar_select %p29, %s30, %s31
      %p35 = pneg %p29
      %p36 = scmp.eq.s32.totalorder %s8, 2
      %p37 = por %p35, %p36
      %p38 = scmp.ne.s32.totalorder %s30, %s33
      %p39 = scmp.eq.s32.totalorder %s8, 0
      %p40 = por %p38, %p39
      %p41 = scmp.ne.s32.totalorder %s30, %s33
      %p42 = scmp.eq.s32.totalorder %s13, 2
      %p43 = por %p41, %p42
      %p44 = scmp.ne.s32.totalorder %s33, %s34
      %p45 = scmp.eq.s32.totalorder %s13, 0
      %p46 = por %p44, %p45
      %p47 = scmp.ne.s32.totalorder %s33, %s34
      %p48 = scmp.eq.s32.totalorder %s14, 2
      %p49 = por %p47, %p48
      %p51 = scmp.ne.s32.totalorder %s34, %s50
      %p52 = scmp.eq.s32.totalorder %s14, 0
      %p53 = por %p51, %p52
      %s54 = ssub.s32 %s16, %s23
      %s55 = ssub.s32 %s15, %s27
      %s56 = sor.u32 %s54, %s55
      %p57 = scmp.eq.s32.totalorder %s56, 0
      %s59 = sadd.s32 %s58, 1
      %s60 = scalar_select %p57, %s58, %s59
      %p63 = pneg %p57
      %p64 = scmp.eq.s32.totalorder %s8, 2
      %p65 = por %p63, %p64
      %p66 = scmp.ne.s32.totalorder %s58, %s61
      %p67 = scmp.eq.s32.totalorder %s8, 0
      %p68 = por %p66, %p67
      %p69 = scmp.ne.s32.totalorder %s58, %s61
      %p70 = scmp.eq.s32.totalorder %s13, 2
      %p71 = por %p69, %p70
      %p72 = scmp.ne.s32.totalorder %s61, %s62
      %p73 = scmp.eq.s32.totalorder %s13, 0
      %p74 = por %p72, %p73
      %p75 = scmp.ne.s32.totalorder %s61, %s62
      %p76 = scmp.eq.s32.totalorder %s14, 2
      %p77 = por %p75, %p76
      %p79 = scmp.ne.s32.totalorder %s62, %s78
      %p80 = scmp.eq.s32.totalorder %s14, 0
      %p81 = por %p79, %p80
      %s82 = ssub.s32 %s15, %s27
      %p83 = scmp.eq.s32.totalorder %s82, 0
      %s85 = sadd.s32 %s84, 1
      %s86 = scalar_select %p83, %s84, %s85
      %p89 = pneg %p83
      %p90 = scmp.eq.s32.totalorder %s8, 2
      %p91 = por %p89, %p90
      %p92 = scmp.ne.s32.totalorder %s84, %s87
      %p93 = scmp.eq.s32.totalorder %s8, 0
      %p94 = por %p92, %p93
      %p95 = scmp.ne.s32.totalorder %s84, %s87
      %p96 = scmp.eq.s32.totalorder %s13, 2
      %p97 = por %p95, %p96
      %p98 = scmp.ne.s32.totalorder %s87, %s88
      %p99 = scmp.eq.s32.totalorder %s13, 0
      %p100 = por %p98, %p99
      %p101 = scmp.ne.s32.totalorder %s87, %s88
      %p102 = scmp.eq.s32.totalorder %s14, 2
      %p103 = por %p101, %p102
      %p105 = scmp.ne.s32.totalorder %s88, %s104
      %p106 = scmp.eq.s32.totalorder %s14, 0
      %p107 = por %p105, %p106
      %p108 = scmp.le.s32.totalorder 1, %s8
      %p109 = scmp.lt.s32.totalorder %s8, 4
      %p110 = pnand %p108, %p109
      %p111 = pneg %p110
      // Predicated region
      $region9: #{mellin_fourier_forward.6} parent=5 // pred_check
        _
      $region10: #{mellin_fourier_forward.6} parent=5 // pred_check_branch
        %113 = sbr.rel (%p110) target = $region12
      $region11: #{mellin_fourier_forward.6} parent=5 // pred_region
        %s114 = ssub.s32 %s8, 1
        // Predicated region
        $region13: #{mellin_fourier_forward.6} parent=11 // pred_check
          %p115 = pneg %p46
        $region14: #{mellin_fourier_forward.6} parent=11 // pred_check_branch
          %117 = sbr.rel (%p115) target = $region16
        $region15: #{mellin_fourier_forward.6} parent=11 // pred_region
          %s118 = smul.u32 2, %s18
          %p119 = scmp.lt.s32.totalorder %s118, 1
          %s120 = scalar_select %p119, %s118, 1
          %s121 = smul.addr %s120, 8
          %s122 = scalar_lea.vmem %s0, %s121
          %s123 = smul.u32 2, %s18
        $region16: #{mellin_fourier_forward.6} parent=11 // pred_fallthru
          _
      $region12: #{mellin_fourier_forward.6} parent=5 // pred_fallthru
        _
      %p124 = scmp.lt.s32.totalorder %s8, 3
      // Predicated region
      $region17: #{mellin_fourier_forward.6} parent=5 // pred_check
        %p125 = pneg %p124
      $region18: #{mellin_fourier_forward.6} parent=5 // pred_check_branch
        %127 = sbr.rel (%p125) target = $region20
      $region19: #{mellin_fourier_forward.6} parent=5 // pred_region
        // Predicated region
        $region21: #{mellin_fourier_forward.6} parent=19 // pred_check
          %p128 = pneg %p68
        $region22: #{mellin_fourier_forward.6} parent=19 // pred_check_branch
          %130 = sbr.rel (%p128) target = $region24
        $region23: #{mellin_fourier_forward.6} parent=19 // pred_region
          %s131 = sand.u32 %s58, 1
          %s132 = sand.u32 %s58, 1
          %s133 = smul.addr %s132, 512
          %s134 = scalar_lea.vmem [#allocation2], %s133
          %s135 = smul.u32 32, %s16
          %s136 = smul.u32 4, %s15
          %s137 = smul.addr %s135, 12
          %s138 = sadd.s32 %s136, %s137
          %s139 = smul.addr %s138, 4
          %s140 = scalar_lea.vmem %s1, %s139
          // Predicated region
          $region25: #{mellin_fourier_forward.6} parent=23 // pred_check
            _
          $region26: #{mellin_fourier_forward.6} parent=23 // pred_check_branch
            %142 = sbr.rel (0) target = $region28
          $region27: #{mellin_fourier_forward.6} parent=23 // pred_region
            // Predicated region
            $region29: #{mellin_fourier_forward.6} parent=27 // pred_check
              _
            $region30: #{mellin_fourier_forward.6} parent=27 // pred_check_branch
              %144 = sbr.rel (0) target = $region32
            $region31: #{mellin_fourier_forward.6} parent=27 // pred_region
              loop: start=0, step=1, limit=1
              $region33: #{mellin_fourier_forward.6} parent=31 // loop_pre_header
                _
              $region34: #{mellin_fourier_forward.6} parent=31 // loop_header
                %s146 = sphi 0, %s150
                %p147 = scmp.ge.s32.totalorder %s146, 1
                %s151 = sphi %s140, %s140
                %s152 = sphi %s134, %s134
              $region35: #{mellin_fourier_forward.6} parent=31 // loop_header_branch
                %149 = sbr.rel (%p147) target = $region39
              $region36: #{mellin_fourier_forward.6} parent=31 // loop_body
                %v153 = vld [vmem:[%s151] sm:$0xff]
                %154 = vst [vmem:[%s152] sm:$0xff] %v153
                %v155 = vld [vmem:[%s151 + $0x8] sm:$0xff]
                %156 = vst [vmem:[%s152 + $0x8] sm:$0xff] %v155
                %v157 = vld [vmem:[%s151 + $0x30] sm:$0xff]
                %158 = vst [vmem:[%s152 + $0x10] sm:$0xff] %v157
                %v159 = vld [vmem:[%s151 + $0x38] sm:$0xff]
                %160 = vst [vmem:[%s152 + $0x18] sm:$0xff] %v159
                %v161 = vld [vmem:[%s151 + $0x60] sm:$0xff]
                %162 = vst [vmem:[%s152 + $0x20] sm:$0xff] %v161
                %v163 = vld [vmem:[%s151 + $0x68] sm:$0xff]
                %164 = vst [vmem:[%s152 + $0x28] sm:$0xff] %v163
                %v165 = vld [vmem:[%s151 + $0x90] sm:$0xff]
                %166 = vst [vmem:[%s152 + $0x30] sm:$0xff] %v165
                %v167 = vld [vmem:[%s151 + $0x98] sm:$0xff]
                %168 = vst [vmem:[%s152 + $0x38] sm:$0xff] %v167
                %v169 = vld [vmem:[%s151 + $0xc0] sm:$0xff]
                %170 = vst [vmem:[%s152 + $0x40] sm:$0xff] %v169
                %v171 = vld [vmem:[%s151 + $0xc8] sm:$0xff]
                %172 = vst [vmem:[%s152 + $0x48] sm:$0xff] %v171
                %v173 = vld [vmem:[%s151 + $0xf0] sm:$0xff]
                %174 = vst [vmem:[%s152 + $0x50] sm:$0xff] %v173
                %v175 = vld [vmem:[%s151 + $0xf8] sm:$0xff]
                %176 = vst [vmem:[%s152 + $0x58] sm:$0xff] %v175
                %v177 = vld [vmem:[%s151 + $0x120] sm:$0xff]
                %178 = vst [vmem:[%s152 + $0x60] sm:$0xff] %v177
                %v179 = vld [vmem:[%s151 + $0x128] sm:$0xff]
                %180 = vst [vmem:[%s152 + $0x68] sm:$0xff] %v179
                %v181 = vld [vmem:[%s151 + $0x150] sm:$0xff]
                %182 = vst [vmem:[%s152 + $0x70] sm:$0xff] %v181
                %v183 = vld [vmem:[%s151 + $0x158] sm:$0xff]
                %184 = vst [vmem:[%s152 + $0x78] sm:$0xff] %v183
                %v185 = vld [vmem:[%s151 + $0x180] sm:$0xff]
                %186 = vst [vmem:[%s152 + $0x80] sm:$0xff] %v185
                %v187 = vld [vmem:[%s151 + $0x188] sm:$0xff]
                %188 = vst [vmem:[%s152 + $0x88] sm:$0xff] %v187
                %v189 = vld [vmem:[%s151 + $0x1b0] sm:$0xff]
                %190 = vst [vmem:[%s152 + $0x90] sm:$0xff] %v189
                %v191 = vld [vmem:[%s151 + $0x1b8] sm:$0xff]
                %192 = vst [vmem:[%s152 + $0x98] sm:$0xff] %v191
                %v193 = vld [vmem:[%s151 + $0x1e0] sm:$0xff]
                %194 = vst [vmem:[%s152 + $0xa0] sm:$0xff] %v193
                %v195 = vld [vmem:[%s151 + $0x1e8] sm:$0xff]
                %196 = vst [vmem:[%s152 + $0xa8] sm:$0xff] %v195
                %v197 = vld [vmem:[%s151 + $0x210] sm:$0xff]
                %198 = vst [vmem:[%s152 + $0xb0] sm:$0xff] %v197
                %v199 = vld [vmem:[%s151 + $0x218] sm:$0xff]
                %200 = vst [vmem:[%s152 + $0xb8] sm:$0xff] %v199
                %v201 = vld [vmem:[%s151 + $0x240] sm:$0xff]
                %202 = vst [vmem:[%s152 + $0xc0] sm:$0xff] %v201
                %v203 = vld [vmem:[%s151 + $0x248] sm:$0xff]
                %204 = vst [vmem:[%s152 + $0xc8] sm:$0xff] %v203
                %v205 = vld [vmem:[%s151 + $0x270] sm:$0xff]
                %206 = vst [vmem:[%s152 + $0xd0] sm:$0xff] %v205
                %v207 = vld [vmem:[%s151 + $0x278] sm:$0xff]
                %208 = vst [vmem:[%s152 + $0xd8] sm:$0xff] %v207
                %v209 = vld [vmem:[%s151 + $0x2a0] sm:$0xff]
                %210 = vst [vmem:[%s152 + $0xe0] sm:$0xff] %v209
                %v211 = vld [vmem:[%s151 + $0x2a8] sm:$0xff]
                %212 = vst [vmem:[%s152 + $0xe8] sm:$0xff] %v211
                %v213 = vld [vmem:[%s151 + $0x2d0] sm:$0xff]
                %214 = vst [vmem:[%s152 + $0xf0] sm:$0xff] %v213
                %v215 = vld [vmem:[%s151 + $0x2d8] sm:$0xff]
                %216 = vst [vmem:[%s152 + $0xf8] sm:$0xff] %v215
                %v217 = vld [vmem:[%s151 + $0x300] sm:$0xff]
                %218 = vst [vmem:[%s152 + $0x100] sm:$0xff] %v217
                %v219 = vld [vmem:[%s151 + $0x308] sm:$0xff]
                %220 = vst [vmem:[%s152 + $0x108] sm:$0xff] %v219
                %v221 = vld [vmem:[%s151 + $0x330] sm:$0xff]
                %222 = vst [vmem:[%s152 + $0x110] sm:$0xff] %v221
                %v223 = vld [vmem:[%s151 + $0x338] sm:$0xff]
                %224 = vst [vmem:[%s152 + $0x118] sm:$0xff] %v223
                %v225 = vld [vmem:[%s151 + $0x360] sm:$0xff]
                %226 = vst [vmem:[%s152 + $0x120] sm:$0xff] %v225
                %v227 = vld [vmem:[%s151 + $0x368] sm:$0xff]
                %228 = vst [vmem:[%s152 + $0x128] sm:$0xff] %v227
                %v229 = vld [vmem:[%s151 + $0x390] sm:$0xff]
                %230 = vst [vmem:[%s152 + $0x130] sm:$0xff] %v229
                %v231 = vld [vmem:[%s151 + $0x398] sm:$0xff]
                %232 = vst [vmem:[%s152 + $0x138] sm:$0xff] %v231
                %v233 = vld [vmem:[%s151 + $0x3c0] sm:$0xff]
                %234 = vst [vmem:[%s152 + $0x140] sm:$0xff] %v233
                %v235 = vld [vmem:[%s151 + $0x3c8] sm:$0xff]
                %236 = vst [vmem:[%s152 + $0x148] sm:$0xff] %v235
                %v237 = vld [vmem:[%s151 + $0x3f0] sm:$0xff]
                %238 = vst [vmem:[%s152 + $0x150] sm:$0xff] %v237
                %v239 = vld [vmem:[%s151 + $0x3f8] sm:$0xff]
                %240 = vst [vmem:[%s152 + $0x158] sm:$0xff] %v239
                %v241 = vld [vmem:[%s151 + $0x420] sm:$0xff]
                %242 = vst [vmem:[%s152 + $0x160] sm:$0xff] %v241
                %v243 = vld [vmem:[%s151 + $0x428] sm:$0xff]
                %244 = vst [vmem:[%s152 + $0x168] sm:$0xff] %v243
                %v245 = vld [vmem:[%s151 + $0x450] sm:$0xff]
                %246 = vst [vmem:[%s152 + $0x170] sm:$0xff] %v245
                %v247 = vld [vmem:[%s151 + $0x458] sm:$0xff]
                %248 = vst [vmem:[%s152 + $0x178] sm:$0xff] %v247
                %v249 = vld [vmem:[%s151 + $0x480] sm:$0xff]
                %250 = vst [vmem:[%s152 + $0x180] sm:$0xff] %v249
                %v251 = vld [vmem:[%s151 + $0x488] sm:$0xff]
                %252 = vst [vmem:[%s152 + $0x188] sm:$0xff] %v251
                %v253 = vld [vmem:[%s151 + $0x4b0] sm:$0xff]
                %254 = vst [vmem:[%s152 + $0x190] sm:$0xff] %v253
                %v255 = vld [vmem:[%s151 + $0x4b8] sm:$0xff]
                %256 = vst [vmem:[%s152 + $0x198] sm:$0xff] %v255
                %v257 = vld [vmem:[%s151 + $0x4e0] sm:$0xff]
                %258 = vst [vmem:[%s152 + $0x1a0] sm:$0xff] %v257
                %v259 = vld [vmem:[%s151 + $0x4e8] sm:$0xff]
                %260 = vst [vmem:[%s152 + $0x1a8] sm:$0xff] %v259
                %v261 = vld [vmem:[%s151 + $0x510] sm:$0xff]
                %262 = vst [vmem:[%s152 + $0x1b0] sm:$0xff] %v261
                %v263 = vld [vmem:[%s151 + $0x518] sm:$0xff]
                %264 = vst [vmem:[%s152 + $0x1b8] sm:$0xff] %v263
                %v265 = vld [vmem:[%s151 + $0x540] sm:$0xff]
                %266 = vst [vmem:[%s152 + $0x1c0] sm:$0xff] %v265
                %v267 = vld [vmem:[%s151 + $0x548] sm:$0xff]
                %268 = vst [vmem:[%s152 + $0x1c8] sm:$0xff] %v267
                %v269 = vld [vmem:[%s151 + $0x570] sm:$0xff]
                %270 = vst [vmem:[%s152 + $0x1d0] sm:$0xff] %v269
                %v271 = vld [vmem:[%s151 + $0x578] sm:$0xff]
                %272 = vst [vmem:[%s152 + $0x1d8] sm:$0xff] %v271
                %v273 = vld [vmem:[%s151 + $0x5a0] sm:$0xff]
                %274 = vst [vmem:[%s152 + $0x1e0] sm:$0xff] %v273
                %v275 = vld [vmem:[%s151 + $0x5a8] sm:$0xff]
                %276 = vst [vmem:[%s152 + $0x1e8] sm:$0xff] %v275
                %v277 = vld [vmem:[%s151 + $0x5d0] sm:$0xff]
                %278 = vst [vmem:[%s152 + $0x1f0] sm:$0xff] %v277
                %v279 = vld [vmem:[%s151 + $0x5d8] sm:$0xff]
                %280 = vst [vmem:[%s152 + $0x1f8] sm:$0xff] %v279
              $region37: #{mellin_fourier_forward.6} parent=31 // loop_footer
                %s150 = sadd.s32 1, %s146
              $region38: #{mellin_fourier_forward.6} parent=31 // loop_footer_branch
                %145 = sbr.rel target = $region34
              $region39: #{mellin_fourier_forward.6} parent=31 // loop_exit
                _
            $region32: #{mellin_fourier_forward.6} parent=27 // pred_fallthru
              _
            // Predicated region
            $region40: #{mellin_fourier_forward.6} parent=27 // pred_check
              _
            $region41: #{mellin_fourier_forward.6} parent=27 // pred_check_branch
              %282 = sbr.rel target = $region43
            $region42: #{mellin_fourier_forward.6} parent=27 // pred_region
              _
            $region43: #{mellin_fourier_forward.6} parent=27 // pred_fallthru
              _
          $region28: #{mellin_fourier_forward.6} parent=23 // pred_fallthru
            _
          %283 = vnop
        $region24: #{mellin_fourier_forward.6} parent=19 // pred_fallthru
          _
      $region20: #{mellin_fourier_forward.6} parent=5 // pred_fallthru
        _
      %p284 = scmp.le.s32.totalorder 1, %s8
      %p285 = scmp.lt.s32.totalorder %s8, 4
      %p286 = pnand %p284, %p285
      %p287 = pneg %p286
      // Predicated region
      $region44: #{mellin_fourier_forward.6} parent=5 // pred_check
        _
      $region45: #{mellin_fourier_forward.6} parent=5 // pred_check_branch
        %289 = sbr.rel (%p286) target = $region47
      $region46: #{mellin_fourier_forward.6} parent=5 // pred_region
        %s290 = ssub.s32 %s8, 1
        %s291 = sand.u32 %s61, 1
        %s292 = sand.u32 %s61, 1
        %s293 = smul.addr %s292, 512
        %s294 = scalar_lea.vmem [#allocation2], %s293
        // Predicated region
        $region48: #{mellin_fourier_forward.6} parent=46 // pred_check
          %p295 = pneg %p74
        $region49: #{mellin_fourier_forward.6} parent=46 // pred_check_branch
          %297 = sbr.rel (%p295) target = $region51
        $region50: #{mellin_fourier_forward.6} parent=46 // pred_region
          _
        $region51: #{mellin_fourier_forward.6} parent=46 // pred_fallthru
          _
        %s298 = smul.u32 2, %s18
        %p299 = scmp.lt.s32.totalorder %s298, 1
        %s300 = scalar_select %p299, %s298, 1
        %s301 = smul.addr %s300, 8
        %s302 = scalar_lea.vmem %s0, %s301
        %p303 = pneg %p46
        %p304 = pneg %p43
        %s305 = sand.u32 %s61, 1
        %s306 = sand.u32 %s61, 1
        %s307 = smul.addr %s306, 512
        %s308 = scalar_lea.vmem [#allocation2], %s307
        %p309 = pneg %p74
        %p310 = pneg %p71
        %p311 = pneg %p100
        %p312 = pneg %p97
        %s313 = sand.u32 %s87, 1
        %s314 = sand.u32 %s87, 1
        %s315 = smul.addr %s314, 64
        %s316 = scalar_lea.vmem [#allocation3], %s315
        %s317 = smul.u32 2, %s18
        %p318 = scmp.lt.s32.totalorder %s317, 1
        %s319 = scalar_select %p318, %s317, 1
        %s320 = smul.addr %s319, 8
        %s321 = scalar_lea.vmem %s0, %s320
        %s322 = smul.u32 2, %s18
        %s323 = smul.u32 32, %s18
        %s324 = smul.u32 4, %s17
        %s325 = smul.u32 4, %s17
        %p326 = scmp.eq.s32.totalorder %s18, 0
        // Predicated region
        $region52: #{mellin_fourier_forward.6} parent=46 // pred_check
          %p327 = pneg %p326
        $region53: #{mellin_fourier_forward.6} parent=46 // pred_check_branch
          %329 = sbr.rel (%p327) target = $region55
        $region54: #{mellin_fourier_forward.6} parent=46 // pred_region
          %330 = vst [vmem:[%s316] sm:$0xff] 0.0
          %331 = vst [vmem:[%s316 + $0x8] sm:$0xff] 0.0
          %332 = vst [vmem:[%s316 + $0x10] sm:$0xff] 0.0
          %333 = vst [vmem:[%s316 + $0x18] sm:$0xff] 0.0
          %334 = vst [vmem:[%s316 + $0x20] sm:$0xff] 0.0
          %335 = vst [vmem:[%s316 + $0x28] sm:$0xff] 0.0
          %336 = vst [vmem:[%s316 + $0x30] sm:$0xff] 0.0
          %337 = vst [vmem:[%s316 + $0x38] sm:$0xff] 0.0
        $region55: #{mellin_fourier_forward.6} parent=46 // pred_fallthru
          _
        %v338 = vld [vmem:[%s316] sm:$0xff]
        %v339 = vld [vmem:[%s316 + $0x8] sm:$0xff]
        %v340 = vld [vmem:[%s316 + $0x10] sm:$0xff]
        %v341 = vld [vmem:[%s316 + $0x18] sm:$0xff]
        %v342 = vld [vmem:[%s316 + $0x20] sm:$0xff]
        %v343 = vld [vmem:[%s316 + $0x28] sm:$0xff]
        %v344 = vld [vmem:[%s316 + $0x30] sm:$0xff]
        %v345 = vld [vmem:[%s316 + $0x38] sm:$0xff]
        %v346 = vld [vmem:[%s321] sm:$0xff]
        %v347 = vld [vmem:[%s321 + $0x8] sm:$0xff]
        %v348 = vld [vmem:[%s321 + $0x10] sm:$0xff]
        %v349 = vld [vmem:[%s321 + $0x18] sm:$0xff]
        %v350 = vpack.c.bf16 %v348, %v346
        %v351 = vpack.c.bf16 %v349, %v347
        %v352 = vld [vmem:[%s294] sm:$0xff]
        %v353 = vld [vmem:[%s294 + $0x8] sm:$0xff]
        %v354 = vld [vmem:[%s294 + $0x10] sm:$0xff]
        %v355 = vld [vmem:[%s294 + $0x18] sm:$0xff]
        %v356 = vld [vmem:[%s294 + $0x20] sm:$0xff]
        %v357 = vld [vmem:[%s294 + $0x28] sm:$0xff]
        %v358 = vld [vmem:[%s294 + $0x30] sm:$0xff]
        %v359 = vld [vmem:[%s294 + $0x38] sm:$0xff]
        %v360 = vld [vmem:[%s294 + $0x40] sm:$0xff]
        %v361 = vld [vmem:[%s294 + $0x48] sm:$0xff]
        %v362 = vld [vmem:[%s294 + $0x50] sm:$0xff]
        %v363 = vld [vmem:[%s294 + $0x58] sm:$0xff]
        %v364 = vld [vmem:[%s294 + $0x60] sm:$0xff]
        %v365 = vld [vmem:[%s294 + $0x68] sm:$0xff]
        %v366 = vld [vmem:[%s294 + $0x70] sm:$0xff]
        %v367 = vld [vmem:[%s294 + $0x78] sm:$0xff]
        %v368 = vld [vmem:[%s294 + $0x80] sm:$0xff]
        %v369 = vld [vmem:[%s294 + $0x88] sm:$0xff]
        %v370 = vld [vmem:[%s294 + $0x90] sm:$0xff]
        %v371 = vld [vmem:[%s294 + $0x98] sm:$0xff]
        %v372 = vld [vmem:[%s294 + $0xa0] sm:$0xff]
        %v373 = vld [vmem:[%s294 + $0xa8] sm:$0xff]
        %v374 = vld [vmem:[%s294 + $0xb0] sm:$0xff]
        %v375 = vld [vmem:[%s294 + $0xb8] sm:$0xff]
        %v376 = vld [vmem:[%s294 + $0xc0] sm:$0xff]
        %v377 = vld [vmem:[%s294 + $0xc8] sm:$0xff]
        %v378 = vld [vmem:[%s294 + $0xd0] sm:$0xff]
        %v379 = vld [vmem:[%s294 + $0xd8] sm:$0xff]
        %v380 = vld [vmem:[%s294 + $0xe0] sm:$0xff]
        %v381 = vld [vmem:[%s294 + $0xe8] sm:$0xff]
        %v382 = vld [vmem:[%s294 + $0xf0] sm:$0xff]
        %v383 = vld [vmem:[%s294 + $0xf8] sm:$0xff]
        %v384 = vld [vmem:[%s294 + $0x100] sm:$0xff]
        %v385 = vld [vmem:[%s294 + $0x108] sm:$0xff]
        %v386 = vld [vmem:[%s294 + $0x110] sm:$0xff]
        %v387 = vld [vmem:[%s294 + $0x118] sm:$0xff]
        %v388 = vld [vmem:[%s294 + $0x120] sm:$0xff]
        %v389 = vld [vmem:[%s294 + $0x128] sm:$0xff]
        %v390 = vld [vmem:[%s294 + $0x130] sm:$0xff]
        %v391 = vld [vmem:[%s294 + $0x138] sm:$0xff]
        %v392 = vld [vmem:[%s294 + $0x140] sm:$0xff]
        %v393 = vld [vmem:[%s294 + $0x148] sm:$0xff]
        %v394 = vld [vmem:[%s294 + $0x150] sm:$0xff]
        %v395 = vld [vmem:[%s294 + $0x158] sm:$0xff]
        %v396 = vld [vmem:[%s294 + $0x160] sm:$0xff]
        %v397 = vld [vmem:[%s294 + $0x168] sm:$0xff]
        %v398 = vld [vmem:[%s294 + $0x170] sm:$0xff]
        %v399 = vld [vmem:[%s294 + $0x178] sm:$0xff]
        %v400 = vld [vmem:[%s294 + $0x180] sm:$0xff]
        %v401 = vld [vmem:[%s294 + $0x188] sm:$0xff]
        %v402 = vld [vmem:[%s294 + $0x190] sm:$0xff]
        %v403 = vld [vmem:[%s294 + $0x198] sm:$0xff]
        %v404 = vld [vmem:[%s294 + $0x1a0] sm:$0xff]
        %v405 = vld [vmem:[%s294 + $0x1a8] sm:$0xff]
        %v406 = vld [vmem:[%s294 + $0x1b0] sm:$0xff]
        %v407 = vld [vmem:[%s294 + $0x1b8] sm:$0xff]
        %v408 = vld [vmem:[%s294 + $0x1c0] sm:$0xff]
        %v409 = vld [vmem:[%s294 + $0x1c8] sm:$0xff]
        %v410 = vld [vmem:[%s294 + $0x1d0] sm:$0xff]
        %v411 = vld [vmem:[%s294 + $0x1d8] sm:$0xff]
        %v412 = vld [vmem:[%s294 + $0x1e0] sm:$0xff]
        %v413 = vld [vmem:[%s294 + $0x1e8] sm:$0xff]
        %v414 = vld [vmem:[%s294 + $0x1f0] sm:$0xff]
        %v415 = vld [vmem:[%s294 + $0x1f8] sm:$0xff]
        %v480 = vunpack.c.l.b16 %v352
        %v481 = vunpack.c.h.b16 %v352
        %v482 = vunpack.c.l.b16 %v353
        %v483 = vunpack.c.h.b16 %v353
        %v484 = vunpack.c.l.b16 %v354
        %v485 = vunpack.c.h.b16 %v354
        %v486 = vunpack.c.l.b16 %v355
        %v487 = vunpack.c.h.b16 %v355
        %v488 = vunpack.c.l.b16 %v356
        %v489 = vunpack.c.h.b16 %v356
        %v490 = vunpack.c.l.b16 %v357
        %v491 = vunpack.c.h.b16 %v357
        %v492 = vunpack.c.l.b16 %v358
        %v493 = vunpack.c.h.b16 %v358
        %v494 = vunpack.c.l.b16 %v359
        %v495 = vunpack.c.h.b16 %v359
        %v496 = vunpack.c.l.b16 %v360
        %v497 = vunpack.c.h.b16 %v360
        %v498 = vunpack.c.l.b16 %v361
        %v499 = vunpack.c.h.b16 %v361
        %v500 = vunpack.c.l.b16 %v362
        %v501 = vunpack.c.h.b16 %v362
        %v502 = vunpack.c.l.b16 %v363
        %v503 = vunpack.c.h.b16 %v363
        %v504 = vunpack.c.l.b16 %v364
        %v505 = vunpack.c.h.b16 %v364
        %v506 = vunpack.c.l.b16 %v365
        %v507 = vunpack.c.h.b16 %v365
        %v508 = vunpack.c.l.b16 %v366
        %v509 = vunpack.c.h.b16 %v366
        %v510 = vunpack.c.l.b16 %v367
        %v511 = vunpack.c.h.b16 %v367
        %v512 = vunpack.c.l.b16 %v368
        %v513 = vunpack.c.h.b16 %v368
        %v514 = vunpack.c.l.b16 %v369
        %v515 = vunpack.c.h.b16 %v369
        %v516 = vunpack.c.l.b16 %v370
        %v517 = vunpack.c.h.b16 %v370
        %v518 = vunpack.c.l.b16 %v371
        %v519 = vunpack.c.h.b16 %v371
        %v520 = vunpack.c.l.b16 %v372
        %v521 = vunpack.c.h.b16 %v372
        %v522 = vunpack.c.l.b16 %v373
        %v523 = vunpack.c.h.b16 %v373
        %v524 = vunpack.c.l.b16 %v374
        %v525 = vunpack.c.h.b16 %v374
        %v526 = vunpack.c.l.b16 %v375
        %v527 = vunpack.c.h.b16 %v375
        %v528 = vunpack.c.l.b16 %v376
        %v529 = vunpack.c.h.b16 %v376
        %v530 = vunpack.c.l.b16 %v377
        %v531 = vunpack.c.h.b16 %v377
        %v532 = vunpack.c.l.b16 %v378
        %v533 = vunpack.c.h.b16 %v378
        %v534 = vunpack.c.l.b16 %v379
        %v535 = vunpack.c.h.b16 %v379
        %v536 = vunpack.c.l.b16 %v380
        %v537 = vunpack.c.h.b16 %v380
        %v538 = vunpack.c.l.b16 %v381
        %v539 = vunpack.c.h.b16 %v381
        %v540 = vunpack.c.l.b16 %v382
        %v541 = vunpack.c.h.b16 %v382
        %v542 = vunpack.c.l.b16 %v383
        %v543 = vunpack.c.h.b16 %v383
        %v544 = vunpack.c.l.b16 %v384
        %v545 = vunpack.c.h.b16 %v384
        %v546 = vunpack.c.l.b16 %v385
        %v547 = vunpack.c.h.b16 %v385
        %v548 = vunpack.c.l.b16 %v386
        %v549 = vunpack.c.h.b16 %v386
        %v550 = vunpack.c.l.b16 %v387
        %v551 = vunpack.c.h.b16 %v387
        %v552 = vunpack.c.l.b16 %v388
        %v553 = vunpack.c.h.b16 %v388
        %v554 = vunpack.c.l.b16 %v389
        %v555 = vunpack.c.h.b16 %v389
        %v556 = vunpack.c.l.b16 %v390
        %v557 = vunpack.c.h.b16 %v390
        %v558 = vunpack.c.l.b16 %v391
        %v559 = vunpack.c.h.b16 %v391
        %v560 = vunpack.c.l.b16 %v392
        %v561 = vunpack.c.h.b16 %v392
        %v562 = vunpack.c.l.b16 %v393
        %v563 = vunpack.c.h.b16 %v393
        %v564 = vunpack.c.l.b16 %v394
        %v565 = vunpack.c.h.b16 %v394
        %v566 = vunpack.c.l.b16 %v395
        %v567 = vunpack.c.h.b16 %v395
        %v568 = vunpack.c.l.b16 %v396
        %v569 = vunpack.c.h.b16 %v396
        %v570 = vunpack.c.l.b16 %v397
        %v571 = vunpack.c.h.b16 %v397
        %v572 = vunpack.c.l.b16 %v398
        %v573 = vunpack.c.h.b16 %v398
        %v574 = vunpack.c.l.b16 %v399
        %v575 = vunpack.c.h.b16 %v399
        %v576 = vunpack.c.l.b16 %v400
        %v577 = vunpack.c.h.b16 %v400
        %v578 = vunpack.c.l.b16 %v401
        %v579 = vunpack.c.h.b16 %v401
        %v580 = vunpack.c.l.b16 %v402
        %v581 = vunpack.c.h.b16 %v402
        %v582 = vunpack.c.l.b16 %v403
        %v583 = vunpack.c.h.b16 %v403
        %v584 = vunpack.c.l.b16 %v404
        %v585 = vunpack.c.h.b16 %v404
        %v586 = vunpack.c.l.b16 %v405
        %v587 = vunpack.c.h.b16 %v405
        %v588 = vunpack.c.l.b16 %v406
        %v589 = vunpack.c.h.b16 %v406
        %v590 = vunpack.c.l.b16 %v407
        %v591 = vunpack.c.h.b16 %v407
        %v592 = vunpack.c.l.b16 %v408
        %v593 = vunpack.c.h.b16 %v408
        %v594 = vunpack.c.l.b16 %v409
        %v595 = vunpack.c.h.b16 %v409
        %v596 = vunpack.c.l.b16 %v410
        %v597 = vunpack.c.h.b16 %v410
        %v598 = vunpack.c.l.b16 %v411
        %v599 = vunpack.c.h.b16 %v411
        %v600 = vunpack.c.l.b16 %v412
        %v601 = vunpack.c.h.b16 %v412
        %v602 = vunpack.c.l.b16 %v413
        %v603 = vunpack.c.h.b16 %v413
        %v604 = vunpack.c.l.b16 %v414
        %v605 = vunpack.c.h.b16 %v414
        %v606 = vunpack.c.l.b16 %v415
        %v607 = vunpack.c.h.b16 %v415
        %v608 = vpack.c.b16 %v484, %v480
        %v609 = vpack.c.b16 %v485, %v481
        %v610 = vpack.c.b16 %v486, %v482
        %v611 = vpack.c.b16 %v487, %v483
        %v612 = vpack.c.b16 %v492, %v488
        %v613 = vpack.c.b16 %v493, %v489
        %v614 = vpack.c.b16 %v494, %v490
        %v615 = vpack.c.b16 %v495, %v491
        %v616 = vpack.c.b16 %v500, %v496
        %v617 = vpack.c.b16 %v501, %v497
        %v618 = vpack.c.b16 %v502, %v498
        %v619 = vpack.c.b16 %v503, %v499
        %v620 = vpack.c.b16 %v508, %v504
        %v621 = vpack.c.b16 %v509, %v505
        %v622 = vpack.c.b16 %v510, %v506
        %v623 = vpack.c.b16 %v511, %v507
        %v624 = vpack.c.b16 %v516, %v512
        %v625 = vpack.c.b16 %v517, %v513
        %v626 = vpack.c.b16 %v518, %v514
        %v627 = vpack.c.b16 %v519, %v515
        %v628 = vpack.c.b16 %v524, %v520
        %v629 = vpack.c.b16 %v525, %v521
        %v630 = vpack.c.b16 %v526, %v522
        %v631 = vpack.c.b16 %v527, %v523
        %v632 = vpack.c.b16 %v532, %v528
        %v633 = vpack.c.b16 %v533, %v529
        %v634 = vpack.c.b16 %v534, %v530
        %v635 = vpack.c.b16 %v535, %v531
        %v636 = vpack.c.b16 %v540, %v536
        %v637 = vpack.c.b16 %v541, %v537
        %v638 = vpack.c.b16 %v542, %v538
        %v639 = vpack.c.b16 %v543, %v539
        %v640 = vpack.c.b16 %v548, %v544
        %v641 = vpack.c.b16 %v549, %v545
        %v642 = vpack.c.b16 %v550, %v546
        %v643 = vpack.c.b16 %v551, %v547
        %v644 = vpack.c.b16 %v556, %v552
        %v645 = vpack.c.b16 %v557, %v553
        %v646 = vpack.c.b16 %v558, %v554
        %v647 = vpack.c.b16 %v559, %v555
        %v648 = vpack.c.b16 %v564, %v560
        %v649 = vpack.c.b16 %v565, %v561
        %v650 = vpack.c.b16 %v566, %v562
        %v651 = vpack.c.b16 %v567, %v563
        %v652 = vpack.c.b16 %v572, %v568
        %v653 = vpack.c.b16 %v573, %v569
        %v654 = vpack.c.b16 %v574, %v570
        %v655 = vpack.c.b16 %v575, %v571
        %v656 = vpack.c.b16 %v580, %v576
        %v657 = vpack.c.b16 %v581, %v577
        %v658 = vpack.c.b16 %v582, %v578
        %v659 = vpack.c.b16 %v583, %v579
        %v660 = vpack.c.b16 %v588, %v584
        %v661 = vpack.c.b16 %v589, %v585
        %v662 = vpack.c.b16 %v590, %v586
        %v663 = vpack.c.b16 %v591, %v587
        %v664 = vpack.c.b16 %v596, %v592
        %v665 = vpack.c.b16 %v597, %v593
        %v666 = vpack.c.b16 %v598, %v594
        %v667 = vpack.c.b16 %v599, %v595
        %v668 = vpack.c.b16 %v604, %v600
        %v669 = vpack.c.b16 %v605, %v601
        %v670 = vpack.c.b16 %v606, %v602
        %v671 = vpack.c.b16 %v607, %v603
        %736 = vmatprep.subr.bf16.mxu0 %v637
        %737 = vmatpush1.bf16.msra.mxu0 %v636
        %738 = vmatprep.subr.bf16.mxu0 %v633
        %739 = vmatpush1.bf16.msra.mxu0 %v632
        %740 = vmatprep.subr.bf16.mxu0 %v629
        %741 = vmatpush1.bf16.msra.mxu0 %v628
        %742 = vmatprep.subr.bf16.mxu0 %v625
        %743 = vmatpush1.bf16.msra.mxu0 %v624
        %744 = vmatprep.subr.bf16.mxu0 %v621
        %745 = vmatpush1.bf16.msra.mxu0 %v620
        %746 = vmatprep.subr.bf16.mxu0 %v617
        %747 = vmatpush1.bf16.msra.mxu0 %v616
        %748 = vmatprep.subr.bf16.mxu0 %v613
        %749 = vmatpush1.bf16.msra.mxu0 %v612
        %750 = vmatprep.subr.bf16.mxu0 %v609
        %751 = vmatpush1.bf16.msra.mxu0 %v608
        %752 = vmatprep.subr.bf16.mxu0 %v669
        %753 = vmatpush2.bf16.msra.mxu0 %v668
        %754 = vmatprep.subr.bf16.mxu0 %v665
        %755 = vmatpush2.bf16.msra.mxu0 %v664
        %756 = vmatprep.subr.bf16.mxu0 %v661
        %757 = vmatpush2.bf16.msra.mxu0 %v660
        %758 = vmatprep.subr.bf16.mxu0 %v657
        %759 = vmatpush2.bf16.msra.mxu0 %v656
        %760 = vmatprep.subr.bf16.mxu0 %v653
        %761 = vmatpush2.bf16.msra.mxu0 %v652
        %762 = vmatprep.subr.bf16.mxu0 %v649
        %763 = vmatpush2.bf16.msra.mxu0 %v648
        %764 = vmatprep.subr.bf16.mxu0 %v645
        %765 = vmatpush2.bf16.msra.mxu0 %v644
        %766 = vmatprep.subr.bf16.mxu0 %v641
        %767 = vmatpush2.bf16.msra.mxu0 %v640
        %768 = vmatprep.mubr.bf16.mxu0 %v351
        %769 = vmatmul.mubr.bf16.gmra.mxu0 %v350
        %v770 = vpop.f32.mrf.mxu0
        %v771 = vadd.f32 0.0, %v770
        %v772 = vpop.f32.mrf.mxu0
        %v773 = vadd.f32 0.0, %v772
        %v774 = vpop.f32.mrf.mxu0
        %v775 = vadd.f32 0.0, %v774
        %v776 = vpop.f32.mrf.mxu0
        %v777 = vadd.f32 0.0, %v776
        %778 = vdwg.mxu0
        %779 = vmatprep.subr.bf16.mxu0 %v639
        %780 = vmatpush1.bf16.msra.mxu0 %v638
        %781 = vmatprep.subr.bf16.mxu0 %v635
        %782 = vmatpush1.bf16.msra.mxu0 %v634
        %783 = vmatprep.subr.bf16.mxu0 %v631
        %784 = vmatpush1.bf16.msra.mxu0 %v630
        %785 = vmatprep.subr.bf16.mxu0 %v627
        %786 = vmatpush1.bf16.msra.mxu0 %v626
        %787 = vmatprep.subr.bf16.mxu0 %v623
        %788 = vmatpush1.bf16.msra.mxu0 %v622
        %789 = vmatprep.subr.bf16.mxu0 %v619
        %790 = vmatpush1.bf16.msra.mxu0 %v618
        %791 = vmatprep.subr.bf16.mxu0 %v615
        %792 = vmatpush1.bf16.msra.mxu0 %v614
        %793 = vmatprep.subr.bf16.mxu0 %v611
        %794 = vmatpush1.bf16.msra.mxu0 %v610
        %795 = vmatprep.subr.bf16.mxu0 %v671
        %796 = vmatpush2.bf16.msra.mxu0 %v670
        %797 = vmatprep.subr.bf16.mxu0 %v667
        %798 = vmatpush2.bf16.msra.mxu0 %v666
        %799 = vmatprep.subr.bf16.mxu0 %v663
        %800 = vmatpush2.bf16.msra.mxu0 %v662
        %801 = vmatprep.subr.bf16.mxu0 %v659
        %802 = vmatpush2.bf16.msra.mxu0 %v658
        %803 = vmatprep.subr.bf16.mxu0 %v655
        %804 = vmatpush2.bf16.msra.mxu0 %v654
        %805 = vmatprep.subr.bf16.mxu0 %v651
        %806 = vmatpush2.bf16.msra.mxu0 %v650
        %807 = vmatprep.subr.bf16.mxu0 %v647
        %808 = vmatpush2.bf16.msra.mxu0 %v646
        %809 = vmatprep.subr.bf16.mxu0 %v643
        %810 = vmatpush2.bf16.msra.mxu0 %v642
        %811 = vmatprep.mubr.bf16.mxu0 %v351
        %812 = vmatmul.mubr.bf16.gmra.mxu0 %v350
        %v813 = vpop.f32.mrf.mxu0
        %v814 = vadd.f32 0.0, %v813
        %v815 = vpop.f32.mrf.mxu0
        %v816 = vadd.f32 0.0, %v815
        %v817 = vpop.f32.mrf.mxu0
        %v818 = vadd.f32 0.0, %v817
        %v819 = vpop.f32.mrf.mxu0
        %v820 = vadd.f32 0.0, %v819
        %821 = vdwg.mxu0
        %v822 = vadd.f32 %v338, %v771
        %v823 = vadd.f32 %v339, %v773
        %v824 = vadd.f32 %v340, %v814
        %v825 = vadd.f32 %v341, %v816
        %v826 = vadd.f32 %v342, %v775
        %v827 = vadd.f32 %v343, %v777
        %v828 = vadd.f32 %v344, %v818
        %v829 = vadd.f32 %v345, %v820
        %830 = vst [vmem:[%s316] sm:$0xff] %v822
        %831 = vst [vmem:[%s316 + $0x8] sm:$0xff] %v823
        %832 = vst [vmem:[%s316 + $0x10] sm:$0xff] %v824
        %833 = vst [vmem:[%s316 + $0x18] sm:$0xff] %v825
        %834 = vst [vmem:[%s316 + $0x20] sm:$0xff] %v826
        %835 = vst [vmem:[%s316 + $0x28] sm:$0xff] %v827
        %836 = vst [vmem:[%s316 + $0x30] sm:$0xff] %v828
        %837 = vst [vmem:[%s316 + $0x38] sm:$0xff] %v829
        %s838 = sand.u32 %s87, 1
        %s839 = sand.u32 %s87, 1
        %s840 = smul.addr %s839, 64
        %s841 = scalar_lea.vmem [#allocation3], %s840
        // Predicated region
        $region56: #{mellin_fourier_forward.6} parent=46 // pred_check
          %p842 = pneg %p97
        $region57: #{mellin_fourier_forward.6} parent=46 // pred_check_branch
          %844 = sbr.rel (%p842) target = $region59
        $region58: #{mellin_fourier_forward.6} parent=46 // pred_region
          %s845 = smul.u32 4, %s17
          %s846 = smul.addr %s845, 8
          %s847 = scalar_lea.vmem %s2, %s846
          // Predicated region
          $region60: #{mellin_fourier_forward.6} parent=58 // pred_check
            _
          $region61: #{mellin_fourier_forward.6} parent=58 // pred_check_branch
            %849 = sbr.rel (0) target = $region63
          $region62: #{mellin_fourier_forward.6} parent=58 // pred_region
            // Predicated region
            $region64: #{mellin_fourier_forward.6} parent=62 // pred_check
              _
            $region65: #{mellin_fourier_forward.6} parent=62 // pred_check_branch
              %851 = sbr.rel (0) target = $region67
            $region66: #{mellin_fourier_forward.6} parent=62 // pred_region
              loop: start=0, step=1, limit=1
              $region68: #{mellin_fourier_forward.6} parent=66 // loop_pre_header
                _
              $region69: #{mellin_fourier_forward.6} parent=66 // loop_header
                %s853 = sphi 0, %s857
                %p854 = scmp.ge.s32.totalorder %s853, 1
                %s858 = sphi %s841, %s841
                %s859 = sphi %s847, %s847
              $region70: #{mellin_fourier_forward.6} parent=66 // loop_header_branch
                %856 = sbr.rel (%p854) target = $region74
              $region71: #{mellin_fourier_forward.6} parent=66 // loop_body
                %v860 = vld [vmem:[%s858] sm:$0xff]
                %861 = vst [vmem:[%s859] sm:$0xff] %v860
                %v862 = vld [vmem:[%s858 + $0x8] sm:$0xff]
                %863 = vst [vmem:[%s859 + $0x8] sm:$0xff] %v862
                %v864 = vld [vmem:[%s858 + $0x10] sm:$0xff]
                %865 = vst [vmem:[%s859 + $0x10] sm:$0xff] %v864
                %v866 = vld [vmem:[%s858 + $0x18] sm:$0xff]
                %867 = vst [vmem:[%s859 + $0x18] sm:$0xff] %v866
                %v868 = vld [vmem:[%s858 + $0x20] sm:$0xff]
                %869 = vst [vmem:[%s859 + $0x60] sm:$0xff] %v868
                %v870 = vld [vmem:[%s858 + $0x28] sm:$0xff]
                %871 = vst [vmem:[%s859 + $0x68] sm:$0xff] %v870
                %v872 = vld [vmem:[%s858 + $0x30] sm:$0xff]
                %873 = vst [vmem:[%s859 + $0x70] sm:$0xff] %v872
                %v874 = vld [vmem:[%s858 + $0x38] sm:$0xff]
                %875 = vst [vmem:[%s859 + $0x78] sm:$0xff] %v874
              $region72: #{mellin_fourier_forward.6} parent=66 // loop_footer
                %s857 = sadd.s32 1, %s853
              $region73: #{mellin_fourier_forward.6} parent=66 // loop_footer_branch
                %852 = sbr.rel target = $region69
              $region74: #{mellin_fourier_forward.6} parent=66 // loop_exit
                _
            $region67: #{mellin_fourier_forward.6} parent=62 // pred_fallthru
              _
            // Predicated region
            $region75: #{mellin_fourier_forward.6} parent=62 // pred_check
              _
            $region76: #{mellin_fourier_forward.6} parent=62 // pred_check_branch
              %877 = sbr.rel target = $region78
            $region77: #{mellin_fourier_forward.6} parent=62 // pred_region
              _
            $region78: #{mellin_fourier_forward.6} parent=62 // pred_fallthru
              _
          $region63: #{mellin_fourier_forward.6} parent=58 // pred_fallthru
            _
          %878 = vnop
        $region59: #{mellin_fourier_forward.6} parent=46 // pred_fallthru
          _
      $region47: #{mellin_fourier_forward.6} parent=5 // pred_fallthru
        _
      %p879 = scmp.le.s32.totalorder 2, %s8
      // Predicated region
      $region79: #{mellin_fourier_forward.6} parent=5 // pred_check
        %p880 = pneg %p879
      $region80: #{mellin_fourier_forward.6} parent=5 // pred_check_branch
        %882 = sbr.rel (%p880) target = $region82
      $region81: #{mellin_fourier_forward.6} parent=5 // pred_region
        %s883 = ssub.s32 %s8, 2
        // Predicated region
        $region83: #{mellin_fourier_forward.6} parent=81 // pred_check
          %p884 = pneg %p103
        $region84: #{mellin_fourier_forward.6} parent=81 // pred_check_branch
          %886 = sbr.rel (%p884) target = $region86
        $region85: #{mellin_fourier_forward.6} parent=81 // pred_region
          %s887 = sand.u32 %s88, 1
          %s888 = sand.u32 %s88, 1
          %s889 = smul.addr %s888, 64
          %s890 = scalar_lea.vmem [#allocation3], %s889
        $region86: #{mellin_fourier_forward.6} parent=81 // pred_fallthru
          _
      $region82: #{mellin_fourier_forward.6} parent=5 // pred_fallthru
        _
    $region6: #{mellin_fourier_forward.6} parent=1 // loop_footer
      %s12 = sadd.s32 1, %s8
    $region7: #{mellin_fourier_forward.6} parent=1 // loop_footer_branch
      %7 = sbr.rel target = $region3
    $region8: #{mellin_fourier_forward.6} parent=1 // loop_exit
      _

// kernel: mellin_fourier_forward.5
$region0: #{mellin_fourier_forward.5}
  #allocation0 [shape = 'u32[]', space=smem, size = 0x4, offset = 0x4, fixed_abs, tag = 'smem constant byte address 0x4 - core index']
  #allocation1 [shape = 'u32[144,128]{1,0:T(1,128)}', space=vmem, size = 0x12000, scoped, tag = 'internal scratch']
  %s0 = inlined_call_operand.vmem [shape: f32[2,16,128], index: 0, kind: input, shape index: {}]
  %s1 = inlined_call_operand.hbm [shape: bf16[16,16], index: 1, kind: input, shape index: {}]
  %s2 = inlined_call_operand.hbm [shape: bf16[16,16], index: 2, kind: input, shape index: {}]
  %s3 = inlined_call_operand.hbm [shape: bf16[128,128], index: 3, kind: input, shape index: {}]
  %s4 = inlined_call_operand.hbm [shape: bf16[128,128], index: 4, kind: input, shape index: {}]
  %s5 = inlined_call_operand.hbm [shape: bf16[128,128], index: 5, kind: input, shape index: {}]
  %s6 = inlined_call_operand.hbm [shape: f32[16,128], index: 6, kind: input, shape index: {}]
  %s7 = inlined_call_operand.vmem [shape: f32[2,16,128], index: 7, kind: output, shape index: {}]
  %s8 = sld [smem:[#allocation0]]
  $region85: #{mellin_fourier_forward.5} parent=0
    _
  %s10 = ssub.s32 1, %s8
  %s11 = scalar_select 0, %s10, %s8
  $region1: #{mellin_fourier_forward.5} parent=0
    #allocation2 [shape = 'u8[4096]{0}', space=vmem, size = 0x1000, scoped, tag = 'input window, operand 1, single buffered']
    #allocation3 [shape = 's32[2]{0}', space=sflag, size = 0x8, scoped, tag = 'scoped memory for mellin_fourier_forward.5']
    #allocation4 [shape = 'u8[4096]{0}', space=vmem, size = 0x1000, scoped, tag = 'input window, operand 2, single buffered']
    #allocation5 [shape = 's32[1]{0}', space=sflag, size = 0x4, scoped, tag = 'scoped memory for mellin_fourier_forward.5']
    #allocation6 [shape = 'u8[32768]{0}', space=vmem, size = 0x8000, scoped, tag = 'input window, operand 3, single buffered']
    #allocation7 [shape = 'u8[32768]{0}', space=vmem, size = 0x8000, scoped, tag = 'input window, operand 4, single buffered']
    #allocation8 [shape = 's32[1]{0}', space=sflag, size = 0x4, scoped, tag = 'scoped memory for mellin_fourier_forward.5']
    #allocation9 [shape = 'u8[32768]{0}', space=vmem, size = 0x8000, scoped, tag = 'input window, operand 5, single buffered']
    #allocation10 [shape = 'u8[8192]{0}', space=vmem, size = 0x2000, scoped, tag = 'input window, operand 6, single buffered']
    #allocation11 [shape = 's32[1]{0}', space=sflag, size = 0x4, scoped, tag = 'scoped memory for mellin_fourier_forward.5']
    %12 = vsyncpa [#allocation3], 0
    %13 = vsyncpa [#allocation5], 0
    %14 = vsyncpa [#allocation8], 0
    %15 = vsyncpa [#allocation11], 0
    loop: start=0, step=1, limit=4
    $region2: #{mellin_fourier_forward.5} parent=1 // loop_pre_header
      _
    $region3: #{mellin_fourier_forward.5} parent=1 // loop_header
      %s17 = sphi 0, %s21
      %p18 = scmp.ge.s32.totalorder %s17, 4
      %s27 = sphi 0, %s29
      %s30 = sphi 0, %s27
      %s31 = sphi 0, %s30
      %s47 = sphi 0, %s31
      %s51 = sphi 0, %s51
      %s53 = sphi 0, %s51
      %s54 = sphi 0, %s53
      %s68 = sphi 0, %s54
      %s72 = sphi 0, %s72
      %s74 = sphi 0, %s72
      %s75 = sphi 0, %s74
      %s89 = sphi 0, %s75
      %s93 = sphi 0, %s93
      %s95 = sphi 0, %s93
      %s96 = sphi 0, %s95
      %s110 = sphi 0, %s96
      %s114 = sphi 0, %s114
      %s116 = sphi 0, %s114
      %s117 = sphi 0, %s116
      %s131 = sphi 0, %s117
      %s135 = sphi 0, %s135
      %s137 = sphi 0, %s135
      %s138 = sphi 0, %s137
      %s152 = sphi 0, %s138
      %s156 = sphi 0, %s156
      %s158 = sphi 0, %s156
      %s159 = sphi 0, %s158
      %s173 = sphi 0, %s159
      %s179 = sphi 0, %s181
      %s182 = sphi 0, %s179
      %s183 = sphi 0, %s182
      %s199 = sphi 0, %s183
    $region4: #{mellin_fourier_forward.5} parent=1 // loop_header_branch
      %20 = sbr.rel (%p18) target = $region8
    $region5: #{mellin_fourier_forward.5} parent=1 // loop_body
      %s22 = ssub.s32 %s17, 1
      %s23 = ssub.s32 %s17, 2
      %s24 = sadd.s32 %s17, 1
      %s25 = ssub.s32 %s17, %s24
      %p26 = scmp.eq.s32.totalorder %s25, 0
      %s28 = sadd.s32 %s27, 1
      %s29 = scalar_select %p26, %s27, %s28
      %p32 = pneg %p26
      %p33 = scmp.eq.s32.totalorder %s17, 1
      %p34 = por %p32, %p33
      %p35 = scmp.ne.s32.totalorder %s27, %s30
      %p36 = scmp.eq.s32.totalorder %s17, 0
      %p37 = por %p35, %p36
      %p38 = scmp.ne.s32.totalorder %s27, %s30
      %p39 = scmp.eq.s32.totalorder %s22, 1
      %p40 = por %p38, %p39
      %p41 = scmp.ne.s32.totalorder %s30, %s31
      %p42 = scmp.eq.s32.totalorder %s22, 0
      %p43 = por %p41, %p42
      %p44 = scmp.ne.s32.totalorder %s30, %s31
      %p45 = scmp.eq.s32.totalorder %s23, 1
      %p46 = por %p44, %p45
      %p48 = scmp.ne.s32.totalorder %s31, %s47
      %p49 = scmp.eq.s32.totalorder %s23, 0
      %p50 = por %p48, %p49
      %s52 = sadd.s32 %s51, 1
      %p55 = scmp.eq.s32.totalorder %s17, 1
      %p56 = scmp.ne.s32.totalorder %s51, %s53
      %p57 = scmp.eq.s32.totalorder %s17, 0
      %p58 = por %p56, %p57
      %p59 = scmp.ne.s32.totalorder %s51, %s53
      %p60 = scmp.eq.s32.totalorder %s22, 1
      %p61 = por %p59, %p60
      %p62 = scmp.ne.s32.totalorder %s53, %s54
      %p63 = scmp.eq.s32.totalorder %s22, 0
      %p64 = por %p62, %p63
      %p65 = scmp.ne.s32.totalorder %s53, %s54
      %p66 = scmp.eq.s32.totalorder %s23, 1
      %p67 = por %p65, %p66
      %p69 = scmp.ne.s32.totalorder %s54, %s68
      %p70 = scmp.eq.s32.totalorder %s23, 0
      %p71 = por %p69, %p70
      %s73 = sadd.s32 %s72, 1
      %p76 = scmp.eq.s32.totalorder %s17, 1
      %p77 = scmp.ne.s32.totalorder %s72, %s74
      %p78 = scmp.eq.s32.totalorder %s17, 0
      %p79 = por %p77, %p78
      %p80 = scmp.ne.s32.totalorder %s72, %s74
      %p81 = scmp.eq.s32.totalorder %s22, 1
      %p82 = por %p80, %p81
      %p83 = scmp.ne.s32.totalorder %s74, %s75
      %p84 = scmp.eq.s32.totalorder %s22, 0
      %p85 = por %p83, %p84
      %p86 = scmp.ne.s32.totalorder %s74, %s75
      %p87 = scmp.eq.s32.totalorder %s23, 1
      %p88 = por %p86, %p87
      %p90 = scmp.ne.s32.totalorder %s75, %s89
      %p91 = scmp.eq.s32.totalorder %s23, 0
      %p92 = por %p90, %p91
      %s94 = sadd.s32 %s93, 1
      %p97 = scmp.eq.s32.totalorder %s17, 1
      %p98 = scmp.ne.s32.totalorder %s93, %s95
      %p99 = scmp.eq.s32.totalorder %s17, 0
      %p100 = por %p98, %p99
      %p101 = scmp.ne.s32.totalorder %s93, %s95
      %p102 = scmp.eq.s32.totalorder %s22, 1
      %p103 = por %p101, %p102
      %p104 = scmp.ne.s32.totalorder %s95, %s96
      %p105 = scmp.eq.s32.totalorder %s22, 0
      %p106 = por %p104, %p105
      %p107 = scmp.ne.s32.totalorder %s95, %s96
      %p108 = scmp.eq.s32.totalorder %s23, 1
      %p109 = por %p107, %p108
      %p111 = scmp.ne.s32.totalorder %s96, %s110
      %p112 = scmp.eq.s32.totalorder %s23, 0
      %p113 = por %p111, %p112
      %s115 = sadd.s32 %s114, 1
      %p118 = scmp.eq.s32.totalorder %s17, 1
      %p119 = scmp.ne.s32.totalorder %s114, %s116
      %p120 = scmp.eq.s32.totalorder %s17, 0
      %p121 = por %p119, %p120
      %p122 = scmp.ne.s32.totalorder %s114, %s116
      %p123 = scmp.eq.s32.totalorder %s22, 1
      %p124 = por %p122, %p123
      %p125 = scmp.ne.s32.totalorder %s116, %s117
      %p126 = scmp.eq.s32.totalorder %s22, 0
      %p127 = por %p125, %p126
      %p128 = scmp.ne.s32.totalorder %s116, %s117
      %p129 = scmp.eq.s32.totalorder %s23, 1
      %p130 = por %p128, %p129
      %p132 = scmp.ne.s32.totalorder %s117, %s131
      %p133 = scmp.eq.s32.totalorder %s23, 0
      %p134 = por %p132, %p133
      %s136 = sadd.s32 %s135, 1
      %p139 = scmp.eq.s32.totalorder %s17, 1
      %p140 = scmp.ne.s32.totalorder %s135, %s137
      %p141 = scmp.eq.s32.totalorder %s17, 0
      %p142 = por %p140, %p141
      %p143 = scmp.ne.s32.totalorder %s135, %s137
      %p144 = scmp.eq.s32.totalorder %s22, 1
      %p145 = por %p143, %p144
      %p146 = scmp.ne.s32.totalorder %s137, %s138
      %p147 = scmp.eq.s32.totalorder %s22, 0
      %p148 = por %p146, %p147
      %p149 = scmp.ne.s32.totalorder %s137, %s138
      %p150 = scmp.eq.s32.totalorder %s23, 1
      %p151 = por %p149, %p150
      %p153 = scmp.ne.s32.totalorder %s138, %s152
      %p154 = scmp.eq.s32.totalorder %s23, 0
      %p155 = por %p153, %p154
      %s157 = sadd.s32 %s156, 1
      %p160 = scmp.eq.s32.totalorder %s17, 1
      %p161 = scmp.ne.s32.totalorder %s156, %s158
      %p162 = scmp.eq.s32.totalorder %s17, 0
      %p163 = por %p161, %p162
      %p164 = scmp.ne.s32.totalorder %s156, %s158
      %p165 = scmp.eq.s32.totalorder %s22, 1
      %p166 = por %p164, %p165
      %p167 = scmp.ne.s32.totalorder %s158, %s159
      %p168 = scmp.eq.s32.totalorder %s22, 0
      %p169 = por %p167, %p168
      %p170 = scmp.ne.s32.totalorder %s158, %s159
      %p171 = scmp.eq.s32.totalorder %s23, 1
      %p172 = por %p170, %p171
      %p174 = scmp.ne.s32.totalorder %s159, %s173
      %p175 = scmp.eq.s32.totalorder %s23, 0
      %p176 = por %p174, %p175
      %s177 = ssub.s32 %s17, %s24
      %p178 = scmp.eq.s32.totalorder %s177, 0
      %s180 = sadd.s32 %s179, 1
      %s181 = scalar_select %p178, %s179, %s180
      %p184 = pneg %p178
      %p185 = scmp.eq.s32.totalorder %s17, 1
      %p186 = por %p184, %p185
      %p187 = scmp.ne.s32.totalorder %s179, %s182
      %p188 = scmp.eq.s32.totalorder %s17, 0
      %p189 = por %p187, %p188
      %p190 = scmp.ne.s32.totalorder %s179, %s182
      %p191 = scmp.eq.s32.totalorder %s22, 1
      %p192 = por %p190, %p191
      %p193 = scmp.ne.s32.totalorder %s182, %s183
      %p194 = scmp.eq.s32.totalorder %s22, 0
      %p195 = por %p193, %p194
      %p196 = scmp.ne.s32.totalorder %s182, %s183
      %p197 = scmp.eq.s32.totalorder %s23, 1
      %p198 = por %p196, %p197
      %p200 = scmp.ne.s32.totalorder %s183, %s199
      %p201 = scmp.eq.s32.totalorder %s23, 0
      %p202 = por %p200, %p201
      %p203 = scmp.le.s32.totalorder 1, %s17
      %p204 = scmp.lt.s32.totalorder %s17, 3
      %p205 = pnand %p203, %p204
      %p206 = pneg %p205
      // Predicated region
      $region9: #{mellin_fourier_forward.5} parent=5 // pred_check
        _
      $region10: #{mellin_fourier_forward.5} parent=5 // pred_check_branch
        %208 = sbr.rel (%p205) target = $region12
      $region11: #{mellin_fourier_forward.5} parent=5 // pred_region
        %s209 = ssub.s32 %s17, 1
        // Predicated region
        $region13: #{mellin_fourier_forward.5} parent=11 // pred_check
          %p210 = pneg %p64
        $region14: #{mellin_fourier_forward.5} parent=11 // pred_check_branch
          %212 = sbr.rel (%p210) target = $region16
        $region15: #{mellin_fourier_forward.5} parent=11 // pred_region
          %s214 = ssub.s32 128, 128
          %215 = vsyncadd [#allocation3], %s214
          %s216 = sshll.u32 [#allocation2], 4
          %s217 = int_to_ptr.vmem [resolvable:$true] %s216
          %222 = dma.hbm_to_vmem [thread:$0]  %s1, 128, %s217, [#allocation3], 64, 64, 4
        $region16: #{mellin_fourier_forward.5} parent=11 // pred_fallthru
          _
        // Predicated region
        $region17: #{mellin_fourier_forward.5} parent=11 // pred_check
          %p223 = pneg %p85
        $region18: #{mellin_fourier_forward.5} parent=11 // pred_check_branch
          %225 = sbr.rel (%p223) target = $region20
        $region19: #{mellin_fourier_forward.5} parent=11 // pred_region
          %s227 = ssub.s32 128, 128
          %228 = vsyncadd [#allocation5], %s227
          %s229 = sshll.u32 [#allocation4], 4
          %s230 = int_to_ptr.vmem [resolvable:$true] %s229
          %235 = dma.hbm_to_vmem [thread:$0]  %s2, 128, %s230, [#allocation5], 64, 64, 4
        $region20: #{mellin_fourier_forward.5} parent=11 // pred_fallthru
          _
        // Predicated region
        $region21: #{mellin_fourier_forward.5} parent=11 // pred_check
          %p236 = pneg %p106
        $region22: #{mellin_fourier_forward.5} parent=11 // pred_check_branch
          %238 = sbr.rel (%p236) target = $region24
        $region23: #{mellin_fourier_forward.5} parent=11 // pred_region
          %s240 = ssub.s32 1024, 1024
          %241 = vsyncadd [#allocation5], %s240
          %s242 = sshll.u32 [#allocation6], 4
          %s243 = int_to_ptr.vmem [resolvable:$true] %s242
          %248 = dma.hbm_to_vmem [thread:$0]  %s3, 1024, %s243, [#allocation5], 64, 64, 4
        $region24: #{mellin_fourier_forward.5} parent=11 // pred_fallthru
          _
        // Predicated region
        $region25: #{mellin_fourier_forward.5} parent=11 // pred_check
          %p249 = pneg %p127
        $region26: #{mellin_fourier_forward.5} parent=11 // pred_check_branch
          %251 = sbr.rel (%p249) target = $region28
        $region27: #{mellin_fourier_forward.5} parent=11 // pred_region
          %s253 = ssub.s32 1024, 1024
          %254 = vsyncadd [#allocation8], %s253
          %s255 = sshll.u32 [#allocation7], 4
          %s256 = int_to_ptr.vmem [resolvable:$true] %s255
          %261 = dma.hbm_to_vmem [thread:$0]  %s4, 1024, %s256, [#allocation8], 64, 64, 4
        $region28: #{mellin_fourier_forward.5} parent=11 // pred_fallthru
          _
        // Predicated region
        $region29: #{mellin_fourier_forward.5} parent=11 // pred_check
          %p262 = pneg %p148
        $region30: #{mellin_fourier_forward.5} parent=11 // pred_check_branch
          %264 = sbr.rel (%p262) target = $region32
        $region31: #{mellin_fourier_forward.5} parent=11 // pred_region
          %s266 = ssub.s32 1024, 1024
          %267 = vsyncadd [#allocation8], %s266
          %s268 = sshll.u32 [#allocation9], 4
          %s269 = int_to_ptr.vmem [resolvable:$true] %s268
          %274 = dma.hbm_to_vmem [thread:$0]  %s5, 1024, %s269, [#allocation8], 64, 64, 4
        $region32: #{mellin_fourier_forward.5} parent=11 // pred_fallthru
          _
        // Predicated region
        $region33: #{mellin_fourier_forward.5} parent=11 // pred_check
          %p275 = pneg %p169
        $region34: #{mellin_fourier_forward.5} parent=11 // pred_check_branch
          %277 = sbr.rel (%p275) target = $region36
        $region35: #{mellin_fourier_forward.5} parent=11 // pred_region
          %s279 = ssub.s32 256, 256
          %280 = vsyncadd [#allocation11], %s279
          %s281 = sshll.u32 [#allocation10], 4
          %s282 = int_to_ptr.vmem [resolvable:$true] %s281
          %287 = dma.hbm_to_vmem [thread:$0]  %s6, 256, %s282, [#allocation11], 128, 128, 8
        $region36: #{mellin_fourier_forward.5} parent=11 // pred_fallthru
          _
      $region12: #{mellin_fourier_forward.5} parent=5 // pred_fallthru
        _
      %p288 = scmp.lt.s32.totalorder %s17, 2
      // Predicated region
      $region37: #{mellin_fourier_forward.5} parent=5 // pred_check
        %p289 = pneg %p288
      $region38: #{mellin_fourier_forward.5} parent=5 // pred_check_branch
        %291 = sbr.rel (%p289) target = $region40
      $region39: #{mellin_fourier_forward.5} parent=5 // pred_region
        // Predicated region
        $region41: #{mellin_fourier_forward.5} parent=39 // pred_check
          %p292 = pneg %p37
        $region42: #{mellin_fourier_forward.5} parent=39 // pred_check_branch
          %294 = sbr.rel (%p292) target = $region44
        $region43: #{mellin_fourier_forward.5} parent=39 // pred_region
          %p295 = scmp.lt.s32.totalorder %s17, 1
          %s296 = scalar_select %p295, %s17, 1
          %s297 = smul.addr %s296, 2
          %s298 = smul.addr %s297, 8
          %s299 = scalar_lea.vmem %s0, %s298
        $region44: #{mellin_fourier_forward.5} parent=39 // pred_fallthru
          _
      $region40: #{mellin_fourier_forward.5} parent=5 // pred_fallthru
        _
      %p300 = scmp.le.s32.totalorder 1, %s17
      %p301 = scmp.lt.s32.totalorder %s17, 3
      %p302 = pnand %p300, %p301
      %p303 = pneg %p302
      // Predicated region
      $region45: #{mellin_fourier_forward.5} parent=5 // pred_check
        _
      $region46: #{mellin_fourier_forward.5} parent=5 // pred_check_branch
        %305 = sbr.rel (%p302) target = $region48
      $region47: #{mellin_fourier_forward.5} parent=5 // pred_region
        %s306 = ssub.s32 %s17, 1
        // Predicated region
        $region49: #{mellin_fourier_forward.5} parent=47 // pred_check
          %p307 = pneg %p64
        $region50: #{mellin_fourier_forward.5} parent=47 // pred_check_branch
          %309 = sbr.rel (%p307) target = $region52
        $region51: #{mellin_fourier_forward.5} parent=47 // pred_region
          %310 = dma.done [#allocation3], 128
        $region52: #{mellin_fourier_forward.5} parent=47 // pred_fallthru
          _
        // Predicated region
        $region53: #{mellin_fourier_forward.5} parent=47 // pred_check
          %p311 = pneg %p85
        $region54: #{mellin_fourier_forward.5} parent=47 // pred_check_branch
          %313 = sbr.rel (%p311) target = $region56
        $region55: #{mellin_fourier_forward.5} parent=47 // pred_region
          %314 = dma.done [#allocation5], 128
        $region56: #{mellin_fourier_forward.5} parent=47 // pred_fallthru
          _
        // Predicated region
        $region57: #{mellin_fourier_forward.5} parent=47 // pred_check
          %p315 = pneg %p106
        $region58: #{mellin_fourier_forward.5} parent=47 // pred_check_branch
          %317 = sbr.rel (%p315) target = $region60
        $region59: #{mellin_fourier_forward.5} parent=47 // pred_region
          %318 = dma.done [#allocation5], 1024
        $region60: #{mellin_fourier_forward.5} parent=47 // pred_fallthru
          _
        // Predicated region
        $region61: #{mellin_fourier_forward.5} parent=47 // pred_check
          %p319 = pneg %p127
        $region62: #{mellin_fourier_forward.5} parent=47 // pred_check_branch
          %321 = sbr.rel (%p319) target = $region64
        $region63: #{mellin_fourier_forward.5} parent=47 // pred_region
          %322 = dma.done [#allocation8], 1024
        $region64: #{mellin_fourier_forward.5} parent=47 // pred_fallthru
          _
        // Predicated region
        $region65: #{mellin_fourier_forward.5} parent=47 // pred_check
          %p323 = pneg %p148
        $region66: #{mellin_fourier_forward.5} parent=47 // pred_check_branch
          %325 = sbr.rel (%p323) target = $region68
        $region67: #{mellin_fourier_forward.5} parent=47 // pred_region
          %326 = dma.done [#allocation8], 1024
        $region68: #{mellin_fourier_forward.5} parent=47 // pred_fallthru
          _
        // Predicated region
        $region69: #{mellin_fourier_forward.5} parent=47 // pred_check
          %p327 = pneg %p169
        $region70: #{mellin_fourier_forward.5} parent=47 // pred_check_branch
          %329 = sbr.rel (%p327) target = $region72
        $region71: #{mellin_fourier_forward.5} parent=47 // pred_region
          %330 = dma.done [#allocation11], 256
        $region72: #{mellin_fourier_forward.5} parent=47 // pred_fallthru
          _
        %p331 = scmp.lt.s32.totalorder %s22, 1
        %s332 = scalar_select %p331, %s22, 1
        %s333 = smul.addr %s332, 2
        %s334 = smul.addr %s333, 8
        %s335 = scalar_lea.vmem %s0, %s334
        %p336 = pneg %p43
        %p337 = pneg %p40
        %p338 = pneg %p64
        %p339 = pneg %p61
        %p340 = pneg %p85
        %p341 = pneg %p82
        %p342 = pneg %p106
        %p343 = pneg %p103
        %p344 = pneg %p127
        %p345 = pneg %p124
        %p346 = pneg %p148
        %p347 = pneg %p145
        %p348 = pneg %p169
        %p349 = pneg %p166
        %p350 = pneg %p195
        %p351 = pneg %p192
        %p352 = scmp.lt.s32.totalorder %s22, 1
        %s353 = scalar_select %p352, %s22, 1
        %s354 = smul.addr %s353, 2
        %s355 = smul.addr %s354, 8
        %s356 = scalar_lea.vmem %s7, %s355
        %p357 = scmp.lt.s32.totalorder %s22, 1
        %s358 = scalar_select %p357, %s22, 1
        %s359 = smul.addr %s358, 2
        %s360 = smul.addr %s359, 8
        %s361 = scalar_lea.vmem %s0, %s360
        %p362 = scmp.lt.s32.totalorder %s22, 1
        %s363 = scalar_select %p362, %s22, 1
        %s364 = smul.addr %s363, 2
        %s365 = smul.addr %s364, 8
        %s366 = scalar_lea.vmem %s7, %s365
        %v368 = vld [vmem:[%s361] sm:$0xff]
        %v369 = vld [vmem:[%s361 + $0x8] sm:$0xff]
        %v370 = vpack.c.bf16 %v369, %v368
        %v371 = vld [vmem:[#allocation2] sm:$0xf]
        %v372 = vld [vmem:[#allocation2 + $0x4] sm:$0xf]
        %v375 = vunpack.c.l.b16 %v371
        %v376 = vunpack.c.l.b16 %v372
        %v377 = vpack.c.b16 %v376, %v375
        %vm378 = vcmask 130048
        %v380 = vsel %vm378, %v377, 0
        %382 = vmatprep.subr.bf16.mxu0 0
        %383 = vmatpush1.bf16.msra.mxu0 0
        %384 = vmatprep.subr.bf16.mxu0 0
        %385 = vmatpush1.bf16.msra.mxu0 0
        %386 = vmatprep.subr.bf16.mxu0 0
        %387 = vmatpush1.bf16.msra.mxu0 0
        %388 = vmatprep.subr.bf16.mxu0 0
        %389 = vmatpush1.bf16.msra.mxu0 0
        %390 = vmatprep.subr.bf16.mxu0 0
        %391 = vmatpush1.bf16.msra.mxu0 0
        %392 = vmatprep.subr.bf16.mxu0 0
        %393 = vmatpush1.bf16.msra.mxu0 0
        %394 = vmatprep.subr.bf16.mxu0 0
        %395 = vmatpush1.bf16.msra.mxu0 0
        %396 = vmatprep.subr.bf16.mxu0 0
        %397 = vmatpush1.bf16.msra.mxu0 %v370
        %398 = vmatprep.subr.bf16.mxu0 0
        %399 = vmatpush2.bf16.msra.mxu0 0
        %400 = vmatprep.subr.bf16.mxu0 0
        %401 = vmatpush2.bf16.msra.mxu0 0
        %402 = vmatprep.subr.bf16.mxu0 0
        %403 = vmatpush2.bf16.msra.mxu0 0
        %404 = vmatprep.subr.bf16.mxu0 0
        %405 = vmatpush2.bf16.msra.mxu0 0
        %406 = vmatprep.subr.bf16.mxu0 0
        %407 = vmatpush2.bf16.msra.mxu0 0
        %408 = vmatprep.subr.bf16.mxu0 0
        %409 = vmatpush2.bf16.msra.mxu0 0
        %410 = vmatprep.subr.bf16.mxu0 0
        %411 = vmatpush2.bf16.msra.mxu0 0
        %412 = vmatprep.subr.bf16.mxu0 0
        %413 = vmatpush2.bf16.msra.mxu0 0
        %414 = vmatprep.mubr.bf16.mxu0 0
        %415 = vmatmul.mubr.bf16.gmra.mxu0 %v380
        %v416 = vpop.f32.mrf.mxu0
        %v417 = vadd.f32 0.0, %v416
        %v418 = vpop.f32.mrf.mxu0
        %v419 = vpop.f32.mrf.mxu0
        %v420 = vadd.f32 0.0, %v419
        %v421 = vpop.f32.mrf.mxu0
        %422 = vdwg.mxu0
        %v423 = vld [vmem:[#allocation4] sm:$0xf]
        %v424 = vld [vmem:[#allocation4 + $0x4] sm:$0xf]
        %v427 = vunpack.c.l.b16 %v423
        %v428 = vunpack.c.l.b16 %v424
        %v429 = vpack.c.b16 %v428, %v427
        %v431 = vsel %vm378, %v429, 0
        %433 = vmatprep.subr.bf16.mxu0 0
        %434 = vmatpush1.bf16.msra.mxu0 0
        %435 = vmatprep.subr.bf16.mxu0 0
        %436 = vmatpush1.bf16.msra.mxu0 0
        %437 = vmatprep.subr.bf16.mxu0 0
        %438 = vmatpush1.bf16.msra.mxu0 0
        %439 = vmatprep.subr.bf16.mxu0 0
        %440 = vmatpush1.bf16.msra.mxu0 0
        %441 = vmatprep.subr.bf16.mxu0 0
        %442 = vmatpush1.bf16.msra.mxu0 0
        %443 = vmatprep.subr.bf16.mxu0 0
        %444 = vmatpush1.bf16.msra.mxu0 0
        %445 = vmatprep.subr.bf16.mxu0 0
        %446 = vmatpush1.bf16.msra.mxu0 0
        %447 = vmatprep.subr.bf16.mxu0 0
        %448 = vmatpush1.bf16.msra.mxu0 %v370
        %449 = vmatprep.subr.bf16.mxu0 0
        %450 = vmatpush2.bf16.msra.mxu0 0
        %451 = vmatprep.subr.bf16.mxu0 0
        %452 = vmatpush2.bf16.msra.mxu0 0
        %453 = vmatprep.subr.bf16.mxu0 0
        %454 = vmatpush2.bf16.msra.mxu0 0
        %455 = vmatprep.subr.bf16.mxu0 0
        %456 = vmatpush2.bf16.msra.mxu0 0
        %457 = vmatprep.subr.bf16.mxu0 0
        %458 = vmatpush2.bf16.msra.mxu0 0
        %459 = vmatprep.subr.bf16.mxu0 0
        %460 = vmatpush2.bf16.msra.mxu0 0
        %461 = vmatprep.subr.bf16.mxu0 0
        %462 = vmatpush2.bf16.msra.mxu0 0
        %463 = vmatprep.subr.bf16.mxu0 0
        %464 = vmatpush2.bf16.msra.mxu0 0
        %465 = vmatprep.mubr.bf16.mxu0 0
        %466 = vmatmul.mubr.bf16.gmra.mxu0 %v431
        %v467 = vpop.f32.mrf.mxu0
        %v468 = vadd.f32 0.0, %v467
        %v469 = vpop.f32.mrf.mxu0
        %v470 = vpop.f32.mrf.mxu0
        %v471 = vadd.f32 0.0, %v470
        %v472 = vpop.f32.mrf.mxu0
        %473 = vdwg.mxu0
        %v474 = vpack.c.bf16 %v420, %v417
        %v475 = vld [vmem:[#allocation6] sm:$0xf]
        %v476 = vld [vmem:[#allocation6 + $0x4] sm:$0xf]
        %v477 = vld [vmem:[#allocation6 + $0x8] sm:$0xf]
        %v478 = vld [vmem:[#allocation6 + $0xc] sm:$0xf]
        %v479 = vld [vmem:[#allocation6 + $0x10] sm:$0xf]
        %v480 = vld [vmem:[#allocation6 + $0x14] sm:$0xf]
        %v481 = vld [vmem:[#allocation6 + $0x18] sm:$0xf]
        %v482 = vld [vmem:[#allocation6 + $0x1c] sm:$0xf]
        %v483 = vld [vmem:[#allocation6 + $0x20] sm:$0xf]
        %v484 = vld [vmem:[#allocation6 + $0x24] sm:$0xf]
        %v485 = vld [vmem:[#allocation6 + $0x28] sm:$0xf]
        %v486 = vld [vmem:[#allocation6 + $0x2c] sm:$0xf]
        %v487 = vld [vmem:[#allocation6 + $0x30] sm:$0xf]
        %v488 = vld [vmem:[#allocation6 + $0x34] sm:$0xf]
        %v489 = vld [vmem:[#allocation6 + $0x38] sm:$0xf]
        %v490 = vld [vmem:[#allocation6 + $0x3c] sm:$0xf]
        %v507 = vunpack.c.l.b16 %v475
        %v508 = vunpack.c.l.b16 %v476
        %v509 = vunpack.c.l.b16 %v477
        %v510 = vunpack.c.l.b16 %v478
        %v511 = vunpack.c.l.b16 %v479
        %v512 = vunpack.c.l.b16 %v480
        %v513 = vunpack.c.l.b16 %v481
        %v514 = vunpack.c.l.b16 %v482
        %v515 = vunpack.c.l.b16 %v483
        %v516 = vunpack.c.l.b16 %v484
        %v517 = vunpack.c.l.b16 %v485
        %v518 = vunpack.c.l.b16 %v486
        %v519 = vunpack.c.l.b16 %v487
        %v520 = vunpack.c.l.b16 %v488
        %v521 = vunpack.c.l.b16 %v489
        %v522 = vunpack.c.l.b16 %v490
        %v523 = vpack.c.b16 %v508, %v507
        %v524 = vpack.c.b16 %v510, %v509
        %v525 = vpack.c.b16 %v512, %v511
        %v526 = vpack.c.b16 %v514, %v513
        %v527 = vpack.c.b16 %v516, %v515
        %v528 = vpack.c.b16 %v518, %v517
        %v529 = vpack.c.b16 %v520, %v519
        %v530 = vpack.c.b16 %v522, %v521
        %539 = vmatprep.subr.bf16.mxu0 0
        %540 = vmatpush1.bf16.msra.mxu0 %v530
        %541 = vmatprep.subr.bf16.mxu0 0
        %542 = vmatpush1.bf16.msra.mxu0 %v529
        %543 = vmatprep.subr.bf16.mxu0 0
        %544 = vmatpush1.bf16.msra.mxu0 %v528
        %545 = vmatprep.subr.bf16.mxu0 0
        %546 = vmatpush1.bf16.msra.mxu0 %v527
        %547 = vmatprep.subr.bf16.mxu0 0
        %548 = vmatpush1.bf16.msra.mxu0 %v526
        %549 = vmatprep.subr.bf16.mxu0 0
        %550 = vmatpush1.bf16.msra.mxu0 %v525
        %551 = vmatprep.subr.bf16.mxu0 0
        %552 = vmatpush1.bf16.msra.mxu0 %v524
        %553 = vmatprep.subr.bf16.mxu0 0
        %554 = vmatpush1.bf16.msra.mxu0 %v523
        %555 = vmatprep.subr.bf16.mxu0 0
        %556 = vmatpush2.bf16.msra.mxu0 0
        %557 = vmatprep.subr.bf16.mxu0 0
        %558 = vmatpush2.bf16.msra.mxu0 0
        %559 = vmatprep.subr.bf16.mxu0 0
        %560 = vmatpush2.bf16.msra.mxu0 0
        %561 = vmatprep.subr.bf16.mxu0 0
        %562 = vmatpush2.bf16.msra.mxu0 0
        %563 = vmatprep.subr.bf16.mxu0 0
        %564 = vmatpush2.bf16.msra.mxu0 0
        %565 = vmatprep.subr.bf16.mxu0 0
        %566 = vmatpush2.bf16.msra.mxu0 0
        %567 = vmatprep.subr.bf16.mxu0 0
        %568 = vmatpush2.bf16.msra.mxu0 0
        %569 = vmatprep.subr.bf16.mxu0 0
        %570 = vmatpush2.bf16.msra.mxu0 0
        %571 = vmatprep.mubr.bf16.mxu0 0
        %572 = vmatmul.mubr.bf16.gmra.mxu0 %v474
        %v573 = vpop.f32.mrf.mxu0
        %v574 = vadd.f32 0.0, %v573
        %v575 = vpop.f32.mrf.mxu0
        %v576 = vpop.f32.mrf.mxu0
        %v577 = vadd.f32 0.0, %v576
        %v578 = vpop.f32.mrf.mxu0
        %579 = vdwg.mxu0
        %v580 = vpack.c.bf16 %v471, %v468
        %v581 = vld [vmem:[#allocation7] sm:$0xf]
        %v582 = vld [vmem:[#allocation7 + $0x4] sm:$0xf]
        %v583 = vld [vmem:[#allocation7 + $0x8] sm:$0xf]
        %v584 = vld [vmem:[#allocation7 + $0xc] sm:$0xf]
        %v585 = vld [vmem:[#allocation7 + $0x10] sm:$0xf]
        %v586 = vld [vmem:[#allocation7 + $0x14] sm:$0xf]
        %v587 = vld [vmem:[#allocation7 + $0x18] sm:$0xf]
        %v588 = vld [vmem:[#allocation7 + $0x1c] sm:$0xf]
        %v589 = vld [vmem:[#allocation7 + $0x20] sm:$0xf]
        %v590 = vld [vmem:[#allocation7 + $0x24] sm:$0xf]
        %v591 = vld [vmem:[#allocation7 + $0x28] sm:$0xf]
        %v592 = vld [vmem:[#allocation7 + $0x2c] sm:$0xf]
        %v593 = vld [vmem:[#allocation7 + $0x30] sm:$0xf]
        %v594 = vld [vmem:[#allocation7 + $0x34] sm:$0xf]
        %v595 = vld [vmem:[#allocation7 + $0x38] sm:$0xf]
        %v596 = vld [vmem:[#allocation7 + $0x3c] sm:$0xf]
        %v613 = vunpack.c.l.b16 %v581
        %v614 = vunpack.c.l.b16 %v582
        %v615 = vunpack.c.l.b16 %v583
        %v616 = vunpack.c.l.b16 %v584
        %v617 = vunpack.c.l.b16 %v585
        %v618 = vunpack.c.l.b16 %v586
        %v619 = vunpack.c.l.b16 %v587
        %v620 = vunpack.c.l.b16 %v588
        %v621 = vunpack.c.l.b16 %v589
        %v622 = vunpack.c.l.b16 %v590
        %v623 = vunpack.c.l.b16 %v591
        %v624 = vunpack.c.l.b16 %v592
        %v625 = vunpack.c.l.b16 %v593
        %v626 = vunpack.c.l.b16 %v594
        %v627 = vunpack.c.l.b16 %v595
        %v628 = vunpack.c.l.b16 %v596
        %v629 = vpack.c.b16 %v614, %v613
        %v630 = vpack.c.b16 %v616, %v615
        %v631 = vpack.c.b16 %v618, %v617
        %v632 = vpack.c.b16 %v620, %v619
        %v633 = vpack.c.b16 %v622, %v621
        %v634 = vpack.c.b16 %v624, %v623
        %v635 = vpack.c.b16 %v626, %v625
        %v636 = vpack.c.b16 %v628, %v627
        %645 = vmatprep.subr.bf16.mxu0 0
        %646 = vmatpush1.bf16.msra.mxu0 %v636
        %647 = vmatprep.subr.bf16.mxu0 0
        %648 = vmatpush1.bf16.msra.mxu0 %v635
        %649 = vmatprep.subr.bf16.mxu0 0
        %650 = vmatpush1.bf16.msra.mxu0 %v634
        %651 = vmatprep.subr.bf16.mxu0 0
        %652 = vmatpush1.bf16.msra.mxu0 %v633
        %653 = vmatprep.subr.bf16.mxu0 0
        %654 = vmatpush1.bf16.msra.mxu0 %v632
        %655 = vmatprep.subr.bf16.mxu0 0
        %656 = vmatpush1.bf16.msra.mxu0 %v631
        %657 = vmatprep.subr.bf16.mxu0 0
        %658 = vmatpush1.bf16.msra.mxu0 %v630
        %659 = vmatprep.subr.bf16.mxu0 0
        %660 = vmatpush1.bf16.msra.mxu0 %v629
        %661 = vmatprep.subr.bf16.mxu0 0
        %662 = vmatpush2.bf16.msra.mxu0 0
        %663 = vmatprep.subr.bf16.mxu0 0
        %664 = vmatpush2.bf16.msra.mxu0 0
        %665 = vmatprep.subr.bf16.mxu0 0
        %666 = vmatpush2.bf16.msra.mxu0 0
        %667 = vmatprep.subr.bf16.mxu0 0
        %668 = vmatpush2.bf16.msra.mxu0 0
        %669 = vmatprep.subr.bf16.mxu0 0
        %670 = vmatpush2.bf16.msra.mxu0 0
        %671 = vmatprep.subr.bf16.mxu0 0
        %672 = vmatpush2.bf16.msra.mxu0 0
        %673 = vmatprep.subr.bf16.mxu0 0
        %674 = vmatpush2.bf16.msra.mxu0 0
        %675 = vmatprep.subr.bf16.mxu0 0
        %676 = vmatpush2.bf16.msra.mxu0 0
        %677 = vmatprep.mubr.bf16.mxu0 0
        %678 = vmatmul.mubr.bf16.gmra.mxu0 %v580
        %v679 = vpop.f32.mrf.mxu0
        %v680 = vadd.f32 0.0, %v679
        %v681 = vpop.f32.mrf.mxu0
        %v682 = vpop.f32.mrf.mxu0
        %v683 = vadd.f32 0.0, %v682
        %v684 = vpop.f32.mrf.mxu0
        %685 = vdwg.mxu0
        %v686 = vadd.f32 %v417, %v468
        %v687 = vadd.f32 %v420, %v471
        %v688 = vpack.c.bf16 %v687, %v686
        %v689 = vld [vmem:[#allocation9] sm:$0xf]
        %v690 = vld [vmem:[#allocation9 + $0x4] sm:$0xf]
        %v691 = vld [vmem:[#allocation9 + $0x8] sm:$0xf]
        %v692 = vld [vmem:[#allocation9 + $0xc] sm:$0xf]
        %v693 = vld [vmem:[#allocation9 + $0x10] sm:$0xf]
        %v694 = vld [vmem:[#allocation9 + $0x14] sm:$0xf]
        %v695 = vld [vmem:[#allocation9 + $0x18] sm:$0xf]
        %v696 = vld [vmem:[#allocation9 + $0x1c] sm:$0xf]
        %v697 = vld [vmem:[#allocation9 + $0x20] sm:$0xf]
        %v698 = vld [vmem:[#allocation9 + $0x24] sm:$0xf]
        %v699 = vld [vmem:[#allocation9 + $0x28] sm:$0xf]
        %v700 = vld [vmem:[#allocation9 + $0x2c] sm:$0xf]
        %v701 = vld [vmem:[#allocation9 + $0x30] sm:$0xf]
        %v702 = vld [vmem:[#allocation9 + $0x34] sm:$0xf]
        %v703 = vld [vmem:[#allocation9 + $0x38] sm:$0xf]
        %v704 = vld [vmem:[#allocation9 + $0x3c] sm:$0xf]
        %v721 = vunpack.c.l.b16 %v689
        %v722 = vunpack.c.l.b16 %v690
        %v723 = vunpack.c.l.b16 %v691
        %v724 = vunpack.c.l.b16 %v692
        %v725 = vunpack.c.l.b16 %v693
        %v726 = vunpack.c.l.b16 %v694
        %v727 = vunpack.c.l.b16 %v695
        %v728 = vunpack.c.l.b16 %v696
        %v729 = vunpack.c.l.b16 %v697
        %v730 = vunpack.c.l.b16 %v698
        %v731 = vunpack.c.l.b16 %v699
        %v732 = vunpack.c.l.b16 %v700
        %v733 = vunpack.c.l.b16 %v701
        %v734 = vunpack.c.l.b16 %v702
        %v735 = vunpack.c.l.b16 %v703
        %v736 = vunpack.c.l.b16 %v704
        %v737 = vpack.c.b16 %v722, %v721
        %v738 = vpack.c.b16 %v724, %v723
        %v739 = vpack.c.b16 %v726, %v725
        %v740 = vpack.c.b16 %v728, %v727
        %v741 = vpack.c.b16 %v730, %v729
        %v742 = vpack.c.b16 %v732, %v731
        %v743 = vpack.c.b16 %v734, %v733
        %v744 = vpack.c.b16 %v736, %v735
        %753 = vmatprep.subr.bf16.mxu0 0
        %754 = vmatpush1.bf16.msra.mxu0 %v744
        %755 = vmatprep.subr.bf16.mxu0 0
        %756 = vmatpush1.bf16.msra.mxu0 %v743
        %757 = vmatprep.subr.bf16.mxu0 0
        %758 = vmatpush1.bf16.msra.mxu0 %v742
        %759 = vmatprep.subr.bf16.mxu0 0
        %760 = vmatpush1.bf16.msra.mxu0 %v741
        %761 = vmatprep.subr.bf16.mxu0 0
        %762 = vmatpush1.bf16.msra.mxu0 %v740
        %763 = vmatprep.subr.bf16.mxu0 0
        %764 = vmatpush1.bf16.msra.mxu0 %v739
        %765 = vmatprep.subr.bf16.mxu0 0
        %766 = vmatpush1.bf16.msra.mxu0 %v738
        %767 = vmatprep.subr.bf16.mxu0 0
        %768 = vmatpush1.bf16.msra.mxu0 %v737
        %769 = vmatprep.subr.bf16.mxu0 0
        %770 = vmatpush2.bf16.msra.mxu0 0
        %771 = vmatprep.subr.bf16.mxu0 0
        %772 = vmatpush2.bf16.msra.mxu0 0
        %773 = vmatprep.subr.bf16.mxu0 0
        %774 = vmatpush2.bf16.msra.mxu0 0
        %775 = vmatprep.subr.bf16.mxu0 0
        %776 = vmatpush2.bf16.msra.mxu0 0
        %777 = vmatprep.subr.bf16.mxu0 0
        %778 = vmatpush2.bf16.msra.mxu0 0
        %779 = vmatprep.subr.bf16.mxu0 0
        %780 = vmatpush2.bf16.msra.mxu0 0
        %781 = vmatprep.subr.bf16.mxu0 0
        %782 = vmatpush2.bf16.msra.mxu0 0
        %783 = vmatprep.subr.bf16.mxu0 0
        %784 = vmatpush2.bf16.msra.mxu0 0
        %785 = vmatprep.mubr.bf16.mxu0 0
        %786 = vmatmul.mubr.bf16.gmra.mxu0 %v688
        %v787 = vpop.f32.mrf.mxu0
        %v788 = vadd.f32 0.0, %v787
        %v789 = vpop.f32.mrf.mxu0
        %v790 = vpop.f32.mrf.mxu0
        %v791 = vadd.f32 0.0, %v790
        %v792 = vpop.f32.mrf.mxu0
        %793 = vdwg.mxu0
        %v794 = vsub.f32 %v574, %v680
        %v795 = vsub.f32 %v577, %v683
        %v796 = vsub.f32 %v788, %v574
        %v797 = vsub.f32 %v791, %v577
        %v798 = vsub.f32 %v796, %v680
        %v799 = vsub.f32 %v797, %v683
        %v800 = vmul.f32 %v794, %v794
        %v801 = vmul.f32 %v795, %v795
        %v802 = vmul.f32 %v798, %v798
        %v803 = vmul.f32 %v799, %v799
        %v804 = vadd.f32 %v800, %v802
        %v805 = vadd.f32 %v801, %v803
        %v806 = vrsqrt.pop %v804
        %v807 = vmul.f32 %v804, %v806
        %vm808 = vcmp.eq.f32.partialorder %v804, inf
        %v809 = vsel %vm808, %v804, %v807
        %vm810 = vcmp.eq.f32.partialorder %v804, 0.0
        %v811 = vand.u32 %v804, 2147483648
        %v812 = vsel %vm810, %v811, %v809
        %v813 = vrsqrt.pop %v805
        %v814 = vmul.f32 %v805, %v813
        %vm815 = vcmp.eq.f32.partialorder %v805, inf
        %v816 = vsel %vm815, %v805, %v814
        %vm817 = vcmp.eq.f32.partialorder %v805, 0.0
        %v818 = vand.u32 %v805, 2147483648
        %v819 = vsel %vm817, %v818, %v816
        %v820 = vld [vmem:[#allocation10] sm:$0xff]
        %v821 = vld [vmem:[#allocation10 + $0x8] sm:$0xff]
        %v822 = vmul.f32 %v812, %v820
        %v823 = vmul.f32 %v819, %v821
        %824 = vst [vmem:[%s366] sm:$0xff] %v822
        %825 = vst [vmem:[%s366 + $0x8] sm:$0xff] %v823
        %p826 = scmp.lt.s32.totalorder %s22, 1
        %s827 = scalar_select %p826, %s22, 1
        %s828 = smul.addr %s827, 2
        %s829 = smul.addr %s828, 8
        %s830 = scalar_lea.vmem %s7, %s829
        // Predicated region
        $region73: #{mellin_fourier_forward.5} parent=47 // pred_check
          %p831 = pneg %p192
        $region74: #{mellin_fourier_forward.5} parent=47 // pred_check_branch
          %833 = sbr.rel (%p831) target = $region76
        $region75: #{mellin_fourier_forward.5} parent=47 // pred_region
          _
        $region76: #{mellin_fourier_forward.5} parent=47 // pred_fallthru
          _
      $region48: #{mellin_fourier_forward.5} parent=5 // pred_fallthru
        _
      %p834 = scmp.le.s32.totalorder 2, %s17
      // Predicated region
      $region77: #{mellin_fourier_forward.5} parent=5 // pred_check
        %p835 = pneg %p834
      $region78: #{mellin_fourier_forward.5} parent=5 // pred_check_branch
        %837 = sbr.rel (%p835) target = $region80
      $region79: #{mellin_fourier_forward.5} parent=5 // pred_region
        %s838 = ssub.s32 %s17, 2
        // Predicated region
        $region81: #{mellin_fourier_forward.5} parent=79 // pred_check
          %p839 = pneg %p198
        $region82: #{mellin_fourier_forward.5} parent=79 // pred_check_branch
          %841 = sbr.rel (%p839) target = $region84
        $region83: #{mellin_fourier_forward.5} parent=79 // pred_region
          %p842 = scmp.lt.s32.totalorder %s23, 1
          %s843 = scalar_select %p842, %s23, 1
          %s844 = smul.addr %s843, 2
          %s845 = smul.addr %s844, 8
          %s846 = scalar_lea.vmem %s7, %s845
        $region84: #{mellin_fourier_forward.5} parent=79 // pred_fallthru
          _
      $region80: #{mellin_fourier_forward.5} parent=5 // pred_fallthru
        _
    $region6: #{mellin_fourier_forward.5} parent=1 // loop_footer
      %s21 = sadd.s32 1, %s17
    $region7: #{mellin_fourier_forward.5} parent=1 // loop_footer_branch
      %16 = sbr.rel target = $region3
    $region8: #{mellin_fourier_forward.5} parent=1 // loop_exit
      _
    %847 = vsyncpa [#allocation3], 1
    %s848 = scalar_lea.sflag [#allocation3], 1
    %849 = vsyncpa %s848, 1
    %850 = vsyncpa [#allocation5], 1
    %851 = vsyncpa [#allocation8], 1
    %852 = vsyncpa [#allocation11], 1

// kernel: squeeze.2
$region0: #{squeeze.2}
  %s0 = inlined_call_operand.vmem [shape: f32[8,1440], index: 0, kind: input, shape index: {}]
  %s1 = inlined_call_operand.vmem [shape: f32[1,8,180,8], index: 1, kind: output, shape index: {}]
  %v2 = vld [vmem:[%s0] sm:$0xff]
  %vm3 = vcmask 64512
  %4 = vst.msk [vmem:[%s1] ss:$184 sm:$0xf] %vm3, %v2
  %5 = vst.msk [vmem:[%s1] ss:$184 sm:$0xf0] %vm3, %v2
  %s6 = scalar_lea.vmem %s0, 8
  %v7 = vld [vmem:[%s6] sm:$0xff]
  %vm8 = vcmask 64512
  %s9 = scalar_lea.vmem %s1, 16
  %10 = vst.msk [vmem:[%s9] ss:$184 sm:$0xf] %vm8, %v7
  %s11 = scalar_lea.vmem %s1, 16
  %12 = vst.msk [vmem:[%s11] ss:$184 sm:$0xf0] %vm8, %v7
  %s13 = scalar_lea.vmem %s0, 16
  %v14 = vld [vmem:[%s13] sm:$0xff]
  %vm15 = vcmask 64512
  %s16 = scalar_lea.vmem %s1, 32
  %17 = vst.msk [vmem:[%s16] ss:$184 sm:$0xf] %vm15, %v14
  %s18 = scalar_lea.vmem %s1, 32
  %19 = vst.msk [vmem:[%s18] ss:$184 sm:$0xf0] %vm15, %v14
  %s20 = scalar_lea.vmem %s0, 24
  %v21 = vld [vmem:[%s20] sm:$0xff]
  %vm22 = vcmask 64512
  %s23 = scalar_lea.vmem %s1, 48
  %24 = vst.msk [vmem:[%s23] ss:$184 sm:$0xf] %vm22, %v21
  %s25 = scalar_lea.vmem %s1, 48
  %26 = vst.msk [vmem:[%s25] ss:$184 sm:$0xf0] %vm22, %v21
  %s27 = scalar_lea.vmem %s0, 32
  %v28 = vld [vmem:[%s27] sm:$0xff]
  %vm29 = vcmask 64512
  %s30 = scalar_lea.vmem %s1, 64
  %31 = vst.msk [vmem:[%s30] ss:$184 sm:$0xf] %vm29, %v28
  %s32 = scalar_lea.vmem %s1, 64
  %33 = vst.msk [vmem:[%s32] ss:$184 sm:$0xf0] %vm29, %v28
  %s34 = scalar_lea.vmem %s0, 40
  %v35 = vld [vmem:[%s34] sm:$0xff]
  %vm36 = vcmask 64512
  %s37 = scalar_lea.vmem %s1, 80
  %38 = vst.msk [vmem:[%s37] ss:$184 sm:$0xf] %vm36, %v35
  %s39 = scalar_lea.vmem %s1, 80
  %40 = vst.msk [vmem:[%s39] ss:$184 sm:$0xf0] %vm36, %v35
  %s41 = scalar_lea.vmem %s0, 48
  %v42 = vld [vmem:[%s41] sm:$0xff]
  %vm43 = vcmask 64512
  %s44 = scalar_lea.vmem %s1, 96
  %45 = vst.msk [vmem:[%s44] ss:$184 sm:$0xf] %vm43, %v42
  %s46 = scalar_lea.vmem %s1, 96
  %47 = vst.msk [vmem:[%s46] ss:$184 sm:$0xf0] %vm43, %v42
  %s48 = scalar_lea.vmem %s0, 56
  %v49 = vld [vmem:[%s48] sm:$0xff]
  %vm50 = vcmask 64512
  %s51 = scalar_lea.vmem %s1, 112
  %52 = vst.msk [vmem:[%s51] ss:$184 sm:$0xf] %vm50, %v49
  %s53 = scalar_lea.vmem %s1, 112
  %54 = vst.msk [vmem:[%s53] ss:$184 sm:$0xf0] %vm50, %v49
  %s55 = scalar_lea.vmem %s0, 64
  %v56 = vld [vmem:[%s55] sm:$0xff]
  %vm57 = vcmask 64512
  %s58 = scalar_lea.vmem %s1, 128
  %59 = vst.msk [vmem:[%s58] ss:$184 sm:$0xf] %vm57, %v56
  %s60 = scalar_lea.vmem %s1, 128
  %61 = vst.msk [vmem:[%s60] ss:$184 sm:$0xf0] %vm57, %v56
  %s62 = scalar_lea.vmem %s0, 72
  %v63 = vld [vmem:[%s62] sm:$0xff]
  %vm64 = vcmask 64512
  %s65 = scalar_lea.vmem %s1, 144
  %66 = vst.msk [vmem:[%s65] ss:$184 sm:$0xf] %vm64, %v63
  %s67 = scalar_lea.vmem %s1, 144
  %68 = vst.msk [vmem:[%s67] ss:$184 sm:$0xf0] %vm64, %v63
  %s69 = scalar_lea.vmem %s0, 80
  %v70 = vld [vmem:[%s69] sm:$0xff]
  %vm71 = vcmask 64512
  %s72 = scalar_lea.vmem %s1, 160
  %73 = vst.msk [vmem:[%s72] ss:$184 sm:$0xf] %vm71, %v70
  %s74 = scalar_lea.vmem %s1, 160
  %75 = vst.msk [vmem:[%s74] ss:$184 sm:$0xf0] %vm71, %v70
  %s76 = scalar_lea.vmem %s0, 88
  %v77 = vld [vmem:[%s76] sm:$0xff]
  %vm78 = vcmask 64512
  %s79 = scalar_lea.vmem %s1, 176
  %80 = vst.msk [vmem:[%s79] ss:$184 sm:$0xf] %vm78, %v77
  %s81 = scalar_lea.vmem %s1, 176
  %82 = vst.msk [vmem:[%s81] ss:$184 sm:$0xf0] %vm78, %v77
  %v83 = vld.sshfl [vmem:[%s0] sm:$0xff pattern:$0x56741230]
  %84 = vrot.lane.b32.xlu0 %v83, 120
  %v85 = vpop.permute.xlu0 %84
  %vm86 = vcmask 64512
  %s87 = scalar_lea.vmem %s1, 1
  %88 = vst.msk [vmem:[%s87] ss:$552 sm:$0x3] %vm86, %v85
  %s89 = scalar_lea.vmem %s1, 737
  %90 = vst.msk [vmem:[%s89] ss:$-184 sm:$0xc] %vm86, %v85
  %s91 = scalar_lea.vmem %s1, 4294965825
  %92 = vst.msk [vmem:[%s91] ss:$552 sm:$0x30] %vm86, %v85
  %s93 = scalar_lea.vmem %s1, 2209
  %94 = vst.msk [vmem:[%s93] ss:$-184 sm:$0xc0] %vm86, %v85
  %s95 = scalar_lea.vmem %s0, 8
  %v96 = vld.sshfl [vmem:[%s95] sm:$0xff pattern:$0x74563012]
  %97 = vrot.lane.b32.xlu0 %v96, 120
  %v98 = vpop.permute.xlu0 %97
  %vm99 = vcmask 64512
  %s100 = scalar_lea.vmem %s1, 385
  %101 = vst.msk [vmem:[%s100] ss:$-184 sm:$0x7] %vm99, %v98
  %s102 = scalar_lea.vmem %s1, 4294966209
  %103 = vst.msk [vmem:[%s102] ss:$552 sm:$0x18] %vm99, %v98
  %s104 = scalar_lea.vmem %s1, 1857
  %105 = vst.msk [vmem:[%s104] ss:$-184 sm:$0x60] %vm99, %v98
  %s106 = scalar_lea.vmem %s1, 1298
  %107 = vst.msk [vmem:[%s106] sm:$0x80] %vm99, %v98
  %s108 = scalar_lea.vmem %s0, 16
  %v109 = vld.sshfl [vmem:[%s108] sm:$0xff pattern:$0x56741230]
  %110 = vrot.lane.b32.xlu0 %v109, 120
  %v111 = vpop.permute.xlu0 %110
  %vm112 = vcmask 64512
  %s113 = scalar_lea.vmem %s1, 33
  %114 = vst.msk [vmem:[%s113] ss:$552 sm:$0x3] %vm112, %v111
  %s115 = scalar_lea.vmem %s1, 769
  %116 = vst.msk [vmem:[%s115] ss:$-184 sm:$0xc] %vm112, %v111
  %s117 = scalar_lea.vmem %s1, 4294965857
  %118 = vst.msk [vmem:[%s117] ss:$552 sm:$0x30] %vm112, %v111
  %s119 = scalar_lea.vmem %s1, 2241
  %120 = vst.msk [vmem:[%s119] ss:$-184 sm:$0xc0] %vm112, %v111
  %s121 = scalar_lea.vmem %s0, 24
  %v122 = vld.sshfl [vmem:[%s121] sm:$0xff pattern:$0x74563012]
  %123 = vrot.lane.b32.xlu0 %v122, 120
  %v124 = vpop.permute.xlu0 %123
  %vm125 = vcmask 64512
  %s126 = scalar_lea.vmem %s1, 417
  %127 = vst.msk [vmem:[%s126] ss:$-184 sm:$0x7] %vm125, %v124
  %s128 = scalar_lea.vmem %s1, 4294966241
  %129 = vst.msk [vmem:[%s128] ss:$552 sm:$0x18] %vm125, %v124
  %s130 = scalar_lea.vmem %s1, 1889
  %131 = vst.msk [vmem:[%s130] ss:$-184 sm:$0x60] %vm125, %v124
  %s132 = scalar_lea.vmem %s1, 1330
  %133 = vst.msk [vmem:[%s132] sm:$0x80] %vm125, %v124
  %s134 = scalar_lea.vmem %s0, 32
  %v135 = vld.sshfl [vmem:[%s134] sm:$0xff pattern:$0x56741230]
  %136 = vrot.lane.b32.xlu0 %v135, 120
  %v137 = vpop.permute.xlu0 %136
  %vm138 = vcmask 64512
  %s139 = scalar_lea.vmem %s1, 65
  %140 = vst.msk [vmem:[%s139] ss:$552 sm:$0x3] %vm138, %v137
  %s141 = scalar_lea.vmem %s1, 801
  %142 = vst.msk [vmem:[%s141] ss:$-184 sm:$0xc] %vm138, %v137
  %s143 = scalar_lea.vmem %s1, 4294965889
  %144 = vst.msk [vmem:[%s143] ss:$552 sm:$0x30] %vm138, %v137
  %s145 = scalar_lea.vmem %s1, 2273
  %146 = vst.msk [vmem:[%s145] ss:$-184 sm:$0xc0] %vm138, %v137
  %s147 = scalar_lea.vmem %s0, 40
  %v148 = vld.sshfl [vmem:[%s147] sm:$0xff pattern:$0x74563012]
  %149 = vrot.lane.b32.xlu0 %v148, 120
  %v150 = vpop.permute.xlu0 %149
  %vm151 = vcmask 64512
  %s152 = scalar_lea.vmem %s1, 449
  %153 = vst.msk [vmem:[%s152] ss:$-184 sm:$0x7] %vm151, %v150
  %s154 = scalar_lea.vmem %s1, 4294966273
  %155 = vst.msk [vmem:[%s154] ss:$552 sm:$0x18] %vm151, %v150
  %s156 = scalar_lea.vmem %s1, 1921
  %157 = vst.msk [vmem:[%s156] ss:$-184 sm:$0x60] %vm151, %v150
  %s158 = scalar_lea.vmem %s1, 1362
  %159 = vst.msk [vmem:[%s158] sm:$0x80] %vm151, %v150
  %s160 = scalar_lea.vmem %s0, 48
  %v161 = vld.sshfl [vmem:[%s160] sm:$0xff pattern:$0x56741230]
  %162 = vrot.lane.b32.xlu0 %v161, 120
  %v163 = vpop.permute.xlu0 %162
  %vm164 = vcmask 64512
  %s165 = scalar_lea.vmem %s1, 97
  %166 = vst.msk [vmem:[%s165] ss:$552 sm:$0x3] %vm164, %v163
  %s167 = scalar_lea.vmem %s1, 833
  %168 = vst.msk [vmem:[%s167] ss:$-184 sm:$0xc] %vm164, %v163
  %s169 = scalar_lea.vmem %s1, 4294965921
  %170 = vst.msk [vmem:[%s169] ss:$552 sm:$0x30] %vm164, %v163
  %s171 = scalar_lea.vmem %s1, 2305
  %172 = vst.msk [vmem:[%s171] ss:$-184 sm:$0xc0] %vm164, %v163
  %s173 = scalar_lea.vmem %s0, 56
  %v174 = vld.sshfl [vmem:[%s173] sm:$0xff pattern:$0x74563012]
  %175 = vrot.lane.b32.xlu0 %v174, 120
  %v176 = vpop.permute.xlu0 %175
  %vm177 = vcmask 64512
  %s178 = scalar_lea.vmem %s1, 481
  %179 = vst.msk [vmem:[%s178] ss:$-184 sm:$0x7] %vm177, %v176
  %s180 = scalar_lea.vmem %s1, 4294966305
  %181 = vst.msk [vmem:[%s180] ss:$552 sm:$0x18] %vm177, %v176
  %s182 = scalar_lea.vmem %s1, 1953
  %183 = vst.msk [vmem:[%s182] ss:$-184 sm:$0x60] %vm177, %v176
  %s184 = scalar_lea.vmem %s1, 1394
  %185 = vst.msk [vmem:[%s184] sm:$0x80] %vm177, %v176
  %s186 = scalar_lea.vmem %s0, 64
  %v187 = vld.sshfl [vmem:[%s186] sm:$0xff pattern:$0x56741230]
  %188 = vrot.lane.b32.xlu0 %v187, 120
  %v189 = vpop.permute.xlu0 %188
  %vm190 = vcmask 64512
  %s191 = scalar_lea.vmem %s1, 129
  %192 = vst.msk [vmem:[%s191] ss:$552 sm:$0x3] %vm190, %v189
  %s193 = scalar_lea.vmem %s1, 865
  %194 = vst.msk [vmem:[%s193] ss:$-184 sm:$0xc] %vm190, %v189
  %s195 = scalar_lea.vmem %s1, 4294965953
  %196 = vst.msk [vmem:[%s195] ss:$552 sm:$0x30] %vm190, %v189
  %s197 = scalar_lea.vmem %s1, 2337
  %198 = vst.msk [vmem:[%s197] ss:$-184 sm:$0xc0] %vm190, %v189
  %s199 = scalar_lea.vmem %s0, 72
  %v200 = vld.sshfl [vmem:[%s199] sm:$0xff pattern:$0x74563012]
  %201 = vrot.lane.b32.xlu0 %v200, 120
  %v202 = vpop.permute.xlu0 %201
  %vm203 = vcmask 64512
  %s204 = scalar_lea.vmem %s1, 513
  %205 = vst.msk [vmem:[%s204] ss:$-184 sm:$0x7] %vm203, %v202
  %s206 = scalar_lea.vmem %s1, 4294966337
  %207 = vst.msk [vmem:[%s206] ss:$552 sm:$0x18] %vm203, %v202
  %s208 = scalar_lea.vmem %s1, 1985
  %209 = vst.msk [vmem:[%s208] ss:$-184 sm:$0x60] %vm203, %v202
  %s210 = scalar_lea.vmem %s1, 1426
  %211 = vst.msk [vmem:[%s210] sm:$0x80] %vm203, %v202
  %s212 = scalar_lea.vmem %s0, 80
  %v213 = vld.sshfl [vmem:[%s212] sm:$0xff pattern:$0x56741230]
  %214 = vrot.lane.b32.xlu0 %v213, 120
  %v215 = vpop.permute.xlu0 %214
  %vm216 = vcmask 64512
  %s217 = scalar_lea.vmem %s1, 161
  %218 = vst.msk [vmem:[%s217] ss:$552 sm:$0x3] %vm216, %v215
  %s219 = scalar_lea.vmem %s1, 897
  %220 = vst.msk [vmem:[%s219] ss:$-184 sm:$0xc] %vm216, %v215
  %s221 = scalar_lea.vmem %s1, 4294965985
  %222 = vst.msk [vmem:[%s221] ss:$552 sm:$0x30] %vm216, %v215
  %s223 = scalar_lea.vmem %s1, 2369
  %224 = vst.msk [vmem:[%s223] ss:$-184 sm:$0xc0] %vm216, %v215
  %s225 = scalar_lea.vmem %s0, 88
  %v226 = vld.sshfl [vmem:[%s225] sm:$0xff pattern:$0x74563012]
  %227 = vrot.lane.b32.xlu0 %v226, 120
  %v228 = vpop.permute.xlu0 %227
  %vm229 = vcmask 64512
  %s230 = scalar_lea.vmem %s1, 545
  %231 = vst.msk [vmem:[%s230] ss:$-184 sm:$0x7] %vm229, %v228
  %s232 = scalar_lea.vmem %s1, 4294966369
  %233 = vst.msk [vmem:[%s232] ss:$552 sm:$0x18] %vm229, %v228
  %s234 = scalar_lea.vmem %s1, 2017
  %235 = vst.msk [vmem:[%s234] ss:$-184 sm:$0x60] %vm229, %v228
  %s236 = scalar_lea.vmem %s1, 1458
  %237 = vst.msk [vmem:[%s236] sm:$0x80] %vm229, %v228
  %v238 = vld.sshfl [vmem:[%s0] sm:$0xff pattern:$0x56741230]
  %239 = vrot.lane.b32.xlu0 %v238, 112
  %v240 = vpop.permute.xlu0 %239
  %vm241 = vcmask 64512
  %s242 = scalar_lea.vmem %s1, 2
  %243 = vst.msk [vmem:[%s242] ss:$552 sm:$0x3] %vm241, %v240
  %s244 = scalar_lea.vmem %s1, 738
  %245 = vst.msk [vmem:[%s244] ss:$-184 sm:$0xc] %vm241, %v240
  %s246 = scalar_lea.vmem %s1, 4294965826
  %247 = vst.msk [vmem:[%s246] ss:$552 sm:$0x30] %vm241, %v240
  %s248 = scalar_lea.vmem %s1, 2210
  %249 = vst.msk [vmem:[%s248] ss:$-184 sm:$0xc0] %vm241, %v240
  %s250 = scalar_lea.vmem %s0, 8
  %v251 = vld.sshfl [vmem:[%s250] sm:$0xff pattern:$0x74563012]
  %252 = vrot.lane.b32.xlu0 %v251, 112
  %v253 = vpop.permute.xlu0 %252
  %vm254 = vcmask 64512
  %s255 = scalar_lea.vmem %s1, 386
  %256 = vst.msk [vmem:[%s255] ss:$-184 sm:$0x7] %vm254, %v253
  %s257 = scalar_lea.vmem %s1, 4294966210
  %258 = vst.msk [vmem:[%s257] ss:$552 sm:$0x18] %vm254, %v253
  %s259 = scalar_lea.vmem %s1, 1858
  %260 = vst.msk [vmem:[%s259] ss:$-184 sm:$0x60] %vm254, %v253
  %s261 = scalar_lea.vmem %s1, 1299
  %262 = vst.msk [vmem:[%s261] sm:$0x80] %vm254, %v253
  %s263 = scalar_lea.vmem %s0, 16
  %v264 = vld.sshfl [vmem:[%s263] sm:$0xff pattern:$0x56741230]
  %265 = vrot.lane.b32.xlu0 %v264, 112
  %v266 = vpop.permute.xlu0 %265
  %vm267 = vcmask 64512
  %s268 = scalar_lea.vmem %s1, 34
  %269 = vst.msk [vmem:[%s268] ss:$552 sm:$0x3] %vm267, %v266
  %s270 = scalar_lea.vmem %s1, 770
  %271 = vst.msk [vmem:[%s270] ss:$-184 sm:$0xc] %vm267, %v266
  %s272 = scalar_lea.vmem %s1, 4294965858
  %273 = vst.msk [vmem:[%s272] ss:$552 sm:$0x30] %vm267, %v266
  %s274 = scalar_lea.vmem %s1, 2242
  %275 = vst.msk [vmem:[%s274] ss:$-184 sm:$0xc0] %vm267, %v266
  %s276 = scalar_lea.vmem %s0, 24
  %v277 = vld.sshfl [vmem:[%s276] sm:$0xff pattern:$0x74563012]
  %278 = vrot.lane.b32.xlu0 %v277, 112
  %v279 = vpop.permute.xlu0 %278
  %vm280 = vcmask 64512
  %s281 = scalar_lea.vmem %s1, 418
  %282 = vst.msk [vmem:[%s281] ss:$-184 sm:$0x7] %vm280, %v279
  %s283 = scalar_lea.vmem %s1, 4294966242
  %284 = vst.msk [vmem:[%s283] ss:$552 sm:$0x18] %vm280, %v279
  %s285 = scalar_lea.vmem %s1, 1890
  %286 = vst.msk [vmem:[%s285] ss:$-184 sm:$0x60] %vm280, %v279
  %s287 = scalar_lea.vmem %s1, 1331
  %288 = vst.msk [vmem:[%s287] sm:$0x80] %vm280, %v279
  %s289 = scalar_lea.vmem %s0, 32
  %v290 = vld.sshfl [vmem:[%s289] sm:$0xff pattern:$0x56741230]
  %291 = vrot.lane.b32.xlu0 %v290, 112
  %v292 = vpop.permute.xlu0 %291
  %vm293 = vcmask 64512
  %s294 = scalar_lea.vmem %s1, 66
  %295 = vst.msk [vmem:[%s294] ss:$552 sm:$0x3] %vm293, %v292
  %s296 = scalar_lea.vmem %s1, 802
  %297 = vst.msk [vmem:[%s296] ss:$-184 sm:$0xc] %vm293, %v292
  %s298 = scalar_lea.vmem %s1, 4294965890
  %299 = vst.msk [vmem:[%s298] ss:$552 sm:$0x30] %vm293, %v292
  %s300 = scalar_lea.vmem %s1, 2274
  %301 = vst.msk [vmem:[%s300] ss:$-184 sm:$0xc0] %vm293, %v292
  %s302 = scalar_lea.vmem %s0, 40
  %v303 = vld.sshfl [vmem:[%s302] sm:$0xff pattern:$0x74563012]
  %304 = vrot.lane.b32.xlu0 %v303, 112
  %v305 = vpop.permute.xlu0 %304
  %vm306 = vcmask 64512
  %s307 = scalar_lea.vmem %s1, 450
  %308 = vst.msk [vmem:[%s307] ss:$-184 sm:$0x7] %vm306, %v305
  %s309 = scalar_lea.vmem %s1, 4294966274
  %310 = vst.msk [vmem:[%s309] ss:$552 sm:$0x18] %vm306, %v305
  %s311 = scalar_lea.vmem %s1, 1922
  %312 = vst.msk [vmem:[%s311] ss:$-184 sm:$0x60] %vm306, %v305
  %s313 = scalar_lea.vmem %s1, 1363
  %314 = vst.msk [vmem:[%s313] sm:$0x80] %vm306, %v305
  %s315 = scalar_lea.vmem %s0, 48
  %v316 = vld.sshfl [vmem:[%s315] sm:$0xff pattern:$0x56741230]
  %317 = vrot.lane.b32.xlu0 %v316, 112
  %v318 = vpop.permute.xlu0 %317
  %vm319 = vcmask 64512
  %s320 = scalar_lea.vmem %s1, 98
  %321 = vst.msk [vmem:[%s320] ss:$552 sm:$0x3] %vm319, %v318
  %s322 = scalar_lea.vmem %s1, 834
  %323 = vst.msk [vmem:[%s322] ss:$-184 sm:$0xc] %vm319, %v318
  %s324 = scalar_lea.vmem %s1, 4294965922
  %325 = vst.msk [vmem:[%s324] ss:$552 sm:$0x30] %vm319, %v318
  %s326 = scalar_lea.vmem %s1, 2306
  %327 = vst.msk [vmem:[%s326] ss:$-184 sm:$0xc0] %vm319, %v318
  %s328 = scalar_lea.vmem %s0, 56
  %v329 = vld.sshfl [vmem:[%s328] sm:$0xff pattern:$0x74563012]
  %330 = vrot.lane.b32.xlu0 %v329, 112
  %v331 = vpop.permute.xlu0 %330
  %vm332 = vcmask 64512
  %s333 = scalar_lea.vmem %s1, 482
  %334 = vst.msk [vmem:[%s333] ss:$-184 sm:$0x7] %vm332, %v331
  %s335 = scalar_lea.vmem %s1, 4294966306
  %336 = vst.msk [vmem:[%s335] ss:$552 sm:$0x18] %vm332, %v331
  %s337 = scalar_lea.vmem %s1, 1954
  %338 = vst.msk [vmem:[%s337] ss:$-184 sm:$0x60] %vm332, %v331
  %s339 = scalar_lea.vmem %s1, 1395
  %340 = vst.msk [vmem:[%s339] sm:$0x80] %vm332, %v331
  %s341 = scalar_lea.vmem %s0, 64
  %v342 = vld.sshfl [vmem:[%s341] sm:$0xff pattern:$0x56741230]
  %343 = vrot.lane.b32.xlu0 %v342, 112
  %v344 = vpop.permute.xlu0 %343
  %vm345 = vcmask 64512
  %s346 = scalar_lea.vmem %s1, 130
  %347 = vst.msk [vmem:[%s346] ss:$552 sm:$0x3] %vm345, %v344
  %s348 = scalar_lea.vmem %s1, 866
  %349 = vst.msk [vmem:[%s348] ss:$-184 sm:$0xc] %vm345, %v344
  %s350 = scalar_lea.vmem %s1, 4294965954
  %351 = vst.msk [vmem:[%s350] ss:$552 sm:$0x30] %vm345, %v344
  %s352 = scalar_lea.vmem %s1, 2338
  %353 = vst.msk [vmem:[%s352] ss:$-184 sm:$0xc0] %vm345, %v344
  %s354 = scalar_lea.vmem %s0, 72
  %v355 = vld.sshfl [vmem:[%s354] sm:$0xff pattern:$0x74563012]
  %356 = vrot.lane.b32.xlu0 %v355, 112
  %v357 = vpop.permute.xlu0 %356
  %vm358 = vcmask 64512
  %s359 = scalar_lea.vmem %s1, 514
  %360 = vst.msk [vmem:[%s359] ss:$-184 sm:$0x7] %vm358, %v357
  %s361 = scalar_lea.vmem %s1, 4294966338
  %362 = vst.msk [vmem:[%s361] ss:$552 sm:$0x18] %vm358, %v357
  %s363 = scalar_lea.vmem %s1, 1986
  %364 = vst.msk [vmem:[%s363] ss:$-184 sm:$0x60] %vm358, %v357
  %s365 = scalar_lea.vmem %s1, 1427
  %366 = vst.msk [vmem:[%s365] sm:$0x80] %vm358, %v357
  %s367 = scalar_lea.vmem %s0, 80
  %v368 = vld.sshfl [vmem:[%s367] sm:$0xff pattern:$0x56741230]
  %369 = vrot.lane.b32.xlu0 %v368, 112
  %v370 = vpop.permute.xlu0 %369
  %vm371 = vcmask 64512
  %s372 = scalar_lea.vmem %s1, 162
  %373 = vst.msk [vmem:[%s372] ss:$552 sm:$0x3] %vm371, %v370
  %s374 = scalar_lea.vmem %s1, 898
  %375 = vst.msk [vmem:[%s374] ss:$-184 sm:$0xc] %vm371, %v370
  %s376 = scalar_lea.vmem %s1, 4294965986
  %377 = vst.msk [vmem:[%s376] ss:$552 sm:$0x30] %vm371, %v370
  %s378 = scalar_lea.vmem %s1, 2370
  %379 = vst.msk [vmem:[%s378] ss:$-184 sm:$0xc0] %vm371, %v370
  %s380 = scalar_lea.vmem %s0, 88
  %v381 = vld.sshfl [vmem:[%s380] sm:$0xff pattern:$0x74563012]
  %382 = vrot.lane.b32.xlu0 %v381, 112
  %v383 = vpop.permute.xlu0 %382
  %vm384 = vcmask 64512
  %s385 = scalar_lea.vmem %s1, 546
  %386 = vst.msk [vmem:[%s385] ss:$-184 sm:$0x7] %vm384, %v383
  %s387 = scalar_lea.vmem %s1, 4294966370
  %388 = vst.msk [vmem:[%s387] ss:$552 sm:$0x18] %vm384, %v383
  %s389 = scalar_lea.vmem %s1, 2018
  %390 = vst.msk [vmem:[%s389] ss:$-184 sm:$0x60] %vm384, %v383
  %s391 = scalar_lea.vmem %s1, 1459
  %392 = vst.msk [vmem:[%s391] sm:$0x80] %vm384, %v383
  %v393 = vld.sshfl [vmem:[%s0] sm:$0xff pattern:$0x56741230]
  %394 = vrot.lane.b32.xlu0 %v393, 104
  %v395 = vpop.permute.xlu0 %394
  %vm396 = vcmask 64512
  %s397 = scalar_lea.vmem %s1, 3
  %398 = vst.msk [vmem:[%s397] ss:$552 sm:$0x3] %vm396, %v395
  %s399 = scalar_lea.vmem %s1, 739
  %400 = vst.msk [vmem:[%s399] ss:$-184 sm:$0xc] %vm396, %v395
  %s401 = scalar_lea.vmem %s1, 4294965827
  %402 = vst.msk [vmem:[%s401] ss:$552 sm:$0x30] %vm396, %v395
  %s403 = scalar_lea.vmem %s1, 2211
  %404 = vst.msk [vmem:[%s403] ss:$-184 sm:$0xc0] %vm396, %v395
  %s405 = scalar_lea.vmem %s0, 8
  %v406 = vld.sshfl [vmem:[%s405] sm:$0xff pattern:$0x74563012]
  %407 = vrot.lane.b32.xlu0 %v406, 104
  %v408 = vpop.permute.xlu0 %407
  %vm409 = vcmask 64512
  %s410 = scalar_lea.vmem %s1, 387
  %411 = vst.msk [vmem:[%s410] ss:$-184 sm:$0x7] %vm409, %v408
  %s412 = scalar_lea.vmem %s1, 4294966211
  %413 = vst.msk [vmem:[%s412] ss:$552 sm:$0x18] %vm409, %v408
  %s414 = scalar_lea.vmem %s1, 1859
  %415 = vst.msk [vmem:[%s414] ss:$-184 sm:$0x60] %vm409, %v408
  %s416 = scalar_lea.vmem %s1, 1300
  %417 = vst.msk [vmem:[%s416] sm:$0x80] %vm409, %v408
  %s418 = scalar_lea.vmem %s0, 16
  %v419 = vld.sshfl [vmem:[%s418] sm:$0xff pattern:$0x56741230]
  %420 = vrot.lane.b32.xlu0 %v419, 104
  %v421 = vpop.permute.xlu0 %420
  %vm422 = vcmask 64512
  %s423 = scalar_lea.vmem %s1, 35
  %424 = vst.msk [vmem:[%s423] ss:$552 sm:$0x3] %vm422, %v421
  %s425 = scalar_lea.vmem %s1, 771
  %426 = vst.msk [vmem:[%s425] ss:$-184 sm:$0xc] %vm422, %v421
  %s427 = scalar_lea.vmem %s1, 4294965859
  %428 = vst.msk [vmem:[%s427] ss:$552 sm:$0x30] %vm422, %v421
  %s429 = scalar_lea.vmem %s1, 2243
  %430 = vst.msk [vmem:[%s429] ss:$-184 sm:$0xc0] %vm422, %v421
  %s431 = scalar_lea.vmem %s0, 24
  %v432 = vld.sshfl [vmem:[%s431] sm:$0xff pattern:$0x74563012]
  %433 = vrot.lane.b32.xlu0 %v432, 104
  %v434 = vpop.permute.xlu0 %433
  %vm435 = vcmask 64512
  %s436 = scalar_lea.vmem %s1, 419
  %437 = vst.msk [vmem:[%s436] ss:$-184 sm:$0x7] %vm435, %v434
  %s438 = scalar_lea.vmem %s1, 4294966243
  %439 = vst.msk [vmem:[%s438] ss:$552 sm:$0x18] %vm435, %v434
  %s440 = scalar_lea.vmem %s1, 1891
  %441 = vst.msk [vmem:[%s440] ss:$-184 sm:$0x60] %vm435, %v434
  %s442 = scalar_lea.vmem %s1, 1332
  %443 = vst.msk [vmem:[%s442] sm:$0x80] %vm435, %v434
  %s444 = scalar_lea.vmem %s0, 32
  %v445 = vld.sshfl [vmem:[%s444] sm:$0xff pattern:$0x56741230]
  %446 = vrot.lane.b32.xlu0 %v445, 104
  %v447 = vpop.permute.xlu0 %446
  %vm448 = vcmask 64512
  %s449 = scalar_lea.vmem %s1, 67
  %450 = vst.msk [vmem:[%s449] ss:$552 sm:$0x3] %vm448, %v447
  %s451 = scalar_lea.vmem %s1, 803
  %452 = vst.msk [vmem:[%s451] ss:$-184 sm:$0xc] %vm448, %v447
  %s453 = scalar_lea.vmem %s1, 4294965891
  %454 = vst.msk [vmem:[%s453] ss:$552 sm:$0x30] %vm448, %v447
  %s455 = scalar_lea.vmem %s1, 2275
  %456 = vst.msk [vmem:[%s455] ss:$-184 sm:$0xc0] %vm448, %v447
  %s457 = scalar_lea.vmem %s0, 40
  %v458 = vld.sshfl [vmem:[%s457] sm:$0xff pattern:$0x74563012]
  %459 = vrot.lane.b32.xlu0 %v458, 104
  %v460 = vpop.permute.xlu0 %459
  %vm461 = vcmask 64512
  %s462 = scalar_lea.vmem %s1, 451
  %463 = vst.msk [vmem:[%s462] ss:$-184 sm:$0x7] %vm461, %v460
  %s464 = scalar_lea.vmem %s1, 4294966275
  %465 = vst.msk [vmem:[%s464] ss:$552 sm:$0x18] %vm461, %v460
  %s466 = scalar_lea.vmem %s1, 1923
  %467 = vst.msk [vmem:[%s466] ss:$-184 sm:$0x60] %vm461, %v460
  %s468 = scalar_lea.vmem %s1, 1364
  %469 = vst.msk [vmem:[%s468] sm:$0x80] %vm461, %v460
  %s470 = scalar_lea.vmem %s0, 48
  %v471 = vld.sshfl [vmem:[%s470] sm:$0xff pattern:$0x56741230]
  %472 = vrot.lane.b32.xlu0 %v471, 104
  %v473 = vpop.permute.xlu0 %472
  %vm474 = vcmask 64512
  %s475 = scalar_lea.vmem %s1, 99
  %476 = vst.msk [vmem:[%s475] ss:$552 sm:$0x3] %vm474, %v473
  %s477 = scalar_lea.vmem %s1, 835
  %478 = vst.msk [vmem:[%s477] ss:$-184 sm:$0xc] %vm474, %v473
  %s479 = scalar_lea.vmem %s1, 4294965923
  %480 = vst.msk [vmem:[%s479] ss:$552 sm:$0x30] %vm474, %v473
  %s481 = scalar_lea.vmem %s1, 2307
  %482 = vst.msk [vmem:[%s481] ss:$-184 sm:$0xc0] %vm474, %v473
  %s483 = scalar_lea.vmem %s0, 56
  %v484 = vld.sshfl [vmem:[%s483] sm:$0xff pattern:$0x74563012]
  %485 = vrot.lane.b32.xlu0 %v484, 104
  %v486 = vpop.permute.xlu0 %485
  %vm487 = vcmask 64512
  %s488 = scalar_lea.vmem %s1, 483
  %489 = vst.msk [vmem:[%s488] ss:$-184 sm:$0x7] %vm487, %v486
  %s490 = scalar_lea.vmem %s1, 4294966307
  %491 = vst.msk [vmem:[%s490] ss:$552 sm:$0x18] %vm487, %v486
  %s492 = scalar_lea.vmem %s1, 1955
  %493 = vst.msk [vmem:[%s492] ss:$-184 sm:$0x60] %vm487, %v486
  %s494 = scalar_lea.vmem %s1, 1396
  %495 = vst.msk [vmem:[%s494] sm:$0x80] %vm487, %v486
  %s496 = scalar_lea.vmem %s0, 64
  %v497 = vld.sshfl [vmem:[%s496] sm:$0xff pattern:$0x56741230]
  %498 = vrot.lane.b32.xlu0 %v497, 104
  %v499 = vpop.permute.xlu0 %498
  %vm500 = vcmask 64512
  %s501 = scalar_lea.vmem %s1, 131
  %502 = vst.msk [vmem:[%s501] ss:$552 sm:$0x3] %vm500, %v499
  %s503 = scalar_lea.vmem %s1, 867
  %504 = vst.msk [vmem:[%s503] ss:$-184 sm:$0xc] %vm500, %v499
  %s505 = scalar_lea.vmem %s1, 4294965955
  %506 = vst.msk [vmem:[%s505] ss:$552 sm:$0x30] %vm500, %v499
  %s507 = scalar_lea.vmem %s1, 2339
  %508 = vst.msk [vmem:[%s507] ss:$-184 sm:$0xc0] %vm500, %v499
  %s509 = scalar_lea.vmem %s0, 72
  %v510 = vld.sshfl [vmem:[%s509] sm:$0xff pattern:$0x74563012]
  %511 = vrot.lane.b32.xlu0 %v510, 104
  %v512 = vpop.permute.xlu0 %511
  %vm513 = vcmask 64512
  %s514 = scalar_lea.vmem %s1, 515
  %515 = vst.msk [vmem:[%s514] ss:$-184 sm:$0x7] %vm513, %v512
  %s516 = scalar_lea.vmem %s1, 4294966339
  %517 = vst.msk [vmem:[%s516] ss:$552 sm:$0x18] %vm513, %v512
  %s518 = scalar_lea.vmem %s1, 1987
  %519 = vst.msk [vmem:[%s518] ss:$-184 sm:$0x60] %vm513, %v512
  %s520 = scalar_lea.vmem %s1, 1428
  %521 = vst.msk [vmem:[%s520] sm:$0x80] %vm513, %v512
  %s522 = scalar_lea.vmem %s0, 80
  %v523 = vld.sshfl [vmem:[%s522] sm:$0xff pattern:$0x56741230]
  %524 = vrot.lane.b32.xlu0 %v523, 104
  %v525 = vpop.permute.xlu0 %524
  %vm526 = vcmask 64512
  %s527 = scalar_lea.vmem %s1, 163
  %528 = vst.msk [vmem:[%s527] ss:$552 sm:$0x3] %vm526, %v525
  %s529 = scalar_lea.vmem %s1, 899
  %530 = vst.msk [vmem:[%s529] ss:$-184 sm:$0xc] %vm526, %v525
  %s531 = scalar_lea.vmem %s1, 4294965987
  %532 = vst.msk [vmem:[%s531] ss:$552 sm:$0x30] %vm526, %v525
  %s533 = scalar_lea.vmem %s1, 2371
  %534 = vst.msk [vmem:[%s533] ss:$-184 sm:$0xc0] %vm526, %v525
  %s535 = scalar_lea.vmem %s0, 88
  %v536 = vld.sshfl [vmem:[%s535] sm:$0xff pattern:$0x74563012]
  %537 = vrot.lane.b32.xlu0 %v536, 104
  %v538 = vpop.permute.xlu0 %537
  %vm539 = vcmask 64512
  %s540 = scalar_lea.vmem %s1, 547
  %541 = vst.msk [vmem:[%s540] ss:$-184 sm:$0x7] %vm539, %v538
  %s542 = scalar_lea.vmem %s1, 4294966371
  %543 = vst.msk [vmem:[%s542] ss:$552 sm:$0x18] %vm539, %v538
  %s544 = scalar_lea.vmem %s1, 2019
  %545 = vst.msk [vmem:[%s544] ss:$-184 sm:$0x60] %vm539, %v538
  %s546 = scalar_lea.vmem %s1, 1460
  %547 = vst.msk [vmem:[%s546] sm:$0x80] %vm539, %v538
  %v548 = vld.sshfl [vmem:[%s0] sm:$0xff pattern:$0x56741230]
  %549 = vrot.lane.b32.xlu0 %v548, 96
  %v550 = vpop.permute.xlu0 %549
  %vm551 = vcmask 64512
  %s552 = scalar_lea.vmem %s1, 4
  %553 = vst.msk [vmem:[%s552] ss:$552 sm:$0x3] %vm551, %v550
  %s554 = scalar_lea.vmem %s1, 740
  %555 = vst.msk [vmem:[%s554] ss:$-184 sm:$0xc] %vm551, %v550
  %s556 = scalar_lea.vmem %s1, 4294965828
  %557 = vst.msk [vmem:[%s556] ss:$552 sm:$0x30] %vm551, %v550
  %s558 = scalar_lea.vmem %s1, 2212
  %559 = vst.msk [vmem:[%s558] ss:$-184 sm:$0xc0] %vm551, %v550
  %s560 = scalar_lea.vmem %s0, 8
  %v561 = vld.sshfl [vmem:[%s560] sm:$0xff pattern:$0x74563012]
  %562 = vrot.lane.b32.xlu0 %v561, 96
  %v563 = vpop.permute.xlu0 %562
  %vm564 = vcmask 64512
  %s565 = scalar_lea.vmem %s1, 388
  %566 = vst.msk [vmem:[%s565] ss:$-184 sm:$0x7] %vm564, %v563
  %s567 = scalar_lea.vmem %s1, 4294966212
  %568 = vst.msk [vmem:[%s567] ss:$552 sm:$0x18] %vm564, %v563
  %s569 = scalar_lea.vmem %s1, 1860
  %570 = vst.msk [vmem:[%s569] ss:$-184 sm:$0x60] %vm564, %v563
  %s571 = scalar_lea.vmem %s1, 1301
  %572 = vst.msk [vmem:[%s571] sm:$0x80] %vm564, %v563
  %s573 = scalar_lea.vmem %s0, 16
  %v574 = vld.sshfl [vmem:[%s573] sm:$0xff pattern:$0x56741230]
  %575 = vrot.lane.b32.xlu0 %v574, 96
  %v576 = vpop.permute.xlu0 %575
  %vm577 = vcmask 64512
  %s578 = scalar_lea.vmem %s1, 36
  %579 = vst.msk [vmem:[%s578] ss:$552 sm:$0x3] %vm577, %v576
  %s580 = scalar_lea.vmem %s1, 772
  %581 = vst.msk [vmem:[%s580] ss:$-184 sm:$0xc] %vm577, %v576
  %s582 = scalar_lea.vmem %s1, 4294965860
  %583 = vst.msk [vmem:[%s582] ss:$552 sm:$0x30] %vm577, %v576
  %s584 = scalar_lea.vmem %s1, 2244
  %585 = vst.msk [vmem:[%s584] ss:$-184 sm:$0xc0] %vm577, %v576
  %s586 = scalar_lea.vmem %s0, 24
  %v587 = vld.sshfl [vmem:[%s586] sm:$0xff pattern:$0x74563012]
  %588 = vrot.lane.b32.xlu0 %v587, 96
  %v589 = vpop.permute.xlu0 %588
  %vm590 = vcmask 64512
  %s591 = scalar_lea.vmem %s1, 420
  %592 = vst.msk [vmem:[%s591] ss:$-184 sm:$0x7] %vm590, %v589
  %s593 = scalar_lea.vmem %s1, 4294966244
  %594 = vst.msk [vmem:[%s593] ss:$552 sm:$0x18] %vm590, %v589
  %s595 = scalar_lea.vmem %s1, 1892
  %596 = vst.msk [vmem:[%s595] ss:$-184 sm:$0x60] %vm590, %v589
  %s597 = scalar_lea.vmem %s1, 1333
  %598 = vst.msk [vmem:[%s597] sm:$0x80] %vm590, %v589
  %s599 = scalar_lea.vmem %s0, 32
  %v600 = vld.sshfl [vmem:[%s599] sm:$0xff pattern:$0x56741230]
  %601 = vrot.lane.b32.xlu0 %v600, 96
  %v602 = vpop.permute.xlu0 %601
  %vm603 = vcmask 64512
  %s604 = scalar_lea.vmem %s1, 68
  %605 = vst.msk [vmem:[%s604] ss:$552 sm:$0x3] %vm603, %v602
  %s606 = scalar_lea.vmem %s1, 804
  %607 = vst.msk [vmem:[%s606] ss:$-184 sm:$0xc] %vm603, %v602
  %s608 = scalar_lea.vmem %s1, 4294965892
  %609 = vst.msk [vmem:[%s608] ss:$552 sm:$0x30] %vm603, %v602
  %s610 = scalar_lea.vmem %s1, 2276
  %611 = vst.msk [vmem:[%s610] ss:$-184 sm:$0xc0] %vm603, %v602
  %s612 = scalar_lea.vmem %s0, 40
  %v613 = vld.sshfl [vmem:[%s612] sm:$0xff pattern:$0x74563012]
  %614 = vrot.lane.b32.xlu0 %v613, 96
  %v615 = vpop.permute.xlu0 %614
  %vm616 = vcmask 64512
  %s617 = scalar_lea.vmem %s1, 452
  %618 = vst.msk [vmem:[%s617] ss:$-184 sm:$0x7] %vm616, %v615
  %s619 = scalar_lea.vmem %s1, 4294966276
  %620 = vst.msk [vmem:[%s619] ss:$552 sm:$0x18] %vm616, %v615
  %s621 = scalar_lea.vmem %s1, 1924
  %622 = vst.msk [vmem:[%s621] ss:$-184 sm:$0x60] %vm616, %v615
  %s623 = scalar_lea.vmem %s1, 1365
  %624 = vst.msk [vmem:[%s623] sm:$0x80] %vm616, %v615
  %s625 = scalar_lea.vmem %s0, 48
  %v626 = vld.sshfl [vmem:[%s625] sm:$0xff pattern:$0x56741230]
  %627 = vrot.lane.b32.xlu0 %v626, 96
  %v628 = vpop.permute.xlu0 %627
  %vm629 = vcmask 64512
  %s630 = scalar_lea.vmem %s1, 100
  %631 = vst.msk [vmem:[%s630] ss:$552 sm:$0x3] %vm629, %v628
  %s632 = scalar_lea.vmem %s1, 836
  %633 = vst.msk [vmem:[%s632] ss:$-184 sm:$0xc] %vm629, %v628
  %s634 = scalar_lea.vmem %s1, 4294965924
  %635 = vst.msk [vmem:[%s634] ss:$552 sm:$0x30] %vm629, %v628
  %s636 = scalar_lea.vmem %s1, 2308
  %637 = vst.msk [vmem:[%s636] ss:$-184 sm:$0xc0] %vm629, %v628
  %s638 = scalar_lea.vmem %s0, 56
  %v639 = vld.sshfl [vmem:[%s638] sm:$0xff pattern:$0x74563012]
  %640 = vrot.lane.b32.xlu0 %v639, 96
  %v641 = vpop.permute.xlu0 %640
  %vm642 = vcmask 64512
  %s643 = scalar_lea.vmem %s1, 484
  %644 = vst.msk [vmem:[%s643] ss:$-184 sm:$0x7] %vm642, %v641
  %s645 = scalar_lea.vmem %s1, 4294966308
  %646 = vst.msk [vmem:[%s645] ss:$552 sm:$0x18] %vm642, %v641
  %s647 = scalar_lea.vmem %s1, 1956
  %648 = vst.msk [vmem:[%s647] ss:$-184 sm:$0x60] %vm642, %v641
  %s649 = scalar_lea.vmem %s1, 1397
  %650 = vst.msk [vmem:[%s649] sm:$0x80] %vm642, %v641
  %s651 = scalar_lea.vmem %s0, 64
  %v652 = vld.sshfl [vmem:[%s651] sm:$0xff pattern:$0x56741230]
  %653 = vrot.lane.b32.xlu0 %v652, 96
  %v654 = vpop.permute.xlu0 %653
  %vm655 = vcmask 64512
  %s656 = scalar_lea.vmem %s1, 132
  %657 = vst.msk [vmem:[%s656] ss:$552 sm:$0x3] %vm655, %v654
  %s658 = scalar_lea.vmem %s1, 868
  %659 = vst.msk [vmem:[%s658] ss:$-184 sm:$0xc] %vm655, %v654
  %s660 = scalar_lea.vmem %s1, 4294965956
  %661 = vst.msk [vmem:[%s660] ss:$552 sm:$0x30] %vm655, %v654
  %s662 = scalar_lea.vmem %s1, 2340
  %663 = vst.msk [vmem:[%s662] ss:$-184 sm:$0xc0] %vm655, %v654
  %s664 = scalar_lea.vmem %s0, 72
  %v665 = vld.sshfl [vmem:[%s664] sm:$0xff pattern:$0x74563012]
  %666 = vrot.lane.b32.xlu0 %v665, 96
  %v667 = vpop.permute.xlu0 %666
  %vm668 = vcmask 64512
  %s669 = scalar_lea.vmem %s1, 516
  %670 = vst.msk [vmem:[%s669] ss:$-184 sm:$0x7] %vm668, %v667
  %s671 = scalar_lea.vmem %s1, 4294966340
  %672 = vst.msk [vmem:[%s671] ss:$552 sm:$0x18] %vm668, %v667
  %s673 = scalar_lea.vmem %s1, 1988
  %674 = vst.msk [vmem:[%s673] ss:$-184 sm:$0x60] %vm668, %v667
  %s675 = scalar_lea.vmem %s1, 1429
  %676 = vst.msk [vmem:[%s675] sm:$0x80] %vm668, %v667
  %s677 = scalar_lea.vmem %s0, 80
  %v678 = vld.sshfl [vmem:[%s677] sm:$0xff pattern:$0x56741230]
  %679 = vrot.lane.b32.xlu0 %v678, 96
  %v680 = vpop.permute.xlu0 %679
  %vm681 = vcmask 64512
  %s682 = scalar_lea.vmem %s1, 164
  %683 = vst.msk [vmem:[%s682] ss:$552 sm:$0x3] %vm681, %v680
  %s684 = scalar_lea.vmem %s1, 900
  %685 = vst.msk [vmem:[%s684] ss:$-184 sm:$0xc] %vm681, %v680
  %s686 = scalar_lea.vmem %s1, 4294965988
  %687 = vst.msk [vmem:[%s686] ss:$552 sm:$0x30] %vm681, %v680
  %s688 = scalar_lea.vmem %s1, 2372
  %689 = vst.msk [vmem:[%s688] ss:$-184 sm:$0xc0] %vm681, %v680
  %v690 = vld.sshfl [vmem:[%s0] sm:$0xff pattern:$0x56741230]
  %691 = vrot.lane.b32.xlu0 %v690, 88
  %v692 = vpop.permute.xlu0 %691
  %vm693 = vcmask 64512
  %s694 = scalar_lea.vmem %s1, 5
  %695 = vst.msk [vmem:[%s694] ss:$552 sm:$0x3] %vm693, %v692
  %s696 = scalar_lea.vmem %s1, 741
  %697 = vst.msk [vmem:[%s696] ss:$-184 sm:$0xc] %vm693, %v692
  %s698 = scalar_lea.vmem %s1, 4294965829
  %699 = vst.msk [vmem:[%s698] ss:$552 sm:$0x30] %vm693, %v692
  %s700 = scalar_lea.vmem %s1, 2213
  %701 = vst.msk [vmem:[%s700] ss:$-184 sm:$0xc0] %vm693, %v692
  %s702 = scalar_lea.vmem %s0, 8
  %v703 = vld.sshfl [vmem:[%s702] sm:$0xff pattern:$0x74563012]
  %704 = vrot.lane.b32.xlu0 %v703, 88
  %v705 = vpop.permute.xlu0 %704
  %vm706 = vcmask 64512
  %s707 = scalar_lea.vmem %s1, 389
  %708 = vst.msk [vmem:[%s707] ss:$-184 sm:$0x7] %vm706, %v705
  %s709 = scalar_lea.vmem %s1, 4294966213
  %710 = vst.msk [vmem:[%s709] ss:$552 sm:$0x18] %vm706, %v705
  %s711 = scalar_lea.vmem %s1, 1861
  %712 = vst.msk [vmem:[%s711] ss:$-184 sm:$0x60] %vm706, %v705
  %s713 = scalar_lea.vmem %s1, 1302
  %714 = vst.msk [vmem:[%s713] sm:$0x80] %vm706, %v705
  %s715 = scalar_lea.vmem %s0, 16
  %v716 = vld.sshfl [vmem:[%s715] sm:$0xff pattern:$0x56741230]
  %717 = vrot.lane.b32.xlu0 %v716, 88
  %v718 = vpop.permute.xlu0 %717
  %vm719 = vcmask 64512
  %s720 = scalar_lea.vmem %s1, 37
  %721 = vst.msk [vmem:[%s720] ss:$552 sm:$0x3] %vm719, %v718
  %s722 = scalar_lea.vmem %s1, 773
  %723 = vst.msk [vmem:[%s722] ss:$-184 sm:$0xc] %vm719, %v718
  %s724 = scalar_lea.vmem %s1, 4294965861
  %725 = vst.msk [vmem:[%s724] ss:$552 sm:$0x30] %vm719, %v718
  %s726 = scalar_lea.vmem %s1, 2245
  %727 = vst.msk [vmem:[%s726] ss:$-184 sm:$0xc0] %vm719, %v718
  %s728 = scalar_lea.vmem %s0, 24
  %v729 = vld.sshfl [vmem:[%s728] sm:$0xff pattern:$0x74563012]
  %730 = vrot.lane.b32.xlu0 %v729, 88
  %v731 = vpop.permute.xlu0 %730
  %vm732 = vcmask 64512
  %s733 = scalar_lea.vmem %s1, 421
  %734 = vst.msk [vmem:[%s733] ss:$-184 sm:$0x7] %vm732, %v731
  %s735 = scalar_lea.vmem %s1, 4294966245
  %736 = vst.msk [vmem:[%s735] ss:$552 sm:$0x18] %vm732, %v731
  %s737 = scalar_lea.vmem %s1, 1893
  %738 = vst.msk [vmem:[%s737] ss:$-184 sm:$0x60] %vm732, %v731
  %s739 = scalar_lea.vmem %s1, 1334
  %740 = vst.msk [vmem:[%s739] sm:$0x80] %vm732, %v731
  %s741 = scalar_lea.vmem %s0, 32
  %v742 = vld.sshfl [vmem:[%s741] sm:$0xff pattern:$0x56741230]
  %743 = vrot.lane.b32.xlu0 %v742, 88
  %v744 = vpop.permute.xlu0 %743
  %vm745 = vcmask 64512
  %s746 = scalar_lea.vmem %s1, 69
  %747 = vst.msk [vmem:[%s746] ss:$552 sm:$0x3] %vm745, %v744
  %s748 = scalar_lea.vmem %s1, 805
  %749 = vst.msk [vmem:[%s748] ss:$-184 sm:$0xc] %vm745, %v744
  %s750 = scalar_lea.vmem %s1, 4294965893
  %751 = vst.msk [vmem:[%s750] ss:$552 sm:$0x30] %vm745, %v744
  %s752 = scalar_lea.vmem %s1, 2277
  %753 = vst.msk [vmem:[%s752] ss:$-184 sm:$0xc0] %vm745, %v744
  %s754 = scalar_lea.vmem %s0, 40
  %v755 = vld.sshfl [vmem:[%s754] sm:$0xff pattern:$0x74563012]
  %756 = vrot.lane.b32.xlu0 %v755, 88
  %v757 = vpop.permute.xlu0 %756
  %vm758 = vcmask 64512
  %s759 = scalar_lea.vmem %s1, 453
  %760 = vst.msk [vmem:[%s759] ss:$-184 sm:$0x7] %vm758, %v757
  %s761 = scalar_lea.vmem %s1, 4294966277
  %762 = vst.msk [vmem:[%s761] ss:$552 sm:$0x18] %vm758, %v757
  %s763 = scalar_lea.vmem %s1, 1925
  %764 = vst.msk [vmem:[%s763] ss:$-184 sm:$0x60] %vm758, %v757
  %s765 = scalar_lea.vmem %s1, 1366
  %766 = vst.msk [vmem:[%s765] sm:$0x80] %vm758, %v757
  %s767 = scalar_lea.vmem %s0, 48
  %v768 = vld.sshfl [vmem:[%s767] sm:$0xff pattern:$0x56741230]
  %769 = vrot.lane.b32.xlu0 %v768, 88
  %v770 = vpop.permute.xlu0 %769
  %vm771 = vcmask 64512
  %s772 = scalar_lea.vmem %s1, 101
  %773 = vst.msk [vmem:[%s772] ss:$552 sm:$0x3] %vm771, %v770
  %s774 = scalar_lea.vmem %s1, 837
  %775 = vst.msk [vmem:[%s774] ss:$-184 sm:$0xc] %vm771, %v770
  %s776 = scalar_lea.vmem %s1, 4294965925
  %777 = vst.msk [vmem:[%s776] ss:$552 sm:$0x30] %vm771, %v770
  %s778 = scalar_lea.vmem %s1, 2309
  %779 = vst.msk [vmem:[%s778] ss:$-184 sm:$0xc0] %vm771, %v770
  %s780 = scalar_lea.vmem %s0, 56
  %v781 = vld.sshfl [vmem:[%s780] sm:$0xff pattern:$0x74563012]
  %782 = vrot.lane.b32.xlu0 %v781, 88
  %v783 = vpop.permute.xlu0 %782
  %vm784 = vcmask 64512
  %s785 = scalar_lea.vmem %s1, 485
  %786 = vst.msk [vmem:[%s785] ss:$-184 sm:$0x7] %vm784, %v783
  %s787 = scalar_lea.vmem %s1, 4294966309
  %788 = vst.msk [vmem:[%s787] ss:$552 sm:$0x18] %vm784, %v783
  %s789 = scalar_lea.vmem %s1, 1957
  %790 = vst.msk [vmem:[%s789] ss:$-184 sm:$0x60] %vm784, %v783
  %s791 = scalar_lea.vmem %s1, 1398
  %792 = vst.msk [vmem:[%s791] sm:$0x80] %vm784, %v783
  %s793 = scalar_lea.vmem %s0, 64
  %v794 = vld.sshfl [vmem:[%s793] sm:$0xff pattern:$0x56741230]
  %795 = vrot.lane.b32.xlu0 %v794, 88
  %v796 = vpop.permute.xlu0 %795
  %vm797 = vcmask 64512
  %s798 = scalar_lea.vmem %s1, 133
  %799 = vst.msk [vmem:[%s798] ss:$552 sm:$0x3] %vm797, %v796
  %s800 = scalar_lea.vmem %s1, 869
  %801 = vst.msk [vmem:[%s800] ss:$-184 sm:$0xc] %vm797, %v796
  %s802 = scalar_lea.vmem %s1, 4294965957
  %803 = vst.msk [vmem:[%s802] ss:$552 sm:$0x30] %vm797, %v796
  %s804 = scalar_lea.vmem %s1, 2341
  %805 = vst.msk [vmem:[%s804] ss:$-184 sm:$0xc0] %vm797, %v796
  %s806 = scalar_lea.vmem %s0, 72
  %v807 = vld.sshfl [vmem:[%s806] sm:$0xff pattern:$0x74563012]
  %808 = vrot.lane.b32.xlu0 %v807, 88
  %v809 = vpop.permute.xlu0 %808
  %vm810 = vcmask 64512
  %s811 = scalar_lea.vmem %s1, 517
  %812 = vst.msk [vmem:[%s811] ss:$-184 sm:$0x7] %vm810, %v809
  %s813 = scalar_lea.vmem %s1, 4294966341
  %814 = vst.msk [vmem:[%s813] ss:$552 sm:$0x18] %vm810, %v809
  %s815 = scalar_lea.vmem %s1, 1989
  %816 = vst.msk [vmem:[%s815] ss:$-184 sm:$0x60] %vm810, %v809
  %s817 = scalar_lea.vmem %s1, 1430
  %818 = vst.msk [vmem:[%s817] sm:$0x80] %vm810, %v809
  %s819 = scalar_lea.vmem %s0, 80
  %v820 = vld.sshfl [vmem:[%s819] sm:$0xff pattern:$0x56741230]
  %821 = vrot.lane.b32.xlu0 %v820, 88
  %v822 = vpop.permute.xlu0 %821
  %vm823 = vcmask 64512
  %s824 = scalar_lea.vmem %s1, 165
  %825 = vst.msk [vmem:[%s824] ss:$552 sm:$0x3] %vm823, %v822
  %s826 = scalar_lea.vmem %s1, 901
  %827 = vst.msk [vmem:[%s826] ss:$-184 sm:$0xc] %vm823, %v822
  %s828 = scalar_lea.vmem %s1, 4294965989
  %829 = vst.msk [vmem:[%s828] ss:$552 sm:$0x30] %vm823, %v822
  %s830 = scalar_lea.vmem %s1, 2373
  %831 = vst.msk [vmem:[%s830] ss:$-184 sm:$0xc0] %vm823, %v822
  %v832 = vld.sshfl [vmem:[%s0] sm:$0xff pattern:$0x56741230]
  %833 = vrot.lane.b32.xlu0 %v832, 80
  %v834 = vpop.permute.xlu0 %833
  %vm835 = vcmask 64512
  %s836 = scalar_lea.vmem %s1, 6
  %837 = vst.msk [vmem:[%s836] ss:$552 sm:$0x3] %vm835, %v834
  %s838 = scalar_lea.vmem %s1, 742
  %839 = vst.msk [vmem:[%s838] ss:$-184 sm:$0xc] %vm835, %v834
  %s840 = scalar_lea.vmem %s1, 4294965830
  %841 = vst.msk [vmem:[%s840] ss:$552 sm:$0x30] %vm835, %v834
  %s842 = scalar_lea.vmem %s1, 2214
  %843 = vst.msk [vmem:[%s842] ss:$-184 sm:$0xc0] %vm835, %v834
  %s844 = scalar_lea.vmem %s0, 8
  %v845 = vld.sshfl [vmem:[%s844] sm:$0xff pattern:$0x74563012]
  %846 = vrot.lane.b32.xlu0 %v845, 80
  %v847 = vpop.permute.xlu0 %846
  %vm848 = vcmask 64512
  %s849 = scalar_lea.vmem %s1, 390
  %850 = vst.msk [vmem:[%s849] ss:$-184 sm:$0x7] %vm848, %v847
  %s851 = scalar_lea.vmem %s1, 4294966214
  %852 = vst.msk [vmem:[%s851] ss:$552 sm:$0x18] %vm848, %v847
  %s853 = scalar_lea.vmem %s1, 1862
  %854 = vst.msk [vmem:[%s853] ss:$-184 sm:$0x60] %vm848, %v847
  %s855 = scalar_lea.vmem %s1, 1303
  %856 = vst.msk [vmem:[%s855] sm:$0x80] %vm848, %v847
  %s857 = scalar_lea.vmem %s0, 16
  %v858 = vld.sshfl [vmem:[%s857] sm:$0xff pattern:$0x56741230]
  %859 = vrot.lane.b32.xlu0 %v858, 80
  %v860 = vpop.permute.xlu0 %859
  %vm861 = vcmask 64512
  %s862 = scalar_lea.vmem %s1, 38
  %863 = vst.msk [vmem:[%s862] ss:$552 sm:$0x3] %vm861, %v860
  %s864 = scalar_lea.vmem %s1, 774
  %865 = vst.msk [vmem:[%s864] ss:$-184 sm:$0xc] %vm861, %v860
  %s866 = scalar_lea.vmem %s1, 4294965862
  %867 = vst.msk [vmem:[%s866] ss:$552 sm:$0x30] %vm861, %v860
  %s868 = scalar_lea.vmem %s1, 2246
  %869 = vst.msk [vmem:[%s868] ss:$-184 sm:$0xc0] %vm861, %v860
  %s870 = scalar_lea.vmem %s0, 24
  %v871 = vld.sshfl [vmem:[%s870] sm:$0xff pattern:$0x74563012]
  %872 = vrot.lane.b32.xlu0 %v871, 80
  %v873 = vpop.permute.xlu0 %872
  %vm874 = vcmask 64512
  %s875 = scalar_lea.vmem %s1, 422
  %876 = vst.msk [vmem:[%s875] ss:$-184 sm:$0x7] %vm874, %v873
  %s877 = scalar_lea.vmem %s1, 4294966246
  %878 = vst.msk [vmem:[%s877] ss:$552 sm:$0x18] %vm874, %v873
  %s879 = scalar_lea.vmem %s1, 1894
  %880 = vst.msk [vmem:[%s879] ss:$-184 sm:$0x60] %vm874, %v873
  %s881 = scalar_lea.vmem %s1, 1335
  %882 = vst.msk [vmem:[%s881] sm:$0x80] %vm874, %v873
  %s883 = scalar_lea.vmem %s0, 32
  %v884 = vld.sshfl [vmem:[%s883] sm:$0xff pattern:$0x56741230]
  %885 = vrot.lane.b32.xlu0 %v884, 80
  %v886 = vpop.permute.xlu0 %885
  %vm887 = vcmask 64512
  %s888 = scalar_lea.vmem %s1, 70
  %889 = vst.msk [vmem:[%s888] ss:$552 sm:$0x3] %vm887, %v886
  %s890 = scalar_lea.vmem %s1, 806
  %891 = vst.msk [vmem:[%s890] ss:$-184 sm:$0xc] %vm887, %v886
  %s892 = scalar_lea.vmem %s1, 4294965894
  %893 = vst.msk [vmem:[%s892] ss:$552 sm:$0x30] %vm887, %v886
  %s894 = scalar_lea.vmem %s1, 2278
  %895 = vst.msk [vmem:[%s894] ss:$-184 sm:$0xc0] %vm887, %v886
  %s896 = scalar_lea.vmem %s0, 40
  %v897 = vld.sshfl [vmem:[%s896] sm:$0xff pattern:$0x74563012]
  %898 = vrot.lane.b32.xlu0 %v897, 80
  %v899 = vpop.permute.xlu0 %898
  %vm900 = vcmask 64512
  %s901 = scalar_lea.vmem %s1, 454
  %902 = vst.msk [vmem:[%s901] ss:$-184 sm:$0x7] %vm900, %v899
  %s903 = scalar_lea.vmem %s1, 4294966278
  %904 = vst.msk [vmem:[%s903] ss:$552 sm:$0x18] %vm900, %v899
  %s905 = scalar_lea.vmem %s1, 1926
  %906 = vst.msk [vmem:[%s905] ss:$-184 sm:$0x60] %vm900, %v899
  %s907 = scalar_lea.vmem %s1, 1367
  %908 = vst.msk [vmem:[%s907] sm:$0x80] %vm900, %v899
  %s909 = scalar_lea.vmem %s0, 48
  %v910 = vld.sshfl [vmem:[%s909] sm:$0xff pattern:$0x56741230]
  %911 = vrot.lane.b32.xlu0 %v910, 80
  %v912 = vpop.permute.xlu0 %911
  %vm913 = vcmask 64512
  %s914 = scalar_lea.vmem %s1, 102
  %915 = vst.msk [vmem:[%s914] ss:$552 sm:$0x3] %vm913, %v912
  %s916 = scalar_lea.vmem %s1, 838
  %917 = vst.msk [vmem:[%s916] ss:$-184 sm:$0xc] %vm913, %v912
  %s918 = scalar_lea.vmem %s1, 4294965926
  %919 = vst.msk [vmem:[%s918] ss:$552 sm:$0x30] %vm913, %v912
  %s920 = scalar_lea.vmem %s1, 2310
  %921 = vst.msk [vmem:[%s920] ss:$-184 sm:$0xc0] %vm913, %v912
  %s922 = scalar_lea.vmem %s0, 56
  %v923 = vld.sshfl [vmem:[%s922] sm:$0xff pattern:$0x74563012]
  %924 = vrot.lane.b32.xlu0 %v923, 80
  %v925 = vpop.permute.xlu0 %924
  %vm926 = vcmask 64512
  %s927 = scalar_lea.vmem %s1, 486
  %928 = vst.msk [vmem:[%s927] ss:$-184 sm:$0x7] %vm926, %v925
  %s929 = scalar_lea.vmem %s1, 4294966310
  %930 = vst.msk [vmem:[%s929] ss:$552 sm:$0x18] %vm926, %v925
  %s931 = scalar_lea.vmem %s1, 1958
  %932 = vst.msk [vmem:[%s931] ss:$-184 sm:$0x60] %vm926, %v925
  %s933 = scalar_lea.vmem %s1, 1399
  %934 = vst.msk [vmem:[%s933] sm:$0x80] %vm926, %v925
  %s935 = scalar_lea.vmem %s0, 64
  %v936 = vld.sshfl [vmem:[%s935] sm:$0xff pattern:$0x56741230]
  %937 = vrot.lane.b32.xlu0 %v936, 80
  %v938 = vpop.permute.xlu0 %937
  %vm939 = vcmask 64512
  %s940 = scalar_lea.vmem %s1, 134
  %941 = vst.msk [vmem:[%s940] ss:$552 sm:$0x3] %vm939, %v938
  %s942 = scalar_lea.vmem %s1, 870
  %943 = vst.msk [vmem:[%s942] ss:$-184 sm:$0xc] %vm939, %v938
  %s944 = scalar_lea.vmem %s1, 4294965958
  %945 = vst.msk [vmem:[%s944] ss:$552 sm:$0x30] %vm939, %v938
  %s946 = scalar_lea.vmem %s1, 2342
  %947 = vst.msk [vmem:[%s946] ss:$-184 sm:$0xc0] %vm939, %v938
  %s948 = scalar_lea.vmem %s0, 72
  %v949 = vld.sshfl [vmem:[%s948] sm:$0xff pattern:$0x74563012]
  %950 = vrot.lane.b32.xlu0 %v949, 80
  %v951 = vpop.permute.xlu0 %950
  %vm952 = vcmask 64512
  %s953 = scalar_lea.vmem %s1, 518
  %954 = vst.msk [vmem:[%s953] ss:$-184 sm:$0x7] %vm952, %v951
  %s955 = scalar_lea.vmem %s1, 4294966342
  %956 = vst.msk [vmem:[%s955] ss:$552 sm:$0x18] %vm952, %v951
  %s957 = scalar_lea.vmem %s1, 1990
  %958 = vst.msk [vmem:[%s957] ss:$-184 sm:$0x60] %vm952, %v951
  %s959 = scalar_lea.vmem %s1, 1431
  %960 = vst.msk [vmem:[%s959] sm:$0x80] %vm952, %v951
  %s961 = scalar_lea.vmem %s0, 80
  %v962 = vld.sshfl [vmem:[%s961] sm:$0xff pattern:$0x56741230]
  %963 = vrot.lane.b32.xlu0 %v962, 80
  %v964 = vpop.permute.xlu0 %963
  %vm965 = vcmask 64512
  %s966 = scalar_lea.vmem %s1, 166
  %967 = vst.msk [vmem:[%s966] ss:$552 sm:$0x3] %vm965, %v964
  %s968 = scalar_lea.vmem %s1, 902
  %969 = vst.msk [vmem:[%s968] ss:$-184 sm:$0xc] %vm965, %v964
  %s970 = scalar_lea.vmem %s1, 4294965990
  %971 = vst.msk [vmem:[%s970] ss:$552 sm:$0x30] %vm965, %v964
  %s972 = scalar_lea.vmem %s1, 2374
  %973 = vst.msk [vmem:[%s972] ss:$-184 sm:$0xc0] %vm965, %v964
  %v974 = vld.sshfl [vmem:[%s0] sm:$0xff pattern:$0x56741230]
  %975 = vrot.lane.b32.xlu0 %v974, 72
  %v976 = vpop.permute.xlu0 %975
  %vm977 = vcmask 64512
  %s978 = scalar_lea.vmem %s1, 7
  %979 = vst.msk [vmem:[%s978] ss:$552 sm:$0x3] %vm977, %v976
  %s980 = scalar_lea.vmem %s1, 743
  %981 = vst.msk [vmem:[%s980] ss:$-184 sm:$0xc] %vm977, %v976
  %s982 = scalar_lea.vmem %s1, 4294965831
  %983 = vst.msk [vmem:[%s982] ss:$552 sm:$0x30] %vm977, %v976
  %s984 = scalar_lea.vmem %s1, 2215
  %985 = vst.msk [vmem:[%s984] ss:$-184 sm:$0xc0] %vm977, %v976
  %s986 = scalar_lea.vmem %s0, 8
  %v987 = vld.sshfl [vmem:[%s986] sm:$0xff pattern:$0x74563012]
  %988 = vrot.lane.b32.xlu0 %v987, 72
  %v989 = vpop.permute.xlu0 %988
  %vm990 = vcmask 64512
  %s991 = scalar_lea.vmem %s1, 391
  %992 = vst.msk [vmem:[%s991] ss:$-184 sm:$0x7] %vm990, %v989
  %s993 = scalar_lea.vmem %s1, 4294966215
  %994 = vst.msk [vmem:[%s993] ss:$552 sm:$0x18] %vm990, %v989
  %s995 = scalar_lea.vmem %s1, 1863
  %996 = vst.msk [vmem:[%s995] ss:$-184 sm:$0x60] %vm990, %v989
  %s997 = scalar_lea.vmem %s1, 1304
  %998 = vst.msk [vmem:[%s997] sm:$0x80] %vm990, %v989
  %s999 = scalar_lea.vmem %s0, 16
  %v1000 = vld.sshfl [vmem:[%s999] sm:$0xff pattern:$0x56741230]
  %1001 = vrot.lane.b32.xlu0 %v1000, 72
  %v1002 = vpop.permute.xlu0 %1001
  %vm1003 = vcmask 64512
  %s1004 = scalar_lea.vmem %s1, 39
  %1005 = vst.msk [vmem:[%s1004] ss:$552 sm:$0x3] %vm1003, %v1002
  %s1006 = scalar_lea.vmem %s1, 775
  %1007 = vst.msk [vmem:[%s1006] ss:$-184 sm:$0xc] %vm1003, %v1002
  %s1008 = scalar_lea.vmem %s1, 4294965863
  %1009 = vst.msk [vmem:[%s1008] ss:$552 sm:$0x30] %vm1003, %v1002
  %s1010 = scalar_lea.vmem %s1, 2247
  %1011 = vst.msk [vmem:[%s1010] ss:$-184 sm:$0xc0] %vm1003, %v1002
  %s1012 = scalar_lea.vmem %s0, 24
  %v1013 = vld.sshfl [vmem:[%s1012] sm:$0xff pattern:$0x74563012]
  %1014 = vrot.lane.b32.xlu0 %v1013, 72
  %v1015 = vpop.permute.xlu0 %1014
  %vm1016 = vcmask 64512
  %s1017 = scalar_lea.vmem %s1, 423
  %1018 = vst.msk [vmem:[%s1017] ss:$-184 sm:$0x7] %vm1016, %v1015
  %s1019 = scalar_lea.vmem %s1, 4294966247
  %1020 = vst.msk [vmem:[%s1019] ss:$552 sm:$0x18] %vm1016, %v1015
  %s1021 = scalar_lea.vmem %s1, 1895
  %1022 = vst.msk [vmem:[%s1021] ss:$-184 sm:$0x60] %vm1016, %v1015
  %s1023 = scalar_lea.vmem %s1, 1336
  %1024 = vst.msk [vmem:[%s1023] sm:$0x80] %vm1016, %v1015
  %s1025 = scalar_lea.vmem %s0, 32
  %v1026 = vld.sshfl [vmem:[%s1025] sm:$0xff pattern:$0x56741230]
  %1027 = vrot.lane.b32.xlu0 %v1026, 72
  %v1028 = vpop.permute.xlu0 %1027
  %vm1029 = vcmask 64512
  %s1030 = scalar_lea.vmem %s1, 71
  %1031 = vst.msk [vmem:[%s1030] ss:$552 sm:$0x3] %vm1029, %v1028
  %s1032 = scalar_lea.vmem %s1, 807
  %1033 = vst.msk [vmem:[%s1032] ss:$-184 sm:$0xc] %vm1029, %v1028
  %s1034 = scalar_lea.vmem %s1, 4294965895
  %1035 = vst.msk [vmem:[%s1034] ss:$552 sm:$0x30] %vm1029, %v1028
  %s1036 = scalar_lea.vmem %s1, 2279
  %1037 = vst.msk [vmem:[%s1036] ss:$-184 sm:$0xc0] %vm1029, %v1028
  %s1038 = scalar_lea.vmem %s0, 40
  %v1039 = vld.sshfl [vmem:[%s1038] sm:$0xff pattern:$0x74563012]
  %1040 = vrot.lane.b32.xlu0 %v1039, 72
  %v1041 = vpop.permute.xlu0 %1040
  %vm1042 = vcmask 64512
  %s1043 = scalar_lea.vmem %s1, 455
  %1044 = vst.msk [vmem:[%s1043] ss:$-184 sm:$0x7] %vm1042, %v1041
  %s1045 = scalar_lea.vmem %s1, 4294966279
  %1046 = vst.msk [vmem:[%s1045] ss:$552 sm:$0x18] %vm1042, %v1041
  %s1047 = scalar_lea.vmem %s1, 1927
  %1048 = vst.msk [vmem:[%s1047] ss:$-184 sm:$0x60] %vm1042, %v1041
  %s1049 = scalar_lea.vmem %s1, 1368
  %1050 = vst.msk [vmem:[%s1049] sm:$0x80] %vm1042, %v1041
  %s1051 = scalar_lea.vmem %s0, 48
  %v1052 = vld.sshfl [vmem:[%s1051] sm:$0xff pattern:$0x56741230]
  %1053 = vrot.lane.b32.xlu0 %v1052, 72
  %v1054 = vpop.permute.xlu0 %1053
  %vm1055 = vcmask 64512
  %s1056 = scalar_lea.vmem %s1, 103
  %1057 = vst.msk [vmem:[%s1056] ss:$552 sm:$0x3] %vm1055, %v1054
  %s1058 = scalar_lea.vmem %s1, 839
  %1059 = vst.msk [vmem:[%s1058] ss:$-184 sm:$0xc] %vm1055, %v1054
  %s1060 = scalar_lea.vmem %s1, 4294965927
  %1061 = vst.msk [vmem:[%s1060] ss:$552 sm:$0x30] %vm1055, %v1054
  %s1062 = scalar_lea.vmem %s1, 2311
  %1063 = vst.msk [vmem:[%s1062] ss:$-184 sm:$0xc0] %vm1055, %v1054
  %s1064 = scalar_lea.vmem %s0, 56
  %v1065 = vld.sshfl [vmem:[%s1064] sm:$0xff pattern:$0x74563012]
  %1066 = vrot.lane.b32.xlu0 %v1065, 72
  %v1067 = vpop.permute.xlu0 %1066
  %vm1068 = vcmask 64512
  %s1069 = scalar_lea.vmem %s1, 487
  %1070 = vst.msk [vmem:[%s1069] ss:$-184 sm:$0x7] %vm1068, %v1067
  %s1071 = scalar_lea.vmem %s1, 4294966311
  %1072 = vst.msk [vmem:[%s1071] ss:$552 sm:$0x18] %vm1068, %v1067
  %s1073 = scalar_lea.vmem %s1, 1959
  %1074 = vst.msk [vmem:[%s1073] ss:$-184 sm:$0x60] %vm1068, %v1067
  %s1075 = scalar_lea.vmem %s1, 1400
  %1076 = vst.msk [vmem:[%s1075] sm:$0x80] %vm1068, %v1067
  %s1077 = scalar_lea.vmem %s0, 64
  %v1078 = vld.sshfl [vmem:[%s1077] sm:$0xff pattern:$0x56741230]
  %1079 = vrot.lane.b32.xlu0 %v1078, 72
  %v1080 = vpop.permute.xlu0 %1079
  %vm1081 = vcmask 64512
  %s1082 = scalar_lea.vmem %s1, 135
  %1083 = vst.msk [vmem:[%s1082] ss:$552 sm:$0x3] %vm1081, %v1080
  %s1084 = scalar_lea.vmem %s1, 871
  %1085 = vst.msk [vmem:[%s1084] ss:$-184 sm:$0xc] %vm1081, %v1080
  %s1086 = scalar_lea.vmem %s1, 4294965959
  %1087 = vst.msk [vmem:[%s1086] ss:$552 sm:$0x30] %vm1081, %v1080
  %s1088 = scalar_lea.vmem %s1, 2343
  %1089 = vst.msk [vmem:[%s1088] ss:$-184 sm:$0xc0] %vm1081, %v1080
  %s1090 = scalar_lea.vmem %s0, 72
  %v1091 = vld.sshfl [vmem:[%s1090] sm:$0xff pattern:$0x74563012]
  %1092 = vrot.lane.b32.xlu0 %v1091, 72
  %v1093 = vpop.permute.xlu0 %1092
  %vm1094 = vcmask 64512
  %s1095 = scalar_lea.vmem %s1, 519
  %1096 = vst.msk [vmem:[%s1095] ss:$-184 sm:$0x7] %vm1094, %v1093
  %s1097 = scalar_lea.vmem %s1, 4294966343
  %1098 = vst.msk [vmem:[%s1097] ss:$552 sm:$0x18] %vm1094, %v1093
  %s1099 = scalar_lea.vmem %s1, 1991
  %1100 = vst.msk [vmem:[%s1099] ss:$-184 sm:$0x60] %vm1094, %v1093
  %s1101 = scalar_lea.vmem %s1, 1432
  %1102 = vst.msk [vmem:[%s1101] sm:$0x80] %vm1094, %v1093
  %s1103 = scalar_lea.vmem %s0, 80
  %v1104 = vld.sshfl [vmem:[%s1103] sm:$0xff pattern:$0x56741230]
  %1105 = vrot.lane.b32.xlu0 %v1104, 72
  %v1106 = vpop.permute.xlu0 %1105
  %vm1107 = vcmask 64512
  %s1108 = scalar_lea.vmem %s1, 167
  %1109 = vst.msk [vmem:[%s1108] ss:$552 sm:$0x3] %vm1107, %v1106
  %s1110 = scalar_lea.vmem %s1, 903
  %1111 = vst.msk [vmem:[%s1110] ss:$-184 sm:$0xc] %vm1107, %v1106
  %s1112 = scalar_lea.vmem %s1, 4294965991
  %1113 = vst.msk [vmem:[%s1112] ss:$552 sm:$0x30] %vm1107, %v1106
  %s1114 = scalar_lea.vmem %s1, 2375
  %1115 = vst.msk [vmem:[%s1114] ss:$-184 sm:$0xc0] %vm1107, %v1106
  %v1116 = vld.sshfl [vmem:[%s0] sm:$0xff pattern:$0x67452301]
  %1117 = vrot.lane.b32.xlu0 %v1116, 64
  %v1118 = vpop.permute.xlu0 %1117
  %vm1119 = vcmask 64512
  %s1120 = scalar_lea.vmem %s1, 192
  %1121 = vst.msk [vmem:[%s1120] ss:$-184 sm:$0x3] %vm1119, %v1118
  %s1122 = scalar_lea.vmem %s1, 928
  %1123 = vst.msk [vmem:[%s1122] ss:$-184 sm:$0xc] %vm1119, %v1118
  %s1124 = scalar_lea.vmem %s1, 1664
  %1125 = vst.msk [vmem:[%s1124] ss:$-184 sm:$0x30] %vm1119, %v1118
  %s1126 = scalar_lea.vmem %s1, 2400
  %1127 = vst.msk [vmem:[%s1126] ss:$-184 sm:$0xc0] %vm1119, %v1118
  %s1128 = scalar_lea.vmem %s0, 8
  %v1129 = vld.sshfl [vmem:[%s1128] sm:$0xff pattern:$0x45670123]
  %1130 = vrot.lane.b32.xlu0 %v1129, 64
  %v1131 = vpop.permute.xlu0 %1130
  %vm1132 = vcmask 64512
  %s1133 = scalar_lea.vmem %s1, 576
  %1134 = vst.msk [vmem:[%s1133] ss:$-184 sm:$0xf] %vm1132, %v1131
  %s1135 = scalar_lea.vmem %s1, 2048
  %1136 = vst.msk [vmem:[%s1135] ss:$-184 sm:$0xf0] %vm1132, %v1131
  %s1137 = scalar_lea.vmem %s0, 16
  %v1138 = vld.sshfl [vmem:[%s1137] sm:$0xff pattern:$0x67452301]
  %1139 = vrot.lane.b32.xlu0 %v1138, 64
  %v1140 = vpop.permute.xlu0 %1139
  %vm1141 = vcmask 64512
  %s1142 = scalar_lea.vmem %s1, 224
  %1143 = vst.msk [vmem:[%s1142] ss:$-184 sm:$0x3] %vm1141, %v1140
  %s1144 = scalar_lea.vmem %s1, 960
  %1145 = vst.msk [vmem:[%s1144] ss:$-184 sm:$0xc] %vm1141, %v1140
  %s1146 = scalar_lea.vmem %s1, 1696
  %1147 = vst.msk [vmem:[%s1146] ss:$-184 sm:$0x30] %vm1141, %v1140
  %s1148 = scalar_lea.vmem %s1, 2432
  %1149 = vst.msk [vmem:[%s1148] ss:$-184 sm:$0xc0] %vm1141, %v1140
  %s1150 = scalar_lea.vmem %s0, 24
  %v1151 = vld.sshfl [vmem:[%s1150] sm:$0xff pattern:$0x45670123]
  %1152 = vrot.lane.b32.xlu0 %v1151, 64
  %v1153 = vpop.permute.xlu0 %1152
  %vm1154 = vcmask 64512
  %s1155 = scalar_lea.vmem %s1, 608
  %1156 = vst.msk [vmem:[%s1155] ss:$-184 sm:$0xf] %vm1154, %v1153
  %s1157 = scalar_lea.vmem %s1, 2080
  %1158 = vst.msk [vmem:[%s1157] ss:$-184 sm:$0xf0] %vm1154, %v1153
  %s1159 = scalar_lea.vmem %s0, 32
  %v1160 = vld.sshfl [vmem:[%s1159] sm:$0xff pattern:$0x67452301]
  %1161 = vrot.lane.b32.xlu0 %v1160, 64
  %v1162 = vpop.permute.xlu0 %1161
  %vm1163 = vcmask 64512
  %s1164 = scalar_lea.vmem %s1, 256
  %1165 = vst.msk [vmem:[%s1164] ss:$-184 sm:$0x3] %vm1163, %v1162
  %s1166 = scalar_lea.vmem %s1, 992
  %1167 = vst.msk [vmem:[%s1166] ss:$-184 sm:$0xc] %vm1163, %v1162
  %s1168 = scalar_lea.vmem %s1, 1728
  %1169 = vst.msk [vmem:[%s1168] ss:$-184 sm:$0x30] %vm1163, %v1162
  %s1170 = scalar_lea.vmem %s1, 2464
  %1171 = vst.msk [vmem:[%s1170] ss:$-184 sm:$0xc0] %vm1163, %v1162
  %s1172 = scalar_lea.vmem %s0, 40
  %v1173 = vld.sshfl [vmem:[%s1172] sm:$0xff pattern:$0x45670123]
  %1174 = vrot.lane.b32.xlu0 %v1173, 64
  %v1175 = vpop.permute.xlu0 %1174
  %vm1176 = vcmask 64512
  %s1177 = scalar_lea.vmem %s1, 640
  %1178 = vst.msk [vmem:[%s1177] ss:$-184 sm:$0xf] %vm1176, %v1175
  %s1179 = scalar_lea.vmem %s1, 2112
  %1180 = vst.msk [vmem:[%s1179] ss:$-184 sm:$0xf0] %vm1176, %v1175
  %s1181 = scalar_lea.vmem %s0, 48
  %v1182 = vld.sshfl [vmem:[%s1181] sm:$0xff pattern:$0x67452301]
  %1183 = vrot.lane.b32.xlu0 %v1182, 64
  %v1184 = vpop.permute.xlu0 %1183
  %vm1185 = vcmask 64512
  %s1186 = scalar_lea.vmem %s1, 288
  %1187 = vst.msk [vmem:[%s1186] ss:$-184 sm:$0x3] %vm1185, %v1184
  %s1188 = scalar_lea.vmem %s1, 1024
  %1189 = vst.msk [vmem:[%s1188] ss:$-184 sm:$0xc] %vm1185, %v1184
  %s1190 = scalar_lea.vmem %s1, 1760
  %1191 = vst.msk [vmem:[%s1190] ss:$-184 sm:$0x30] %vm1185, %v1184
  %s1192 = scalar_lea.vmem %s1, 2496
  %1193 = vst.msk [vmem:[%s1192] ss:$-184 sm:$0xc0] %vm1185, %v1184
  %s1194 = scalar_lea.vmem %s0, 56
  %v1195 = vld.sshfl [vmem:[%s1194] sm:$0xff pattern:$0x45670123]
  %1196 = vrot.lane.b32.xlu0 %v1195, 64
  %v1197 = vpop.permute.xlu0 %1196
  %vm1198 = vcmask 64512
  %s1199 = scalar_lea.vmem %s1, 672
  %1200 = vst.msk [vmem:[%s1199] ss:$-184 sm:$0xf] %vm1198, %v1197
  %s1201 = scalar_lea.vmem %s1, 2144
  %1202 = vst.msk [vmem:[%s1201] ss:$-184 sm:$0xf0] %vm1198, %v1197
  %s1203 = scalar_lea.vmem %s0, 64
  %v1204 = vld.sshfl [vmem:[%s1203] sm:$0xff pattern:$0x67452301]
  %1205 = vrot.lane.b32.xlu0 %v1204, 64
  %v1206 = vpop.permute.xlu0 %1205
  %vm1207 = vcmask 64512
  %s1208 = scalar_lea.vmem %s1, 320
  %1209 = vst.msk [vmem:[%s1208] ss:$-184 sm:$0x3] %vm1207, %v1206
  %s1210 = scalar_lea.vmem %s1, 1056
  %1211 = vst.msk [vmem:[%s1210] ss:$-184 sm:$0xc] %vm1207, %v1206
  %s1212 = scalar_lea.vmem %s1, 1792
  %1213 = vst.msk [vmem:[%s1212] ss:$-184 sm:$0x30] %vm1207, %v1206
  %s1214 = scalar_lea.vmem %s1, 2528
  %1215 = vst.msk [vmem:[%s1214] ss:$-184 sm:$0xc0] %vm1207, %v1206
  %s1216 = scalar_lea.vmem %s0, 72
  %v1217 = vld.sshfl [vmem:[%s1216] sm:$0xff pattern:$0x45670123]
  %1218 = vrot.lane.b32.xlu0 %v1217, 64
  %v1219 = vpop.permute.xlu0 %1218
  %vm1220 = vcmask 64512
  %s1221 = scalar_lea.vmem %s1, 704
  %1222 = vst.msk [vmem:[%s1221] ss:$-184 sm:$0xf] %vm1220, %v1219
  %s1223 = scalar_lea.vmem %s1, 2176
  %1224 = vst.msk [vmem:[%s1223] ss:$-184 sm:$0xf0] %vm1220, %v1219
  %s1225 = scalar_lea.vmem %s0, 80
  %v1226 = vld.sshfl [vmem:[%s1225] sm:$0xff pattern:$0x67452301]
  %1227 = vrot.lane.b32.xlu0 %v1226, 64
  %v1228 = vpop.permute.xlu0 %1227
  %vm1229 = vcmask 64512
  %s1230 = scalar_lea.vmem %s1, 352
  %1231 = vst.msk [vmem:[%s1230] ss:$-184 sm:$0x3] %vm1229, %v1228
  %s1232 = scalar_lea.vmem %s1, 1088
  %1233 = vst.msk [vmem:[%s1232] ss:$-184 sm:$0xc] %vm1229, %v1228
  %s1234 = scalar_lea.vmem %s1, 1824
  %1235 = vst.msk [vmem:[%s1234] ss:$-184 sm:$0x30] %vm1229, %v1228
  %s1236 = scalar_lea.vmem %s1, 2560
  %1237 = vst.msk [vmem:[%s1236] ss:$-184 sm:$0xc0] %vm1229, %v1228
  %v1238 = vld.sshfl [vmem:[%s0] sm:$0xff pattern:$0x67452301]
  %1239 = vrot.lane.b32.xlu0 %v1238, 56
  %v1240 = vpop.permute.xlu0 %1239
  %vm1241 = vcmask 64512
  %s1242 = scalar_lea.vmem %s1, 193
  %1243 = vst.msk [vmem:[%s1242] ss:$-184 sm:$0x3] %vm1241, %v1240
  %s1244 = scalar_lea.vmem %s1, 929
  %1245 = vst.msk [vmem:[%s1244] ss:$-184 sm:$0xc] %vm1241, %v1240
  %s1246 = scalar_lea.vmem %s1, 1665
  %1247 = vst.msk [vmem:[%s1246] ss:$-184 sm:$0x30] %vm1241, %v1240
  %s1248 = scalar_lea.vmem %s1, 2401
  %1249 = vst.msk [vmem:[%s1248] ss:$-184 sm:$0xc0] %vm1241, %v1240
  %s1250 = scalar_lea.vmem %s0, 8
  %v1251 = vld.sshfl [vmem:[%s1250] sm:$0xff pattern:$0x45670123]
  %1252 = vrot.lane.b32.xlu0 %v1251, 56
  %v1253 = vpop.permute.xlu0 %1252
  %vm1254 = vcmask 64512
  %s1255 = scalar_lea.vmem %s1, 577
  %1256 = vst.msk [vmem:[%s1255] ss:$-184 sm:$0xf] %vm1254, %v1253
  %s1257 = scalar_lea.vmem %s1, 2049
  %1258 = vst.msk [vmem:[%s1257] ss:$-184 sm:$0xf0] %vm1254, %v1253
  %s1259 = scalar_lea.vmem %s0, 16
  %v1260 = vld.sshfl [vmem:[%s1259] sm:$0xff pattern:$0x67452301]
  %1261 = vrot.lane.b32.xlu0 %v1260, 56
  %v1262 = vpop.permute.xlu0 %1261
  %vm1263 = vcmask 64512
  %s1264 = scalar_lea.vmem %s1, 225
  %1265 = vst.msk [vmem:[%s1264] ss:$-184 sm:$0x3] %vm1263, %v1262
  %s1266 = scalar_lea.vmem %s1, 961
  %1267 = vst.msk [vmem:[%s1266] ss:$-184 sm:$0xc] %vm1263, %v1262
  %s1268 = scalar_lea.vmem %s1, 1697
  %1269 = vst.msk [vmem:[%s1268] ss:$-184 sm:$0x30] %vm1263, %v1262
  %s1270 = scalar_lea.vmem %s1, 2433
  %1271 = vst.msk [vmem:[%s1270] ss:$-184 sm:$0xc0] %vm1263, %v1262
  %s1272 = scalar_lea.vmem %s0, 24
  %v1273 = vld.sshfl [vmem:[%s1272] sm:$0xff pattern:$0x45670123]
  %1274 = vrot.lane.b32.xlu0 %v1273, 56
  %v1275 = vpop.permute.xlu0 %1274
  %vm1276 = vcmask 64512
  %s1277 = scalar_lea.vmem %s1, 609
  %1278 = vst.msk [vmem:[%s1277] ss:$-184 sm:$0xf] %vm1276, %v1275
  %s1279 = scalar_lea.vmem %s1, 2081
  %1280 = vst.msk [vmem:[%s1279] ss:$-184 sm:$0xf0] %vm1276, %v1275
  %s1281 = scalar_lea.vmem %s0, 32
  %v1282 = vld.sshfl [vmem:[%s1281] sm:$0xff pattern:$0x67452301]
  %1283 = vrot.lane.b32.xlu0 %v1282, 56
  %v1284 = vpop.permute.xlu0 %1283
  %vm1285 = vcmask 64512
  %s1286 = scalar_lea.vmem %s1, 257
  %1287 = vst.msk [vmem:[%s1286] ss:$-184 sm:$0x3] %vm1285, %v1284
  %s1288 = scalar_lea.vmem %s1, 993
  %1289 = vst.msk [vmem:[%s1288] ss:$-184 sm:$0xc] %vm1285, %v1284
  %s1290 = scalar_lea.vmem %s1, 1729
  %1291 = vst.msk [vmem:[%s1290] ss:$-184 sm:$0x30] %vm1285, %v1284
  %s1292 = scalar_lea.vmem %s1, 2465
  %1293 = vst.msk [vmem:[%s1292] ss:$-184 sm:$0xc0] %vm1285, %v1284
  %s1294 = scalar_lea.vmem %s0, 40
  %v1295 = vld.sshfl [vmem:[%s1294] sm:$0xff pattern:$0x45670123]
  %1296 = vrot.lane.b32.xlu0 %v1295, 56
  %v1297 = vpop.permute.xlu0 %1296
  %vm1298 = vcmask 64512
  %s1299 = scalar_lea.vmem %s1, 641
  %1300 = vst.msk [vmem:[%s1299] ss:$-184 sm:$0xf] %vm1298, %v1297
  %s1301 = scalar_lea.vmem %s1, 2113
  %1302 = vst.msk [vmem:[%s1301] ss:$-184 sm:$0xf0] %vm1298, %v1297
  %s1303 = scalar_lea.vmem %s0, 48
  %v1304 = vld.sshfl [vmem:[%s1303] sm:$0xff pattern:$0x67452301]
  %1305 = vrot.lane.b32.xlu0 %v1304, 56
  %v1306 = vpop.permute.xlu0 %1305
  %vm1307 = vcmask 64512
  %s1308 = scalar_lea.vmem %s1, 289
  %1309 = vst.msk [vmem:[%s1308] ss:$-184 sm:$0x3] %vm1307, %v1306
  %s1310 = scalar_lea.vmem %s1, 1025
  %1311 = vst.msk [vmem:[%s1310] ss:$-184 sm:$0xc] %vm1307, %v1306
  %s1312 = scalar_lea.vmem %s1, 1761
  %1313 = vst.msk [vmem:[%s1312] ss:$-184 sm:$0x30] %vm1307, %v1306
  %s1314 = scalar_lea.vmem %s1, 2497
  %1315 = vst.msk [vmem:[%s1314] ss:$-184 sm:$0xc0] %vm1307, %v1306
  %s1316 = scalar_lea.vmem %s0, 56
  %v1317 = vld.sshfl [vmem:[%s1316] sm:$0xff pattern:$0x45670123]
  %1318 = vrot.lane.b32.xlu0 %v1317, 56
  %v1319 = vpop.permute.xlu0 %1318
  %vm1320 = vcmask 64512
  %s1321 = scalar_lea.vmem %s1, 673
  %1322 = vst.msk [vmem:[%s1321] ss:$-184 sm:$0xf] %vm1320, %v1319
  %s1323 = scalar_lea.vmem %s1, 2145
  %1324 = vst.msk [vmem:[%s1323] ss:$-184 sm:$0xf0] %vm1320, %v1319
  %s1325 = scalar_lea.vmem %s0, 64
  %v1326 = vld.sshfl [vmem:[%s1325] sm:$0xff pattern:$0x67452301]
  %1327 = vrot.lane.b32.xlu0 %v1326, 56
  %v1328 = vpop.permute.xlu0 %1327
  %vm1329 = vcmask 64512
  %s1330 = scalar_lea.vmem %s1, 321
  %1331 = vst.msk [vmem:[%s1330] ss:$-184 sm:$0x3] %vm1329, %v1328
  %s1332 = scalar_lea.vmem %s1, 1057
  %1333 = vst.msk [vmem:[%s1332] ss:$-184 sm:$0xc] %vm1329, %v1328
  %s1334 = scalar_lea.vmem %s1, 1793
  %1335 = vst.msk [vmem:[%s1334] ss:$-184 sm:$0x30] %vm1329, %v1328
  %s1336 = scalar_lea.vmem %s1, 2529
  %1337 = vst.msk [vmem:[%s1336] ss:$-184 sm:$0xc0] %vm1329, %v1328
  %s1338 = scalar_lea.vmem %s0, 72
  %v1339 = vld.sshfl [vmem:[%s1338] sm:$0xff pattern:$0x45670123]
  %1340 = vrot.lane.b32.xlu0 %v1339, 56
  %v1341 = vpop.permute.xlu0 %1340
  %vm1342 = vcmask 64512
  %s1343 = scalar_lea.vmem %s1, 705
  %1344 = vst.msk [vmem:[%s1343] ss:$-184 sm:$0xf] %vm1342, %v1341
  %s1345 = scalar_lea.vmem %s1, 2177
  %1346 = vst.msk [vmem:[%s1345] ss:$-184 sm:$0xf0] %vm1342, %v1341
  %s1347 = scalar_lea.vmem %s0, 80
  %v1348 = vld.sshfl [vmem:[%s1347] sm:$0xff pattern:$0x67452301]
  %1349 = vrot.lane.b32.xlu0 %v1348, 56
  %v1350 = vpop.permute.xlu0 %1349
  %vm1351 = vcmask 64512
  %s1352 = scalar_lea.vmem %s1, 353
  %1353 = vst.msk [vmem:[%s1352] ss:$-184 sm:$0x3] %vm1351, %v1350
  %s1354 = scalar_lea.vmem %s1, 1089
  %1355 = vst.msk [vmem:[%s1354] ss:$-184 sm:$0xc] %vm1351, %v1350
  %s1356 = scalar_lea.vmem %s1, 1825
  %1357 = vst.msk [vmem:[%s1356] ss:$-184 sm:$0x30] %vm1351, %v1350
  %s1358 = scalar_lea.vmem %s1, 2561
  %1359 = vst.msk [vmem:[%s1358] ss:$-184 sm:$0xc0] %vm1351, %v1350
  %v1360 = vld.sshfl [vmem:[%s0] sm:$0xff pattern:$0x67452301]
  %1361 = vrot.lane.b32.xlu0 %v1360, 48
  %v1362 = vpop.permute.xlu0 %1361
  %vm1363 = vcmask 64512
  %s1364 = scalar_lea.vmem %s1, 194
  %1365 = vst.msk [vmem:[%s1364] ss:$-184 sm:$0x3] %vm1363, %v1362
  %s1366 = scalar_lea.vmem %s1, 930
  %1367 = vst.msk [vmem:[%s1366] ss:$-184 sm:$0xc] %vm1363, %v1362
  %s1368 = scalar_lea.vmem %s1, 1666
  %1369 = vst.msk [vmem:[%s1368] ss:$-184 sm:$0x30] %vm1363, %v1362
  %s1370 = scalar_lea.vmem %s1, 2402
  %1371 = vst.msk [vmem:[%s1370] ss:$-184 sm:$0xc0] %vm1363, %v1362
  %s1372 = scalar_lea.vmem %s0, 8
  %v1373 = vld.sshfl [vmem:[%s1372] sm:$0xff pattern:$0x45670123]
  %1374 = vrot.lane.b32.xlu0 %v1373, 48
  %v1375 = vpop.permute.xlu0 %1374
  %vm1376 = vcmask 64512
  %s1377 = scalar_lea.vmem %s1, 578
  %1378 = vst.msk [vmem:[%s1377] ss:$-184 sm:$0xf] %vm1376, %v1375
  %s1379 = scalar_lea.vmem %s1, 2050
  %1380 = vst.msk [vmem:[%s1379] ss:$-184 sm:$0xf0] %vm1376, %v1375
  %s1381 = scalar_lea.vmem %s0, 16
  %v1382 = vld.sshfl [vmem:[%s1381] sm:$0xff pattern:$0x67452301]
  %1383 = vrot.lane.b32.xlu0 %v1382, 48
  %v1384 = vpop.permute.xlu0 %1383
  %vm1385 = vcmask 64512
  %s1386 = scalar_lea.vmem %s1, 226
  %1387 = vst.msk [vmem:[%s1386] ss:$-184 sm:$0x3] %vm1385, %v1384
  %s1388 = scalar_lea.vmem %s1, 962
  %1389 = vst.msk [vmem:[%s1388] ss:$-184 sm:$0xc] %vm1385, %v1384
  %s1390 = scalar_lea.vmem %s1, 1698
  %1391 = vst.msk [vmem:[%s1390] ss:$-184 sm:$0x30] %vm1385, %v1384
  %s1392 = scalar_lea.vmem %s1, 2434
  %1393 = vst.msk [vmem:[%s1392] ss:$-184 sm:$0xc0] %vm1385, %v1384
  %s1394 = scalar_lea.vmem %s0, 24
  %v1395 = vld.sshfl [vmem:[%s1394] sm:$0xff pattern:$0x45670123]
  %1396 = vrot.lane.b32.xlu0 %v1395, 48
  %v1397 = vpop.permute.xlu0 %1396
  %vm1398 = vcmask 64512
  %s1399 = scalar_lea.vmem %s1, 610
  %1400 = vst.msk [vmem:[%s1399] ss:$-184 sm:$0xf] %vm1398, %v1397
  %s1401 = scalar_lea.vmem %s1, 2082
  %1402 = vst.msk [vmem:[%s1401] ss:$-184 sm:$0xf0] %vm1398, %v1397
  %s1403 = scalar_lea.vmem %s0, 32
  %v1404 = vld.sshfl [vmem:[%s1403] sm:$0xff pattern:$0x67452301]
  %1405 = vrot.lane.b32.xlu0 %v1404, 48
  %v1406 = vpop.permute.xlu0 %1405
  %vm1407 = vcmask 64512
  %s1408 = scalar_lea.vmem %s1, 258
  %1409 = vst.msk [vmem:[%s1408] ss:$-184 sm:$0x3] %vm1407, %v1406
  %s1410 = scalar_lea.vmem %s1, 994
  %1411 = vst.msk [vmem:[%s1410] ss:$-184 sm:$0xc] %vm1407, %v1406
  %s1412 = scalar_lea.vmem %s1, 1730
  %1413 = vst.msk [vmem:[%s1412] ss:$-184 sm:$0x30] %vm1407, %v1406
  %s1414 = scalar_lea.vmem %s1, 2466
  %1415 = vst.msk [vmem:[%s1414] ss:$-184 sm:$0xc0] %vm1407, %v1406
  %s1416 = scalar_lea.vmem %s0, 40
  %v1417 = vld.sshfl [vmem:[%s1416] sm:$0xff pattern:$0x45670123]
  %1418 = vrot.lane.b32.xlu0 %v1417, 48
  %v1419 = vpop.permute.xlu0 %1418
  %vm1420 = vcmask 64512
  %s1421 = scalar_lea.vmem %s1, 642
  %1422 = vst.msk [vmem:[%s1421] ss:$-184 sm:$0xf] %vm1420, %v1419
  %s1423 = scalar_lea.vmem %s1, 2114
  %1424 = vst.msk [vmem:[%s1423] ss:$-184 sm:$0xf0] %vm1420, %v1419
  %s1425 = scalar_lea.vmem %s0, 48
  %v1426 = vld.sshfl [vmem:[%s1425] sm:$0xff pattern:$0x67452301]
  %1427 = vrot.lane.b32.xlu0 %v1426, 48
  %v1428 = vpop.permute.xlu0 %1427
  %vm1429 = vcmask 64512
  %s1430 = scalar_lea.vmem %s1, 290
  %1431 = vst.msk [vmem:[%s1430] ss:$-184 sm:$0x3] %vm1429, %v1428
  %s1432 = scalar_lea.vmem %s1, 1026
  %1433 = vst.msk [vmem:[%s1432] ss:$-184 sm:$0xc] %vm1429, %v1428
  %s1434 = scalar_lea.vmem %s1, 1762
  %1435 = vst.msk [vmem:[%s1434] ss:$-184 sm:$0x30] %vm1429, %v1428
  %s1436 = scalar_lea.vmem %s1, 2498
  %1437 = vst.msk [vmem:[%s1436] ss:$-184 sm:$0xc0] %vm1429, %v1428
  %s1438 = scalar_lea.vmem %s0, 56
  %v1439 = vld.sshfl [vmem:[%s1438] sm:$0xff pattern:$0x45670123]
  %1440 = vrot.lane.b32.xlu0 %v1439, 48
  %v1441 = vpop.permute.xlu0 %1440
  %vm1442 = vcmask 64512
  %s1443 = scalar_lea.vmem %s1, 674
  %1444 = vst.msk [vmem:[%s1443] ss:$-184 sm:$0xf] %vm1442, %v1441
  %s1445 = scalar_lea.vmem %s1, 2146
  %1446 = vst.msk [vmem:[%s1445] ss:$-184 sm:$0xf0] %vm1442, %v1441
  %s1447 = scalar_lea.vmem %s0, 64
  %v1448 = vld.sshfl [vmem:[%s1447] sm:$0xff pattern:$0x67452301]
  %1449 = vrot.lane.b32.xlu0 %v1448, 48
  %v1450 = vpop.permute.xlu0 %1449
  %vm1451 = vcmask 64512
  %s1452 = scalar_lea.vmem %s1, 322
  %1453 = vst.msk [vmem:[%s1452] ss:$-184 sm:$0x3] %vm1451, %v1450
  %s1454 = scalar_lea.vmem %s1, 1058
  %1455 = vst.msk [vmem:[%s1454] ss:$-184 sm:$0xc] %vm1451, %v1450
  %s1456 = scalar_lea.vmem %s1, 1794
  %1457 = vst.msk [vmem:[%s1456] ss:$-184 sm:$0x30] %vm1451, %v1450
  %s1458 = scalar_lea.vmem %s1, 2530
  %1459 = vst.msk [vmem:[%s1458] ss:$-184 sm:$0xc0] %vm1451, %v1450
  %s1460 = scalar_lea.vmem %s0, 72
  %v1461 = vld.sshfl [vmem:[%s1460] sm:$0xff pattern:$0x45670123]
  %1462 = vrot.lane.b32.xlu0 %v1461, 48
  %v1463 = vpop.permute.xlu0 %1462
  %vm1464 = vcmask 64512
  %s1465 = scalar_lea.vmem %s1, 706
  %1466 = vst.msk [vmem:[%s1465] ss:$-184 sm:$0xf] %vm1464, %v1463
  %s1467 = scalar_lea.vmem %s1, 2178
  %1468 = vst.msk [vmem:[%s1467] ss:$-184 sm:$0xf0] %vm1464, %v1463
  %s1469 = scalar_lea.vmem %s0, 80
  %v1470 = vld.sshfl [vmem:[%s1469] sm:$0xff pattern:$0x67452301]
  %1471 = vrot.lane.b32.xlu0 %v1470, 48
  %v1472 = vpop.permute.xlu0 %1471
  %vm1473 = vcmask 64512
  %s1474 = scalar_lea.vmem %s1, 354
  %1475 = vst.msk [vmem:[%s1474] ss:$-184 sm:$0x3] %vm1473, %v1472
  %s1476 = scalar_lea.vmem %s1, 1090
  %1477 = vst.msk [vmem:[%s1476] ss:$-184 sm:$0xc] %vm1473, %v1472
  %s1478 = scalar_lea.vmem %s1, 1826
  %1479 = vst.msk [vmem:[%s1478] ss:$-184 sm:$0x30] %vm1473, %v1472
  %s1480 = scalar_lea.vmem %s1, 2562
  %1481 = vst.msk [vmem:[%s1480] ss:$-184 sm:$0xc0] %vm1473, %v1472
  %v1482 = vld.sshfl [vmem:[%s0] sm:$0xff pattern:$0x67452301]
  %1483 = vrot.lane.b32.xlu0 %v1482, 40
  %v1484 = vpop.permute.xlu0 %1483
  %vm1485 = vcmask 64512
  %s1486 = scalar_lea.vmem %s1, 195
  %1487 = vst.msk [vmem:[%s1486] ss:$-184 sm:$0x3] %vm1485, %v1484
  %s1488 = scalar_lea.vmem %s1, 931
  %1489 = vst.msk [vmem:[%s1488] ss:$-184 sm:$0xc] %vm1485, %v1484
  %s1490 = scalar_lea.vmem %s1, 1667
  %1491 = vst.msk [vmem:[%s1490] ss:$-184 sm:$0x30] %vm1485, %v1484
  %s1492 = scalar_lea.vmem %s1, 2403
  %1493 = vst.msk [vmem:[%s1492] ss:$-184 sm:$0xc0] %vm1485, %v1484
  %s1494 = scalar_lea.vmem %s0, 8
  %v1495 = vld.sshfl [vmem:[%s1494] sm:$0xff pattern:$0x45670123]
  %1496 = vrot.lane.b32.xlu0 %v1495, 40
  %v1497 = vpop.permute.xlu0 %1496
  %vm1498 = vcmask 64512
  %s1499 = scalar_lea.vmem %s1, 579
  %1500 = vst.msk [vmem:[%s1499] ss:$-184 sm:$0xf] %vm1498, %v1497
  %s1501 = scalar_lea.vmem %s1, 2051
  %1502 = vst.msk [vmem:[%s1501] ss:$-184 sm:$0xf0] %vm1498, %v1497
  %s1503 = scalar_lea.vmem %s0, 16
  %v1504 = vld.sshfl [vmem:[%s1503] sm:$0xff pattern:$0x67452301]
  %1505 = vrot.lane.b32.xlu0 %v1504, 40
  %v1506 = vpop.permute.xlu0 %1505
  %vm1507 = vcmask 64512
  %s1508 = scalar_lea.vmem %s1, 227
  %1509 = vst.msk [vmem:[%s1508] ss:$-184 sm:$0x3] %vm1507, %v1506
  %s1510 = scalar_lea.vmem %s1, 963
  %1511 = vst.msk [vmem:[%s1510] ss:$-184 sm:$0xc] %vm1507, %v1506
  %s1512 = scalar_lea.vmem %s1, 1699
  %1513 = vst.msk [vmem:[%s1512] ss:$-184 sm:$0x30] %vm1507, %v1506
  %s1514 = scalar_lea.vmem %s1, 2435
  %1515 = vst.msk [vmem:[%s1514] ss:$-184 sm:$0xc0] %vm1507, %v1506
  %s1516 = scalar_lea.vmem %s0, 24
  %v1517 = vld.sshfl [vmem:[%s1516] sm:$0xff pattern:$0x45670123]
  %1518 = vrot.lane.b32.xlu0 %v1517, 40
  %v1519 = vpop.permute.xlu0 %1518
  %vm1520 = vcmask 64512
  %s1521 = scalar_lea.vmem %s1, 611
  %1522 = vst.msk [vmem:[%s1521] ss:$-184 sm:$0xf] %vm1520, %v1519
  %s1523 = scalar_lea.vmem %s1, 2083
  %1524 = vst.msk [vmem:[%s1523] ss:$-184 sm:$0xf0] %vm1520, %v1519
  %s1525 = scalar_lea.vmem %s0, 32
  %v1526 = vld.sshfl [vmem:[%s1525] sm:$0xff pattern:$0x67452301]
  %1527 = vrot.lane.b32.xlu0 %v1526, 40
  %v1528 = vpop.permute.xlu0 %1527
  %vm1529 = vcmask 64512
  %s1530 = scalar_lea.vmem %s1, 259
  %1531 = vst.msk [vmem:[%s1530] ss:$-184 sm:$0x3] %vm1529, %v1528
  %s1532 = scalar_lea.vmem %s1, 995
  %1533 = vst.msk [vmem:[%s1532] ss:$-184 sm:$0xc] %vm1529, %v1528
  %s1534 = scalar_lea.vmem %s1, 1731
  %1535 = vst.msk [vmem:[%s1534] ss:$-184 sm:$0x30] %vm1529, %v1528
  %s1536 = scalar_lea.vmem %s1, 2467
  %1537 = vst.msk [vmem:[%s1536] ss:$-184 sm:$0xc0] %vm1529, %v1528
  %s1538 = scalar_lea.vmem %s0, 40
  %v1539 = vld.sshfl [vmem:[%s1538] sm:$0xff pattern:$0x45670123]
  %1540 = vrot.lane.b32.xlu0 %v1539, 40
  %v1541 = vpop.permute.xlu0 %1540
  %vm1542 = vcmask 64512
  %s1543 = scalar_lea.vmem %s1, 643
  %1544 = vst.msk [vmem:[%s1543] ss:$-184 sm:$0xf] %vm1542, %v1541
  %s1545 = scalar_lea.vmem %s1, 2115
  %1546 = vst.msk [vmem:[%s1545] ss:$-184 sm:$0xf0] %vm1542, %v1541
  %s1547 = scalar_lea.vmem %s0, 48
  %v1548 = vld.sshfl [vmem:[%s1547] sm:$0xff pattern:$0x67452301]
  %1549 = vrot.lane.b32.xlu0 %v1548, 40
  %v1550 = vpop.permute.xlu0 %1549
  %vm1551 = vcmask 64512
  %s1552 = scalar_lea.vmem %s1, 291
  %1553 = vst.msk [vmem:[%s1552] ss:$-184 sm:$0x3] %vm1551, %v1550
  %s1554 = scalar_lea.vmem %s1, 1027
  %1555 = vst.msk [vmem:[%s1554] ss:$-184 sm:$0xc] %vm1551, %v1550
  %s1556 = scalar_lea.vmem %s1, 1763
  %1557 = vst.msk [vmem:[%s1556] ss:$-184 sm:$0x30] %vm1551, %v1550
  %s1558 = scalar_lea.vmem %s1, 2499
  %1559 = vst.msk [vmem:[%s1558] ss:$-184 sm:$0xc0] %vm1551, %v1550
  %s1560 = scalar_lea.vmem %s0, 56
  %v1561 = vld.sshfl [vmem:[%s1560] sm:$0xff pattern:$0x45670123]
  %1562 = vrot.lane.b32.xlu0 %v1561, 40
  %v1563 = vpop.permute.xlu0 %1562
  %vm1564 = vcmask 64512
  %s1565 = scalar_lea.vmem %s1, 675
  %1566 = vst.msk [vmem:[%s1565] ss:$-184 sm:$0xf] %vm1564, %v1563
  %s1567 = scalar_lea.vmem %s1, 2147
  %1568 = vst.msk [vmem:[%s1567] ss:$-184 sm:$0xf0] %vm1564, %v1563
  %s1569 = scalar_lea.vmem %s0, 64
  %v1570 = vld.sshfl [vmem:[%s1569] sm:$0xff pattern:$0x67452301]
  %1571 = vrot.lane.b32.xlu0 %v1570, 40
  %v1572 = vpop.permute.xlu0 %1571
  %vm1573 = vcmask 64512
  %s1574 = scalar_lea.vmem %s1, 323
  %1575 = vst.msk [vmem:[%s1574] ss:$-184 sm:$0x3] %vm1573, %v1572
  %s1576 = scalar_lea.vmem %s1, 1059
  %1577 = vst.msk [vmem:[%s1576] ss:$-184 sm:$0xc] %vm1573, %v1572
  %s1578 = scalar_lea.vmem %s1, 1795
  %1579 = vst.msk [vmem:[%s1578] ss:$-184 sm:$0x30] %vm1573, %v1572
  %s1580 = scalar_lea.vmem %s1, 2531
  %1581 = vst.msk [vmem:[%s1580] ss:$-184 sm:$0xc0] %vm1573, %v1572
  %s1582 = scalar_lea.vmem %s0, 72
  %v1583 = vld.sshfl [vmem:[%s1582] sm:$0xff pattern:$0x45670123]
  %1584 = vrot.lane.b32.xlu0 %v1583, 40
  %v1585 = vpop.permute.xlu0 %1584
  %vm1586 = vcmask 64512
  %s1587 = scalar_lea.vmem %s1, 707
  %1588 = vst.msk [vmem:[%s1587] ss:$-184 sm:$0xf] %vm1586, %v1585
  %s1589 = scalar_lea.vmem %s1, 2179
  %1590 = vst.msk [vmem:[%s1589] ss:$-184 sm:$0xf0] %vm1586, %v1585
  %s1591 = scalar_lea.vmem %s0, 80
  %v1592 = vld.sshfl [vmem:[%s1591] sm:$0xff pattern:$0x67452301]
  %1593 = vrot.lane.b32.xlu0 %v1592, 40
  %v1594 = vpop.permute.xlu0 %1593
  %vm1595 = vcmask 64512
  %s1596 = scalar_lea.vmem %s1, 355
  %1597 = vst.msk [vmem:[%s1596] ss:$-184 sm:$0x3] %vm1595, %v1594
  %s1598 = scalar_lea.vmem %s1, 1091
  %1599 = vst.msk [vmem:[%s1598] ss:$-184 sm:$0xc] %vm1595, %v1594
  %s1600 = scalar_lea.vmem %s1, 1827
  %1601 = vst.msk [vmem:[%s1600] ss:$-184 sm:$0x30] %vm1595, %v1594
  %s1602 = scalar_lea.vmem %s1, 2563
  %1603 = vst.msk [vmem:[%s1602] ss:$-184 sm:$0xc0] %vm1595, %v1594
  %v1604 = vld.sshfl [vmem:[%s0] sm:$0xff pattern:$0x67452301]
  %1605 = vrot.lane.b32.xlu0 %v1604, 32
  %v1606 = vpop.permute.xlu0 %1605
  %vm1607 = vcmask 64512
  %s1608 = scalar_lea.vmem %s1, 196
  %1609 = vst.msk [vmem:[%s1608] ss:$-184 sm:$0x3] %vm1607, %v1606
  %s1610 = scalar_lea.vmem %s1, 932
  %1611 = vst.msk [vmem:[%s1610] ss:$-184 sm:$0xc] %vm1607, %v1606
  %s1612 = scalar_lea.vmem %s1, 1668
  %1613 = vst.msk [vmem:[%s1612] ss:$-184 sm:$0x30] %vm1607, %v1606
  %s1614 = scalar_lea.vmem %s1, 2404
  %1615 = vst.msk [vmem:[%s1614] ss:$-184 sm:$0xc0] %vm1607, %v1606
  %s1616 = scalar_lea.vmem %s0, 8
  %v1617 = vld.sshfl [vmem:[%s1616] sm:$0xff pattern:$0x45670123]
  %1618 = vrot.lane.b32.xlu0 %v1617, 32
  %v1619 = vpop.permute.xlu0 %1618
  %vm1620 = vcmask 64512
  %s1621 = scalar_lea.vmem %s1, 580
  %1622 = vst.msk [vmem:[%s1621] ss:$-184 sm:$0xf] %vm1620, %v1619
  %s1623 = scalar_lea.vmem %s1, 2052
  %1624 = vst.msk [vmem:[%s1623] ss:$-184 sm:$0xf0] %vm1620, %v1619
  %s1625 = scalar_lea.vmem %s0, 16
  %v1626 = vld.sshfl [vmem:[%s1625] sm:$0xff pattern:$0x67452301]
  %1627 = vrot.lane.b32.xlu0 %v1626, 32
  %v1628 = vpop.permute.xlu0 %1627
  %vm1629 = vcmask 64512
  %s1630 = scalar_lea.vmem %s1, 228
  %1631 = vst.msk [vmem:[%s1630] ss:$-184 sm:$0x3] %vm1629, %v1628
  %s1632 = scalar_lea.vmem %s1, 964
  %1633 = vst.msk [vmem:[%s1632] ss:$-184 sm:$0xc] %vm1629, %v1628
  %s1634 = scalar_lea.vmem %s1, 1700
  %1635 = vst.msk [vmem:[%s1634] ss:$-184 sm:$0x30] %vm1629, %v1628
  %s1636 = scalar_lea.vmem %s1, 2436
  %1637 = vst.msk [vmem:[%s1636] ss:$-184 sm:$0xc0] %vm1629, %v1628
  %s1638 = scalar_lea.vmem %s0, 24
  %v1639 = vld.sshfl [vmem:[%s1638] sm:$0xff pattern:$0x45670123]
  %1640 = vrot.lane.b32.xlu0 %v1639, 32
  %v1641 = vpop.permute.xlu0 %1640
  %vm1642 = vcmask 64512
  %s1643 = scalar_lea.vmem %s1, 612
  %1644 = vst.msk [vmem:[%s1643] ss:$-184 sm:$0xf] %vm1642, %v1641
  %s1645 = scalar_lea.vmem %s1, 2084
  %1646 = vst.msk [vmem:[%s1645] ss:$-184 sm:$0xf0] %vm1642, %v1641
  %s1647 = scalar_lea.vmem %s0, 32
  %v1648 = vld.sshfl [vmem:[%s1647] sm:$0xff pattern:$0x67452301]
  %1649 = vrot.lane.b32.xlu0 %v1648, 32
  %v1650 = vpop.permute.xlu0 %1649
  %vm1651 = vcmask 64512
  %s1652 = scalar_lea.vmem %s1, 260
  %1653 = vst.msk [vmem:[%s1652] ss:$-184 sm:$0x3] %vm1651, %v1650
  %s1654 = scalar_lea.vmem %s1, 996
  %1655 = vst.msk [vmem:[%s1654] ss:$-184 sm:$0xc] %vm1651, %v1650
  %s1656 = scalar_lea.vmem %s1, 1732
  %1657 = vst.msk [vmem:[%s1656] ss:$-184 sm:$0x30] %vm1651, %v1650
  %s1658 = scalar_lea.vmem %s1, 2468
  %1659 = vst.msk [vmem:[%s1658] ss:$-184 sm:$0xc0] %vm1651, %v1650
  %s1660 = scalar_lea.vmem %s0, 40
  %v1661 = vld.sshfl [vmem:[%s1660] sm:$0xff pattern:$0x45670123]
  %1662 = vrot.lane.b32.xlu0 %v1661, 32
  %v1663 = vpop.permute.xlu0 %1662
  %vm1664 = vcmask 64512
  %s1665 = scalar_lea.vmem %s1, 644
  %1666 = vst.msk [vmem:[%s1665] ss:$-184 sm:$0xf] %vm1664, %v1663
  %s1667 = scalar_lea.vmem %s1, 2116
  %1668 = vst.msk [vmem:[%s1667] ss:$-184 sm:$0xf0] %vm1664, %v1663
  %s1669 = scalar_lea.vmem %s0, 48
  %v1670 = vld.sshfl [vmem:[%s1669] sm:$0xff pattern:$0x67452301]
  %1671 = vrot.lane.b32.xlu0 %v1670, 32
  %v1672 = vpop.permute.xlu0 %1671
  %vm1673 = vcmask 64512
  %s1674 = scalar_lea.vmem %s1, 292
  %1675 = vst.msk [vmem:[%s1674] ss:$-184 sm:$0x3] %vm1673, %v1672
  %s1676 = scalar_lea.vmem %s1, 1028
  %1677 = vst.msk [vmem:[%s1676] ss:$-184 sm:$0xc] %vm1673, %v1672
  %s1678 = scalar_lea.vmem %s1, 1764
  %1679 = vst.msk [vmem:[%s1678] ss:$-184 sm:$0x30] %vm1673, %v1672
  %s1680 = scalar_lea.vmem %s1, 2500
  %1681 = vst.msk [vmem:[%s1680] ss:$-184 sm:$0xc0] %vm1673, %v1672
  %s1682 = scalar_lea.vmem %s0, 56
  %v1683 = vld.sshfl [vmem:[%s1682] sm:$0xff pattern:$0x45670123]
  %1684 = vrot.lane.b32.xlu0 %v1683, 32
  %v1685 = vpop.permute.xlu0 %1684
  %vm1686 = vcmask 64512
  %s1687 = scalar_lea.vmem %s1, 676
  %1688 = vst.msk [vmem:[%s1687] ss:$-184 sm:$0xf] %vm1686, %v1685
  %s1689 = scalar_lea.vmem %s1, 2148
  %1690 = vst.msk [vmem:[%s1689] ss:$-184 sm:$0xf0] %vm1686, %v1685
  %s1691 = scalar_lea.vmem %s0, 64
  %v1692 = vld.sshfl [vmem:[%s1691] sm:$0xff pattern:$0x67452301]
  %1693 = vrot.lane.b32.xlu0 %v1692, 32
  %v1694 = vpop.permute.xlu0 %1693
  %vm1695 = vcmask 64512
  %s1696 = scalar_lea.vmem %s1, 324
  %1697 = vst.msk [vmem:[%s1696] ss:$-184 sm:$0x3] %vm1695, %v1694
  %s1698 = scalar_lea.vmem %s1, 1060
  %1699 = vst.msk [vmem:[%s1698] ss:$-184 sm:$0xc] %vm1695, %v1694
  %s1700 = scalar_lea.vmem %s1, 1796
  %1701 = vst.msk [vmem:[%s1700] ss:$-184 sm:$0x30] %vm1695, %v1694
  %s1702 = scalar_lea.vmem %s1, 2532
  %1703 = vst.msk [vmem:[%s1702] ss:$-184 sm:$0xc0] %vm1695, %v1694
  %s1704 = scalar_lea.vmem %s0, 72
  %v1705 = vld.sshfl [vmem:[%s1704] sm:$0xff pattern:$0x45670123]
  %1706 = vrot.lane.b32.xlu0 %v1705, 32
  %v1707 = vpop.permute.xlu0 %1706
  %vm1708 = vcmask 64512
  %s1709 = scalar_lea.vmem %s1, 708
  %1710 = vst.msk [vmem:[%s1709] ss:$-184 sm:$0xf] %vm1708, %v1707
  %s1711 = scalar_lea.vmem %s1, 2180
  %1712 = vst.msk [vmem:[%s1711] ss:$-184 sm:$0xf0] %vm1708, %v1707
  %s1713 = scalar_lea.vmem %s0, 80
  %v1714 = vld.sshfl [vmem:[%s1713] sm:$0xff pattern:$0x67452301]
  %1715 = vrot.lane.b32.xlu0 %v1714, 32
  %v1716 = vpop.permute.xlu0 %1715
  %vm1717 = vcmask 64512
  %s1718 = scalar_lea.vmem %s1, 356
  %1719 = vst.msk [vmem:[%s1718] ss:$-184 sm:$0x3] %vm1717, %v1716
  %s1720 = scalar_lea.vmem %s1, 1092
  %1721 = vst.msk [vmem:[%s1720] ss:$-184 sm:$0xc] %vm1717, %v1716
  %s1722 = scalar_lea.vmem %s1, 1828
  %1723 = vst.msk [vmem:[%s1722] ss:$-184 sm:$0x30] %vm1717, %v1716
  %s1724 = scalar_lea.vmem %s1, 2564
  %1725 = vst.msk [vmem:[%s1724] ss:$-184 sm:$0xc0] %vm1717, %v1716
  %v1726 = vld.sshfl [vmem:[%s0] sm:$0xff pattern:$0x67452301]
  %1727 = vrot.lane.b32.xlu0 %v1726, 24
  %v1728 = vpop.permute.xlu0 %1727
  %vm1729 = vcmask 64512
  %s1730 = scalar_lea.vmem %s1, 197
  %1731 = vst.msk [vmem:[%s1730] ss:$-184 sm:$0x3] %vm1729, %v1728
  %s1732 = scalar_lea.vmem %s1, 933
  %1733 = vst.msk [vmem:[%s1732] ss:$-184 sm:$0xc] %vm1729, %v1728
  %s1734 = scalar_lea.vmem %s1, 1669
  %1735 = vst.msk [vmem:[%s1734] ss:$-184 sm:$0x30] %vm1729, %v1728
  %s1736 = scalar_lea.vmem %s1, 2405
  %1737 = vst.msk [vmem:[%s1736] ss:$-184 sm:$0xc0] %vm1729, %v1728
  %s1738 = scalar_lea.vmem %s0, 8
  %v1739 = vld.sshfl [vmem:[%s1738] sm:$0xff pattern:$0x45670123]
  %1740 = vrot.lane.b32.xlu0 %v1739, 24
  %v1741 = vpop.permute.xlu0 %1740
  %vm1742 = vcmask 64512
  %s1743 = scalar_lea.vmem %s1, 581
  %1744 = vst.msk [vmem:[%s1743] ss:$-184 sm:$0xf] %vm1742, %v1741
  %s1745 = scalar_lea.vmem %s1, 2053
  %1746 = vst.msk [vmem:[%s1745] ss:$-184 sm:$0xf0] %vm1742, %v1741
  %s1747 = scalar_lea.vmem %s0, 16
  %v1748 = vld.sshfl [vmem:[%s1747] sm:$0xff pattern:$0x67452301]
  %1749 = vrot.lane.b32.xlu0 %v1748, 24
  %v1750 = vpop.permute.xlu0 %1749
  %vm1751 = vcmask 64512
  %s1752 = scalar_lea.vmem %s1, 229
  %1753 = vst.msk [vmem:[%s1752] ss:$-184 sm:$0x3] %vm1751, %v1750
  %s1754 = scalar_lea.vmem %s1, 965
  %1755 = vst.msk [vmem:[%s1754] ss:$-184 sm:$0xc] %vm1751, %v1750
  %s1756 = scalar_lea.vmem %s1, 1701
  %1757 = vst.msk [vmem:[%s1756] ss:$-184 sm:$0x30] %vm1751, %v1750
  %s1758 = scalar_lea.vmem %s1, 2437
  %1759 = vst.msk [vmem:[%s1758] ss:$-184 sm:$0xc0] %vm1751, %v1750
  %s1760 = scalar_lea.vmem %s0, 24
  %v1761 = vld.sshfl [vmem:[%s1760] sm:$0xff pattern:$0x45670123]
  %1762 = vrot.lane.b32.xlu0 %v1761, 24
  %v1763 = vpop.permute.xlu0 %1762
  %vm1764 = vcmask 64512
  %s1765 = scalar_lea.vmem %s1, 613
  %1766 = vst.msk [vmem:[%s1765] ss:$-184 sm:$0xf] %vm1764, %v1763
  %s1767 = scalar_lea.vmem %s1, 2085
  %1768 = vst.msk [vmem:[%s1767] ss:$-184 sm:$0xf0] %vm1764, %v1763
  %s1769 = scalar_lea.vmem %s0, 32
  %v1770 = vld.sshfl [vmem:[%s1769] sm:$0xff pattern:$0x67452301]
  %1771 = vrot.lane.b32.xlu0 %v1770, 24
  %v1772 = vpop.permute.xlu0 %1771
  %vm1773 = vcmask 64512
  %s1774 = scalar_lea.vmem %s1, 261
  %1775 = vst.msk [vmem:[%s1774] ss:$-184 sm:$0x3] %vm1773, %v1772
  %s1776 = scalar_lea.vmem %s1, 997
  %1777 = vst.msk [vmem:[%s1776] ss:$-184 sm:$0xc] %vm1773, %v1772
  %s1778 = scalar_lea.vmem %s1, 1733
  %1779 = vst.msk [vmem:[%s1778] ss:$-184 sm:$0x30] %vm1773, %v1772
  %s1780 = scalar_lea.vmem %s1, 2469
  %1781 = vst.msk [vmem:[%s1780] ss:$-184 sm:$0xc0] %vm1773, %v1772
  %s1782 = scalar_lea.vmem %s0, 40
  %v1783 = vld.sshfl [vmem:[%s1782] sm:$0xff pattern:$0x45670123]
  %1784 = vrot.lane.b32.xlu0 %v1783, 24
  %v1785 = vpop.permute.xlu0 %1784
  %vm1786 = vcmask 64512
  %s1787 = scalar_lea.vmem %s1, 645
  %1788 = vst.msk [vmem:[%s1787] ss:$-184 sm:$0xf] %vm1786, %v1785
  %s1789 = scalar_lea.vmem %s1, 2117
  %1790 = vst.msk [vmem:[%s1789] ss:$-184 sm:$0xf0] %vm1786, %v1785
  %s1791 = scalar_lea.vmem %s0, 48
  %v1792 = vld.sshfl [vmem:[%s1791] sm:$0xff pattern:$0x67452301]
  %1793 = vrot.lane.b32.xlu0 %v1792, 24
  %v1794 = vpop.permute.xlu0 %1793
  %vm1795 = vcmask 64512
  %s1796 = scalar_lea.vmem %s1, 293
  %1797 = vst.msk [vmem:[%s1796] ss:$-184 sm:$0x3] %vm1795, %v1794
  %s1798 = scalar_lea.vmem %s1, 1029
  %1799 = vst.msk [vmem:[%s1798] ss:$-184 sm:$0xc] %vm1795, %v1794
  %s1800 = scalar_lea.vmem %s1, 1765
  %1801 = vst.msk [vmem:[%s1800] ss:$-184 sm:$0x30] %vm1795, %v1794
  %s1802 = scalar_lea.vmem %s1, 2501
  %1803 = vst.msk [vmem:[%s1802] ss:$-184 sm:$0xc0] %vm1795, %v1794
  %s1804 = scalar_lea.vmem %s0, 56
  %v1805 = vld.sshfl [vmem:[%s1804] sm:$0xff pattern:$0x45670123]
  %1806 = vrot.lane.b32.xlu0 %v1805, 24
  %v1807 = vpop.permute.xlu0 %1806
  %vm1808 = vcmask 64512
  %s1809 = scalar_lea.vmem %s1, 677
  %1810 = vst.msk [vmem:[%s1809] ss:$-184 sm:$0xf] %vm1808, %v1807
  %s1811 = scalar_lea.vmem %s1, 2149
  %1812 = vst.msk [vmem:[%s1811] ss:$-184 sm:$0xf0] %vm1808, %v1807
  %s1813 = scalar_lea.vmem %s0, 64
  %v1814 = vld.sshfl [vmem:[%s1813] sm:$0xff pattern:$0x67452301]
  %1815 = vrot.lane.b32.xlu0 %v1814, 24
  %v1816 = vpop.permute.xlu0 %1815
  %vm1817 = vcmask 64512
  %s1818 = scalar_lea.vmem %s1, 325
  %1819 = vst.msk [vmem:[%s1818] ss:$-184 sm:$0x3] %vm1817, %v1816
  %s1820 = scalar_lea.vmem %s1, 1061
  %1821 = vst.msk [vmem:[%s1820] ss:$-184 sm:$0xc] %vm1817, %v1816
  %s1822 = scalar_lea.vmem %s1, 1797
  %1823 = vst.msk [vmem:[%s1822] ss:$-184 sm:$0x30] %vm1817, %v1816
  %s1824 = scalar_lea.vmem %s1, 2533
  %1825 = vst.msk [vmem:[%s1824] ss:$-184 sm:$0xc0] %vm1817, %v1816
  %s1826 = scalar_lea.vmem %s0, 72
  %v1827 = vld.sshfl [vmem:[%s1826] sm:$0xff pattern:$0x45670123]
  %1828 = vrot.lane.b32.xlu0 %v1827, 24
  %v1829 = vpop.permute.xlu0 %1828
  %vm1830 = vcmask 64512
  %s1831 = scalar_lea.vmem %s1, 709
  %1832 = vst.msk [vmem:[%s1831] ss:$-184 sm:$0xf] %vm1830, %v1829
  %s1833 = scalar_lea.vmem %s1, 2181
  %1834 = vst.msk [vmem:[%s1833] ss:$-184 sm:$0xf0] %vm1830, %v1829
  %s1835 = scalar_lea.vmem %s0, 80
  %v1836 = vld.sshfl [vmem:[%s1835] sm:$0xff pattern:$0x67452301]
  %1837 = vrot.lane.b32.xlu0 %v1836, 24
  %v1838 = vpop.permute.xlu0 %1837
  %vm1839 = vcmask 64512
  %s1840 = scalar_lea.vmem %s1, 357
  %1841 = vst.msk [vmem:[%s1840] ss:$-184 sm:$0x3] %vm1839, %v1838
  %s1842 = scalar_lea.vmem %s1, 1093
  %1843 = vst.msk [vmem:[%s1842] ss:$-184 sm:$0xc] %vm1839, %v1838
  %s1844 = scalar_lea.vmem %s1, 1829
  %1845 = vst.msk [vmem:[%s1844] ss:$-184 sm:$0x30] %vm1839, %v1838
  %s1846 = scalar_lea.vmem %s1, 2565
  %1847 = vst.msk [vmem:[%s1846] ss:$-184 sm:$0xc0] %vm1839, %v1838
  %v1848 = vld.sshfl [vmem:[%s0] sm:$0xff pattern:$0x67452301]
  %1849 = vrot.lane.b32.xlu0 %v1848, 16
  %v1850 = vpop.permute.xlu0 %1849
  %vm1851 = vcmask 64512
  %s1852 = scalar_lea.vmem %s1, 198
  %1853 = vst.msk [vmem:[%s1852] ss:$-184 sm:$0x3] %vm1851, %v1850
  %s1854 = scalar_lea.vmem %s1, 934
  %1855 = vst.msk [vmem:[%s1854] ss:$-184 sm:$0xc] %vm1851, %v1850
  %s1856 = scalar_lea.vmem %s1, 1670
  %1857 = vst.msk [vmem:[%s1856] ss:$-184 sm:$0x30] %vm1851, %v1850
  %s1858 = scalar_lea.vmem %s1, 2406
  %1859 = vst.msk [vmem:[%s1858] ss:$-184 sm:$0xc0] %vm1851, %v1850
  %s1860 = scalar_lea.vmem %s0, 8
  %v1861 = vld.sshfl [vmem:[%s1860] sm:$0xff pattern:$0x45670123]
  %1862 = vrot.lane.b32.xlu0 %v1861, 16
  %v1863 = vpop.permute.xlu0 %1862
  %vm1864 = vcmask 64512
  %s1865 = scalar_lea.vmem %s1, 582
  %1866 = vst.msk [vmem:[%s1865] ss:$-184 sm:$0xf] %vm1864, %v1863
  %s1867 = scalar_lea.vmem %s1, 2054
  %1868 = vst.msk [vmem:[%s1867] ss:$-184 sm:$0xf0] %vm1864, %v1863
  %s1869 = scalar_lea.vmem %s0, 16
  %v1870 = vld.sshfl [vmem:[%s1869] sm:$0xff pattern:$0x67452301]
  %1871 = vrot.lane.b32.xlu0 %v1870, 16
  %v1872 = vpop.permute.xlu0 %1871
  %vm1873 = vcmask 64512
  %s1874 = scalar_lea.vmem %s1, 230
  %1875 = vst.msk [vmem:[%s1874] ss:$-184 sm:$0x3] %vm1873, %v1872
  %s1876 = scalar_lea.vmem %s1, 966
  %1877 = vst.msk [vmem:[%s1876] ss:$-184 sm:$0xc] %vm1873, %v1872
  %s1878 = scalar_lea.vmem %s1, 1702
  %1879 = vst.msk [vmem:[%s1878] ss:$-184 sm:$0x30] %vm1873, %v1872
  %s1880 = scalar_lea.vmem %s1, 2438
  %1881 = vst.msk [vmem:[%s1880] ss:$-184 sm:$0xc0] %vm1873, %v1872
  %s1882 = scalar_lea.vmem %s0, 24
  %v1883 = vld.sshfl [vmem:[%s1882] sm:$0xff pattern:$0x45670123]
  %1884 = vrot.lane.b32.xlu0 %v1883, 16
  %v1885 = vpop.permute.xlu0 %1884
  %vm1886 = vcmask 64512
  %s1887 = scalar_lea.vmem %s1, 614
  %1888 = vst.msk [vmem:[%s1887] ss:$-184 sm:$0xf] %vm1886, %v1885
  %s1889 = scalar_lea.vmem %s1, 2086
  %1890 = vst.msk [vmem:[%s1889] ss:$-184 sm:$0xf0] %vm1886, %v1885
  %s1891 = scalar_lea.vmem %s0, 32
  %v1892 = vld.sshfl [vmem:[%s1891] sm:$0xff pattern:$0x67452301]
  %1893 = vrot.lane.b32.xlu0 %v1892, 16
  %v1894 = vpop.permute.xlu0 %1893
  %vm1895 = vcmask 64512
  %s1896 = scalar_lea.vmem %s1, 262
  %1897 = vst.msk [vmem:[%s1896] ss:$-184 sm:$0x3] %vm1895, %v1894
  %s1898 = scalar_lea.vmem %s1, 998
  %1899 = vst.msk [vmem:[%s1898] ss:$-184 sm:$0xc] %vm1895, %v1894
  %s1900 = scalar_lea.vmem %s1, 1734
  %1901 = vst.msk [vmem:[%s1900] ss:$-184 sm:$0x30] %vm1895, %v1894
  %s1902 = scalar_lea.vmem %s1, 2470
  %1903 = vst.msk [vmem:[%s1902] ss:$-184 sm:$0xc0] %vm1895, %v1894
  %s1904 = scalar_lea.vmem %s0, 40
  %v1905 = vld.sshfl [vmem:[%s1904] sm:$0xff pattern:$0x45670123]
  %1906 = vrot.lane.b32.xlu0 %v1905, 16
  %v1907 = vpop.permute.xlu0 %1906
  %vm1908 = vcmask 64512
  %s1909 = scalar_lea.vmem %s1, 646
  %1910 = vst.msk [vmem:[%s1909] ss:$-184 sm:$0xf] %vm1908, %v1907
  %s1911 = scalar_lea.vmem %s1, 2118
  %1912 = vst.msk [vmem:[%s1911] ss:$-184 sm:$0xf0] %vm1908, %v1907
  %s1913 = scalar_lea.vmem %s0, 48
  %v1914 = vld.sshfl [vmem:[%s1913] sm:$0xff pattern:$0x67452301]
  %1915 = vrot.lane.b32.xlu0 %v1914, 16
  %v1916 = vpop.permute.xlu0 %1915
  %vm1917 = vcmask 64512
  %s1918 = scalar_lea.vmem %s1, 294
  %1919 = vst.msk [vmem:[%s1918] ss:$-184 sm:$0x3] %vm1917, %v1916
  %s1920 = scalar_lea.vmem %s1, 1030
  %1921 = vst.msk [vmem:[%s1920] ss:$-184 sm:$0xc] %vm1917, %v1916
  %s1922 = scalar_lea.vmem %s1, 1766
  %1923 = vst.msk [vmem:[%s1922] ss:$-184 sm:$0x30] %vm1917, %v1916
  %s1924 = scalar_lea.vmem %s1, 2502
  %1925 = vst.msk [vmem:[%s1924] ss:$-184 sm:$0xc0] %vm1917, %v1916
  %s1926 = scalar_lea.vmem %s0, 56
  %v1927 = vld.sshfl [vmem:[%s1926] sm:$0xff pattern:$0x45670123]
  %1928 = vrot.lane.b32.xlu0 %v1927, 16
  %v1929 = vpop.permute.xlu0 %1928
  %vm1930 = vcmask 64512
  %s1931 = scalar_lea.vmem %s1, 678
  %1932 = vst.msk [vmem:[%s1931] ss:$-184 sm:$0xf] %vm1930, %v1929
  %s1933 = scalar_lea.vmem %s1, 2150
  %1934 = vst.msk [vmem:[%s1933] ss:$-184 sm:$0xf0] %vm1930, %v1929
  %s1935 = scalar_lea.vmem %s0, 64
  %v1936 = vld.sshfl [vmem:[%s1935] sm:$0xff pattern:$0x67452301]
  %1937 = vrot.lane.b32.xlu0 %v1936, 16
  %v1938 = vpop.permute.xlu0 %1937
  %vm1939 = vcmask 64512
  %s1940 = scalar_lea.vmem %s1, 326
  %1941 = vst.msk [vmem:[%s1940] ss:$-184 sm:$0x3] %vm1939, %v1938
  %s1942 = scalar_lea.vmem %s1, 1062
  %1943 = vst.msk [vmem:[%s1942] ss:$-184 sm:$0xc] %vm1939, %v1938
  %s1944 = scalar_lea.vmem %s1, 1798
  %1945 = vst.msk [vmem:[%s1944] ss:$-184 sm:$0x30] %vm1939, %v1938
  %s1946 = scalar_lea.vmem %s1, 2534
  %1947 = vst.msk [vmem:[%s1946] ss:$-184 sm:$0xc0] %vm1939, %v1938
  %s1948 = scalar_lea.vmem %s0, 72
  %v1949 = vld.sshfl [vmem:[%s1948] sm:$0xff pattern:$0x45670123]
  %1950 = vrot.lane.b32.xlu0 %v1949, 16
  %v1951 = vpop.permute.xlu0 %1950
  %vm1952 = vcmask 64512
  %s1953 = scalar_lea.vmem %s1, 710
  %1954 = vst.msk [vmem:[%s1953] ss:$-184 sm:$0xf] %vm1952, %v1951
  %s1955 = scalar_lea.vmem %s1, 2182
  %1956 = vst.msk [vmem:[%s1955] ss:$-184 sm:$0xf0] %vm1952, %v1951
  %s1957 = scalar_lea.vmem %s0, 80
  %v1958 = vld.sshfl [vmem:[%s1957] sm:$0xff pattern:$0x67452301]
  %1959 = vrot.lane.b32.xlu0 %v1958, 16
  %v1960 = vpop.permute.xlu0 %1959
  %vm1961 = vcmask 64512
  %s1962 = scalar_lea.vmem %s1, 358
  %1963 = vst.msk [vmem:[%s1962] ss:$-184 sm:$0x3] %vm1961, %v1960
  %s1964 = scalar_lea.vmem %s1, 1094
  %1965 = vst.msk [vmem:[%s1964] ss:$-184 sm:$0xc] %vm1961, %v1960
  %s1966 = scalar_lea.vmem %s1, 1830
  %1967 = vst.msk [vmem:[%s1966] ss:$-184 sm:$0x30] %vm1961, %v1960
  %s1968 = scalar_lea.vmem %s1, 2566
  %1969 = vst.msk [vmem:[%s1968] ss:$-184 sm:$0xc0] %vm1961, %v1960
  %v1970 = vld.sshfl [vmem:[%s0] sm:$0xff pattern:$0x67452301]
  %1971 = vrot.lane.b32.xlu0 %v1970, 8
  %v1972 = vpop.permute.xlu0 %1971
  %vm1973 = vcmask 64512
  %s1974 = scalar_lea.vmem %s1, 199
  %1975 = vst.msk [vmem:[%s1974] ss:$-184 sm:$0x3] %vm1973, %v1972
  %s1976 = scalar_lea.vmem %s1, 935
  %1977 = vst.msk [vmem:[%s1976] ss:$-184 sm:$0xc] %vm1973, %v1972
  %s1978 = scalar_lea.vmem %s1, 1671
  %1979 = vst.msk [vmem:[%s1978] ss:$-184 sm:$0x30] %vm1973, %v1972
  %s1980 = scalar_lea.vmem %s1, 2407
  %1981 = vst.msk [vmem:[%s1980] ss:$-184 sm:$0xc0] %vm1973, %v1972
  %s1982 = scalar_lea.vmem %s0, 8
  %v1983 = vld.sshfl [vmem:[%s1982] sm:$0xff pattern:$0x45670123]
  %1984 = vrot.lane.b32.xlu0 %v1983, 8
  %v1985 = vpop.permute.xlu0 %1984
  %vm1986 = vcmask 64512
  %s1987 = scalar_lea.vmem %s1, 583
  %1988 = vst.msk [vmem:[%s1987] ss:$-184 sm:$0xf] %vm1986, %v1985
  %s1989 = scalar_lea.vmem %s1, 2055
  %1990 = vst.msk [vmem:[%s1989] ss:$-184 sm:$0xf0] %vm1986, %v1985
  %s1991 = scalar_lea.vmem %s0, 16
  %v1992 = vld.sshfl [vmem:[%s1991] sm:$0xff pattern:$0x67452301]
  %1993 = vrot.lane.b32.xlu0 %v1992, 8
  %v1994 = vpop.permute.xlu0 %1993
  %vm1995 = vcmask 64512
  %s1996 = scalar_lea.vmem %s1, 231
  %1997 = vst.msk [vmem:[%s1996] ss:$-184 sm:$0x3] %vm1995, %v1994
  %s1998 = scalar_lea.vmem %s1, 967
  %1999 = vst.msk [vmem:[%s1998] ss:$-184 sm:$0xc] %vm1995, %v1994
  %s2000 = scalar_lea.vmem %s1, 1703
  %2001 = vst.msk [vmem:[%s2000] ss:$-184 sm:$0x30] %vm1995, %v1994
  %s2002 = scalar_lea.vmem %s1, 2439
  %2003 = vst.msk [vmem:[%s2002] ss:$-184 sm:$0xc0] %vm1995, %v1994
  %s2004 = scalar_lea.vmem %s0, 24
  %v2005 = vld.sshfl [vmem:[%s2004] sm:$0xff pattern:$0x45670123]
  %2006 = vrot.lane.b32.xlu0 %v2005, 8
  %v2007 = vpop.permute.xlu0 %2006
  %vm2008 = vcmask 64512
  %s2009 = scalar_lea.vmem %s1, 615
  %2010 = vst.msk [vmem:[%s2009] ss:$-184 sm:$0xf] %vm2008, %v2007
  %s2011 = scalar_lea.vmem %s1, 2087
  %2012 = vst.msk [vmem:[%s2011] ss:$-184 sm:$0xf0] %vm2008, %v2007
  %s2013 = scalar_lea.vmem %s0, 32
  %v2014 = vld.sshfl [vmem:[%s2013] sm:$0xff pattern:$0x67452301]
  %2015 = vrot.lane.b32.xlu0 %v2014, 8
  %v2016 = vpop.permute.xlu0 %2015
  %vm2017 = vcmask 64512
  %s2018 = scalar_lea.vmem %s1, 263
  %2019 = vst.msk [vmem:[%s2018] ss:$-184 sm:$0x3] %vm2017, %v2016
  %s2020 = scalar_lea.vmem %s1, 999
  %2021 = vst.msk [vmem:[%s2020] ss:$-184 sm:$0xc] %vm2017, %v2016
  %s2022 = scalar_lea.vmem %s1, 1735
  %2023 = vst.msk [vmem:[%s2022] ss:$-184 sm:$0x30] %vm2017, %v2016
  %s2024 = scalar_lea.vmem %s1, 2471
  %2025 = vst.msk [vmem:[%s2024] ss:$-184 sm:$0xc0] %vm2017, %v2016
  %s2026 = scalar_lea.vmem %s0, 40
  %v2027 = vld.sshfl [vmem:[%s2026] sm:$0xff pattern:$0x45670123]
  %2028 = vrot.lane.b32.xlu0 %v2027, 8
  %v2029 = vpop.permute.xlu0 %2028
  %vm2030 = vcmask 64512
  %s2031 = scalar_lea.vmem %s1, 647
  %2032 = vst.msk [vmem:[%s2031] ss:$-184 sm:$0xf] %vm2030, %v2029
  %s2033 = scalar_lea.vmem %s1, 2119
  %2034 = vst.msk [vmem:[%s2033] ss:$-184 sm:$0xf0] %vm2030, %v2029
  %s2035 = scalar_lea.vmem %s0, 48
  %v2036 = vld.sshfl [vmem:[%s2035] sm:$0xff pattern:$0x67452301]
  %2037 = vrot.lane.b32.xlu0 %v2036, 8
  %v2038 = vpop.permute.xlu0 %2037
  %vm2039 = vcmask 64512
  %s2040 = scalar_lea.vmem %s1, 295
  %2041 = vst.msk [vmem:[%s2040] ss:$-184 sm:$0x3] %vm2039, %v2038
  %s2042 = scalar_lea.vmem %s1, 1031
  %2043 = vst.msk [vmem:[%s2042] ss:$-184 sm:$0xc] %vm2039, %v2038
  %s2044 = scalar_lea.vmem %s1, 1767
  %2045 = vst.msk [vmem:[%s2044] ss:$-184 sm:$0x30] %vm2039, %v2038
  %s2046 = scalar_lea.vmem %s1, 2503
  %2047 = vst.msk [vmem:[%s2046] ss:$-184 sm:$0xc0] %vm2039, %v2038
  %s2048 = scalar_lea.vmem %s0, 56
  %v2049 = vld.sshfl [vmem:[%s2048] sm:$0xff pattern:$0x45670123]
  %2050 = vrot.lane.b32.xlu0 %v2049, 8
  %v2051 = vpop.permute.xlu0 %2050
  %vm2052 = vcmask 64512
  %s2053 = scalar_lea.vmem %s1, 679
  %2054 = vst.msk [vmem:[%s2053] ss:$-184 sm:$0xf] %vm2052, %v2051
  %s2055 = scalar_lea.vmem %s1, 2151
  %2056 = vst.msk [vmem:[%s2055] ss:$-184 sm:$0xf0] %vm2052, %v2051
  %s2057 = scalar_lea.vmem %s0, 64
  %v2058 = vld.sshfl [vmem:[%s2057] sm:$0xff pattern:$0x67452301]
  %2059 = vrot.lane.b32.xlu0 %v2058, 8
  %v2060 = vpop.permute.xlu0 %2059
  %vm2061 = vcmask 64512
  %s2062 = scalar_lea.vmem %s1, 327
  %2063 = vst.msk [vmem:[%s2062] ss:$-184 sm:$0x3] %vm2061, %v2060
  %s2064 = scalar_lea.vmem %s1, 1063
  %2065 = vst.msk [vmem:[%s2064] ss:$-184 sm:$0xc] %vm2061, %v2060
  %s2066 = scalar_lea.vmem %s1, 1799
  %2067 = vst.msk [vmem:[%s2066] ss:$-184 sm:$0x30] %vm2061, %v2060
  %s2068 = scalar_lea.vmem %s1, 2535
  %2069 = vst.msk [vmem:[%s2068] ss:$-184 sm:$0xc0] %vm2061, %v2060
  %s2070 = scalar_lea.vmem %s0, 72
  %v2071 = vld.sshfl [vmem:[%s2070] sm:$0xff pattern:$0x45670123]
  %2072 = vrot.lane.b32.xlu0 %v2071, 8
  %v2073 = vpop.permute.xlu0 %2072
  %vm2074 = vcmask 64512
  %s2075 = scalar_lea.vmem %s1, 711
  %2076 = vst.msk [vmem:[%s2075] ss:$-184 sm:$0xf] %vm2074, %v2073
  %s2077 = scalar_lea.vmem %s1, 2183
  %2078 = vst.msk [vmem:[%s2077] ss:$-184 sm:$0xf0] %vm2074, %v2073
  %s2079 = scalar_lea.vmem %s0, 80
  %v2080 = vld.sshfl [vmem:[%s2079] sm:$0xff pattern:$0x67452301]
  %2081 = vrot.lane.b32.xlu0 %v2080, 8
  %v2082 = vpop.permute.xlu0 %2081
  %vm2083 = vcmask 64512
  %s2084 = scalar_lea.vmem %s1, 359
  %2085 = vst.msk [vmem:[%s2084] ss:$-184 sm:$0x3] %vm2083, %v2082
  %s2086 = scalar_lea.vmem %s1, 1095
  %2087 = vst.msk [vmem:[%s2086] ss:$-184 sm:$0xc] %vm2083, %v2082
  %s2088 = scalar_lea.vmem %s1, 1831
  %2089 = vst.msk [vmem:[%s2088] ss:$-184 sm:$0x30] %vm2083, %v2082
  %s2090 = scalar_lea.vmem %s1, 2567
  %2091 = vst.msk [vmem:[%s2090] ss:$-184 sm:$0xc0] %vm2083, %v2082

// kernel: mellin_fourier_forward.7
$region0: #{mellin_fourier_forward.7}
  #allocation0 [shape = 'u32[]', space=smem, size = 0x4, offset = 0x4, fixed_abs, tag = 'smem constant byte address 0x4 - core index']
  #allocation1 [shape = 'u32[144,128]{1,0:T(1,128)}', space=vmem, size = 0x12000, scoped, tag = 'internal scratch']
  %s0 = inlined_call_operand.vmem [shape: f32[1,180,128], index: 0, kind: input, shape index: {}]
  %s1 = inlined_call_operand.vmem [shape: bf16[180,180], index: 1, kind: input, shape index: {}]
  %s2 = inlined_call_operand.vmem [shape: bf16[180,180], index: 2, kind: input, shape index: {}]
  %s3 = inlined_call_operand.vmem [shape: bf16[128,128], index: 3, kind: input, shape index: {}]
  %s4 = inlined_call_operand.vmem [shape: bf16[128,128], index: 4, kind: input, shape index: {}]
  %s5 = inlined_call_operand.vmem [shape: bf16[128,128], index: 5, kind: input, shape index: {}]
  %s6 = inlined_call_operand.vmem [shape: bf16[180,180], index: 6, kind: input, shape index: {}]
  %s7 = inlined_call_operand.vmem [shape: bf16[180,180], index: 7, kind: input, shape index: {}]
  %s8 = inlined_call_operand.vmem [shape: bf16[180,180], index: 8, kind: input, shape index: {}]
  %s9 = inlined_call_operand.vmem [shape: bf16[64,16], index: 9, kind: input, shape index: {}]
  %s10 = inlined_call_operand.vmem [shape: bf16[64,16], index: 10, kind: input, shape index: {}]
  %s11 = inlined_call_operand.vmem [shape: f32[1,180,16], index: 11, kind: output, shape index: {}]
  %s12 = sld [smem:[#allocation0]]
  $region54: #{mellin_fourier_forward.7} parent=0
    _
  %s14 = ssub.s32 1, %s12
  %s15 = scalar_select 0, %s14, %s12
  // Predicated region
  $region2: #{mellin_fourier_forward.7} parent=0 // pred_check
    _
  $region3: #{mellin_fourier_forward.7} parent=0 // pred_check_branch
    %17 = sbr.rel (0) target = $region5
  $region4: #{mellin_fourier_forward.7} parent=0 // pred_region
    _
  $region5: #{mellin_fourier_forward.7} parent=0 // pred_fallthru
    _
  // Predicated region
  $region6: #{mellin_fourier_forward.7} parent=0 // pred_check
    _
  $region7: #{mellin_fourier_forward.7} parent=0 // pred_check_branch
    %19 = sbr.rel (0) target = $region9
  $region8: #{mellin_fourier_forward.7} parent=0 // pred_region
    _
  $region9: #{mellin_fourier_forward.7} parent=0 // pred_fallthru
    _
  // Predicated region
  $region10: #{mellin_fourier_forward.7} parent=0 // pred_check
    _
  $region11: #{mellin_fourier_forward.7} parent=0 // pred_check_branch
    %21 = sbr.rel (0) target = $region13
  $region12: #{mellin_fourier_forward.7} parent=0 // pred_region
    _
  $region13: #{mellin_fourier_forward.7} parent=0 // pred_fallthru
    _
  // Predicated region
  $region14: #{mellin_fourier_forward.7} parent=0 // pred_check
    _
  $region15: #{mellin_fourier_forward.7} parent=0 // pred_check_branch
    %23 = sbr.rel (0) target = $region17
  $region16: #{mellin_fourier_forward.7} parent=0 // pred_region
    _
  $region17: #{mellin_fourier_forward.7} parent=0 // pred_fallthru
    _
  // Predicated region
  $region18: #{mellin_fourier_forward.7} parent=0 // pred_check
    _
  $region19: #{mellin_fourier_forward.7} parent=0 // pred_check_branch
    %25 = sbr.rel (0) target = $region21
  $region20: #{mellin_fourier_forward.7} parent=0 // pred_region
    _
  $region21: #{mellin_fourier_forward.7} parent=0 // pred_fallthru
    _
  // Predicated region
  $region22: #{mellin_fourier_forward.7} parent=0 // pred_check
    _
  $region23: #{mellin_fourier_forward.7} parent=0 // pred_check_branch
    %27 = sbr.rel (0) target = $region25
  $region24: #{mellin_fourier_forward.7} parent=0 // pred_region
    _
  $region25: #{mellin_fourier_forward.7} parent=0 // pred_fallthru
    _
  // Predicated region
  $region26: #{mellin_fourier_forward.7} parent=0 // pred_check
    _
  $region27: #{mellin_fourier_forward.7} parent=0 // pred_check_branch
    %29 = sbr.rel (0) target = $region29
  $region28: #{mellin_fourier_forward.7} parent=0 // pred_region
    _
  $region29: #{mellin_fourier_forward.7} parent=0 // pred_fallthru
    _
  // Predicated region
  $region30: #{mellin_fourier_forward.7} parent=0 // pred_check
    _
  $region31: #{mellin_fourier_forward.7} parent=0 // pred_check_branch
    %31 = sbr.rel (0) target = $region33
  $region32: #{mellin_fourier_forward.7} parent=0 // pred_region
    _
  $region33: #{mellin_fourier_forward.7} parent=0 // pred_fallthru
    _
  // Predicated region
  $region34: #{mellin_fourier_forward.7} parent=0 // pred_check
    _
  $region35: #{mellin_fourier_forward.7} parent=0 // pred_check_branch
    %33 = sbr.rel (0) target = $region37
  $region36: #{mellin_fourier_forward.7} parent=0 // pred_region
    _
  $region37: #{mellin_fourier_forward.7} parent=0 // pred_fallthru
    _
  // Predicated region
  $region38: #{mellin_fourier_forward.7} parent=0 // pred_check
    _
  $region39: #{mellin_fourier_forward.7} parent=0 // pred_check_branch
    %35 = sbr.rel (0) target = $region41
  $region40: #{mellin_fourier_forward.7} parent=0 // pred_region
    _
  $region41: #{mellin_fourier_forward.7} parent=0 // pred_fallthru
    _
  // Predicated region
  $region42: #{mellin_fourier_forward.7} parent=0 // pred_check
    _
  $region43: #{mellin_fourier_forward.7} parent=0 // pred_check_branch
    %37 = sbr.rel (0) target = $region45
  $region44: #{mellin_fourier_forward.7} parent=0 // pred_region
    _
  $region45: #{mellin_fourier_forward.7} parent=0 // pred_fallthru
    _
  %v39 = vld [vmem:[%s0] sm:$0xff]
  %v40 = vld [vmem:[%s0 + $0x8] sm:$0xff]
  %v41 = vld [vmem:[%s0 + $0x10] sm:$0xff]
  %v42 = vld [vmem:[%s0 + $0x18] sm:$0xff]
  %v43 = vld [vmem:[%s0 + $0x20] sm:$0xff]
  %v44 = vld [vmem:[%s0 + $0x28] sm:$0xff]
  %v45 = vld [vmem:[%s0 + $0x30] sm:$0xff]
  %v46 = vld [vmem:[%s0 + $0x38] sm:$0xff]
  %v47 = vld [vmem:[%s0 + $0x40] sm:$0xff]
  %v48 = vld [vmem:[%s0 + $0x48] sm:$0xff]
  %v49 = vld [vmem:[%s0 + $0x50] sm:$0xff]
  %v50 = vld [vmem:[%s0 + $0x58] sm:$0xff]
  %v51 = vld [vmem:[%s0 + $0x60] sm:$0xff]
  %v52 = vld [vmem:[%s0 + $0x68] sm:$0xff]
  %v53 = vld [vmem:[%s0 + $0x70] sm:$0xff]
  %v54 = vld [vmem:[%s0 + $0x78] sm:$0xff]
  %v55 = vld [vmem:[%s0 + $0x80] sm:$0xff]
  %v56 = vld [vmem:[%s0 + $0x88] sm:$0xff]
  %v57 = vld [vmem:[%s0 + $0x90] sm:$0xff]
  %v58 = vld [vmem:[%s0 + $0x98] sm:$0xff]
  %v59 = vld [vmem:[%s0 + $0xa0] sm:$0xff]
  %v60 = vld [vmem:[%s0 + $0xa8] sm:$0xff]
  %v61 = vld [vmem:[%s0 + $0xb0] sm:$0xf]
  %v62 = vpack.c.bf16 %v40, %v39
  %v63 = vpack.c.bf16 %v42, %v41
  %v64 = vpack.c.bf16 %v44, %v43
  %v65 = vpack.c.bf16 %v46, %v45
  %v66 = vpack.c.bf16 %v48, %v47
  %v67 = vpack.c.bf16 %v50, %v49
  %v68 = vpack.c.bf16 %v52, %v51
  %v69 = vpack.c.bf16 %v54, %v53
  %v70 = vpack.c.bf16 %v56, %v55
  %v71 = vpack.c.bf16 %v58, %v57
  %v72 = vpack.c.bf16 %v60, %v59
  %v73 = vpack.c.bf16 %v61, %v61
  %v74 = vld [vmem:[%s1] sm:$0xff]
  %v75 = vld [vmem:[%s1 + $0x8] sm:$0xff]
  %v76 = vld [vmem:[%s1 + $0x10] sm:$0xff]
  %v77 = vld [vmem:[%s1 + $0x18] sm:$0xff]
  %v78 = vld [vmem:[%s1 + $0x20] sm:$0xff]
  %v79 = vld [vmem:[%s1 + $0x28] sm:$0xff]
  %v80 = vld [vmem:[%s1 + $0x30] sm:$0xff]
  %v81 = vld [vmem:[%s1 + $0x38] sm:$0xff]
  %v82 = vld [vmem:[%s1 + $0x40] sm:$0xff]
  %v83 = vld [vmem:[%s1 + $0x48] sm:$0xff]
  %v84 = vld [vmem:[%s1 + $0x50] sm:$0xff]
  %v85 = vld [vmem:[%s1 + $0x58] sm:$0xff]
  %v86 = vld [vmem:[%s1 + $0x60] sm:$0xff]
  %v87 = vld [vmem:[%s1 + $0x68] sm:$0xff]
  %v88 = vld [vmem:[%s1 + $0x70] sm:$0xff]
  %v89 = vld [vmem:[%s1 + $0x78] sm:$0xff]
  %v90 = vld [vmem:[%s1 + $0x80] sm:$0xff]
  %v91 = vld [vmem:[%s1 + $0x88] sm:$0xff]
  %v92 = vld [vmem:[%s1 + $0x90] sm:$0xff]
  %v93 = vld [vmem:[%s1 + $0x98] sm:$0xff]
  %v94 = vld [vmem:[%s1 + $0xa0] sm:$0xff]
  %v95 = vld [vmem:[%s1 + $0xa8] sm:$0xff]
  %v96 = vld [vmem:[%s1 + $0xb0] sm:$0x33]
  %v120 = vunpack.c.l.b16 %v74
  %v121 = vunpack.c.h.b16 %v74
  %v122 = vunpack.c.l.b16 %v75
  %v123 = vunpack.c.h.b16 %v75
  %v124 = vunpack.c.l.b16 %v76
  %v125 = vunpack.c.h.b16 %v76
  %v126 = vunpack.c.l.b16 %v77
  %v127 = vunpack.c.h.b16 %v77
  %v128 = vunpack.c.l.b16 %v78
  %v129 = vunpack.c.h.b16 %v78
  %v130 = vunpack.c.l.b16 %v79
  %v131 = vunpack.c.h.b16 %v79
  %v132 = vunpack.c.l.b16 %v80
  %v133 = vunpack.c.h.b16 %v80
  %v134 = vunpack.c.l.b16 %v81
  %v135 = vunpack.c.h.b16 %v81
  %v136 = vunpack.c.l.b16 %v82
  %v137 = vunpack.c.h.b16 %v82
  %v138 = vunpack.c.l.b16 %v83
  %v139 = vunpack.c.h.b16 %v83
  %v140 = vunpack.c.l.b16 %v84
  %v141 = vunpack.c.h.b16 %v84
  %v142 = vunpack.c.l.b16 %v85
  %v143 = vunpack.c.h.b16 %v85
  %v144 = vunpack.c.l.b16 %v86
  %v145 = vunpack.c.h.b16 %v86
  %v146 = vunpack.c.l.b16 %v87
  %v147 = vunpack.c.h.b16 %v87
  %v148 = vunpack.c.l.b16 %v88
  %v149 = vunpack.c.h.b16 %v88
  %v150 = vunpack.c.l.b16 %v89
  %v151 = vunpack.c.h.b16 %v89
  %v152 = vunpack.c.l.b16 %v90
  %v153 = vunpack.c.h.b16 %v90
  %v154 = vunpack.c.l.b16 %v91
  %v155 = vunpack.c.h.b16 %v91
  %v156 = vunpack.c.l.b16 %v92
  %v157 = vunpack.c.h.b16 %v92
  %v158 = vunpack.c.l.b16 %v93
  %v159 = vunpack.c.h.b16 %v93
  %v160 = vunpack.c.l.b16 %v94
  %v161 = vunpack.c.h.b16 %v94
  %v162 = vunpack.c.l.b16 %v95
  %v163 = vunpack.c.h.b16 %v95
  %v164 = vunpack.c.l.b16 %v96
  %v165 = vunpack.c.h.b16 %v96
  %v166 = vpack.c.b16 %v122, %v120
  %v167 = vpack.c.b16 %v123, %v121
  %v168 = vpack.c.b16 %v126, %v124
  %v169 = vpack.c.b16 %v127, %v125
  %v170 = vpack.c.b16 %v130, %v128
  %v171 = vpack.c.b16 %v131, %v129
  %v172 = vpack.c.b16 %v134, %v132
  %v173 = vpack.c.b16 %v135, %v133
  %v174 = vpack.c.b16 %v138, %v136
  %v175 = vpack.c.b16 %v139, %v137
  %v176 = vpack.c.b16 %v142, %v140
  %v177 = vpack.c.b16 %v143, %v141
  %v178 = vpack.c.b16 %v146, %v144
  %v179 = vpack.c.b16 %v147, %v145
  %v180 = vpack.c.b16 %v150, %v148
  %v181 = vpack.c.b16 %v151, %v149
  %v182 = vpack.c.b16 %v154, %v152
  %v183 = vpack.c.b16 %v155, %v153
  %v184 = vpack.c.b16 %v158, %v156
  %v185 = vpack.c.b16 %v159, %v157
  %v186 = vpack.c.b16 %v162, %v160
  %v187 = vpack.c.b16 %v163, %v161
  %v188 = vpack.c.b16 %v164, %v164
  %v189 = vpack.c.b16 %v165, %v165
  %vm202 = vcmask 424960
  %v204 = vsel %vm202, %v167, 0
  %v207 = vsel %vm202, %v169, 0
  %v210 = vsel %vm202, %v171, 0
  %v213 = vsel %vm202, %v173, 0
  %v216 = vsel %vm202, %v175, 0
  %v219 = vsel %vm202, %v177, 0
  %v222 = vsel %vm202, %v179, 0
  %v225 = vsel %vm202, %v181, 0
  %v228 = vsel %vm202, %v183, 0
  %v231 = vsel %vm202, %v185, 0
  %v234 = vsel %vm202, %v187, 0
  %v237 = vsel %vm202, %v189, 0
  %vm239 = vcmask 1041408
  %v241 = vsel %vm239, %v73, 0
  %243 = vmatprep.subr.bf16.mxu0 0
  %244 = vmatpush1.bf16.msra.mxu0 %v69
  %245 = vmatprep.subr.bf16.mxu0 0
  %246 = vmatpush1.bf16.msra.mxu0 %v68
  %247 = vmatprep.subr.bf16.mxu0 0
  %248 = vmatpush1.bf16.msra.mxu0 %v67
  %249 = vmatprep.subr.bf16.mxu0 0
  %250 = vmatpush1.bf16.msra.mxu0 %v66
  %251 = vmatprep.subr.bf16.mxu0 0
  %252 = vmatpush1.bf16.msra.mxu0 %v65
  %253 = vmatprep.subr.bf16.mxu0 0
  %254 = vmatpush1.bf16.msra.mxu0 %v64
  %255 = vmatprep.subr.bf16.mxu0 0
  %256 = vmatpush1.bf16.msra.mxu0 %v63
  %257 = vmatprep.subr.bf16.mxu0 0
  %258 = vmatpush1.bf16.msra.mxu0 %v62
  %259 = vmatprep.subr.bf16.mxu0 0
  %260 = vmatpush2.bf16.msra.mxu0 0
  %261 = vmatprep.subr.bf16.mxu0 0
  %262 = vmatpush2.bf16.msra.mxu0 0
  %263 = vmatprep.subr.bf16.mxu0 0
  %264 = vmatpush2.bf16.msra.mxu0 0
  %265 = vmatprep.subr.bf16.mxu0 0
  %266 = vmatpush2.bf16.msra.mxu0 0
  %267 = vmatprep.subr.bf16.mxu0 0
  %268 = vmatpush2.bf16.msra.mxu0 %v241
  %269 = vmatprep.subr.bf16.mxu0 0
  %270 = vmatpush2.bf16.msra.mxu0 %v72
  %271 = vmatprep.subr.bf16.mxu0 0
  %272 = vmatpush2.bf16.msra.mxu0 %v71
  %273 = vmatprep.subr.bf16.mxu0 0
  %274 = vmatpush2.bf16.msra.mxu0 %v70
  %275 = vmatprep.mubr.bf16.mxu0 %v204
  %276 = vmatmul.mubr.bf16.gmra.mxu0 %v166
  %v277 = vpop.f32.mrf.mxu0
  %v278 = vadd.f32 0.0, %v277
  %v279 = vpop.f32.mrf.mxu0
  %v280 = vpop.f32.mrf.mxu0
  %v281 = vadd.f32 0.0, %v280
  %v282 = vpop.f32.mrf.mxu0
  %283 = vmatprep.mubr.bf16.mxu0 %v207
  %284 = vmatmul.mubr.bf16.gmra.mxu0 %v168
  %v285 = vpop.f32.mrf.mxu0
  %v286 = vadd.f32 0.0, %v285
  %v287 = vpop.f32.mrf.mxu0
  %v288 = vpop.f32.mrf.mxu0
  %v289 = vadd.f32 0.0, %v288
  %v290 = vpop.f32.mrf.mxu0
  %291 = vmatprep.mubr.bf16.mxu0 %v210
  %292 = vmatmul.mubr.bf16.gmra.mxu0 %v170
  %v293 = vpop.f32.mrf.mxu0
  %v294 = vadd.f32 0.0, %v293
  %v295 = vpop.f32.mrf.mxu0
  %v296 = vpop.f32.mrf.mxu0
  %v297 = vadd.f32 0.0, %v296
  %v298 = vpop.f32.mrf.mxu0
  %299 = vmatprep.mubr.bf16.mxu0 %v213
  %300 = vmatmul.mubr.bf16.gmra.mxu0 %v172
  %v301 = vpop.f32.mrf.mxu0
  %v302 = vadd.f32 0.0, %v301
  %v303 = vpop.f32.mrf.mxu0
  %v304 = vpop.f32.mrf.mxu0
  %v305 = vadd.f32 0.0, %v304
  %v306 = vpop.f32.mrf.mxu0
  %307 = vmatprep.mubr.bf16.mxu0 %v216
  %308 = vmatmul.mubr.bf16.gmra.mxu0 %v174
  %v309 = vpop.f32.mrf.mxu0
  %v310 = vadd.f32 0.0, %v309
  %v311 = vpop.f32.mrf.mxu0
  %v312 = vpop.f32.mrf.mxu0
  %v313 = vadd.f32 0.0, %v312
  %v314 = vpop.f32.mrf.mxu0
  %315 = vmatprep.mubr.bf16.mxu0 %v219
  %316 = vmatmul.mubr.bf16.gmra.mxu0 %v176
  %v317 = vpop.f32.mrf.mxu0
  %v318 = vadd.f32 0.0, %v317
  %v319 = vpop.f32.mrf.mxu0
  %v320 = vpop.f32.mrf.mxu0
  %v321 = vadd.f32 0.0, %v320
  %v322 = vpop.f32.mrf.mxu0
  %323 = vmatprep.mubr.bf16.mxu0 %v222
  %324 = vmatmul.mubr.bf16.gmra.mxu0 %v178
  %v325 = vpop.f32.mrf.mxu0
  %v326 = vadd.f32 0.0, %v325
  %v327 = vpop.f32.mrf.mxu0
  %v328 = vpop.f32.mrf.mxu0
  %v329 = vadd.f32 0.0, %v328
  %v330 = vpop.f32.mrf.mxu0
  %331 = vmatprep.mubr.bf16.mxu0 %v225
  %332 = vmatmul.mubr.bf16.gmra.mxu0 %v180
  %v333 = vpop.f32.mrf.mxu0
  %v334 = vadd.f32 0.0, %v333
  %v335 = vpop.f32.mrf.mxu0
  %v336 = vpop.f32.mrf.mxu0
  %v337 = vadd.f32 0.0, %v336
  %v338 = vpop.f32.mrf.mxu0
  %339 = vmatprep.mubr.bf16.mxu0 %v228
  %340 = vmatmul.mubr.bf16.gmra.mxu0 %v182
  %v341 = vpop.f32.mrf.mxu0
  %v342 = vadd.f32 0.0, %v341
  %v343 = vpop.f32.mrf.mxu0
  %v344 = vpop.f32.mrf.mxu0
  %v345 = vadd.f32 0.0, %v344
  %v346 = vpop.f32.mrf.mxu0
  %347 = vmatprep.mubr.bf16.mxu0 %v231
  %348 = vmatmul.mubr.bf16.gmra.mxu0 %v184
  %v349 = vpop.f32.mrf.mxu0
  %v350 = vadd.f32 0.0, %v349
  %v351 = vpop.f32.mrf.mxu0
  %v352 = vpop.f32.mrf.mxu0
  %v353 = vadd.f32 0.0, %v352
  %v354 = vpop.f32.mrf.mxu0
  %355 = vmatprep.mubr.bf16.mxu0 %v234
  %356 = vmatmul.mubr.bf16.gmra.mxu0 %v186
  %v357 = vpop.f32.mrf.mxu0
  %v358 = vadd.f32 0.0, %v357
  %v359 = vpop.f32.mrf.mxu0
  %v360 = vpop.f32.mrf.mxu0
  %v361 = vadd.f32 0.0, %v360
  %v362 = vpop.f32.mrf.mxu0
  %363 = vmatprep.mubr.bf16.mxu0 %v237
  %364 = vmatmul.mubr.bf16.gmra.mxu0 %v188
  %v365 = vpop.f32.mrf.mxu0
  %v366 = vadd.f32 0.0, %v365
  %v367 = vpop.f32.mrf.mxu0
  %v368 = vpop.f32.mrf.mxu0
  %v369 = vpop.f32.mrf.mxu0
  %370 = vdwg.mxu0
  %v371 = vld [vmem:[%s2] sm:$0xff]
  %v372 = vld [vmem:[%s2 + $0x8] sm:$0xff]
  %v373 = vld [vmem:[%s2 + $0x10] sm:$0xff]
  %v374 = vld [vmem:[%s2 + $0x18] sm:$0xff]
  %v375 = vld [vmem:[%s2 + $0x20] sm:$0xff]
  %v376 = vld [vmem:[%s2 + $0x28] sm:$0xff]
  %v377 = vld [vmem:[%s2 + $0x30] sm:$0xff]
  %v378 = vld [vmem:[%s2 + $0x38] sm:$0xff]
  %v379 = vld [vmem:[%s2 + $0x40] sm:$0xff]
  %v380 = vld [vmem:[%s2 + $0x48] sm:$0xff]
  %v381 = vld [vmem:[%s2 + $0x50] sm:$0xff]
  %v382 = vld [vmem:[%s2 + $0x58] sm:$0xff]
  %v383 = vld [vmem:[%s2 + $0x60] sm:$0xff]
  %v384 = vld [vmem:[%s2 + $0x68] sm:$0xff]
  %v385 = vld [vmem:[%s2 + $0x70] sm:$0xff]
  %v386 = vld [vmem:[%s2 + $0x78] sm:$0xff]
  %v387 = vld [vmem:[%s2 + $0x80] sm:$0xff]
  %v388 = vld [vmem:[%s2 + $0x88] sm:$0xff]
  %v389 = vld [vmem:[%s2 + $0x90] sm:$0xff]
  %v390 = vld [vmem:[%s2 + $0x98] sm:$0xff]
  %v391 = vld [vmem:[%s2 + $0xa0] sm:$0xff]
  %v392 = vld [vmem:[%s2 + $0xa8] sm:$0xff]
  %v393 = vld [vmem:[%s2 + $0xb0] sm:$0x33]
  %v417 = vunpack.c.l.b16 %v371
  %v418 = vunpack.c.h.b16 %v371
  %v419 = vunpack.c.l.b16 %v372
  %v420 = vunpack.c.h.b16 %v372
  %v421 = vunpack.c.l.b16 %v373
  %v422 = vunpack.c.h.b16 %v373
  %v423 = vunpack.c.l.b16 %v374
  %v424 = vunpack.c.h.b16 %v374
  %v425 = vunpack.c.l.b16 %v375
  %v426 = vunpack.c.h.b16 %v375
  %v427 = vunpack.c.l.b16 %v376
  %v428 = vunpack.c.h.b16 %v376
  %v429 = vunpack.c.l.b16 %v377
  %v430 = vunpack.c.h.b16 %v377
  %v431 = vunpack.c.l.b16 %v378
  %v432 = vunpack.c.h.b16 %v378
  %v433 = vunpack.c.l.b16 %v379
  %v434 = vunpack.c.h.b16 %v379
  %v435 = vunpack.c.l.b16 %v380
  %v436 = vunpack.c.h.b16 %v380
  %v437 = vunpack.c.l.b16 %v381
  %v438 = vunpack.c.h.b16 %v381
  %v439 = vunpack.c.l.b16 %v382
  %v440 = vunpack.c.h.b16 %v382
  %v441 = vunpack.c.l.b16 %v383
  %v442 = vunpack.c.h.b16 %v383
  %v443 = vunpack.c.l.b16 %v384
  %v444 = vunpack.c.h.b16 %v384
  %v445 = vunpack.c.l.b16 %v385
  %v446 = vunpack.c.h.b16 %v385
  %v447 = vunpack.c.l.b16 %v386
  %v448 = vunpack.c.h.b16 %v386
  %v449 = vunpack.c.l.b16 %v387
  %v450 = vunpack.c.h.b16 %v387
  %v451 = vunpack.c.l.b16 %v388
  %v452 = vunpack.c.h.b16 %v388
  %v453 = vunpack.c.l.b16 %v389
  %v454 = vunpack.c.h.b16 %v389
  %v455 = vunpack.c.l.b16 %v390
  %v456 = vunpack.c.h.b16 %v390
  %v457 = vunpack.c.l.b16 %v391
  %v458 = vunpack.c.h.b16 %v391
  %v459 = vunpack.c.l.b16 %v392
  %v460 = vunpack.c.h.b16 %v392
  %v461 = vunpack.c.l.b16 %v393
  %v462 = vunpack.c.h.b16 %v393
  %v463 = vpack.c.b16 %v419, %v417
  %v464 = vpack.c.b16 %v420, %v418
  %v465 = vpack.c.b16 %v423, %v421
  %v466 = vpack.c.b16 %v424, %v422
  %v467 = vpack.c.b16 %v427, %v425
  %v468 = vpack.c.b16 %v428, %v426
  %v469 = vpack.c.b16 %v431, %v429
  %v470 = vpack.c.b16 %v432, %v430
  %v471 = vpack.c.b16 %v435, %v433
  %v472 = vpack.c.b16 %v436, %v434
  %v473 = vpack.c.b16 %v439, %v437
  %v474 = vpack.c.b16 %v440, %v438
  %v475 = vpack.c.b16 %v443, %v441
  %v476 = vpack.c.b16 %v444, %v442
  %v477 = vpack.c.b16 %v447, %v445
  %v478 = vpack.c.b16 %v448, %v446
  %v479 = vpack.c.b16 %v451, %v449
  %v480 = vpack.c.b16 %v452, %v450
  %v481 = vpack.c.b16 %v455, %v453
  %v482 = vpack.c.b16 %v456, %v454
  %v483 = vpack.c.b16 %v459, %v457
  %v484 = vpack.c.b16 %v460, %v458
  %v485 = vpack.c.b16 %v461, %v461
  %v486 = vpack.c.b16 %v462, %v462
  %v500 = vsel %vm202, %v464, 0
  %v503 = vsel %vm202, %v466, 0
  %v506 = vsel %vm202, %v468, 0
  %v509 = vsel %vm202, %v470, 0
  %v512 = vsel %vm202, %v472, 0
  %v515 = vsel %vm202, %v474, 0
  %v518 = vsel %vm202, %v476, 0
  %v521 = vsel %vm202, %v478, 0
  %v524 = vsel %vm202, %v480, 0
  %v527 = vsel %vm202, %v482, 0
  %v530 = vsel %vm202, %v484, 0
  %v533 = vsel %vm202, %v486, 0
  %535 = vmatprep.subr.bf16.mxu0 0
  %536 = vmatpush1.bf16.msra.mxu0 %v69
  %537 = vmatprep.subr.bf16.mxu0 0
  %538 = vmatpush1.bf16.msra.mxu0 %v68
  %539 = vmatprep.subr.bf16.mxu0 0
  %540 = vmatpush1.bf16.msra.mxu0 %v67
  %541 = vmatprep.subr.bf16.mxu0 0
  %542 = vmatpush1.bf16.msra.mxu0 %v66
  %543 = vmatprep.subr.bf16.mxu0 0
  %544 = vmatpush1.bf16.msra.mxu0 %v65
  %545 = vmatprep.subr.bf16.mxu0 0
  %546 = vmatpush1.bf16.msra.mxu0 %v64
  %547 = vmatprep.subr.bf16.mxu0 0
  %548 = vmatpush1.bf16.msra.mxu0 %v63
  %549 = vmatprep.subr.bf16.mxu0 0
  %550 = vmatpush1.bf16.msra.mxu0 %v62
  %551 = vmatprep.subr.bf16.mxu0 0
  %552 = vmatpush2.bf16.msra.mxu0 0
  %553 = vmatprep.subr.bf16.mxu0 0
  %554 = vmatpush2.bf16.msra.mxu0 0
  %555 = vmatprep.subr.bf16.mxu0 0
  %556 = vmatpush2.bf16.msra.mxu0 0
  %557 = vmatprep.subr.bf16.mxu0 0
  %558 = vmatpush2.bf16.msra.mxu0 0
  %559 = vmatprep.subr.bf16.mxu0 0
  %560 = vmatpush2.bf16.msra.mxu0 %v241
  %561 = vmatprep.subr.bf16.mxu0 0
  %562 = vmatpush2.bf16.msra.mxu0 %v72
  %563 = vmatprep.subr.bf16.mxu0 0
  %564 = vmatpush2.bf16.msra.mxu0 %v71
  %565 = vmatprep.subr.bf16.mxu0 0
  %566 = vmatpush2.bf16.msra.mxu0 %v70
  %567 = vmatprep.mubr.bf16.mxu0 %v500
  %568 = vmatmul.mubr.bf16.gmra.mxu0 %v463
  %v569 = vpop.f32.mrf.mxu0
  %v570 = vadd.f32 0.0, %v569
  %v571 = vpop.f32.mrf.mxu0
  %v572 = vpop.f32.mrf.mxu0
  %v573 = vadd.f32 0.0, %v572
  %v574 = vpop.f32.mrf.mxu0
  %575 = vmatprep.mubr.bf16.mxu0 %v503
  %576 = vmatmul.mubr.bf16.gmra.mxu0 %v465
  %v577 = vpop.f32.mrf.mxu0
  %v578 = vadd.f32 0.0, %v577
  %v579 = vpop.f32.mrf.mxu0
  %v580 = vpop.f32.mrf.mxu0
  %v581 = vadd.f32 0.0, %v580
  %v582 = vpop.f32.mrf.mxu0
  %583 = vmatprep.mubr.bf16.mxu0 %v506
  %584 = vmatmul.mubr.bf16.gmra.mxu0 %v467
  %v585 = vpop.f32.mrf.mxu0
  %v586 = vadd.f32 0.0, %v585
  %v587 = vpop.f32.mrf.mxu0
  %v588 = vpop.f32.mrf.mxu0
  %v589 = vadd.f32 0.0, %v588
  %v590 = vpop.f32.mrf.mxu0
  %591 = vmatprep.mubr.bf16.mxu0 %v509
  %592 = vmatmul.mubr.bf16.gmra.mxu0 %v469
  %v593 = vpop.f32.mrf.mxu0
  %v594 = vadd.f32 0.0, %v593
  %v595 = vpop.f32.mrf.mxu0
  %v596 = vpop.f32.mrf.mxu0
  %v597 = vadd.f32 0.0, %v596
  %v598 = vpop.f32.mrf.mxu0
  %599 = vmatprep.mubr.bf16.mxu0 %v512
  %600 = vmatmul.mubr.bf16.gmra.mxu0 %v471
  %v601 = vpop.f32.mrf.mxu0
  %v602 = vadd.f32 0.0, %v601
  %v603 = vpop.f32.mrf.mxu0
  %v604 = vpop.f32.mrf.mxu0
  %v605 = vadd.f32 0.0, %v604
  %v606 = vpop.f32.mrf.mxu0
  %607 = vmatprep.mubr.bf16.mxu0 %v515
  %608 = vmatmul.mubr.bf16.gmra.mxu0 %v473
  %v609 = vpop.f32.mrf.mxu0
  %v610 = vadd.f32 0.0, %v609
  %v611 = vpop.f32.mrf.mxu0
  %v612 = vpop.f32.mrf.mxu0
  %v613 = vadd.f32 0.0, %v612
  %v614 = vpop.f32.mrf.mxu0
  %615 = vmatprep.mubr.bf16.mxu0 %v518
  %616 = vmatmul.mubr.bf16.gmra.mxu0 %v475
  %v617 = vpop.f32.mrf.mxu0
  %v618 = vadd.f32 0.0, %v617
  %v619 = vpop.f32.mrf.mxu0
  %v620 = vpop.f32.mrf.mxu0
  %v621 = vadd.f32 0.0, %v620
  %v622 = vpop.f32.mrf.mxu0
  %623 = vmatprep.mubr.bf16.mxu0 %v521
  %624 = vmatmul.mubr.bf16.gmra.mxu0 %v477
  %v625 = vpop.f32.mrf.mxu0
  %v626 = vadd.f32 0.0, %v625
  %v627 = vpop.f32.mrf.mxu0
  %v628 = vpop.f32.mrf.mxu0
  %v629 = vadd.f32 0.0, %v628
  %v630 = vpop.f32.mrf.mxu0
  %631 = vmatprep.mubr.bf16.mxu0 %v524
  %632 = vmatmul.mubr.bf16.gmra.mxu0 %v479
  %v633 = vpop.f32.mrf.mxu0
  %v634 = vadd.f32 0.0, %v633
  %v635 = vpop.f32.mrf.mxu0
  %v636 = vpop.f32.mrf.mxu0
  %v637 = vadd.f32 0.0, %v636
  %v638 = vpop.f32.mrf.mxu0
  %639 = vmatprep.mubr.bf16.mxu0 %v527
  %640 = vmatmul.mubr.bf16.gmra.mxu0 %v481
  %v641 = vpop.f32.mrf.mxu0
  %v642 = vadd.f32 0.0, %v641
  %v643 = vpop.f32.mrf.mxu0
  %v644 = vpop.f32.mrf.mxu0
  %v645 = vadd.f32 0.0, %v644
  %v646 = vpop.f32.mrf.mxu0
  %647 = vmatprep.mubr.bf16.mxu0 %v530
  %648 = vmatmul.mubr.bf16.gmra.mxu0 %v483
  %v649 = vpop.f32.mrf.mxu0
  %v650 = vadd.f32 0.0, %v649
  %v651 = vpop.f32.mrf.mxu0
  %v652 = vpop.f32.mrf.mxu0
  %v653 = vadd.f32 0.0, %v652
  %v654 = vpop.f32.mrf.mxu0
  %655 = vmatprep.mubr.bf16.mxu0 %v533
  %656 = vmatmul.mubr.bf16.gmra.mxu0 %v485
  %v657 = vpop.f32.mrf.mxu0
  %v658 = vadd.f32 0.0, %v657
  %v659 = vpop.f32.mrf.mxu0
  %v660 = vpop.f32.mrf.mxu0
  %v661 = vpop.f32.mrf.mxu0
  %662 = vdwg.mxu0
  %v663 = vpack.c.bf16 %v281, %v278
  %v664 = vpack.c.bf16 %v289, %v286
  %v665 = vpack.c.bf16 %v297, %v294
  %v666 = vpack.c.bf16 %v305, %v302
  %v667 = vpack.c.bf16 %v313, %v310
  %v668 = vpack.c.bf16 %v321, %v318
  %v669 = vpack.c.bf16 %v329, %v326
  %v670 = vpack.c.bf16 %v337, %v334
  %v671 = vpack.c.bf16 %v345, %v342
  %v672 = vpack.c.bf16 %v353, %v350
  %v673 = vpack.c.bf16 %v361, %v358
  %v674 = vpack.c.bf16 %v366, %v366
  %v675 = vld [vmem:[%s3] sm:$0xf]
  %v676 = vld [vmem:[%s3 + $0x4] sm:$0xf]
  %v677 = vld [vmem:[%s3 + $0x8] sm:$0xf]
  %v678 = vld [vmem:[%s3 + $0xc] sm:$0xf]
  %v679 = vld [vmem:[%s3 + $0x10] sm:$0xf]
  %v680 = vld [vmem:[%s3 + $0x14] sm:$0xf]
  %v681 = vld [vmem:[%s3 + $0x18] sm:$0xf]
  %v682 = vld [vmem:[%s3 + $0x1c] sm:$0xf]
  %v683 = vld [vmem:[%s3 + $0x20] sm:$0xf]
  %v684 = vld [vmem:[%s3 + $0x24] sm:$0xf]
  %v685 = vld [vmem:[%s3 + $0x28] sm:$0xf]
  %v686 = vld [vmem:[%s3 + $0x2c] sm:$0xf]
  %v687 = vld [vmem:[%s3 + $0x30] sm:$0xf]
  %v688 = vld [vmem:[%s3 + $0x34] sm:$0xf]
  %v689 = vld [vmem:[%s3 + $0x38] sm:$0xf]
  %v690 = vld [vmem:[%s3 + $0x3c] sm:$0xf]
  %v707 = vunpack.c.l.b16 %v675
  %v708 = vunpack.c.l.b16 %v676
  %v709 = vunpack.c.l.b16 %v677
  %v710 = vunpack.c.l.b16 %v678
  %v711 = vunpack.c.l.b16 %v679
  %v712 = vunpack.c.l.b16 %v680
  %v713 = vunpack.c.l.b16 %v681
  %v714 = vunpack.c.l.b16 %v682
  %v715 = vunpack.c.l.b16 %v683
  %v716 = vunpack.c.l.b16 %v684
  %v717 = vunpack.c.l.b16 %v685
  %v718 = vunpack.c.l.b16 %v686
  %v719 = vunpack.c.l.b16 %v687
  %v720 = vunpack.c.l.b16 %v688
  %v721 = vunpack.c.l.b16 %v689
  %v722 = vunpack.c.l.b16 %v690
  %v723 = vpack.c.b16 %v708, %v707
  %v724 = vpack.c.b16 %v710, %v709
  %v725 = vpack.c.b16 %v712, %v711
  %v726 = vpack.c.b16 %v714, %v713
  %v727 = vpack.c.b16 %v716, %v715
  %v728 = vpack.c.b16 %v718, %v717
  %v729 = vpack.c.b16 %v720, %v719
  %v730 = vpack.c.b16 %v722, %v721
  %739 = vmatprep.subr.bf16.mxu0 0
  %740 = vmatpush1.bf16.msra.mxu0 %v730
  %741 = vmatprep.subr.bf16.mxu0 0
  %742 = vmatpush1.bf16.msra.mxu0 %v729
  %743 = vmatprep.subr.bf16.mxu0 0
  %744 = vmatpush1.bf16.msra.mxu0 %v728
  %745 = vmatprep.subr.bf16.mxu0 0
  %746 = vmatpush1.bf16.msra.mxu0 %v727
  %747 = vmatprep.subr.bf16.mxu0 0
  %748 = vmatpush1.bf16.msra.mxu0 %v726
  %749 = vmatprep.subr.bf16.mxu0 0
  %750 = vmatpush1.bf16.msra.mxu0 %v725
  %751 = vmatprep.subr.bf16.mxu0 0
  %752 = vmatpush1.bf16.msra.mxu0 %v724
  %753 = vmatprep.subr.bf16.mxu0 0
  %754 = vmatpush1.bf16.msra.mxu0 %v723
  %755 = vmatprep.subr.bf16.mxu0 0
  %756 = vmatpush2.bf16.msra.mxu0 0
  %757 = vmatprep.subr.bf16.mxu0 0
  %758 = vmatpush2.bf16.msra.mxu0 0
  %759 = vmatprep.subr.bf16.mxu0 0
  %760 = vmatpush2.bf16.msra.mxu0 0
  %761 = vmatprep.subr.bf16.mxu0 0
  %762 = vmatpush2.bf16.msra.mxu0 0
  %763 = vmatprep.subr.bf16.mxu0 0
  %764 = vmatpush2.bf16.msra.mxu0 0
  %765 = vmatprep.subr.bf16.mxu0 0
  %766 = vmatpush2.bf16.msra.mxu0 0
  %767 = vmatprep.subr.bf16.mxu0 0
  %768 = vmatpush2.bf16.msra.mxu0 0
  %769 = vmatprep.subr.bf16.mxu0 0
  %770 = vmatpush2.bf16.msra.mxu0 0
  %771 = vmatprep.mubr.bf16.mxu0 0
  %772 = vmatmul.mubr.bf16.gmra.mxu0 %v663
  %v773 = vpop.f32.mrf.mxu0
  %v774 = vadd.f32 0.0, %v773
  %v775 = vpop.f32.mrf.mxu0
  %v776 = vpop.f32.mrf.mxu0
  %v777 = vadd.f32 0.0, %v776
  %v778 = vpop.f32.mrf.mxu0
  %779 = vmatprep.mubr.bf16.mxu0 0
  %780 = vmatmul.mubr.bf16.gmra.mxu0 %v664
  %v781 = vpop.f32.mrf.mxu0
  %v782 = vadd.f32 0.0, %v781
  %v783 = vpop.f32.mrf.mxu0
  %v784 = vpop.f32.mrf.mxu0
  %v785 = vadd.f32 0.0, %v784
  %v786 = vpop.f32.mrf.mxu0
  %787 = vmatprep.mubr.bf16.mxu0 0
  %788 = vmatmul.mubr.bf16.gmra.mxu0 %v665
  %v789 = vpop.f32.mrf.mxu0
  %v790 = vadd.f32 0.0, %v789
  %v791 = vpop.f32.mrf.mxu0
  %v792 = vpop.f32.mrf.mxu0
  %v793 = vadd.f32 0.0, %v792
  %v794 = vpop.f32.mrf.mxu0
  %795 = vmatprep.mubr.bf16.mxu0 0
  %796 = vmatmul.mubr.bf16.gmra.mxu0 %v666
  %v797 = vpop.f32.mrf.mxu0
  %v798 = vadd.f32 0.0, %v797
  %v799 = vpop.f32.mrf.mxu0
  %v800 = vpop.f32.mrf.mxu0
  %v801 = vadd.f32 0.0, %v800
  %v802 = vpop.f32.mrf.mxu0
  %803 = vmatprep.mubr.bf16.mxu0 0
  %804 = vmatmul.mubr.bf16.gmra.mxu0 %v667
  %v805 = vpop.f32.mrf.mxu0
  %v806 = vadd.f32 0.0, %v805
  %v807 = vpop.f32.mrf.mxu0
  %v808 = vpop.f32.mrf.mxu0
  %v809 = vadd.f32 0.0, %v808
  %v810 = vpop.f32.mrf.mxu0
  %811 = vmatprep.mubr.bf16.mxu0 0
  %812 = vmatmul.mubr.bf16.gmra.mxu0 %v668
  %v813 = vpop.f32.mrf.mxu0
  %v814 = vadd.f32 0.0, %v813
  %v815 = vpop.f32.mrf.mxu0
  %v816 = vpop.f32.mrf.mxu0
  %v817 = vadd.f32 0.0, %v816
  %v818 = vpop.f32.mrf.mxu0
  %819 = vmatprep.mubr.bf16.mxu0 0
  %820 = vmatmul.mubr.bf16.gmra.mxu0 %v669
  %v821 = vpop.f32.mrf.mxu0
  %v822 = vadd.f32 0.0, %v821
  %v823 = vpop.f32.mrf.mxu0
  %v824 = vpop.f32.mrf.mxu0
  %v825 = vadd.f32 0.0, %v824
  %v826 = vpop.f32.mrf.mxu0
  %827 = vmatprep.mubr.bf16.mxu0 0
  %828 = vmatmul.mubr.bf16.gmra.mxu0 %v670
  %v829 = vpop.f32.mrf.mxu0
  %v830 = vadd.f32 0.0, %v829
  %v831 = vpop.f32.mrf.mxu0
  %v832 = vpop.f32.mrf.mxu0
  %v833 = vadd.f32 0.0, %v832
  %v834 = vpop.f32.mrf.mxu0
  %835 = vmatprep.mubr.bf16.mxu0 0
  %836 = vmatmul.mubr.bf16.gmra.mxu0 %v671
  %v837 = vpop.f32.mrf.mxu0
  %v838 = vadd.f32 0.0, %v837
  %v839 = vpop.f32.mrf.mxu0
  %v840 = vpop.f32.mrf.mxu0
  %v841 = vadd.f32 0.0, %v840
  %v842 = vpop.f32.mrf.mxu0
  %843 = vmatprep.mubr.bf16.mxu0 0
  %844 = vmatmul.mubr.bf16.gmra.mxu0 %v672
  %v845 = vpop.f32.mrf.mxu0
  %v846 = vadd.f32 0.0, %v845
  %v847 = vpop.f32.mrf.mxu0
  %v848 = vpop.f32.mrf.mxu0
  %v849 = vadd.f32 0.0, %v848
  %v850 = vpop.f32.mrf.mxu0
  %851 = vmatprep.mubr.bf16.mxu0 0
  %852 = vmatmul.mubr.bf16.gmra.mxu0 %v673
  %v853 = vpop.f32.mrf.mxu0
  %v854 = vadd.f32 0.0, %v853
  %v855 = vpop.f32.mrf.mxu0
  %v856 = vpop.f32.mrf.mxu0
  %v857 = vadd.f32 0.0, %v856
  %v858 = vpop.f32.mrf.mxu0
  %859 = vmatprep.mubr.bf16.mxu0 0
  %860 = vmatmul.mubr.bf16.gmra.mxu0 %v674
  %v861 = vpop.f32.mrf.mxu0
  %v862 = vadd.f32 0.0, %v861
  %v863 = vpop.f32.mrf.mxu0
  %v864 = vpop.f32.mrf.mxu0
  %v865 = vpop.f32.mrf.mxu0
  %866 = vdwg.mxu0
  %v867 = vpack.c.bf16 %v573, %v570
  %v868 = vpack.c.bf16 %v581, %v578
  %v869 = vpack.c.bf16 %v589, %v586
  %v870 = vpack.c.bf16 %v597, %v594
  %v871 = vpack.c.bf16 %v605, %v602
  %v872 = vpack.c.bf16 %v613, %v610
  %v873 = vpack.c.bf16 %v621, %v618
  %v874 = vpack.c.bf16 %v629, %v626
  %v875 = vpack.c.bf16 %v637, %v634
  %v876 = vpack.c.bf16 %v645, %v642
  %v877 = vpack.c.bf16 %v653, %v650
  %v878 = vpack.c.bf16 %v658, %v658
  %v879 = vld [vmem:[%s4] sm:$0xf]
  %v880 = vld [vmem:[%s4 + $0x4] sm:$0xf]
  %v881 = vld [vmem:[%s4 + $0x8] sm:$0xf]
  %v882 = vld [vmem:[%s4 + $0xc] sm:$0xf]
  %v883 = vld [vmem:[%s4 + $0x10] sm:$0xf]
  %v884 = vld [vmem:[%s4 + $0x14] sm:$0xf]
  %v885 = vld [vmem:[%s4 + $0x18] sm:$0xf]
  %v886 = vld [vmem:[%s4 + $0x1c] sm:$0xf]
  %v887 = vld [vmem:[%s4 + $0x20] sm:$0xf]
  %v888 = vld [vmem:[%s4 + $0x24] sm:$0xf]
  %v889 = vld [vmem:[%s4 + $0x28] sm:$0xf]
  %v890 = vld [vmem:[%s4 + $0x2c] sm:$0xf]
  %v891 = vld [vmem:[%s4 + $0x30] sm:$0xf]
  %v892 = vld [vmem:[%s4 + $0x34] sm:$0xf]
  %v893 = vld [vmem:[%s4 + $0x38] sm:$0xf]
  %v894 = vld [vmem:[%s4 + $0x3c] sm:$0xf]
  %v911 = vunpack.c.l.b16 %v879
  %v912 = vunpack.c.l.b16 %v880
  %v913 = vunpack.c.l.b16 %v881
  %v914 = vunpack.c.l.b16 %v882
  %v915 = vunpack.c.l.b16 %v883
  %v916 = vunpack.c.l.b16 %v884
  %v917 = vunpack.c.l.b16 %v885
  %v918 = vunpack.c.l.b16 %v886
  %v919 = vunpack.c.l.b16 %v887
  %v920 = vunpack.c.l.b16 %v888
  %v921 = vunpack.c.l.b16 %v889
  %v922 = vunpack.c.l.b16 %v890
  %v923 = vunpack.c.l.b16 %v891
  %v924 = vunpack.c.l.b16 %v892
  %v925 = vunpack.c.l.b16 %v893
  %v926 = vunpack.c.l.b16 %v894
  %v927 = vpack.c.b16 %v912, %v911
  %v928 = vpack.c.b16 %v914, %v913
  %v929 = vpack.c.b16 %v916, %v915
  %v930 = vpack.c.b16 %v918, %v917
  %v931 = vpack.c.b16 %v920, %v919
  %v932 = vpack.c.b16 %v922, %v921
  %v933 = vpack.c.b16 %v924, %v923
  %v934 = vpack.c.b16 %v926, %v925
  %943 = vmatprep.subr.bf16.mxu0 0
  %944 = vmatpush1.bf16.msra.mxu0 %v934
  %945 = vmatprep.subr.bf16.mxu0 0
  %946 = vmatpush1.bf16.msra.mxu0 %v933
  %947 = vmatprep.subr.bf16.mxu0 0
  %948 = vmatpush1.bf16.msra.mxu0 %v932
  %949 = vmatprep.subr.bf16.mxu0 0
  %950 = vmatpush1.bf16.msra.mxu0 %v931
  %951 = vmatprep.subr.bf16.mxu0 0
  %952 = vmatpush1.bf16.msra.mxu0 %v930
  %953 = vmatprep.subr.bf16.mxu0 0
  %954 = vmatpush1.bf16.msra.mxu0 %v929
  %955 = vmatprep.subr.bf16.mxu0 0
  %956 = vmatpush1.bf16.msra.mxu0 %v928
  %957 = vmatprep.subr.bf16.mxu0 0
  %958 = vmatpush1.bf16.msra.mxu0 %v927
  %959 = vmatprep.subr.bf16.mxu0 0
  %960 = vmatpush2.bf16.msra.mxu0 0
  %961 = vmatprep.subr.bf16.mxu0 0
  %962 = vmatpush2.bf16.msra.mxu0 0
  %963 = vmatprep.subr.bf16.mxu0 0
  %964 = vmatpush2.bf16.msra.mxu0 0
  %965 = vmatprep.subr.bf16.mxu0 0
  %966 = vmatpush2.bf16.msra.mxu0 0
  %967 = vmatprep.subr.bf16.mxu0 0
  %968 = vmatpush2.bf16.msra.mxu0 0
  %969 = vmatprep.subr.bf16.mxu0 0
  %970 = vmatpush2.bf16.msra.mxu0 0
  %971 = vmatprep.subr.bf16.mxu0 0
  %972 = vmatpush2.bf16.msra.mxu0 0
  %973 = vmatprep.subr.bf16.mxu0 0
  %974 = vmatpush2.bf16.msra.mxu0 0
  %975 = vmatprep.mubr.bf16.mxu0 0
  %976 = vmatmul.mubr.bf16.gmra.mxu0 %v867
  %v977 = vpop.f32.mrf.mxu0
  %v978 = vadd.f32 0.0, %v977
  %v979 = vpop.f32.mrf.mxu0
  %v980 = vpop.f32.mrf.mxu0
  %v981 = vadd.f32 0.0, %v980
  %v982 = vpop.f32.mrf.mxu0
  %983 = vmatprep.mubr.bf16.mxu0 0
  %984 = vmatmul.mubr.bf16.gmra.mxu0 %v868
  %v985 = vpop.f32.mrf.mxu0
  %v986 = vadd.f32 0.0, %v985
  %v987 = vpop.f32.mrf.mxu0
  %v988 = vpop.f32.mrf.mxu0
  %v989 = vadd.f32 0.0, %v988
  %v990 = vpop.f32.mrf.mxu0
  %991 = vmatprep.mubr.bf16.mxu0 0
  %992 = vmatmul.mubr.bf16.gmra.mxu0 %v869
  %v993 = vpop.f32.mrf.mxu0
  %v994 = vadd.f32 0.0, %v993
  %v995 = vpop.f32.mrf.mxu0
  %v996 = vpop.f32.mrf.mxu0
  %v997 = vadd.f32 0.0, %v996
  %v998 = vpop.f32.mrf.mxu0
  %999 = vmatprep.mubr.bf16.mxu0 0
  %1000 = vmatmul.mubr.bf16.gmra.mxu0 %v870
  %v1001 = vpop.f32.mrf.mxu0
  %v1002 = vadd.f32 0.0, %v1001
  %v1003 = vpop.f32.mrf.mxu0
  %v1004 = vpop.f32.mrf.mxu0
  %v1005 = vadd.f32 0.0, %v1004
  %v1006 = vpop.f32.mrf.mxu0
  %1007 = vmatprep.mubr.bf16.mxu0 0
  %1008 = vmatmul.mubr.bf16.gmra.mxu0 %v871
  %v1009 = vpop.f32.mrf.mxu0
  %v1010 = vadd.f32 0.0, %v1009
  %v1011 = vpop.f32.mrf.mxu0
  %v1012 = vpop.f32.mrf.mxu0
  %v1013 = vadd.f32 0.0, %v1012
  %v1014 = vpop.f32.mrf.mxu0
  %1015 = vmatprep.mubr.bf16.mxu0 0
  %1016 = vmatmul.mubr.bf16.gmra.mxu0 %v872
  %v1017 = vpop.f32.mrf.mxu0
  %v1018 = vadd.f32 0.0, %v1017
  %v1019 = vpop.f32.mrf.mxu0
  %v1020 = vpop.f32.mrf.mxu0
  %v1021 = vadd.f32 0.0, %v1020
  %v1022 = vpop.f32.mrf.mxu0
  %1023 = vmatprep.mubr.bf16.mxu0 0
  %1024 = vmatmul.mubr.bf16.gmra.mxu0 %v873
  %v1025 = vpop.f32.mrf.mxu0
  %v1026 = vadd.f32 0.0, %v1025
  %v1027 = vpop.f32.mrf.mxu0
  %v1028 = vpop.f32.mrf.mxu0
  %v1029 = vadd.f32 0.0, %v1028
  %v1030 = vpop.f32.mrf.mxu0
  %1031 = vmatprep.mubr.bf16.mxu0 0
  %1032 = vmatmul.mubr.bf16.gmra.mxu0 %v874
  %v1033 = vpop.f32.mrf.mxu0
  %v1034 = vadd.f32 0.0, %v1033
  %v1035 = vpop.f32.mrf.mxu0
  %v1036 = vpop.f32.mrf.mxu0
  %v1037 = vadd.f32 0.0, %v1036
  %v1038 = vpop.f32.mrf.mxu0
  %1039 = vmatprep.mubr.bf16.mxu0 0
  %1040 = vmatmul.mubr.bf16.gmra.mxu0 %v875
  %v1041 = vpop.f32.mrf.mxu0
  %v1042 = vadd.f32 0.0, %v1041
  %v1043 = vpop.f32.mrf.mxu0
  %v1044 = vpop.f32.mrf.mxu0
  %v1045 = vadd.f32 0.0, %v1044
  %v1046 = vpop.f32.mrf.mxu0
  %1047 = vmatprep.mubr.bf16.mxu0 0
  %1048 = vmatmul.mubr.bf16.gmra.mxu0 %v876
  %v1049 = vpop.f32.mrf.mxu0
  %v1050 = vadd.f32 0.0, %v1049
  %v1051 = vpop.f32.mrf.mxu0
  %v1052 = vpop.f32.mrf.mxu0
  %v1053 = vadd.f32 0.0, %v1052
  %v1054 = vpop.f32.mrf.mxu0
  %1055 = vmatprep.mubr.bf16.mxu0 0
  %1056 = vmatmul.mubr.bf16.gmra.mxu0 %v877
  %v1057 = vpop.f32.mrf.mxu0
  %v1058 = vadd.f32 0.0, %v1057
  %v1059 = vpop.f32.mrf.mxu0
  %v1060 = vpop.f32.mrf.mxu0
  %v1061 = vadd.f32 0.0, %v1060
  %v1062 = vpop.f32.mrf.mxu0
  %1063 = vmatprep.mubr.bf16.mxu0 0
  %1064 = vmatmul.mubr.bf16.gmra.mxu0 %v878
  %v1065 = vpop.f32.mrf.mxu0
  %v1066 = vadd.f32 0.0, %v1065
  %v1067 = vpop.f32.mrf.mxu0
  %v1068 = vpop.f32.mrf.mxu0
  %v1069 = vpop.f32.mrf.mxu0
  %1070 = vdwg.mxu0
  %v1071 = vadd.f32 %v278, %v570
  %v1072 = vadd.f32 %v281, %v573
  %v1073 = vadd.f32 %v286, %v578
  %v1074 = vadd.f32 %v289, %v581
  %v1075 = vadd.f32 %v294, %v586
  %v1076 = vadd.f32 %v297, %v589
  %v1077 = vadd.f32 %v302, %v594
  %v1078 = vadd.f32 %v305, %v597
  %v1079 = vadd.f32 %v310, %v602
  %v1080 = vadd.f32 %v313, %v605
  %v1081 = vadd.f32 %v318, %v610
  %v1082 = vadd.f32 %v321, %v613
  %v1083 = vadd.f32 %v326, %v618
  %v1084 = vadd.f32 %v329, %v621
  %v1085 = vadd.f32 %v334, %v626
  %v1086 = vadd.f32 %v337, %v629
  %v1087 = vadd.f32 %v342, %v634
  %v1088 = vadd.f32 %v345, %v637
  %v1089 = vadd.f32 %v350, %v642
  %v1090 = vadd.f32 %v353, %v645
  %v1091 = vadd.f32 %v358, %v650
  %v1092 = vadd.f32 %v361, %v653
  %v1093 = vadd.f32 %v366, %v658
  %v1094 = vpack.c.bf16 %v1072, %v1071
  %v1095 = vpack.c.bf16 %v1074, %v1073
  %v1096 = vpack.c.bf16 %v1076, %v1075
  %v1097 = vpack.c.bf16 %v1078, %v1077
  %v1098 = vpack.c.bf16 %v1080, %v1079
  %v1099 = vpack.c.bf16 %v1082, %v1081
  %v1100 = vpack.c.bf16 %v1084, %v1083
  %v1101 = vpack.c.bf16 %v1086, %v1085
  %v1102 = vpack.c.bf16 %v1088, %v1087
  %v1103 = vpack.c.bf16 %v1090, %v1089
  %v1104 = vpack.c.bf16 %v1092, %v1091
  %v1105 = vpack.c.bf16 %v1093, %v1093
  %v1106 = vld [vmem:[%s5] sm:$0xf]
  %v1107 = vld [vmem:[%s5 + $0x4] sm:$0xf]
  %v1108 = vld [vmem:[%s5 + $0x8] sm:$0xf]
  %v1109 = vld [vmem:[%s5 + $0xc] sm:$0xf]
  %v1110 = vld [vmem:[%s5 + $0x10] sm:$0xf]
  %v1111 = vld [vmem:[%s5 + $0x14] sm:$0xf]
  %v1112 = vld [vmem:[%s5 + $0x18] sm:$0xf]
  %v1113 = vld [vmem:[%s5 + $0x1c] sm:$0xf]
  %v1114 = vld [vmem:[%s5 + $0x20] sm:$0xf]
  %v1115 = vld [vmem:[%s5 + $0x24] sm:$0xf]
  %v1116 = vld [vmem:[%s5 + $0x28] sm:$0xf]
  %v1117 = vld [vmem:[%s5 + $0x2c] sm:$0xf]
  %v1118 = vld [vmem:[%s5 + $0x30] sm:$0xf]
  %v1119 = vld [vmem:[%s5 + $0x34] sm:$0xf]
  %v1120 = vld [vmem:[%s5 + $0x38] sm:$0xf]
  %v1121 = vld [vmem:[%s5 + $0x3c] sm:$0xf]
  %v1138 = vunpack.c.l.b16 %v1106
  %v1139 = vunpack.c.l.b16 %v1107
  %v1140 = vunpack.c.l.b16 %v1108
  %v1141 = vunpack.c.l.b16 %v1109
  %v1142 = vunpack.c.l.b16 %v1110
  %v1143 = vunpack.c.l.b16 %v1111
  %v1144 = vunpack.c.l.b16 %v1112
  %v1145 = vunpack.c.l.b16 %v1113
  %v1146 = vunpack.c.l.b16 %v1114
  %v1147 = vunpack.c.l.b16 %v1115
  %v1148 = vunpack.c.l.b16 %v1116
  %v1149 = vunpack.c.l.b16 %v1117
  %v1150 = vunpack.c.l.b16 %v1118
  %v1151 = vunpack.c.l.b16 %v1119
  %v1152 = vunpack.c.l.b16 %v1120
  %v1153 = vunpack.c.l.b16 %v1121
  %v1154 = vpack.c.b16 %v1139, %v1138
  %v1155 = vpack.c.b16 %v1141, %v1140
  %v1156 = vpack.c.b16 %v1143, %v1142
  %v1157 = vpack.c.b16 %v1145, %v1144
  %v1158 = vpack.c.b16 %v1147, %v1146
  %v1159 = vpack.c.b16 %v1149, %v1148
  %v1160 = vpack.c.b16 %v1151, %v1150
  %v1161 = vpack.c.b16 %v1153, %v1152
  %1170 = vmatprep.subr.bf16.mxu0 0
  %1171 = vmatpush1.bf16.msra.mxu0 %v1161
  %1172 = vmatprep.subr.bf16.mxu0 0
  %1173 = vmatpush1.bf16.msra.mxu0 %v1160
  %1174 = vmatprep.subr.bf16.mxu0 0
  %1175 = vmatpush1.bf16.msra.mxu0 %v1159
  %1176 = vmatprep.subr.bf16.mxu0 0
  %1177 = vmatpush1.bf16.msra.mxu0 %v1158
  %1178 = vmatprep.subr.bf16.mxu0 0
  %1179 = vmatpush1.bf16.msra.mxu0 %v1157
  %1180 = vmatprep.subr.bf16.mxu0 0
  %1181 = vmatpush1.bf16.msra.mxu0 %v1156
  %1182 = vmatprep.subr.bf16.mxu0 0
  %1183 = vmatpush1.bf16.msra.mxu0 %v1155
  %1184 = vmatprep.subr.bf16.mxu0 0
  %1185 = vmatpush1.bf16.msra.mxu0 %v1154
  %1186 = vmatprep.subr.bf16.mxu0 0
  %1187 = vmatpush2.bf16.msra.mxu0 0
  %1188 = vmatprep.subr.bf16.mxu0 0
  %1189 = vmatpush2.bf16.msra.mxu0 0
  %1190 = vmatprep.subr.bf16.mxu0 0
  %1191 = vmatpush2.bf16.msra.mxu0 0
  %1192 = vmatprep.subr.bf16.mxu0 0
  %1193 = vmatpush2.bf16.msra.mxu0 0
  %1194 = vmatprep.subr.bf16.mxu0 0
  %1195 = vmatpush2.bf16.msra.mxu0 0
  %1196 = vmatprep.subr.bf16.mxu0 0
  %1197 = vmatpush2.bf16.msra.mxu0 0
  %1198 = vmatprep.subr.bf16.mxu0 0
  %1199 = vmatpush2.bf16.msra.mxu0 0
  %1200 = vmatprep.subr.bf16.mxu0 0
  %1201 = vmatpush2.bf16.msra.mxu0 0
  %1202 = vmatprep.mubr.bf16.mxu0 0
  %1203 = vmatmul.mubr.bf16.gmra.mxu0 %v1094
  %v1204 = vpop.f32.mrf.mxu0
  %v1205 = vadd.f32 0.0, %v1204
  %v1206 = vpop.f32.mrf.mxu0
  %v1207 = vpop.f32.mrf.mxu0
  %v1208 = vadd.f32 0.0, %v1207
  %v1209 = vpop.f32.mrf.mxu0
  %1210 = vmatprep.mubr.bf16.mxu0 0
  %1211 = vmatmul.mubr.bf16.gmra.mxu0 %v1095
  %v1212 = vpop.f32.mrf.mxu0
  %v1213 = vadd.f32 0.0, %v1212
  %v1214 = vpop.f32.mrf.mxu0
  %v1215 = vpop.f32.mrf.mxu0
  %v1216 = vadd.f32 0.0, %v1215
  %v1217 = vpop.f32.mrf.mxu0
  %1218 = vmatprep.mubr.bf16.mxu0 0
  %1219 = vmatmul.mubr.bf16.gmra.mxu0 %v1096
  %v1220 = vpop.f32.mrf.mxu0
  %v1221 = vadd.f32 0.0, %v1220
  %v1222 = vpop.f32.mrf.mxu0
  %v1223 = vpop.f32.mrf.mxu0
  %v1224 = vadd.f32 0.0, %v1223
  %v1225 = vpop.f32.mrf.mxu0
  %1226 = vmatprep.mubr.bf16.mxu0 0
  %1227 = vmatmul.mubr.bf16.gmra.mxu0 %v1097
  %v1228 = vpop.f32.mrf.mxu0
  %v1229 = vadd.f32 0.0, %v1228
  %v1230 = vpop.f32.mrf.mxu0
  %v1231 = vpop.f32.mrf.mxu0
  %v1232 = vadd.f32 0.0, %v1231
  %v1233 = vpop.f32.mrf.mxu0
  %1234 = vmatprep.mubr.bf16.mxu0 0
  %1235 = vmatmul.mubr.bf16.gmra.mxu0 %v1098
  %v1236 = vpop.f32.mrf.mxu0
  %v1237 = vadd.f32 0.0, %v1236
  %v1238 = vpop.f32.mrf.mxu0
  %v1239 = vpop.f32.mrf.mxu0
  %v1240 = vadd.f32 0.0, %v1239
  %v1241 = vpop.f32.mrf.mxu0
  %1242 = vmatprep.mubr.bf16.mxu0 0
  %1243 = vmatmul.mubr.bf16.gmra.mxu0 %v1099
  %v1244 = vpop.f32.mrf.mxu0
  %v1245 = vadd.f32 0.0, %v1244
  %v1246 = vpop.f32.mrf.mxu0
  %v1247 = vpop.f32.mrf.mxu0
  %v1248 = vadd.f32 0.0, %v1247
  %v1249 = vpop.f32.mrf.mxu0
  %1250 = vmatprep.mubr.bf16.mxu0 0
  %1251 = vmatmul.mubr.bf16.gmra.mxu0 %v1100
  %v1252 = vpop.f32.mrf.mxu0
  %v1253 = vadd.f32 0.0, %v1252
  %v1254 = vpop.f32.mrf.mxu0
  %v1255 = vpop.f32.mrf.mxu0
  %v1256 = vadd.f32 0.0, %v1255
  %v1257 = vpop.f32.mrf.mxu0
  %1258 = vmatprep.mubr.bf16.mxu0 0
  %1259 = vmatmul.mubr.bf16.gmra.mxu0 %v1101
  %v1260 = vpop.f32.mrf.mxu0
  %v1261 = vadd.f32 0.0, %v1260
  %v1262 = vpop.f32.mrf.mxu0
  %v1263 = vpop.f32.mrf.mxu0
  %v1264 = vadd.f32 0.0, %v1263
  %v1265 = vpop.f32.mrf.mxu0
  %1266 = vmatprep.mubr.bf16.mxu0 0
  %1267 = vmatmul.mubr.bf16.gmra.mxu0 %v1102
  %v1268 = vpop.f32.mrf.mxu0
  %v1269 = vadd.f32 0.0, %v1268
  %v1270 = vpop.f32.mrf.mxu0
  %v1271 = vpop.f32.mrf.mxu0
  %v1272 = vadd.f32 0.0, %v1271
  %v1273 = vpop.f32.mrf.mxu0
  %1274 = vmatprep.mubr.bf16.mxu0 0
  %1275 = vmatmul.mubr.bf16.gmra.mxu0 %v1103
  %v1276 = vpop.f32.mrf.mxu0
  %v1277 = vadd.f32 0.0, %v1276
  %v1278 = vpop.f32.mrf.mxu0
  %v1279 = vpop.f32.mrf.mxu0
  %v1280 = vadd.f32 0.0, %v1279
  %v1281 = vpop.f32.mrf.mxu0
  %1282 = vmatprep.mubr.bf16.mxu0 0
  %1283 = vmatmul.mubr.bf16.gmra.mxu0 %v1104
  %v1284 = vpop.f32.mrf.mxu0
  %v1285 = vadd.f32 0.0, %v1284
  %v1286 = vpop.f32.mrf.mxu0
  %v1287 = vpop.f32.mrf.mxu0
  %v1288 = vadd.f32 0.0, %v1287
  %v1289 = vpop.f32.mrf.mxu0
  %1290 = vmatprep.mubr.bf16.mxu0 0
  %1291 = vmatmul.mubr.bf16.gmra.mxu0 %v1105
  %v1292 = vpop.f32.mrf.mxu0
  %v1293 = vadd.f32 0.0, %v1292
  %v1294 = vpop.f32.mrf.mxu0
  %v1295 = vpop.f32.mrf.mxu0
  %v1296 = vpop.f32.mrf.mxu0
  %1297 = vdwg.mxu0
  %v1298 = vsub.f32 %v774, %v978
  %v1299 = vsub.f32 %v777, %v981
  %v1300 = vsub.f32 %v782, %v986
  %v1301 = vsub.f32 %v785, %v989
  %v1302 = vsub.f32 %v790, %v994
  %v1303 = vsub.f32 %v793, %v997
  %v1304 = vsub.f32 %v798, %v1002
  %v1305 = vsub.f32 %v801, %v1005
  %v1306 = vsub.f32 %v806, %v1010
  %v1307 = vsub.f32 %v809, %v1013
  %v1308 = vsub.f32 %v814, %v1018
  %v1309 = vsub.f32 %v817, %v1021
  %v1310 = vsub.f32 %v822, %v1026
  %v1311 = vsub.f32 %v825, %v1029
  %v1312 = vsub.f32 %v830, %v1034
  %v1313 = vsub.f32 %v833, %v1037
  %v1314 = vsub.f32 %v838, %v1042
  %v1315 = vsub.f32 %v841, %v1045
  %v1316 = vsub.f32 %v846, %v1050
  %v1317 = vsub.f32 %v849, %v1053
  %v1318 = vsub.f32 %v854, %v1058
  %v1319 = vsub.f32 %v857, %v1061
  %v1320 = vsub.f32 %v862, %v1066
  %v1321 = vsub.f32 %v1205, %v774
  %v1322 = vsub.f32 %v1208, %v777
  %v1323 = vsub.f32 %v1213, %v782
  %v1324 = vsub.f32 %v1216, %v785
  %v1325 = vsub.f32 %v1221, %v790
  %v1326 = vsub.f32 %v1224, %v793
  %v1327 = vsub.f32 %v1229, %v798
  %v1328 = vsub.f32 %v1232, %v801
  %v1329 = vsub.f32 %v1237, %v806
  %v1330 = vsub.f32 %v1240, %v809
  %v1331 = vsub.f32 %v1245, %v814
  %v1332 = vsub.f32 %v1248, %v817
  %v1333 = vsub.f32 %v1253, %v822
  %v1334 = vsub.f32 %v1256, %v825
  %v1335 = vsub.f32 %v1261, %v830
  %v1336 = vsub.f32 %v1264, %v833
  %v1337 = vsub.f32 %v1269, %v838
  %v1338 = vsub.f32 %v1272, %v841
  %v1339 = vsub.f32 %v1277, %v846
  %v1340 = vsub.f32 %v1280, %v849
  %v1341 = vsub.f32 %v1285, %v854
  %v1342 = vsub.f32 %v1288, %v857
  %v1343 = vsub.f32 %v1293, %v862
  %v1344 = vsub.f32 %v1321, %v978
  %v1345 = vsub.f32 %v1322, %v981
  %v1346 = vsub.f32 %v1323, %v986
  %v1347 = vsub.f32 %v1324, %v989
  %v1348 = vsub.f32 %v1325, %v994
  %v1349 = vsub.f32 %v1326, %v997
  %v1350 = vsub.f32 %v1327, %v1002
  %v1351 = vsub.f32 %v1328, %v1005
  %v1352 = vsub.f32 %v1329, %v1010
  %v1353 = vsub.f32 %v1330, %v1013
  %v1354 = vsub.f32 %v1331, %v1018
  %v1355 = vsub.f32 %v1332, %v1021
  %v1356 = vsub.f32 %v1333, %v1026
  %v1357 = vsub.f32 %v1334, %v1029
  %v1358 = vsub.f32 %v1335, %v1034
  %v1359 = vsub.f32 %v1336, %v1037
  %v1360 = vsub.f32 %v1337, %v1042
  %v1361 = vsub.f32 %v1338, %v1045
  %v1362 = vsub.f32 %v1339, %v1050
  %v1363 = vsub.f32 %v1340, %v1053
  %v1364 = vsub.f32 %v1341, %v1058
  %v1365 = vsub.f32 %v1342, %v1061
  %v1366 = vsub.f32 %v1343, %v1066
  %1390 = vrot.lane.b32.xlu0 %v1298, 64
  %v1391 = vpop.permute.xlu0 %1390
  %1392 = vrot.lane.b32.xlu0 %v1299, 64
  %v1393 = vpop.permute.xlu0 %1392
  %1394 = vrot.lane.b32.xlu0 %v1300, 64
  %v1395 = vpop.permute.xlu0 %1394
  %1396 = vrot.lane.b32.xlu0 %v1301, 64
  %v1397 = vpop.permute.xlu0 %1396
  %1398 = vrot.lane.b32.xlu0 %v1302, 64
  %v1399 = vpop.permute.xlu0 %1398
  %1400 = vrot.lane.b32.xlu0 %v1303, 64
  %v1401 = vpop.permute.xlu0 %1400
  %1402 = vrot.lane.b32.xlu0 %v1304, 64
  %v1403 = vpop.permute.xlu0 %1402
  %1404 = vrot.lane.b32.xlu0 %v1305, 64
  %v1405 = vpop.permute.xlu0 %1404
  %1406 = vrot.lane.b32.xlu0 %v1306, 64
  %v1407 = vpop.permute.xlu0 %1406
  %1408 = vrot.lane.b32.xlu0 %v1307, 64
  %v1409 = vpop.permute.xlu0 %1408
  %1410 = vrot.lane.b32.xlu0 %v1308, 64
  %v1411 = vpop.permute.xlu0 %1410
  %1412 = vrot.lane.b32.xlu0 %v1309, 64
  %v1413 = vpop.permute.xlu0 %1412
  %1414 = vrot.lane.b32.xlu0 %v1310, 64
  %v1415 = vpop.permute.xlu0 %1414
  %1416 = vrot.lane.b32.xlu0 %v1311, 64
  %v1417 = vpop.permute.xlu0 %1416
  %1418 = vrot.lane.b32.xlu0 %v1312, 64
  %v1419 = vpop.permute.xlu0 %1418
  %1420 = vrot.lane.b32.xlu0 %v1313, 64
  %v1421 = vpop.permute.xlu0 %1420
  %1422 = vrot.lane.b32.xlu0 %v1314, 64
  %v1423 = vpop.permute.xlu0 %1422
  %1424 = vrot.lane.b32.xlu0 %v1315, 64
  %v1425 = vpop.permute.xlu0 %1424
  %1426 = vrot.lane.b32.xlu0 %v1316, 64
  %v1427 = vpop.permute.xlu0 %1426
  %1428 = vrot.lane.b32.xlu0 %v1317, 64
  %v1429 = vpop.permute.xlu0 %1428
  %1430 = vrot.lane.b32.xlu0 %v1318, 64
  %v1431 = vpop.permute.xlu0 %1430
  %1432 = vrot.lane.b32.xlu0 %v1319, 64
  %v1433 = vpop.permute.xlu0 %1432
  %1434 = vrot.lane.b32.xlu0 %v1320, 64
  %v1435 = vpop.permute.xlu0 %1434
  %v1459 = vmul.f32 %v1298, %v1391
  %v1460 = vmul.f32 %v1299, %v1393
  %v1461 = vmul.f32 %v1300, %v1395
  %v1462 = vmul.f32 %v1301, %v1397
  %v1463 = vmul.f32 %v1302, %v1399
  %v1464 = vmul.f32 %v1303, %v1401
  %v1465 = vmul.f32 %v1304, %v1403
  %v1466 = vmul.f32 %v1305, %v1405
  %v1467 = vmul.f32 %v1306, %v1407
  %v1468 = vmul.f32 %v1307, %v1409
  %v1469 = vmul.f32 %v1308, %v1411
  %v1470 = vmul.f32 %v1309, %v1413
  %v1471 = vmul.f32 %v1310, %v1415
  %v1472 = vmul.f32 %v1311, %v1417
  %v1473 = vmul.f32 %v1312, %v1419
  %v1474 = vmul.f32 %v1313, %v1421
  %v1475 = vmul.f32 %v1314, %v1423
  %v1476 = vmul.f32 %v1315, %v1425
  %v1477 = vmul.f32 %v1316, %v1427
  %v1478 = vmul.f32 %v1317, %v1429
  %v1479 = vmul.f32 %v1318, %v1431
  %v1480 = vmul.f32 %v1319, %v1433
  %v1481 = vmul.f32 %v1320, %v1435
  %1505 = vrot.lane.b32.xlu0 %v1344, 64
  %v1506 = vpop.permute.xlu0 %1505
  %1507 = vrot.lane.b32.xlu0 %v1345, 64
  %v1508 = vpop.permute.xlu0 %1507
  %1509 = vrot.lane.b32.xlu0 %v1346, 64
  %v1510 = vpop.permute.xlu0 %1509
  %1511 = vrot.lane.b32.xlu0 %v1347, 64
  %v1512 = vpop.permute.xlu0 %1511
  %1513 = vrot.lane.b32.xlu0 %v1348, 64
  %v1514 = vpop.permute.xlu0 %1513
  %1515 = vrot.lane.b32.xlu0 %v1349, 64
  %v1516 = vpop.permute.xlu0 %1515
  %1517 = vrot.lane.b32.xlu0 %v1350, 64
  %v1518 = vpop.permute.xlu0 %1517
  %1519 = vrot.lane.b32.xlu0 %v1351, 64
  %v1520 = vpop.permute.xlu0 %1519
  %1521 = vrot.lane.b32.xlu0 %v1352, 64
  %v1522 = vpop.permute.xlu0 %1521
  %1523 = vrot.lane.b32.xlu0 %v1353, 64
  %v1524 = vpop.permute.xlu0 %1523
  %1525 = vrot.lane.b32.xlu0 %v1354, 64
  %v1526 = vpop.permute.xlu0 %1525
  %1527 = vrot.lane.b32.xlu0 %v1355, 64
  %v1528 = vpop.permute.xlu0 %1527
  %1529 = vrot.lane.b32.xlu0 %v1356, 64
  %v1530 = vpop.permute.xlu0 %1529
  %1531 = vrot.lane.b32.xlu0 %v1357, 64
  %v1532 = vpop.permute.xlu0 %1531
  %1533 = vrot.lane.b32.xlu0 %v1358, 64
  %v1534 = vpop.permute.xlu0 %1533
  %1535 = vrot.lane.b32.xlu0 %v1359, 64
  %v1536 = vpop.permute.xlu0 %1535
  %1537 = vrot.lane.b32.xlu0 %v1360, 64
  %v1538 = vpop.permute.xlu0 %1537
  %1539 = vrot.lane.b32.xlu0 %v1361, 64
  %v1540 = vpop.permute.xlu0 %1539
  %1541 = vrot.lane.b32.xlu0 %v1362, 64
  %v1542 = vpop.permute.xlu0 %1541
  %1543 = vrot.lane.b32.xlu0 %v1363, 64
  %v1544 = vpop.permute.xlu0 %1543
  %1545 = vrot.lane.b32.xlu0 %v1364, 64
  %v1546 = vpop.permute.xlu0 %1545
  %1547 = vrot.lane.b32.xlu0 %v1365, 64
  %v1548 = vpop.permute.xlu0 %1547
  %1549 = vrot.lane.b32.xlu0 %v1366, 64
  %v1550 = vpop.permute.xlu0 %1549
  %v1574 = vmul.f32 %v1344, %v1506
  %v1575 = vmul.f32 %v1345, %v1508
  %v1576 = vmul.f32 %v1346, %v1510
  %v1577 = vmul.f32 %v1347, %v1512
  %v1578 = vmul.f32 %v1348, %v1514
  %v1579 = vmul.f32 %v1349, %v1516
  %v1580 = vmul.f32 %v1350, %v1518
  %v1581 = vmul.f32 %v1351, %v1520
  %v1582 = vmul.f32 %v1352, %v1522
  %v1583 = vmul.f32 %v1353, %v1524
  %v1584 = vmul.f32 %v1354, %v1526
  %v1585 = vmul.f32 %v1355, %v1528
  %v1586 = vmul.f32 %v1356, %v1530
  %v1587 = vmul.f32 %v1357, %v1532
  %v1588 = vmul.f32 %v1358, %v1534
  %v1589 = vmul.f32 %v1359, %v1536
  %v1590 = vmul.f32 %v1360, %v1538
  %v1591 = vmul.f32 %v1361, %v1540
  %v1592 = vmul.f32 %v1362, %v1542
  %v1593 = vmul.f32 %v1363, %v1544
  %v1594 = vmul.f32 %v1364, %v1546
  %v1595 = vmul.f32 %v1365, %v1548
  %v1596 = vmul.f32 %v1366, %v1550
  %v1597 = vadd.f32 %v1459, %v1574
  %v1598 = vadd.f32 %v1460, %v1575
  %v1599 = vadd.f32 %v1461, %v1576
  %v1600 = vadd.f32 %v1462, %v1577
  %v1601 = vadd.f32 %v1463, %v1578
  %v1602 = vadd.f32 %v1464, %v1579
  %v1603 = vadd.f32 %v1465, %v1580
  %v1604 = vadd.f32 %v1466, %v1581
  %v1605 = vadd.f32 %v1467, %v1582
  %v1606 = vadd.f32 %v1468, %v1583
  %v1607 = vadd.f32 %v1469, %v1584
  %v1608 = vadd.f32 %v1470, %v1585
  %v1609 = vadd.f32 %v1471, %v1586
  %v1610 = vadd.f32 %v1472, %v1587
  %v1611 = vadd.f32 %v1473, %v1588
  %v1612 = vadd.f32 %v1474, %v1589
  %v1613 = vadd.f32 %v1475, %v1590
  %v1614 = vadd.f32 %v1476, %v1591
  %v1615 = vadd.f32 %v1477, %v1592
  %v1616 = vadd.f32 %v1478, %v1593
  %v1617 = vadd.f32 %v1479, %v1594
  %v1618 = vadd.f32 %v1480, %v1595
  %v1619 = vadd.f32 %v1481, %v1596
  %v1620 = vmul.f32 %v1344, %v1391
  %v1621 = vmul.f32 %v1345, %v1393
  %v1622 = vmul.f32 %v1346, %v1395
  %v1623 = vmul.f32 %v1347, %v1397
  %v1624 = vmul.f32 %v1348, %v1399
  %v1625 = vmul.f32 %v1349, %v1401
  %v1626 = vmul.f32 %v1350, %v1403
  %v1627 = vmul.f32 %v1351, %v1405
  %v1628 = vmul.f32 %v1352, %v1407
  %v1629 = vmul.f32 %v1353, %v1409
  %v1630 = vmul.f32 %v1354, %v1411
  %v1631 = vmul.f32 %v1355, %v1413
  %v1632 = vmul.f32 %v1356, %v1415
  %v1633 = vmul.f32 %v1357, %v1417
  %v1634 = vmul.f32 %v1358, %v1419
  %v1635 = vmul.f32 %v1359, %v1421
  %v1636 = vmul.f32 %v1360, %v1423
  %v1637 = vmul.f32 %v1361, %v1425
  %v1638 = vmul.f32 %v1362, %v1427
  %v1639 = vmul.f32 %v1363, %v1429
  %v1640 = vmul.f32 %v1364, %v1431
  %v1641 = vmul.f32 %v1365, %v1433
  %v1642 = vmul.f32 %v1366, %v1435
  %v1643 = vmul.f32 %v1298, %v1506
  %v1644 = vmul.f32 %v1299, %v1508
  %v1645 = vmul.f32 %v1300, %v1510
  %v1646 = vmul.f32 %v1301, %v1512
  %v1647 = vmul.f32 %v1302, %v1514
  %v1648 = vmul.f32 %v1303, %v1516
  %v1649 = vmul.f32 %v1304, %v1518
  %v1650 = vmul.f32 %v1305, %v1520
  %v1651 = vmul.f32 %v1306, %v1522
  %v1652 = vmul.f32 %v1307, %v1524
  %v1653 = vmul.f32 %v1308, %v1526
  %v1654 = vmul.f32 %v1309, %v1528
  %v1655 = vmul.f32 %v1310, %v1530
  %v1656 = vmul.f32 %v1311, %v1532
  %v1657 = vmul.f32 %v1312, %v1534
  %v1658 = vmul.f32 %v1313, %v1536
  %v1659 = vmul.f32 %v1314, %v1538
  %v1660 = vmul.f32 %v1315, %v1540
  %v1661 = vmul.f32 %v1316, %v1542
  %v1662 = vmul.f32 %v1317, %v1544
  %v1663 = vmul.f32 %v1318, %v1546
  %v1664 = vmul.f32 %v1319, %v1548
  %v1665 = vmul.f32 %v1320, %v1550
  %v1666 = vsub.f32 %v1620, %v1643
  %v1667 = vsub.f32 %v1621, %v1644
  %v1668 = vsub.f32 %v1622, %v1645
  %v1669 = vsub.f32 %v1623, %v1646
  %v1670 = vsub.f32 %v1624, %v1647
  %v1671 = vsub.f32 %v1625, %v1648
  %v1672 = vsub.f32 %v1626, %v1649
  %v1673 = vsub.f32 %v1627, %v1650
  %v1674 = vsub.f32 %v1628, %v1651
  %v1675 = vsub.f32 %v1629, %v1652
  %v1676 = vsub.f32 %v1630, %v1653
  %v1677 = vsub.f32 %v1631, %v1654
  %v1678 = vsub.f32 %v1632, %v1655
  %v1679 = vsub.f32 %v1633, %v1656
  %v1680 = vsub.f32 %v1634, %v1657
  %v1681 = vsub.f32 %v1635, %v1658
  %v1682 = vsub.f32 %v1636, %v1659
  %v1683 = vsub.f32 %v1637, %v1660
  %v1684 = vsub.f32 %v1638, %v1661
  %v1685 = vsub.f32 %v1639, %v1662
  %v1686 = vsub.f32 %v1640, %v1663
  %v1687 = vsub.f32 %v1641, %v1664
  %v1688 = vsub.f32 %v1642, %v1665
  %v1689 = vmul.f32 %v1597, %v1597
  %v1690 = vmul.f32 %v1598, %v1598
  %v1691 = vmul.f32 %v1599, %v1599
  %v1692 = vmul.f32 %v1600, %v1600
  %v1693 = vmul.f32 %v1601, %v1601
  %v1694 = vmul.f32 %v1602, %v1602
  %v1695 = vmul.f32 %v1603, %v1603
  %v1696 = vmul.f32 %v1604, %v1604
  %v1697 = vmul.f32 %v1605, %v1605
  %v1698 = vmul.f32 %v1606, %v1606
  %v1699 = vmul.f32 %v1607, %v1607
  %v1700 = vmul.f32 %v1608, %v1608
  %v1701 = vmul.f32 %v1609, %v1609
  %v1702 = vmul.f32 %v1610, %v1610
  %v1703 = vmul.f32 %v1611, %v1611
  %v1704 = vmul.f32 %v1612, %v1612
  %v1705 = vmul.f32 %v1613, %v1613
  %v1706 = vmul.f32 %v1614, %v1614
  %v1707 = vmul.f32 %v1615, %v1615
  %v1708 = vmul.f32 %v1616, %v1616
  %v1709 = vmul.f32 %v1617, %v1617
  %v1710 = vmul.f32 %v1618, %v1618
  %v1711 = vmul.f32 %v1619, %v1619
  %v1712 = vmul.f32 %v1666, %v1666
  %v1713 = vmul.f32 %v1667, %v1667
  %v1714 = vmul.f32 %v1668, %v1668
  %v1715 = vmul.f32 %v1669, %v1669
  %v1716 = vmul.f32 %v1670, %v1670
  %v1717 = vmul.f32 %v1671, %v1671
  %v1718 = vmul.f32 %v1672, %v1672
  %v1719 = vmul.f32 %v1673, %v1673
  %v1720 = vmul.f32 %v1674, %v1674
  %v1721 = vmul.f32 %v1675, %v1675
  %v1722 = vmul.f32 %v1676, %v1676
  %v1723 = vmul.f32 %v1677, %v1677
  %v1724 = vmul.f32 %v1678, %v1678
  %v1725 = vmul.f32 %v1679, %v1679
  %v1726 = vmul.f32 %v1680, %v1680
  %v1727 = vmul.f32 %v1681, %v1681
  %v1728 = vmul.f32 %v1682, %v1682
  %v1729 = vmul.f32 %v1683, %v1683
  %v1730 = vmul.f32 %v1684, %v1684
  %v1731 = vmul.f32 %v1685, %v1685
  %v1732 = vmul.f32 %v1686, %v1686
  %v1733 = vmul.f32 %v1687, %v1687
  %v1734 = vmul.f32 %v1688, %v1688
  %v1735 = vadd.f32 %v1689, %v1712
  %v1736 = vadd.f32 %v1690, %v1713
  %v1737 = vadd.f32 %v1691, %v1714
  %v1738 = vadd.f32 %v1692, %v1715
  %v1739 = vadd.f32 %v1693, %v1716
  %v1740 = vadd.f32 %v1694, %v1717
  %v1741 = vadd.f32 %v1695, %v1718
  %v1742 = vadd.f32 %v1696, %v1719
  %v1743 = vadd.f32 %v1697, %v1720
  %v1744 = vadd.f32 %v1698, %v1721
  %v1745 = vadd.f32 %v1699, %v1722
  %v1746 = vadd.f32 %v1700, %v1723
  %v1747 = vadd.f32 %v1701, %v1724
  %v1748 = vadd.f32 %v1702, %v1725
  %v1749 = vadd.f32 %v1703, %v1726
  %v1750 = vadd.f32 %v1704, %v1727
  %v1751 = vadd.f32 %v1705, %v1728
  %v1752 = vadd.f32 %v1706, %v1729
  %v1753 = vadd.f32 %v1707, %v1730
  %v1754 = vadd.f32 %v1708, %v1731
  %v1755 = vadd.f32 %v1709, %v1732
  %v1756 = vadd.f32 %v1710, %v1733
  %v1757 = vadd.f32 %v1711, %v1734
  %v1758 = vadd.f32 %v1735, 1e-16
  %v1759 = vadd.f32 %v1736, 1e-16
  %v1760 = vadd.f32 %v1737, 1e-16
  %v1761 = vadd.f32 %v1738, 1e-16
  %v1762 = vadd.f32 %v1739, 1e-16
  %v1763 = vadd.f32 %v1740, 1e-16
  %v1764 = vadd.f32 %v1741, 1e-16
  %v1765 = vadd.f32 %v1742, 1e-16
  %v1766 = vadd.f32 %v1743, 1e-16
  %v1767 = vadd.f32 %v1744, 1e-16
  %v1768 = vadd.f32 %v1745, 1e-16
  %v1769 = vadd.f32 %v1746, 1e-16
  %v1770 = vadd.f32 %v1747, 1e-16
  %v1771 = vadd.f32 %v1748, 1e-16
  %v1772 = vadd.f32 %v1749, 1e-16
  %v1773 = vadd.f32 %v1750, 1e-16
  %v1774 = vadd.f32 %v1751, 1e-16
  %v1775 = vadd.f32 %v1752, 1e-16
  %v1776 = vadd.f32 %v1753, 1e-16
  %v1777 = vadd.f32 %v1754, 1e-16
  %v1778 = vadd.f32 %v1755, 1e-16
  %v1779 = vadd.f32 %v1756, 1e-16
  %v1780 = vadd.f32 %v1757, 1e-16
  %v1781 = vrsqrt.pop %v1758
  %v1782 = vrsqrt.pop %v1759
  %v1783 = vrsqrt.pop %v1760
  %v1784 = vrsqrt.pop %v1761
  %v1785 = vrsqrt.pop %v1762
  %v1786 = vrsqrt.pop %v1763
  %v1787 = vrsqrt.pop %v1764
  %v1788 = vrsqrt.pop %v1765
  %v1789 = vrsqrt.pop %v1766
  %v1790 = vrsqrt.pop %v1767
  %v1791 = vrsqrt.pop %v1768
  %v1792 = vrsqrt.pop %v1769
  %v1793 = vrsqrt.pop %v1770
  %v1794 = vrsqrt.pop %v1771
  %v1795 = vrsqrt.pop %v1772
  %v1796 = vrsqrt.pop %v1773
  %v1797 = vrsqrt.pop %v1774
  %v1798 = vrsqrt.pop %v1775
  %v1799 = vrsqrt.pop %v1776
  %v1800 = vrsqrt.pop %v1777
  %v1801 = vrsqrt.pop %v1778
  %v1802 = vrsqrt.pop %v1779
  %v1803 = vrsqrt.pop %v1780
  %v1804 = vmul.f32 %v1597, %v1781
  %v1805 = vmul.f32 %v1598, %v1782
  %v1806 = vmul.f32 %v1599, %v1783
  %v1807 = vmul.f32 %v1600, %v1784
  %v1808 = vmul.f32 %v1601, %v1785
  %v1809 = vmul.f32 %v1602, %v1786
  %v1810 = vmul.f32 %v1603, %v1787
  %v1811 = vmul.f32 %v1604, %v1788
  %v1812 = vmul.f32 %v1605, %v1789
  %v1813 = vmul.f32 %v1606, %v1790
  %v1814 = vmul.f32 %v1607, %v1791
  %v1815 = vmul.f32 %v1608, %v1792
  %v1816 = vmul.f32 %v1609, %v1793
  %v1817 = vmul.f32 %v1610, %v1794
  %v1818 = vmul.f32 %v1611, %v1795
  %v1819 = vmul.f32 %v1612, %v1796
  %v1820 = vmul.f32 %v1613, %v1797
  %v1821 = vmul.f32 %v1614, %v1798
  %v1822 = vmul.f32 %v1615, %v1799
  %v1823 = vmul.f32 %v1616, %v1800
  %v1824 = vmul.f32 %v1617, %v1801
  %v1825 = vmul.f32 %v1618, %v1802
  %v1826 = vmul.f32 %v1619, %v1803
  %v1827 = vmul.f32 %v1666, %v1781
  %v1828 = vmul.f32 %v1667, %v1782
  %v1829 = vmul.f32 %v1668, %v1783
  %v1830 = vmul.f32 %v1669, %v1784
  %v1831 = vmul.f32 %v1670, %v1785
  %v1832 = vmul.f32 %v1671, %v1786
  %v1833 = vmul.f32 %v1672, %v1787
  %v1834 = vmul.f32 %v1673, %v1788
  %v1835 = vmul.f32 %v1674, %v1789
  %v1836 = vmul.f32 %v1675, %v1790
  %v1837 = vmul.f32 %v1676, %v1791
  %v1838 = vmul.f32 %v1677, %v1792
  %v1839 = vmul.f32 %v1678, %v1793
  %v1840 = vmul.f32 %v1679, %v1794
  %v1841 = vmul.f32 %v1680, %v1795
  %v1842 = vmul.f32 %v1681, %v1796
  %v1843 = vmul.f32 %v1682, %v1797
  %v1844 = vmul.f32 %v1683, %v1798
  %v1845 = vmul.f32 %v1684, %v1799
  %v1846 = vmul.f32 %v1685, %v1800
  %v1847 = vmul.f32 %v1686, %v1801
  %v1848 = vmul.f32 %v1687, %v1802
  %v1849 = vmul.f32 %v1688, %v1803
  %v1850 = vld [vmem:[%s6] sm:$0xff]
  %v1851 = vld [vmem:[%s6 + $0x8] sm:$0xff]
  %v1852 = vld [vmem:[%s6 + $0x10] sm:$0xff]
  %v1853 = vld [vmem:[%s6 + $0x18] sm:$0xff]
  %v1854 = vld [vmem:[%s6 + $0x20] sm:$0xff]
  %v1855 = vld [vmem:[%s6 + $0x28] sm:$0xff]
  %v1856 = vld [vmem:[%s6 + $0x30] sm:$0xff]
  %v1857 = vld [vmem:[%s6 + $0x38] sm:$0xff]
  %v1858 = vld [vmem:[%s6 + $0x40] sm:$0xff]
  %v1859 = vld [vmem:[%s6 + $0x48] sm:$0xff]
  %v1860 = vld [vmem:[%s6 + $0x50] sm:$0xff]
  %v1861 = vld [vmem:[%s6 + $0x58] sm:$0xff]
  %v1862 = vld [vmem:[%s6 + $0x60] sm:$0xff]
  %v1863 = vld [vmem:[%s6 + $0x68] sm:$0xff]
  %v1864 = vld [vmem:[%s6 + $0x70] sm:$0xff]
  %v1865 = vld [vmem:[%s6 + $0x78] sm:$0xff]
  %v1866 = vld [vmem:[%s6 + $0x80] sm:$0xff]
  %v1867 = vld [vmem:[%s6 + $0x88] sm:$0xff]
  %v1868 = vld [vmem:[%s6 + $0x90] sm:$0xff]
  %v1869 = vld [vmem:[%s6 + $0x98] sm:$0xff]
  %v1870 = vld [vmem:[%s6 + $0xa0] sm:$0xff]
  %v1871 = vld [vmem:[%s6 + $0xa8] sm:$0xff]
  %v1872 = vld [vmem:[%s6 + $0xb0] sm:$0x33]
  %v1873 = vpack.c.bf16 %v1805, %v1804
  %v1874 = vpack.c.bf16 %v1807, %v1806
  %v1875 = vpack.c.bf16 %v1809, %v1808
  %v1876 = vpack.c.bf16 %v1811, %v1810
  %v1877 = vpack.c.bf16 %v1813, %v1812
  %v1878 = vpack.c.bf16 %v1815, %v1814
  %v1879 = vpack.c.bf16 %v1817, %v1816
  %v1880 = vpack.c.bf16 %v1819, %v1818
  %v1881 = vpack.c.bf16 %v1821, %v1820
  %v1882 = vpack.c.bf16 %v1823, %v1822
  %v1883 = vpack.c.bf16 %v1825, %v1824
  %v1884 = vpack.c.bf16 %v1826, %v1826
  %v1908 = vunpack.c.l.b16 %v1850
  %v1909 = vunpack.c.h.b16 %v1850
  %v1910 = vunpack.c.l.b16 %v1851
  %v1911 = vunpack.c.h.b16 %v1851
  %v1912 = vunpack.c.l.b16 %v1852
  %v1913 = vunpack.c.h.b16 %v1852
  %v1914 = vunpack.c.l.b16 %v1853
  %v1915 = vunpack.c.h.b16 %v1853
  %v1916 = vunpack.c.l.b16 %v1854
  %v1917 = vunpack.c.h.b16 %v1854
  %v1918 = vunpack.c.l.b16 %v1855
  %v1919 = vunpack.c.h.b16 %v1855
  %v1920 = vunpack.c.l.b16 %v1856
  %v1921 = vunpack.c.h.b16 %v1856
  %v1922 = vunpack.c.l.b16 %v1857
  %v1923 = vunpack.c.h.b16 %v1857
  %v1924 = vunpack.c.l.b16 %v1858
  %v1925 = vunpack.c.h.b16 %v1858
  %v1926 = vunpack.c.l.b16 %v1859
  %v1927 = vunpack.c.h.b16 %v1859
  %v1928 = vunpack.c.l.b16 %v1860
  %v1929 = vunpack.c.h.b16 %v1860
  %v1930 = vunpack.c.l.b16 %v1861
  %v1931 = vunpack.c.h.b16 %v1861
  %v1932 = vunpack.c.l.b16 %v1862
  %v1933 = vunpack.c.h.b16 %v1862
  %v1934 = vunpack.c.l.b16 %v1863
  %v1935 = vunpack.c.h.b16 %v1863
  %v1936 = vunpack.c.l.b16 %v1864
  %v1937 = vunpack.c.h.b16 %v1864
  %v1938 = vunpack.c.l.b16 %v1865
  %v1939 = vunpack.c.h.b16 %v1865
  %v1940 = vunpack.c.l.b16 %v1866
  %v1941 = vunpack.c.h.b16 %v1866
  %v1942 = vunpack.c.l.b16 %v1867
  %v1943 = vunpack.c.h.b16 %v1867
  %v1944 = vunpack.c.l.b16 %v1868
  %v1945 = vunpack.c.h.b16 %v1868
  %v1946 = vunpack.c.l.b16 %v1869
  %v1947 = vunpack.c.h.b16 %v1869
  %v1948 = vunpack.c.l.b16 %v1870
  %v1949 = vunpack.c.h.b16 %v1870
  %v1950 = vunpack.c.l.b16 %v1871
  %v1951 = vunpack.c.h.b16 %v1871
  %v1952 = vunpack.c.l.b16 %v1872
  %v1953 = vunpack.c.h.b16 %v1872
  %v1954 = vpack.c.b16 %v1910, %v1908
  %v1955 = vpack.c.b16 %v1911, %v1909
  %v1956 = vpack.c.b16 %v1914, %v1912
  %v1957 = vpack.c.b16 %v1915, %v1913
  %v1958 = vpack.c.b16 %v1918, %v1916
  %v1959 = vpack.c.b16 %v1919, %v1917
  %v1960 = vpack.c.b16 %v1922, %v1920
  %v1961 = vpack.c.b16 %v1923, %v1921
  %v1962 = vpack.c.b16 %v1926, %v1924
  %v1963 = vpack.c.b16 %v1927, %v1925
  %v1964 = vpack.c.b16 %v1930, %v1928
  %v1965 = vpack.c.b16 %v1931, %v1929
  %v1966 = vpack.c.b16 %v1934, %v1932
  %v1967 = vpack.c.b16 %v1935, %v1933
  %v1968 = vpack.c.b16 %v1938, %v1936
  %v1969 = vpack.c.b16 %v1939, %v1937
  %v1970 = vpack.c.b16 %v1942, %v1940
  %v1971 = vpack.c.b16 %v1943, %v1941
  %v1972 = vpack.c.b16 %v1946, %v1944
  %v1973 = vpack.c.b16 %v1947, %v1945
  %v1974 = vpack.c.b16 %v1950, %v1948
  %v1975 = vpack.c.b16 %v1951, %v1949
  %v1976 = vpack.c.b16 %v1952, %v1952
  %v1977 = vpack.c.b16 %v1953, %v1953
  %v1991 = vsel %vm202, %v1955, 0
  %v1994 = vsel %vm202, %v1957, 0
  %v1997 = vsel %vm202, %v1959, 0
  %v2000 = vsel %vm202, %v1961, 0
  %v2003 = vsel %vm202, %v1963, 0
  %v2006 = vsel %vm202, %v1965, 0
  %v2009 = vsel %vm202, %v1967, 0
  %v2012 = vsel %vm202, %v1969, 0
  %v2015 = vsel %vm202, %v1971, 0
  %v2018 = vsel %vm202, %v1973, 0
  %v2021 = vsel %vm202, %v1975, 0
  %v2024 = vsel %vm202, %v1977, 0
  %v2027 = vsel %vm239, %v1884, 0
  %2029 = vmatprep.subr.bf16.mxu0 0
  %2030 = vmatpush1.bf16.msra.mxu0 %v1880
  %2031 = vmatprep.subr.bf16.mxu0 0
  %2032 = vmatpush1.bf16.msra.mxu0 %v1879
  %2033 = vmatprep.subr.bf16.mxu0 0
  %2034 = vmatpush1.bf16.msra.mxu0 %v1878
  %2035 = vmatprep.subr.bf16.mxu0 0
  %2036 = vmatpush1.bf16.msra.mxu0 %v1877
  %2037 = vmatprep.subr.bf16.mxu0 0
  %2038 = vmatpush1.bf16.msra.mxu0 %v1876
  %2039 = vmatprep.subr.bf16.mxu0 0
  %2040 = vmatpush1.bf16.msra.mxu0 %v1875
  %2041 = vmatprep.subr.bf16.mxu0 0
  %2042 = vmatpush1.bf16.msra.mxu0 %v1874
  %2043 = vmatprep.subr.bf16.mxu0 0
  %2044 = vmatpush1.bf16.msra.mxu0 %v1873
  %2045 = vmatprep.subr.bf16.mxu0 0
  %2046 = vmatpush2.bf16.msra.mxu0 0
  %2047 = vmatprep.subr.bf16.mxu0 0
  %2048 = vmatpush2.bf16.msra.mxu0 0
  %2049 = vmatprep.subr.bf16.mxu0 0
  %2050 = vmatpush2.bf16.msra.mxu0 0
  %2051 = vmatprep.subr.bf16.mxu0 0
  %2052 = vmatpush2.bf16.msra.mxu0 0
  %2053 = vmatprep.subr.bf16.mxu0 0
  %2054 = vmatpush2.bf16.msra.mxu0 %v2027
  %2055 = vmatprep.subr.bf16.mxu0 0
  %2056 = vmatpush2.bf16.msra.mxu0 %v1883
  %2057 = vmatprep.subr.bf16.mxu0 0
  %2058 = vmatpush2.bf16.msra.mxu0 %v1882
  %2059 = vmatprep.subr.bf16.mxu0 0
  %2060 = vmatpush2.bf16.msra.mxu0 %v1881
  %2061 = vmatprep.mubr.bf16.mxu0 %v1991
  %2062 = vmatmul.mubr.bf16.gmra.mxu0 %v1954
  %v2063 = vpop.f32.mrf.mxu0
  %v2064 = vadd.f32 0.0, %v2063
  %v2065 = vpop.f32.mrf.mxu0
  %v2066 = vpop.f32.mrf.mxu0
  %v2067 = vadd.f32 0.0, %v2066
  %v2068 = vpop.f32.mrf.mxu0
  %2069 = vmatprep.mubr.bf16.mxu0 %v1994
  %2070 = vmatmul.mubr.bf16.gmra.mxu0 %v1956
  %v2071 = vpop.f32.mrf.mxu0
  %v2072 = vadd.f32 0.0, %v2071
  %v2073 = vpop.f32.mrf.mxu0
  %v2074 = vpop.f32.mrf.mxu0
  %v2075 = vadd.f32 0.0, %v2074
  %v2076 = vpop.f32.mrf.mxu0
  %2077 = vmatprep.mubr.bf16.mxu0 %v1997
  %2078 = vmatmul.mubr.bf16.gmra.mxu0 %v1958
  %v2079 = vpop.f32.mrf.mxu0
  %v2080 = vadd.f32 0.0, %v2079
  %v2081 = vpop.f32.mrf.mxu0
  %v2082 = vpop.f32.mrf.mxu0
  %v2083 = vadd.f32 0.0, %v2082
  %v2084 = vpop.f32.mrf.mxu0
  %2085 = vmatprep.mubr.bf16.mxu0 %v2000
  %2086 = vmatmul.mubr.bf16.gmra.mxu0 %v1960
  %v2087 = vpop.f32.mrf.mxu0
  %v2088 = vadd.f32 0.0, %v2087
  %v2089 = vpop.f32.mrf.mxu0
  %v2090 = vpop.f32.mrf.mxu0
  %v2091 = vadd.f32 0.0, %v2090
  %v2092 = vpop.f32.mrf.mxu0
  %2093 = vmatprep.mubr.bf16.mxu0 %v2003
  %2094 = vmatmul.mubr.bf16.gmra.mxu0 %v1962
  %v2095 = vpop.f32.mrf.mxu0
  %v2096 = vadd.f32 0.0, %v2095
  %v2097 = vpop.f32.mrf.mxu0
  %v2098 = vpop.f32.mrf.mxu0
  %v2099 = vadd.f32 0.0, %v2098
  %v2100 = vpop.f32.mrf.mxu0
  %2101 = vmatprep.mubr.bf16.mxu0 %v2006
  %2102 = vmatmul.mubr.bf16.gmra.mxu0 %v1964
  %v2103 = vpop.f32.mrf.mxu0
  %v2104 = vadd.f32 0.0, %v2103
  %v2105 = vpop.f32.mrf.mxu0
  %v2106 = vpop.f32.mrf.mxu0
  %v2107 = vadd.f32 0.0, %v2106
  %v2108 = vpop.f32.mrf.mxu0
  %2109 = vmatprep.mubr.bf16.mxu0 %v2009
  %2110 = vmatmul.mubr.bf16.gmra.mxu0 %v1966
  %v2111 = vpop.f32.mrf.mxu0
  %v2112 = vadd.f32 0.0, %v2111
  %v2113 = vpop.f32.mrf.mxu0
  %v2114 = vpop.f32.mrf.mxu0
  %v2115 = vadd.f32 0.0, %v2114
  %v2116 = vpop.f32.mrf.mxu0
  %2117 = vmatprep.mubr.bf16.mxu0 %v2012
  %2118 = vmatmul.mubr.bf16.gmra.mxu0 %v1968
  %v2119 = vpop.f32.mrf.mxu0
  %v2120 = vadd.f32 0.0, %v2119
  %v2121 = vpop.f32.mrf.mxu0
  %v2122 = vpop.f32.mrf.mxu0
  %v2123 = vadd.f32 0.0, %v2122
  %v2124 = vpop.f32.mrf.mxu0
  %2125 = vmatprep.mubr.bf16.mxu0 %v2015
  %2126 = vmatmul.mubr.bf16.gmra.mxu0 %v1970
  %v2127 = vpop.f32.mrf.mxu0
  %v2128 = vadd.f32 0.0, %v2127
  %v2129 = vpop.f32.mrf.mxu0
  %v2130 = vpop.f32.mrf.mxu0
  %v2131 = vadd.f32 0.0, %v2130
  %v2132 = vpop.f32.mrf.mxu0
  %2133 = vmatprep.mubr.bf16.mxu0 %v2018
  %2134 = vmatmul.mubr.bf16.gmra.mxu0 %v1972
  %v2135 = vpop.f32.mrf.mxu0
  %v2136 = vadd.f32 0.0, %v2135
  %v2137 = vpop.f32.mrf.mxu0
  %v2138 = vpop.f32.mrf.mxu0
  %v2139 = vadd.f32 0.0, %v2138
  %v2140 = vpop.f32.mrf.mxu0
  %2141 = vmatprep.mubr.bf16.mxu0 %v2021
  %2142 = vmatmul.mubr.bf16.gmra.mxu0 %v1974
  %v2143 = vpop.f32.mrf.mxu0
  %v2144 = vadd.f32 0.0, %v2143
  %v2145 = vpop.f32.mrf.mxu0
  %v2146 = vpop.f32.mrf.mxu0
  %v2147 = vadd.f32 0.0, %v2146
  %v2148 = vpop.f32.mrf.mxu0
  %2149 = vmatprep.mubr.bf16.mxu0 %v2024
  %2150 = vmatmul.mubr.bf16.gmra.mxu0 %v1976
  %v2151 = vpop.f32.mrf.mxu0
  %v2152 = vadd.f32 0.0, %v2151
  %v2153 = vpop.f32.mrf.mxu0
  %v2154 = vpop.f32.mrf.mxu0
  %v2155 = vpop.f32.mrf.mxu0
  %2156 = vdwg.mxu0
  %v2157 = vld [vmem:[%s7] sm:$0xff]
  %v2158 = vld [vmem:[%s7 + $0x8] sm:$0xff]
  %v2159 = vld [vmem:[%s7 + $0x10] sm:$0xff]
  %v2160 = vld [vmem:[%s7 + $0x18] sm:$0xff]
  %v2161 = vld [vmem:[%s7 + $0x20] sm:$0xff]
  %v2162 = vld [vmem:[%s7 + $0x28] sm:$0xff]
  %v2163 = vld [vmem:[%s7 + $0x30] sm:$0xff]
  %v2164 = vld [vmem:[%s7 + $0x38] sm:$0xff]
  %v2165 = vld [vmem:[%s7 + $0x40] sm:$0xff]
  %v2166 = vld [vmem:[%s7 + $0x48] sm:$0xff]
  %v2167 = vld [vmem:[%s7 + $0x50] sm:$0xff]
  %v2168 = vld [vmem:[%s7 + $0x58] sm:$0xff]
  %v2169 = vld [vmem:[%s7 + $0x60] sm:$0xff]
  %v2170 = vld [vmem:[%s7 + $0x68] sm:$0xff]
  %v2171 = vld [vmem:[%s7 + $0x70] sm:$0xff]
  %v2172 = vld [vmem:[%s7 + $0x78] sm:$0xff]
  %v2173 = vld [vmem:[%s7 + $0x80] sm:$0xff]
  %v2174 = vld [vmem:[%s7 + $0x88] sm:$0xff]
  %v2175 = vld [vmem:[%s7 + $0x90] sm:$0xff]
  %v2176 = vld [vmem:[%s7 + $0x98] sm:$0xff]
  %v2177 = vld [vmem:[%s7 + $0xa0] sm:$0xff]
  %v2178 = vld [vmem:[%s7 + $0xa8] sm:$0xff]
  %v2179 = vld [vmem:[%s7 + $0xb0] sm:$0x33]
  %v2180 = vpack.c.bf16 %v1828, %v1827
  %v2181 = vpack.c.bf16 %v1830, %v1829
  %v2182 = vpack.c.bf16 %v1832, %v1831
  %v2183 = vpack.c.bf16 %v1834, %v1833
  %v2184 = vpack.c.bf16 %v1836, %v1835
  %v2185 = vpack.c.bf16 %v1838, %v1837
  %v2186 = vpack.c.bf16 %v1840, %v1839
  %v2187 = vpack.c.bf16 %v1842, %v1841
  %v2188 = vpack.c.bf16 %v1844, %v1843
  %v2189 = vpack.c.bf16 %v1846, %v1845
  %v2190 = vpack.c.bf16 %v1848, %v1847
  %v2191 = vpack.c.bf16 %v1849, %v1849
  %v2215 = vunpack.c.l.b16 %v2157
  %v2216 = vunpack.c.h.b16 %v2157
  %v2217 = vunpack.c.l.b16 %v2158
  %v2218 = vunpack.c.h.b16 %v2158
  %v2219 = vunpack.c.l.b16 %v2159
  %v2220 = vunpack.c.h.b16 %v2159
  %v2221 = vunpack.c.l.b16 %v2160
  %v2222 = vunpack.c.h.b16 %v2160
  %v2223 = vunpack.c.l.b16 %v2161
  %v2224 = vunpack.c.h.b16 %v2161
  %v2225 = vunpack.c.l.b16 %v2162
  %v2226 = vunpack.c.h.b16 %v2162
  %v2227 = vunpack.c.l.b16 %v2163
  %v2228 = vunpack.c.h.b16 %v2163
  %v2229 = vunpack.c.l.b16 %v2164
  %v2230 = vunpack.c.h.b16 %v2164
  %v2231 = vunpack.c.l.b16 %v2165
  %v2232 = vunpack.c.h.b16 %v2165
  %v2233 = vunpack.c.l.b16 %v2166
  %v2234 = vunpack.c.h.b16 %v2166
  %v2235 = vunpack.c.l.b16 %v2167
  %v2236 = vunpack.c.h.b16 %v2167
  %v2237 = vunpack.c.l.b16 %v2168
  %v2238 = vunpack.c.h.b16 %v2168
  %v2239 = vunpack.c.l.b16 %v2169
  %v2240 = vunpack.c.h.b16 %v2169
  %v2241 = vunpack.c.l.b16 %v2170
  %v2242 = vunpack.c.h.b16 %v2170
  %v2243 = vunpack.c.l.b16 %v2171
  %v2244 = vunpack.c.h.b16 %v2171
  %v2245 = vunpack.c.l.b16 %v2172
  %v2246 = vunpack.c.h.b16 %v2172
  %v2247 = vunpack.c.l.b16 %v2173
  %v2248 = vunpack.c.h.b16 %v2173
  %v2249 = vunpack.c.l.b16 %v2174
  %v2250 = vunpack.c.h.b16 %v2174
  %v2251 = vunpack.c.l.b16 %v2175
  %v2252 = vunpack.c.h.b16 %v2175
  %v2253 = vunpack.c.l.b16 %v2176
  %v2254 = vunpack.c.h.b16 %v2176
  %v2255 = vunpack.c.l.b16 %v2177
  %v2256 = vunpack.c.h.b16 %v2177
  %v2257 = vunpack.c.l.b16 %v2178
  %v2258 = vunpack.c.h.b16 %v2178
  %v2259 = vunpack.c.l.b16 %v2179
  %v2260 = vunpack.c.h.b16 %v2179
  %v2261 = vpack.c.b16 %v2217, %v2215
  %v2262 = vpack.c.b16 %v2218, %v2216
  %v2263 = vpack.c.b16 %v2221, %v2219
  %v2264 = vpack.c.b16 %v2222, %v2220
  %v2265 = vpack.c.b16 %v2225, %v2223
  %v2266 = vpack.c.b16 %v2226, %v2224
  %v2267 = vpack.c.b16 %v2229, %v2227
  %v2268 = vpack.c.b16 %v2230, %v2228
  %v2269 = vpack.c.b16 %v2233, %v2231
  %v2270 = vpack.c.b16 %v2234, %v2232
  %v2271 = vpack.c.b16 %v2237, %v2235
  %v2272 = vpack.c.b16 %v2238, %v2236
  %v2273 = vpack.c.b16 %v2241, %v2239
  %v2274 = vpack.c.b16 %v2242, %v2240
  %v2275 = vpack.c.b16 %v2245, %v2243
  %v2276 = vpack.c.b16 %v2246, %v2244
  %v2277 = vpack.c.b16 %v2249, %v2247
  %v2278 = vpack.c.b16 %v2250, %v2248
  %v2279 = vpack.c.b16 %v2253, %v2251
  %v2280 = vpack.c.b16 %v2254, %v2252
  %v2281 = vpack.c.b16 %v2257, %v2255
  %v2282 = vpack.c.b16 %v2258, %v2256
  %v2283 = vpack.c.b16 %v2259, %v2259
  %v2284 = vpack.c.b16 %v2260, %v2260
  %v2298 = vsel %vm202, %v2262, 0
  %v2301 = vsel %vm202, %v2264, 0
  %v2304 = vsel %vm202, %v2266, 0
  %v2307 = vsel %vm202, %v2268, 0
  %v2310 = vsel %vm202, %v2270, 0
  %v2313 = vsel %vm202, %v2272, 0
  %v2316 = vsel %vm202, %v2274, 0
  %v2319 = vsel %vm202, %v2276, 0
  %v2322 = vsel %vm202, %v2278, 0
  %v2325 = vsel %vm202, %v2280, 0
  %v2328 = vsel %vm202, %v2282, 0
  %v2331 = vsel %vm202, %v2284, 0
  %v2334 = vsel %vm239, %v2191, 0
  %2336 = vmatprep.subr.bf16.mxu0 0
  %2337 = vmatpush1.bf16.msra.mxu0 %v2187
  %2338 = vmatprep.subr.bf16.mxu0 0
  %2339 = vmatpush1.bf16.msra.mxu0 %v2186
  %2340 = vmatprep.subr.bf16.mxu0 0
  %2341 = vmatpush1.bf16.msra.mxu0 %v2185
  %2342 = vmatprep.subr.bf16.mxu0 0
  %2343 = vmatpush1.bf16.msra.mxu0 %v2184
  %2344 = vmatprep.subr.bf16.mxu0 0
  %2345 = vmatpush1.bf16.msra.mxu0 %v2183
  %2346 = vmatprep.subr.bf16.mxu0 0
  %2347 = vmatpush1.bf16.msra.mxu0 %v2182
  %2348 = vmatprep.subr.bf16.mxu0 0
  %2349 = vmatpush1.bf16.msra.mxu0 %v2181
  %2350 = vmatprep.subr.bf16.mxu0 0
  %2351 = vmatpush1.bf16.msra.mxu0 %v2180
  %2352 = vmatprep.subr.bf16.mxu0 0
  %2353 = vmatpush2.bf16.msra.mxu0 0
  %2354 = vmatprep.subr.bf16.mxu0 0
  %2355 = vmatpush2.bf16.msra.mxu0 0
  %2356 = vmatprep.subr.bf16.mxu0 0
  %2357 = vmatpush2.bf16.msra.mxu0 0
  %2358 = vmatprep.subr.bf16.mxu0 0
  %2359 = vmatpush2.bf16.msra.mxu0 0
  %2360 = vmatprep.subr.bf16.mxu0 0
  %2361 = vmatpush2.bf16.msra.mxu0 %v2334
  %2362 = vmatprep.subr.bf16.mxu0 0
  %2363 = vmatpush2.bf16.msra.mxu0 %v2190
  %2364 = vmatprep.subr.bf16.mxu0 0
  %2365 = vmatpush2.bf16.msra.mxu0 %v2189
  %2366 = vmatprep.subr.bf16.mxu0 0
  %2367 = vmatpush2.bf16.msra.mxu0 %v2188
  %2368 = vmatprep.mubr.bf16.mxu0 %v2298
  %2369 = vmatmul.mubr.bf16.gmra.mxu0 %v2261
  %v2370 = vpop.f32.mrf.mxu0
  %v2371 = vadd.f32 0.0, %v2370
  %v2372 = vpop.f32.mrf.mxu0
  %v2373 = vpop.f32.mrf.mxu0
  %v2374 = vadd.f32 0.0, %v2373
  %v2375 = vpop.f32.mrf.mxu0
  %2376 = vmatprep.mubr.bf16.mxu0 %v2301
  %2377 = vmatmul.mubr.bf16.gmra.mxu0 %v2263
  %v2378 = vpop.f32.mrf.mxu0
  %v2379 = vadd.f32 0.0, %v2378
  %v2380 = vpop.f32.mrf.mxu0
  %v2381 = vpop.f32.mrf.mxu0
  %v2382 = vadd.f32 0.0, %v2381
  %v2383 = vpop.f32.mrf.mxu0
  %2384 = vmatprep.mubr.bf16.mxu0 %v2304
  %2385 = vmatmul.mubr.bf16.gmra.mxu0 %v2265
  %v2386 = vpop.f32.mrf.mxu0
  %v2387 = vadd.f32 0.0, %v2386
  %v2388 = vpop.f32.mrf.mxu0
  %v2389 = vpop.f32.mrf.mxu0
  %v2390 = vadd.f32 0.0, %v2389
  %v2391 = vpop.f32.mrf.mxu0
  %2392 = vmatprep.mubr.bf16.mxu0 %v2307
  %2393 = vmatmul.mubr.bf16.gmra.mxu0 %v2267
  %v2394 = vpop.f32.mrf.mxu0
  %v2395 = vadd.f32 0.0, %v2394
  %v2396 = vpop.f32.mrf.mxu0
  %v2397 = vpop.f32.mrf.mxu0
  %v2398 = vadd.f32 0.0, %v2397
  %v2399 = vpop.f32.mrf.mxu0
  %2400 = vmatprep.mubr.bf16.mxu0 %v2310
  %2401 = vmatmul.mubr.bf16.gmra.mxu0 %v2269
  %v2402 = vpop.f32.mrf.mxu0
  %v2403 = vadd.f32 0.0, %v2402
  %v2404 = vpop.f32.mrf.mxu0
  %v2405 = vpop.f32.mrf.mxu0
  %v2406 = vadd.f32 0.0, %v2405
  %v2407 = vpop.f32.mrf.mxu0
  %2408 = vmatprep.mubr.bf16.mxu0 %v2313
  %2409 = vmatmul.mubr.bf16.gmra.mxu0 %v2271
  %v2410 = vpop.f32.mrf.mxu0
  %v2411 = vadd.f32 0.0, %v2410
  %v2412 = vpop.f32.mrf.mxu0
  %v2413 = vpop.f32.mrf.mxu0
  %v2414 = vadd.f32 0.0, %v2413
  %v2415 = vpop.f32.mrf.mxu0
  %2416 = vmatprep.mubr.bf16.mxu0 %v2316
  %2417 = vmatmul.mubr.bf16.gmra.mxu0 %v2273
  %v2418 = vpop.f32.mrf.mxu0
  %v2419 = vadd.f32 0.0, %v2418
  %v2420 = vpop.f32.mrf.mxu0
  %v2421 = vpop.f32.mrf.mxu0
  %v2422 = vadd.f32 0.0, %v2421
  %v2423 = vpop.f32.mrf.mxu0
  %2424 = vmatprep.mubr.bf16.mxu0 %v2319
  %2425 = vmatmul.mubr.bf16.gmra.mxu0 %v2275
  %v2426 = vpop.f32.mrf.mxu0
  %v2427 = vadd.f32 0.0, %v2426
  %v2428 = vpop.f32.mrf.mxu0
  %v2429 = vpop.f32.mrf.mxu0
  %v2430 = vadd.f32 0.0, %v2429
  %v2431 = vpop.f32.mrf.mxu0
  %2432 = vmatprep.mubr.bf16.mxu0 %v2322
  %2433 = vmatmul.mubr.bf16.gmra.mxu0 %v2277
  %v2434 = vpop.f32.mrf.mxu0
  %v2435 = vadd.f32 0.0, %v2434
  %v2436 = vpop.f32.mrf.mxu0
  %v2437 = vpop.f32.mrf.mxu0
  %v2438 = vadd.f32 0.0, %v2437
  %v2439 = vpop.f32.mrf.mxu0
  %2440 = vmatprep.mubr.bf16.mxu0 %v2325
  %2441 = vmatmul.mubr.bf16.gmra.mxu0 %v2279
  %v2442 = vpop.f32.mrf.mxu0
  %v2443 = vadd.f32 0.0, %v2442
  %v2444 = vpop.f32.mrf.mxu0
  %v2445 = vpop.f32.mrf.mxu0
  %v2446 = vadd.f32 0.0, %v2445
  %v2447 = vpop.f32.mrf.mxu0
  %2448 = vmatprep.mubr.bf16.mxu0 %v2328
  %2449 = vmatmul.mubr.bf16.gmra.mxu0 %v2281
  %v2450 = vpop.f32.mrf.mxu0
  %v2451 = vadd.f32 0.0, %v2450
  %v2452 = vpop.f32.mrf.mxu0
  %v2453 = vpop.f32.mrf.mxu0
  %v2454 = vadd.f32 0.0, %v2453
  %v2455 = vpop.f32.mrf.mxu0
  %2456 = vmatprep.mubr.bf16.mxu0 %v2331
  %2457 = vmatmul.mubr.bf16.gmra.mxu0 %v2283
  %v2458 = vpop.f32.mrf.mxu0
  %v2459 = vadd.f32 0.0, %v2458
  %v2460 = vpop.f32.mrf.mxu0
  %v2461 = vpop.f32.mrf.mxu0
  %v2462 = vpop.f32.mrf.mxu0
  %2463 = vdwg.mxu0
  %v2464 = vld [vmem:[%s8] sm:$0xff]
  %v2465 = vld [vmem:[%s8 + $0x8] sm:$0xff]
  %v2466 = vld [vmem:[%s8 + $0x10] sm:$0xff]
  %v2467 = vld [vmem:[%s8 + $0x18] sm:$0xff]
  %v2468 = vld [vmem:[%s8 + $0x20] sm:$0xff]
  %v2469 = vld [vmem:[%s8 + $0x28] sm:$0xff]
  %v2470 = vld [vmem:[%s8 + $0x30] sm:$0xff]
  %v2471 = vld [vmem:[%s8 + $0x38] sm:$0xff]
  %v2472 = vld [vmem:[%s8 + $0x40] sm:$0xff]
  %v2473 = vld [vmem:[%s8 + $0x48] sm:$0xff]
  %v2474 = vld [vmem:[%s8 + $0x50] sm:$0xff]
  %v2475 = vld [vmem:[%s8 + $0x58] sm:$0xff]
  %v2476 = vld [vmem:[%s8 + $0x60] sm:$0xff]
  %v2477 = vld [vmem:[%s8 + $0x68] sm:$0xff]
  %v2478 = vld [vmem:[%s8 + $0x70] sm:$0xff]
  %v2479 = vld [vmem:[%s8 + $0x78] sm:$0xff]
  %v2480 = vld [vmem:[%s8 + $0x80] sm:$0xff]
  %v2481 = vld [vmem:[%s8 + $0x88] sm:$0xff]
  %v2482 = vld [vmem:[%s8 + $0x90] sm:$0xff]
  %v2483 = vld [vmem:[%s8 + $0x98] sm:$0xff]
  %v2484 = vld [vmem:[%s8 + $0xa0] sm:$0xff]
  %v2485 = vld [vmem:[%s8 + $0xa8] sm:$0xff]
  %v2486 = vld [vmem:[%s8 + $0xb0] sm:$0x33]
  %v2487 = vadd.f32 %v1804, %v1827
  %v2488 = vadd.f32 %v1805, %v1828
  %v2489 = vadd.f32 %v1806, %v1829
  %v2490 = vadd.f32 %v1807, %v1830
  %v2491 = vadd.f32 %v1808, %v1831
  %v2492 = vadd.f32 %v1809, %v1832
  %v2493 = vadd.f32 %v1810, %v1833
  %v2494 = vadd.f32 %v1811, %v1834
  %v2495 = vadd.f32 %v1812, %v1835
  %v2496 = vadd.f32 %v1813, %v1836
  %v2497 = vadd.f32 %v1814, %v1837
  %v2498 = vadd.f32 %v1815, %v1838
  %v2499 = vadd.f32 %v1816, %v1839
  %v2500 = vadd.f32 %v1817, %v1840
  %v2501 = vadd.f32 %v1818, %v1841
  %v2502 = vadd.f32 %v1819, %v1842
  %v2503 = vadd.f32 %v1820, %v1843
  %v2504 = vadd.f32 %v1821, %v1844
  %v2505 = vadd.f32 %v1822, %v1845
  %v2506 = vadd.f32 %v1823, %v1846
  %v2507 = vadd.f32 %v1824, %v1847
  %v2508 = vadd.f32 %v1825, %v1848
  %v2509 = vadd.f32 %v1826, %v1849
  %v2510 = vpack.c.bf16 %v2488, %v2487
  %v2511 = vpack.c.bf16 %v2490, %v2489
  %v2512 = vpack.c.bf16 %v2492, %v2491
  %v2513 = vpack.c.bf16 %v2494, %v2493
  %v2514 = vpack.c.bf16 %v2496, %v2495
  %v2515 = vpack.c.bf16 %v2498, %v2497
  %v2516 = vpack.c.bf16 %v2500, %v2499
  %v2517 = vpack.c.bf16 %v2502, %v2501
  %v2518 = vpack.c.bf16 %v2504, %v2503
  %v2519 = vpack.c.bf16 %v2506, %v2505
  %v2520 = vpack.c.bf16 %v2508, %v2507
  %v2521 = vpack.c.bf16 %v2509, %v2509
  %v2545 = vunpack.c.l.b16 %v2464
  %v2546 = vunpack.c.h.b16 %v2464
  %v2547 = vunpack.c.l.b16 %v2465
  %v2548 = vunpack.c.h.b16 %v2465
  %v2549 = vunpack.c.l.b16 %v2466
  %v2550 = vunpack.c.h.b16 %v2466
  %v2551 = vunpack.c.l.b16 %v2467
  %v2552 = vunpack.c.h.b16 %v2467
  %v2553 = vunpack.c.l.b16 %v2468
  %v2554 = vunpack.c.h.b16 %v2468
  %v2555 = vunpack.c.l.b16 %v2469
  %v2556 = vunpack.c.h.b16 %v2469
  %v2557 = vunpack.c.l.b16 %v2470
  %v2558 = vunpack.c.h.b16 %v2470
  %v2559 = vunpack.c.l.b16 %v2471
  %v2560 = vunpack.c.h.b16 %v2471
  %v2561 = vunpack.c.l.b16 %v2472
  %v2562 = vunpack.c.h.b16 %v2472
  %v2563 = vunpack.c.l.b16 %v2473
  %v2564 = vunpack.c.h.b16 %v2473
  %v2565 = vunpack.c.l.b16 %v2474
  %v2566 = vunpack.c.h.b16 %v2474
  %v2567 = vunpack.c.l.b16 %v2475
  %v2568 = vunpack.c.h.b16 %v2475
  %v2569 = vunpack.c.l.b16 %v2476
  %v2570 = vunpack.c.h.b16 %v2476
  %v2571 = vunpack.c.l.b16 %v2477
  %v2572 = vunpack.c.h.b16 %v2477
  %v2573 = vunpack.c.l.b16 %v2478
  %v2574 = vunpack.c.h.b16 %v2478
  %v2575 = vunpack.c.l.b16 %v2479
  %v2576 = vunpack.c.h.b16 %v2479
  %v2577 = vunpack.c.l.b16 %v2480
  %v2578 = vunpack.c.h.b16 %v2480
  %v2579 = vunpack.c.l.b16 %v2481
  %v2580 = vunpack.c.h.b16 %v2481
  %v2581 = vunpack.c.l.b16 %v2482
  %v2582 = vunpack.c.h.b16 %v2482
  %v2583 = vunpack.c.l.b16 %v2483
  %v2584 = vunpack.c.h.b16 %v2483
  %v2585 = vunpack.c.l.b16 %v2484
  %v2586 = vunpack.c.h.b16 %v2484
  %v2587 = vunpack.c.l.b16 %v2485
  %v2588 = vunpack.c.h.b16 %v2485
  %v2589 = vunpack.c.l.b16 %v2486
  %v2590 = vunpack.c.h.b16 %v2486
  %v2591 = vpack.c.b16 %v2547, %v2545
  %v2592 = vpack.c.b16 %v2548, %v2546
  %v2593 = vpack.c.b16 %v2551, %v2549
  %v2594 = vpack.c.b16 %v2552, %v2550
  %v2595 = vpack.c.b16 %v2555, %v2553
  %v2596 = vpack.c.b16 %v2556, %v2554
  %v2597 = vpack.c.b16 %v2559, %v2557
  %v2598 = vpack.c.b16 %v2560, %v2558
  %v2599 = vpack.c.b16 %v2563, %v2561
  %v2600 = vpack.c.b16 %v2564, %v2562
  %v2601 = vpack.c.b16 %v2567, %v2565
  %v2602 = vpack.c.b16 %v2568, %v2566
  %v2603 = vpack.c.b16 %v2571, %v2569
  %v2604 = vpack.c.b16 %v2572, %v2570
  %v2605 = vpack.c.b16 %v2575, %v2573
  %v2606 = vpack.c.b16 %v2576, %v2574
  %v2607 = vpack.c.b16 %v2579, %v2577
  %v2608 = vpack.c.b16 %v2580, %v2578
  %v2609 = vpack.c.b16 %v2583, %v2581
  %v2610 = vpack.c.b16 %v2584, %v2582
  %v2611 = vpack.c.b16 %v2587, %v2585
  %v2612 = vpack.c.b16 %v2588, %v2586
  %v2613 = vpack.c.b16 %v2589, %v2589
  %v2614 = vpack.c.b16 %v2590, %v2590
  %v2628 = vsel %vm202, %v2592, 0
  %v2631 = vsel %vm202, %v2594, 0
  %v2634 = vsel %vm202, %v2596, 0
  %v2637 = vsel %vm202, %v2598, 0
  %v2640 = vsel %vm202, %v2600, 0
  %v2643 = vsel %vm202, %v2602, 0
  %v2646 = vsel %vm202, %v2604, 0
  %v2649 = vsel %vm202, %v2606, 0
  %v2652 = vsel %vm202, %v2608, 0
  %v2655 = vsel %vm202, %v2610, 0
  %v2658 = vsel %vm202, %v2612, 0
  %v2661 = vsel %vm202, %v2614, 0
  %v2664 = vsel %vm239, %v2521, 0
  %2666 = vmatprep.subr.bf16.mxu0 0
  %2667 = vmatpush1.bf16.msra.mxu0 %v2517
  %2668 = vmatprep.subr.bf16.mxu0 0
  %2669 = vmatpush1.bf16.msra.mxu0 %v2516
  %2670 = vmatprep.subr.bf16.mxu0 0
  %2671 = vmatpush1.bf16.msra.mxu0 %v2515
  %2672 = vmatprep.subr.bf16.mxu0 0
  %2673 = vmatpush1.bf16.msra.mxu0 %v2514
  %2674 = vmatprep.subr.bf16.mxu0 0
  %2675 = vmatpush1.bf16.msra.mxu0 %v2513
  %2676 = vmatprep.subr.bf16.mxu0 0
  %2677 = vmatpush1.bf16.msra.mxu0 %v2512
  %2678 = vmatprep.subr.bf16.mxu0 0
  %2679 = vmatpush1.bf16.msra.mxu0 %v2511
  %2680 = vmatprep.subr.bf16.mxu0 0
  %2681 = vmatpush1.bf16.msra.mxu0 %v2510
  %2682 = vmatprep.subr.bf16.mxu0 0
  %2683 = vmatpush2.bf16.msra.mxu0 0
  %2684 = vmatprep.subr.bf16.mxu0 0
  %2685 = vmatpush2.bf16.msra.mxu0 0
  %2686 = vmatprep.subr.bf16.mxu0 0
  %2687 = vmatpush2.bf16.msra.mxu0 0
  %2688 = vmatprep.subr.bf16.mxu0 0
  %2689 = vmatpush2.bf16.msra.mxu0 0
  %2690 = vmatprep.subr.bf16.mxu0 0
  %2691 = vmatpush2.bf16.msra.mxu0 %v2664
  %2692 = vmatprep.subr.bf16.mxu0 0
  %2693 = vmatpush2.bf16.msra.mxu0 %v2520
  %2694 = vmatprep.subr.bf16.mxu0 0
  %2695 = vmatpush2.bf16.msra.mxu0 %v2519
  %2696 = vmatprep.subr.bf16.mxu0 0
  %2697 = vmatpush2.bf16.msra.mxu0 %v2518
  %2698 = vmatprep.mubr.bf16.mxu0 %v2628
  %2699 = vmatmul.mubr.bf16.gmra.mxu0 %v2591
  %v2700 = vpop.f32.mrf.mxu0
  %v2701 = vadd.f32 0.0, %v2700
  %v2702 = vpop.f32.mrf.mxu0
  %v2703 = vpop.f32.mrf.mxu0
  %v2704 = vadd.f32 0.0, %v2703
  %v2705 = vpop.f32.mrf.mxu0
  %2706 = vmatprep.mubr.bf16.mxu0 %v2631
  %2707 = vmatmul.mubr.bf16.gmra.mxu0 %v2593
  %v2708 = vpop.f32.mrf.mxu0
  %v2709 = vadd.f32 0.0, %v2708
  %v2710 = vpop.f32.mrf.mxu0
  %v2711 = vpop.f32.mrf.mxu0
  %v2712 = vadd.f32 0.0, %v2711
  %v2713 = vpop.f32.mrf.mxu0
  %2714 = vmatprep.mubr.bf16.mxu0 %v2634
  %2715 = vmatmul.mubr.bf16.gmra.mxu0 %v2595
  %v2716 = vpop.f32.mrf.mxu0
  %v2717 = vadd.f32 0.0, %v2716
  %v2718 = vpop.f32.mrf.mxu0
  %v2719 = vpop.f32.mrf.mxu0
  %v2720 = vadd.f32 0.0, %v2719
  %v2721 = vpop.f32.mrf.mxu0
  %2722 = vmatprep.mubr.bf16.mxu0 %v2637
  %2723 = vmatmul.mubr.bf16.gmra.mxu0 %v2597
  %v2724 = vpop.f32.mrf.mxu0
  %v2725 = vadd.f32 0.0, %v2724
  %v2726 = vpop.f32.mrf.mxu0
  %v2727 = vpop.f32.mrf.mxu0
  %v2728 = vadd.f32 0.0, %v2727
  %v2729 = vpop.f32.mrf.mxu0
  %2730 = vmatprep.mubr.bf16.mxu0 %v2640
  %2731 = vmatmul.mubr.bf16.gmra.mxu0 %v2599
  %v2732 = vpop.f32.mrf.mxu0
  %v2733 = vadd.f32 0.0, %v2732
  %v2734 = vpop.f32.mrf.mxu0
  %v2735 = vpop.f32.mrf.mxu0
  %v2736 = vadd.f32 0.0, %v2735
  %v2737 = vpop.f32.mrf.mxu0
  %2738 = vmatprep.mubr.bf16.mxu0 %v2643
  %2739 = vmatmul.mubr.bf16.gmra.mxu0 %v2601
  %v2740 = vpop.f32.mrf.mxu0
  %v2741 = vadd.f32 0.0, %v2740
  %v2742 = vpop.f32.mrf.mxu0
  %v2743 = vpop.f32.mrf.mxu0
  %v2744 = vadd.f32 0.0, %v2743
  %v2745 = vpop.f32.mrf.mxu0
  %2746 = vmatprep.mubr.bf16.mxu0 %v2646
  %2747 = vmatmul.mubr.bf16.gmra.mxu0 %v2603
  %v2748 = vpop.f32.mrf.mxu0
  %v2749 = vadd.f32 0.0, %v2748
  %v2750 = vpop.f32.mrf.mxu0
  %v2751 = vpop.f32.mrf.mxu0
  %v2752 = vadd.f32 0.0, %v2751
  %v2753 = vpop.f32.mrf.mxu0
  %2754 = vmatprep.mubr.bf16.mxu0 %v2649
  %2755 = vmatmul.mubr.bf16.gmra.mxu0 %v2605
  %v2756 = vpop.f32.mrf.mxu0
  %v2757 = vadd.f32 0.0, %v2756
  %v2758 = vpop.f32.mrf.mxu0
  %v2759 = vpop.f32.mrf.mxu0
  %v2760 = vadd.f32 0.0, %v2759
  %v2761 = vpop.f32.mrf.mxu0
  %2762 = vmatprep.mubr.bf16.mxu0 %v2652
  %2763 = vmatmul.mubr.bf16.gmra.mxu0 %v2607
  %v2764 = vpop.f32.mrf.mxu0
  %v2765 = vadd.f32 0.0, %v2764
  %v2766 = vpop.f32.mrf.mxu0
  %v2767 = vpop.f32.mrf.mxu0
  %v2768 = vadd.f32 0.0, %v2767
  %v2769 = vpop.f32.mrf.mxu0
  %2770 = vmatprep.mubr.bf16.mxu0 %v2655
  %2771 = vmatmul.mubr.bf16.gmra.mxu0 %v2609
  %v2772 = vpop.f32.mrf.mxu0
  %v2773 = vadd.f32 0.0, %v2772
  %v2774 = vpop.f32.mrf.mxu0
  %v2775 = vpop.f32.mrf.mxu0
  %v2776 = vadd.f32 0.0, %v2775
  %v2777 = vpop.f32.mrf.mxu0
  %2778 = vmatprep.mubr.bf16.mxu0 %v2658
  %2779 = vmatmul.mubr.bf16.gmra.mxu0 %v2611
  %v2780 = vpop.f32.mrf.mxu0
  %v2781 = vadd.f32 0.0, %v2780
  %v2782 = vpop.f32.mrf.mxu0
  %v2783 = vpop.f32.mrf.mxu0
  %v2784 = vadd.f32 0.0, %v2783
  %v2785 = vpop.f32.mrf.mxu0
  %2786 = vmatprep.mubr.bf16.mxu0 %v2661
  %2787 = vmatmul.mubr.bf16.gmra.mxu0 %v2613
  %v2788 = vpop.f32.mrf.mxu0
  %v2789 = vadd.f32 0.0, %v2788
  %v2790 = vpop.f32.mrf.mxu0
  %v2791 = vpop.f32.mrf.mxu0
  %v2792 = vpop.f32.mrf.mxu0
  %2793 = vdwg.mxu0
  %v2794 = vsub.f32 %v2064, %v2371
  %v2795 = vsub.f32 %v2067, %v2374
  %v2796 = vsub.f32 %v2072, %v2379
  %v2797 = vsub.f32 %v2075, %v2382
  %v2798 = vsub.f32 %v2080, %v2387
  %v2799 = vsub.f32 %v2083, %v2390
  %v2800 = vsub.f32 %v2088, %v2395
  %v2801 = vsub.f32 %v2091, %v2398
  %v2802 = vsub.f32 %v2096, %v2403
  %v2803 = vsub.f32 %v2099, %v2406
  %v2804 = vsub.f32 %v2104, %v2411
  %v2805 = vsub.f32 %v2107, %v2414
  %v2806 = vsub.f32 %v2112, %v2419
  %v2807 = vsub.f32 %v2115, %v2422
  %v2808 = vsub.f32 %v2120, %v2427
  %v2809 = vsub.f32 %v2123, %v2430
  %v2810 = vsub.f32 %v2128, %v2435
  %v2811 = vsub.f32 %v2131, %v2438
  %v2812 = vsub.f32 %v2136, %v2443
  %v2813 = vsub.f32 %v2139, %v2446
  %v2814 = vsub.f32 %v2144, %v2451
  %v2815 = vsub.f32 %v2147, %v2454
  %v2816 = vsub.f32 %v2152, %v2459
  %v2817 = vsub.f32 %v2701, %v2064
  %v2818 = vsub.f32 %v2704, %v2067
  %v2819 = vsub.f32 %v2709, %v2072
  %v2820 = vsub.f32 %v2712, %v2075
  %v2821 = vsub.f32 %v2717, %v2080
  %v2822 = vsub.f32 %v2720, %v2083
  %v2823 = vsub.f32 %v2725, %v2088
  %v2824 = vsub.f32 %v2728, %v2091
  %v2825 = vsub.f32 %v2733, %v2096
  %v2826 = vsub.f32 %v2736, %v2099
  %v2827 = vsub.f32 %v2741, %v2104
  %v2828 = vsub.f32 %v2744, %v2107
  %v2829 = vsub.f32 %v2749, %v2112
  %v2830 = vsub.f32 %v2752, %v2115
  %v2831 = vsub.f32 %v2757, %v2120
  %v2832 = vsub.f32 %v2760, %v2123
  %v2833 = vsub.f32 %v2765, %v2128
  %v2834 = vsub.f32 %v2768, %v2131
  %v2835 = vsub.f32 %v2773, %v2136
  %v2836 = vsub.f32 %v2776, %v2139
  %v2837 = vsub.f32 %v2781, %v2144
  %v2838 = vsub.f32 %v2784, %v2147
  %v2839 = vsub.f32 %v2789, %v2152
  %v2840 = vsub.f32 %v2817, %v2371
  %v2841 = vsub.f32 %v2818, %v2374
  %v2842 = vsub.f32 %v2819, %v2379
  %v2843 = vsub.f32 %v2820, %v2382
  %v2844 = vsub.f32 %v2821, %v2387
  %v2845 = vsub.f32 %v2822, %v2390
  %v2846 = vsub.f32 %v2823, %v2395
  %v2847 = vsub.f32 %v2824, %v2398
  %v2848 = vsub.f32 %v2825, %v2403
  %v2849 = vsub.f32 %v2826, %v2406
  %v2850 = vsub.f32 %v2827, %v2411
  %v2851 = vsub.f32 %v2828, %v2414
  %v2852 = vsub.f32 %v2829, %v2419
  %v2853 = vsub.f32 %v2830, %v2422
  %v2854 = vsub.f32 %v2831, %v2427
  %v2855 = vsub.f32 %v2832, %v2430
  %v2856 = vsub.f32 %v2833, %v2435
  %v2857 = vsub.f32 %v2834, %v2438
  %v2858 = vsub.f32 %v2835, %v2443
  %v2859 = vsub.f32 %v2836, %v2446
  %v2860 = vsub.f32 %v2837, %v2451
  %v2861 = vsub.f32 %v2838, %v2454
  %v2862 = vsub.f32 %v2839, %v2459
  %v2863 = vpack.c.bf16 %v2795, %v2794
  %v2864 = vpack.c.bf16 %v2797, %v2796
  %v2865 = vpack.c.bf16 %v2799, %v2798
  %v2866 = vpack.c.bf16 %v2801, %v2800
  %v2867 = vpack.c.bf16 %v2803, %v2802
  %v2868 = vpack.c.bf16 %v2805, %v2804
  %v2869 = vpack.c.bf16 %v2807, %v2806
  %v2870 = vpack.c.bf16 %v2809, %v2808
  %v2871 = vpack.c.bf16 %v2811, %v2810
  %v2872 = vpack.c.bf16 %v2813, %v2812
  %v2873 = vpack.c.bf16 %v2815, %v2814
  %v2874 = vpack.c.bf16 %v2816, %v2816
  %v2875 = vld [vmem:[%s9] sm:$0xf]
  %v2876 = vld [vmem:[%s9 + $0x4] sm:$0xf]
  %v2877 = vld [vmem:[%s9 + $0x8] sm:$0xf]
  %v2878 = vld [vmem:[%s9 + $0xc] sm:$0xf]
  %v2879 = vld [vmem:[%s9 + $0x10] sm:$0xf]
  %v2880 = vld [vmem:[%s9 + $0x14] sm:$0xf]
  %v2881 = vld [vmem:[%s9 + $0x18] sm:$0xf]
  %v2882 = vld [vmem:[%s9 + $0x1c] sm:$0xf]
  %v2891 = vunpack.c.l.b16 %v2875
  %v2892 = vunpack.c.l.b16 %v2876
  %v2893 = vunpack.c.l.b16 %v2877
  %v2894 = vunpack.c.l.b16 %v2878
  %v2895 = vunpack.c.l.b16 %v2879
  %v2896 = vunpack.c.l.b16 %v2880
  %v2897 = vunpack.c.l.b16 %v2881
  %v2898 = vunpack.c.l.b16 %v2882
  %v2899 = vpack.c.b16 %v2892, %v2891
  %v2900 = vpack.c.b16 %v2894, %v2893
  %v2901 = vpack.c.b16 %v2896, %v2895
  %v2902 = vpack.c.b16 %v2898, %v2897
  %vm2907 = vcmask 523264
  %v2909 = vsel %vm2907, %v2863, 0
  %v2912 = vsel %vm2907, %v2864, 0
  %v2915 = vsel %vm2907, %v2865, 0
  %v2918 = vsel %vm2907, %v2866, 0
  %v2921 = vsel %vm2907, %v2867, 0
  %v2924 = vsel %vm2907, %v2868, 0
  %v2927 = vsel %vm2907, %v2869, 0
  %v2930 = vsel %vm2907, %v2870, 0
  %v2933 = vsel %vm2907, %v2871, 0
  %v2936 = vsel %vm2907, %v2872, 0
  %v2939 = vsel %vm2907, %v2873, 0
  %v2942 = vsel %vm2907, %v2874, 0
  %2944 = vmatprep.subr.bf16.mxu0 0
  %2945 = vmatpush1.bf16.msra.mxu0 0
  %2946 = vmatprep.subr.bf16.mxu0 0
  %2947 = vmatpush1.bf16.msra.mxu0 0
  %2948 = vmatprep.subr.bf16.mxu0 0
  %2949 = vmatpush1.bf16.msra.mxu0 0
  %2950 = vmatprep.subr.bf16.mxu0 0
  %2951 = vmatpush1.bf16.msra.mxu0 0
  %2952 = vmatprep.subr.bf16.mxu0 0
  %2953 = vmatpush1.bf16.msra.mxu0 %v2902
  %2954 = vmatprep.subr.bf16.mxu0 0
  %2955 = vmatpush1.bf16.msra.mxu0 %v2901
  %2956 = vmatprep.subr.bf16.mxu0 0
  %2957 = vmatpush1.bf16.msra.mxu0 %v2900
  %2958 = vmatprep.subr.bf16.mxu0 0
  %2959 = vmatpush1.bf16.msra.mxu0 %v2899
  %2960 = vmatprep.subr.bf16.mxu0 0
  %2961 = vmatpush2.bf16.msra.mxu0 0
  %2962 = vmatprep.subr.bf16.mxu0 0
  %2963 = vmatpush2.bf16.msra.mxu0 0
  %2964 = vmatprep.subr.bf16.mxu0 0
  %2965 = vmatpush2.bf16.msra.mxu0 0
  %2966 = vmatprep.subr.bf16.mxu0 0
  %2967 = vmatpush2.bf16.msra.mxu0 0
  %2968 = vmatprep.subr.bf16.mxu0 0
  %2969 = vmatpush2.bf16.msra.mxu0 0
  %2970 = vmatprep.subr.bf16.mxu0 0
  %2971 = vmatpush2.bf16.msra.mxu0 0
  %2972 = vmatprep.subr.bf16.mxu0 0
  %2973 = vmatpush2.bf16.msra.mxu0 0
  %2974 = vmatprep.subr.bf16.mxu0 0
  %2975 = vmatpush2.bf16.msra.mxu0 0
  %2976 = vmatprep.mubr.bf16.mxu0 0
  %2977 = vmatmul.mubr.bf16.gmra.mxu0 %v2909
  %v2978 = vpop.f32.mrf.mxu0
  %v2979 = vadd.f32 0.0, %v2978
  %v2980 = vpop.f32.mrf.mxu0
  %v2981 = vpop.f32.mrf.mxu0
  %v2982 = vadd.f32 0.0, %v2981
  %v2983 = vpop.f32.mrf.mxu0
  %2984 = vmatprep.mubr.bf16.mxu0 0
  %2985 = vmatmul.mubr.bf16.gmra.mxu0 %v2912
  %v2986 = vpop.f32.mrf.mxu0
  %v2987 = vadd.f32 0.0, %v2986
  %v2988 = vpop.f32.mrf.mxu0
  %v2989 = vpop.f32.mrf.mxu0
  %v2990 = vadd.f32 0.0, %v2989
  %v2991 = vpop.f32.mrf.mxu0
  %2992 = vmatprep.mubr.bf16.mxu0 0
  %2993 = vmatmul.mubr.bf16.gmra.mxu0 %v2915
  %v2994 = vpop.f32.mrf.mxu0
  %v2995 = vadd.f32 0.0, %v2994
  %v2996 = vpop.f32.mrf.mxu0
  %v2997 = vpop.f32.mrf.mxu0
  %v2998 = vadd.f32 0.0, %v2997
  %v2999 = vpop.f32.mrf.mxu0
  %3000 = vmatprep.mubr.bf16.mxu0 0
  %3001 = vmatmul.mubr.bf16.gmra.mxu0 %v2918
  %v3002 = vpop.f32.mrf.mxu0
  %v3003 = vadd.f32 0.0, %v3002
  %v3004 = vpop.f32.mrf.mxu0
  %v3005 = vpop.f32.mrf.mxu0
  %v3006 = vadd.f32 0.0, %v3005
  %v3007 = vpop.f32.mrf.mxu0
  %3008 = vmatprep.mubr.bf16.mxu0 0
  %3009 = vmatmul.mubr.bf16.gmra.mxu0 %v2921
  %v3010 = vpop.f32.mrf.mxu0
  %v3011 = vadd.f32 0.0, %v3010
  %v3012 = vpop.f32.mrf.mxu0
  %v3013 = vpop.f32.mrf.mxu0
  %v3014 = vadd.f32 0.0, %v3013
  %v3015 = vpop.f32.mrf.mxu0
  %3016 = vmatprep.mubr.bf16.mxu0 0
  %3017 = vmatmul.mubr.bf16.gmra.mxu0 %v2924
  %v3018 = vpop.f32.mrf.mxu0
  %v3019 = vadd.f32 0.0, %v3018
  %v3020 = vpop.f32.mrf.mxu0
  %v3021 = vpop.f32.mrf.mxu0
  %v3022 = vadd.f32 0.0, %v3021
  %v3023 = vpop.f32.mrf.mxu0
  %3024 = vmatprep.mubr.bf16.mxu0 0
  %3025 = vmatmul.mubr.bf16.gmra.mxu0 %v2927
  %v3026 = vpop.f32.mrf.mxu0
  %v3027 = vadd.f32 0.0, %v3026
  %v3028 = vpop.f32.mrf.mxu0
  %v3029 = vpop.f32.mrf.mxu0
  %v3030 = vadd.f32 0.0, %v3029
  %v3031 = vpop.f32.mrf.mxu0
  %3032 = vmatprep.mubr.bf16.mxu0 0
  %3033 = vmatmul.mubr.bf16.gmra.mxu0 %v2930
  %v3034 = vpop.f32.mrf.mxu0
  %v3035 = vadd.f32 0.0, %v3034
  %v3036 = vpop.f32.mrf.mxu0
  %v3037 = vpop.f32.mrf.mxu0
  %v3038 = vadd.f32 0.0, %v3037
  %v3039 = vpop.f32.mrf.mxu0
  %3040 = vmatprep.mubr.bf16.mxu0 0
  %3041 = vmatmul.mubr.bf16.gmra.mxu0 %v2933
  %v3042 = vpop.f32.mrf.mxu0
  %v3043 = vadd.f32 0.0, %v3042
  %v3044 = vpop.f32.mrf.mxu0
  %v3045 = vpop.f32.mrf.mxu0
  %v3046 = vadd.f32 0.0, %v3045
  %v3047 = vpop.f32.mrf.mxu0
  %3048 = vmatprep.mubr.bf16.mxu0 0
  %3049 = vmatmul.mubr.bf16.gmra.mxu0 %v2936
  %v3050 = vpop.f32.mrf.mxu0
  %v3051 = vadd.f32 0.0, %v3050
  %v3052 = vpop.f32.mrf.mxu0
  %v3053 = vpop.f32.mrf.mxu0
  %v3054 = vadd.f32 0.0, %v3053
  %v3055 = vpop.f32.mrf.mxu0
  %3056 = vmatprep.mubr.bf16.mxu0 0
  %3057 = vmatmul.mubr.bf16.gmra.mxu0 %v2939
  %v3058 = vpop.f32.mrf.mxu0
  %v3059 = vadd.f32 0.0, %v3058
  %v3060 = vpop.f32.mrf.mxu0
  %v3061 = vpop.f32.mrf.mxu0
  %v3062 = vadd.f32 0.0, %v3061
  %v3063 = vpop.f32.mrf.mxu0
  %3064 = vmatprep.mubr.bf16.mxu0 0
  %3065 = vmatmul.mubr.bf16.gmra.mxu0 %v2942
  %v3066 = vpop.f32.mrf.mxu0
  %v3067 = vadd.f32 0.0, %v3066
  %v3068 = vpop.f32.mrf.mxu0
  %v3069 = vpop.f32.mrf.mxu0
  %v3070 = vpop.f32.mrf.mxu0
  %3071 = vdwg.mxu0
  %v3072 = vpack.c.bf16 %v2841, %v2840
  %v3073 = vpack.c.bf16 %v2843, %v2842
  %v3074 = vpack.c.bf16 %v2845, %v2844
  %v3075 = vpack.c.bf16 %v2847, %v2846
  %v3076 = vpack.c.bf16 %v2849, %v2848
  %v3077 = vpack.c.bf16 %v2851, %v2850
  %v3078 = vpack.c.bf16 %v2853, %v2852
  %v3079 = vpack.c.bf16 %v2855, %v2854
  %v3080 = vpack.c.bf16 %v2857, %v2856
  %v3081 = vpack.c.bf16 %v2859, %v2858
  %v3082 = vpack.c.bf16 %v2861, %v2860
  %v3083 = vpack.c.bf16 %v2862, %v2862
  %v3084 = vld [vmem:[%s10] sm:$0xf]
  %v3085 = vld [vmem:[%s10 + $0x4] sm:$0xf]
  %v3086 = vld [vmem:[%s10 + $0x8] sm:$0xf]
  %v3087 = vld [vmem:[%s10 + $0xc] sm:$0xf]
  %v3088 = vld [vmem:[%s10 + $0x10] sm:$0xf]
  %v3089 = vld [vmem:[%s10 + $0x14] sm:$0xf]
  %v3090 = vld [vmem:[%s10 + $0x18] sm:$0xf]
  %v3091 = vld [vmem:[%s10 + $0x1c] sm:$0xf]
  %v3100 = vunpack.c.l.b16 %v3084
  %v3101 = vunpack.c.l.b16 %v3085
  %v3102 = vunpack.c.l.b16 %v3086
  %v3103 = vunpack.c.l.b16 %v3087
  %v3104 = vunpack.c.l.b16 %v3088
  %v3105 = vunpack.c.l.b16 %v3089
  %v3106 = vunpack.c.l.b16 %v3090
  %v3107 = vunpack.c.l.b16 %v3091
  %v3108 = vpack.c.b16 %v3101, %v3100
  %v3109 = vpack.c.b16 %v3103, %v3102
  %v3110 = vpack.c.b16 %v3105, %v3104
  %v3111 = vpack.c.b16 %v3107, %v3106
  %v3117 = vsel %vm2907, %v3072, 0
  %v3120 = vsel %vm2907, %v3073, 0
  %v3123 = vsel %vm2907, %v3074, 0
  %v3126 = vsel %vm2907, %v3075, 0
  %v3129 = vsel %vm2907, %v3076, 0
  %v3132 = vsel %vm2907, %v3077, 0
  %v3135 = vsel %vm2907, %v3078, 0
  %v3138 = vsel %vm2907, %v3079, 0
  %v3141 = vsel %vm2907, %v3080, 0
  %v3144 = vsel %vm2907, %v3081, 0
  %v3147 = vsel %vm2907, %v3082, 0
  %v3150 = vsel %vm2907, %v3083, 0
  %3152 = vmatprep.subr.bf16.mxu0 0
  %3153 = vmatpush1.bf16.msra.mxu0 0
  %3154 = vmatprep.subr.bf16.mxu0 0
  %3155 = vmatpush1.bf16.msra.mxu0 0
  %3156 = vmatprep.subr.bf16.mxu0 0
  %3157 = vmatpush1.bf16.msra.mxu0 0
  %3158 = vmatprep.subr.bf16.mxu0 0
  %3159 = vmatpush1.bf16.msra.mxu0 0
  %3160 = vmatprep.subr.bf16.mxu0 0
  %3161 = vmatpush1.bf16.msra.mxu0 %v3111
  %3162 = vmatprep.subr.bf16.mxu0 0
  %3163 = vmatpush1.bf16.msra.mxu0 %v3110
  %3164 = vmatprep.subr.bf16.mxu0 0
  %3165 = vmatpush1.bf16.msra.mxu0 %v3109
  %3166 = vmatprep.subr.bf16.mxu0 0
  %3167 = vmatpush1.bf16.msra.mxu0 %v3108
  %3168 = vmatprep.subr.bf16.mxu0 0
  %3169 = vmatpush2.bf16.msra.mxu0 0
  %3170 = vmatprep.subr.bf16.mxu0 0
  %3171 = vmatpush2.bf16.msra.mxu0 0
  %3172 = vmatprep.subr.bf16.mxu0 0
  %3173 = vmatpush2.bf16.msra.mxu0 0
  %3174 = vmatprep.subr.bf16.mxu0 0
  %3175 = vmatpush2.bf16.msra.mxu0 0
  %3176 = vmatprep.subr.bf16.mxu0 0
  %3177 = vmatpush2.bf16.msra.mxu0 0
  %3178 = vmatprep.subr.bf16.mxu0 0
  %3179 = vmatpush2.bf16.msra.mxu0 0
  %3180 = vmatprep.subr.bf16.mxu0 0
  %3181 = vmatpush2.bf16.msra.mxu0 0
  %3182 = vmatprep.subr.bf16.mxu0 0
  %3183 = vmatpush2.bf16.msra.mxu0 0
  %3184 = vmatprep.mubr.bf16.mxu0 0
  %3185 = vmatmul.mubr.bf16.gmra.mxu0 %v3117
  %v3186 = vpop.f32.mrf.mxu0
  %v3187 = vadd.f32 0.0, %v3186
  %v3188 = vpop.f32.mrf.mxu0
  %v3189 = vpop.f32.mrf.mxu0
  %v3190 = vadd.f32 0.0, %v3189
  %v3191 = vpop.f32.mrf.mxu0
  %3192 = vmatprep.mubr.bf16.mxu0 0
  %3193 = vmatmul.mubr.bf16.gmra.mxu0 %v3120
  %v3194 = vpop.f32.mrf.mxu0
  %v3195 = vadd.f32 0.0, %v3194
  %v3196 = vpop.f32.mrf.mxu0
  %v3197 = vpop.f32.mrf.mxu0
  %v3198 = vadd.f32 0.0, %v3197
  %v3199 = vpop.f32.mrf.mxu0
  %3200 = vmatprep.mubr.bf16.mxu0 0
  %3201 = vmatmul.mubr.bf16.gmra.mxu0 %v3123
  %v3202 = vpop.f32.mrf.mxu0
  %v3203 = vadd.f32 0.0, %v3202
  %v3204 = vpop.f32.mrf.mxu0
  %v3205 = vpop.f32.mrf.mxu0
  %v3206 = vadd.f32 0.0, %v3205
  %v3207 = vpop.f32.mrf.mxu0
  %3208 = vmatprep.mubr.bf16.mxu0 0
  %3209 = vmatmul.mubr.bf16.gmra.mxu0 %v3126
  %v3210 = vpop.f32.mrf.mxu0
  %v3211 = vadd.f32 0.0, %v3210
  %v3212 = vpop.f32.mrf.mxu0
  %v3213 = vpop.f32.mrf.mxu0
  %v3214 = vadd.f32 0.0, %v3213
  %v3215 = vpop.f32.mrf.mxu0
  %3216 = vmatprep.mubr.bf16.mxu0 0
  %3217 = vmatmul.mubr.bf16.gmra.mxu0 %v3129
  %v3218 = vpop.f32.mrf.mxu0
  %v3219 = vadd.f32 0.0, %v3218
  %v3220 = vpop.f32.mrf.mxu0
  %v3221 = vpop.f32.mrf.mxu0
  %v3222 = vadd.f32 0.0, %v3221
  %v3223 = vpop.f32.mrf.mxu0
  %3224 = vmatprep.mubr.bf16.mxu0 0
  %3225 = vmatmul.mubr.bf16.gmra.mxu0 %v3132
  %v3226 = vpop.f32.mrf.mxu0
  %v3227 = vadd.f32 0.0, %v3226
  %v3228 = vpop.f32.mrf.mxu0
  %v3229 = vpop.f32.mrf.mxu0
  %v3230 = vadd.f32 0.0, %v3229
  %v3231 = vpop.f32.mrf.mxu0
  %3232 = vmatprep.mubr.bf16.mxu0 0
  %3233 = vmatmul.mubr.bf16.gmra.mxu0 %v3135
  %v3234 = vpop.f32.mrf.mxu0
  %v3235 = vadd.f32 0.0, %v3234
  %v3236 = vpop.f32.mrf.mxu0
  %v3237 = vpop.f32.mrf.mxu0
  %v3238 = vadd.f32 0.0, %v3237
  %v3239 = vpop.f32.mrf.mxu0
  %3240 = vmatprep.mubr.bf16.mxu0 0
  %3241 = vmatmul.mubr.bf16.gmra.mxu0 %v3138
  %v3242 = vpop.f32.mrf.mxu0
  %v3243 = vadd.f32 0.0, %v3242
  %v3244 = vpop.f32.mrf.mxu0
  %v3245 = vpop.f32.mrf.mxu0
  %v3246 = vadd.f32 0.0, %v3245
  %v3247 = vpop.f32.mrf.mxu0
  %3248 = vmatprep.mubr.bf16.mxu0 0
  %3249 = vmatmul.mubr.bf16.gmra.mxu0 %v3141
  %v3250 = vpop.f32.mrf.mxu0
  %v3251 = vadd.f32 0.0, %v3250
  %v3252 = vpop.f32.mrf.mxu0
  %v3253 = vpop.f32.mrf.mxu0
  %v3254 = vadd.f32 0.0, %v3253
  %v3255 = vpop.f32.mrf.mxu0
  %3256 = vmatprep.mubr.bf16.mxu0 0
  %3257 = vmatmul.mubr.bf16.gmra.mxu0 %v3144
  %v3258 = vpop.f32.mrf.mxu0
  %v3259 = vadd.f32 0.0, %v3258
  %v3260 = vpop.f32.mrf.mxu0
  %v3261 = vpop.f32.mrf.mxu0
  %v3262 = vadd.f32 0.0, %v3261
  %v3263 = vpop.f32.mrf.mxu0
  %3264 = vmatprep.mubr.bf16.mxu0 0
  %3265 = vmatmul.mubr.bf16.gmra.mxu0 %v3147
  %v3266 = vpop.f32.mrf.mxu0
  %v3267 = vadd.f32 0.0, %v3266
  %v3268 = vpop.f32.mrf.mxu0
  %v3269 = vpop.f32.mrf.mxu0
  %v3270 = vadd.f32 0.0, %v3269
  %v3271 = vpop.f32.mrf.mxu0
  %3272 = vmatprep.mubr.bf16.mxu0 0
  %3273 = vmatmul.mubr.bf16.gmra.mxu0 %v3150
  %v3274 = vpop.f32.mrf.mxu0
  %v3275 = vadd.f32 0.0, %v3274
  %v3276 = vpop.f32.mrf.mxu0
  %v3277 = vpop.f32.mrf.mxu0
  %v3278 = vpop.f32.mrf.mxu0
  %3279 = vdwg.mxu0
  %v3280 = vsub.f32 %v2979, %v3187
  %v3281 = vsub.f32 %v2982, %v3190
  %v3282 = vsub.f32 %v2987, %v3195
  %v3283 = vsub.f32 %v2990, %v3198
  %v3284 = vsub.f32 %v2995, %v3203
  %v3285 = vsub.f32 %v2998, %v3206
  %v3286 = vsub.f32 %v3003, %v3211
  %v3287 = vsub.f32 %v3006, %v3214
  %v3288 = vsub.f32 %v3011, %v3219
  %v3289 = vsub.f32 %v3014, %v3222
  %v3290 = vsub.f32 %v3019, %v3227
  %v3291 = vsub.f32 %v3022, %v3230
  %v3292 = vsub.f32 %v3027, %v3235
  %v3293 = vsub.f32 %v3030, %v3238
  %v3294 = vsub.f32 %v3035, %v3243
  %v3295 = vsub.f32 %v3038, %v3246
  %v3296 = vsub.f32 %v3043, %v3251
  %v3297 = vsub.f32 %v3046, %v3254
  %v3298 = vsub.f32 %v3051, %v3259
  %v3299 = vsub.f32 %v3054, %v3262
  %v3300 = vsub.f32 %v3059, %v3267
  %v3301 = vsub.f32 %v3062, %v3270
  %v3302 = vsub.f32 %v3067, %v3275
  %vm3303 = vcmask 130048
  %3304 = vst.msk [vmem:[%s11] sm:$0xff] %vm3303, %v3280
  %3305 = vst.msk [vmem:[%s11 + $0x8] sm:$0xff] %vm3303, %v3281
  %3306 = vst.msk [vmem:[%s11 + $0x10] sm:$0xff] %vm3303, %v3282
  %3307 = vst.msk [vmem:[%s11 + $0x18] sm:$0xff] %vm3303, %v3283
  %3308 = vst.msk [vmem:[%s11 + $0x20] sm:$0xff] %vm3303, %v3284
  %3309 = vst.msk [vmem:[%s11 + $0x28] sm:$0xff] %vm3303, %v3285
  %3310 = vst.msk [vmem:[%s11 + $0x30] sm:$0xff] %vm3303, %v3286
  %3311 = vst.msk [vmem:[%s11 + $0x38] sm:$0xff] %vm3303, %v3287
  %3312 = vst.msk [vmem:[%s11 + $0x40] sm:$0xff] %vm3303, %v3288
  %3313 = vst.msk [vmem:[%s11 + $0x48] sm:$0xff] %vm3303, %v3289
  %3314 = vst.msk [vmem:[%s11 + $0x50] sm:$0xff] %vm3303, %v3290
  %3315 = vst.msk [vmem:[%s11 + $0x58] sm:$0xff] %vm3303, %v3291
  %3316 = vst.msk [vmem:[%s11 + $0x60] sm:$0xff] %vm3303, %v3292
  %3317 = vst.msk [vmem:[%s11 + $0x68] sm:$0xff] %vm3303, %v3293
  %3318 = vst.msk [vmem:[%s11 + $0x70] sm:$0xff] %vm3303, %v3294
  %3319 = vst.msk [vmem:[%s11 + $0x78] sm:$0xff] %vm3303, %v3295
  %3320 = vst.msk [vmem:[%s11 + $0x80] sm:$0xff] %vm3303, %v3296
  %3321 = vst.msk [vmem:[%s11 + $0x88] sm:$0xff] %vm3303, %v3297
  %3322 = vst.msk [vmem:[%s11 + $0x90] sm:$0xff] %vm3303, %v3298
  %3323 = vst.msk [vmem:[%s11 + $0x98] sm:$0xff] %vm3303, %v3299
  %3324 = vst.msk [vmem:[%s11 + $0xa0] sm:$0xff] %vm3303, %v3300
  %3325 = vst.msk [vmem:[%s11 + $0xa8] sm:$0xff] %vm3303, %v3301
  %vm3326 = vcmask 125952
  %3327 = vst.msk [vmem:[%s11 + $0xb0] sm:$0xf] %vm3326, %v3302
  // Predicated region
  $region46: #{mellin_fourier_forward.7} parent=0 // pred_check
    _
  $region47: #{mellin_fourier_forward.7} parent=0 // pred_check_branch
    %3329 = sbr.rel (0) target = $region49
  $region48: #{mellin_fourier_forward.7} parent=0 // pred_region
    _
  $region49: #{mellin_fourier_forward.7} parent=0 // pred_fallthru
    _
  // Predicated region
  $region50: #{mellin_fourier_forward.7} parent=0 // pred_check
    _
  $region51: #{mellin_fourier_forward.7} parent=0 // pred_check_branch
    %3331 = sbr.rel (0) target = $region53
  $region52: #{mellin_fourier_forward.7} parent=0 // pred_region
    _
  $region53: #{mellin_fourier_forward.7} parent=0 // pred_fallthru
    _

// kernel: mellin_fourier_forward.8
$region0: #{mellin_fourier_forward.8}
  #allocation0 [shape = 'u32[]', space=smem, size = 0x4, offset = 0x4, fixed_abs, tag = 'smem constant byte address 0x4 - core index']
  #allocation1 [shape = 'u32[144,128]{1,0:T(1,128)}', space=vmem, size = 0x12000, scoped, tag = 'internal scratch']
  %s0 = inlined_call_operand.vmem [shape: f32[2,4,256], index: 0, kind: input, shape index: {}]
  %s1 = inlined_call_operand.vmem [shape: bf16[2,256,256], index: 1, kind: input, shape index: {}]
  %s2 = inlined_call_operand.vmem [shape: f32[2,4,256], index: 2, kind: output, shape index: {}]
  %s3 = sld [smem:[#allocation0]]
  $region45: #{mellin_fourier_forward.8} parent=0
    _
  %s5 = ssub.s32 1, %s3
  %s6 = scalar_select 0, %s5, %s3
  loop: start=0, step=1, limit=4
  $region2: #{mellin_fourier_forward.8} parent=0 // loop_pre_header
    _
  $region3: #{mellin_fourier_forward.8} parent=0 // loop_header
    %s8 = sphi 0, %s12
    %p9 = scmp.ge.s32.totalorder %s8, 4
    %s15 = sphi 0, %s34
    %s16 = sphi 0, %s30
    %s17 = sphi 0, %s26
    %s18 = sphi 0, %s15
    %s19 = sphi 0, %s16
    %s20 = sphi 0, %s17
    %s21 = sphi 0, %s18
    %s22 = sphi 0, %s19
    %s23 = sphi 0, %s20
    %s39 = sphi 0, %s41
    %s42 = sphi 0, %s39
    %s43 = sphi 0, %s42
    %s59 = sphi 0, %s43
    %s69 = sphi 0, %s71
    %s72 = sphi 0, %s69
    %s73 = sphi 0, %s72
    %s89 = sphi 0, %s73
    %s97 = sphi 0, %s99
    %s100 = sphi 0, %s97
    %s101 = sphi 0, %s100
    %s117 = sphi 0, %s101
  $region4: #{mellin_fourier_forward.8} parent=0 // loop_header_branch
    %11 = sbr.rel (%p9) target = $region8
  $region5: #{mellin_fourier_forward.8} parent=0 // loop_body
    %s13 = ssub.s32 %s8, 1
    %s14 = ssub.s32 %s8, 2
    %s24 = sadd.s32 1, %s17
    %p25 = scmp.ge.s32.totalorder %s24, 1
    %s26 = scalar_select %p25, 0, %s24
    %s27 = sadd.s32 1, %s16
    %s28 = scalar_select %p25, %s27, %s16
    %p29 = scmp.ge.s32.totalorder %s28, 1
    %s30 = scalar_select %p29, 0, %s28
    %s31 = sadd.s32 1, %s15
    %s32 = scalar_select %p29, %s31, %s15
    %p33 = scmp.ge.s32.totalorder %s32, 2
    %s34 = scalar_select %p33, 0, %s32
    %s35 = ssub.s32 %s15, %s34
    %s36 = ssub.s32 %s17, %s26
    %s37 = sor.u32 %s35, %s36
    %p38 = scmp.eq.s32.totalorder %s37, 0
    %s40 = sadd.s32 %s39, 1
    %s41 = scalar_select %p38, %s39, %s40
    %p44 = pneg %p38
    %p45 = scmp.eq.s32.totalorder %s8, 1
    %p46 = por %p44, %p45
    %p47 = scmp.ne.s32.totalorder %s39, %s42
    %p48 = scmp.eq.s32.totalorder %s8, 0
    %p49 = por %p47, %p48
    %p50 = scmp.ne.s32.totalorder %s39, %s42
    %p51 = scmp.eq.s32.totalorder %s13, 1
    %p52 = por %p50, %p51
    %p53 = scmp.ne.s32.totalorder %s42, %s43
    %p54 = scmp.eq.s32.totalorder %s13, 0
    %p55 = por %p53, %p54
    %p56 = scmp.ne.s32.totalorder %s42, %s43
    %p57 = scmp.eq.s32.totalorder %s14, 1
    %p58 = por %p56, %p57
    %p60 = scmp.ne.s32.totalorder %s43, %s59
    %p61 = scmp.eq.s32.totalorder %s14, 0
    %p62 = por %p60, %p61
    %s63 = ssub.s32 %s15, %s34
    %s64 = ssub.s32 %s17, %s26
    %s65 = sor.u32 %s63, %s64
    %s66 = ssub.s32 %s16, %s30
    %s67 = sor.u32 %s65, %s66
    %p68 = scmp.eq.s32.totalorder %s67, 0
    %s70 = sadd.s32 %s69, 1
    %s71 = scalar_select %p68, %s69, %s70
    %p74 = pneg %p68
    %p75 = scmp.eq.s32.totalorder %s8, 1
    %p76 = por %p74, %p75
    %p77 = scmp.ne.s32.totalorder %s69, %s72
    %p78 = scmp.eq.s32.totalorder %s8, 0
    %p79 = por %p77, %p78
    %p80 = scmp.ne.s32.totalorder %s69, %s72
    %p81 = scmp.eq.s32.totalorder %s13, 1
    %p82 = por %p80, %p81
    %p83 = scmp.ne.s32.totalorder %s72, %s73
    %p84 = scmp.eq.s32.totalorder %s13, 0
    %p85 = por %p83, %p84
    %p86 = scmp.ne.s32.totalorder %s72, %s73
    %p87 = scmp.eq.s32.totalorder %s14, 1
    %p88 = por %p86, %p87
    %p90 = scmp.ne.s32.totalorder %s73, %s89
    %p91 = scmp.eq.s32.totalorder %s14, 0
    %p92 = por %p90, %p91
    %s93 = ssub.s32 %s15, %s34
    %s94 = ssub.s32 %s16, %s30
    %s95 = sor.u32 %s93, %s94
    %p96 = scmp.eq.s32.totalorder %s95, 0
    %s98 = sadd.s32 %s97, 1
    %s99 = scalar_select %p96, %s97, %s98
    %p102 = pneg %p96
    %p103 = scmp.eq.s32.totalorder %s8, 1
    %p104 = por %p102, %p103
    %p105 = scmp.ne.s32.totalorder %s97, %s100
    %p106 = scmp.eq.s32.totalorder %s8, 0
    %p107 = por %p105, %p106
    %p108 = scmp.ne.s32.totalorder %s97, %s100
    %p109 = scmp.eq.s32.totalorder %s13, 1
    %p110 = por %p108, %p109
    %p111 = scmp.ne.s32.totalorder %s100, %s101
    %p112 = scmp.eq.s32.totalorder %s13, 0
    %p113 = por %p111, %p112
    %p114 = scmp.ne.s32.totalorder %s100, %s101
    %p115 = scmp.eq.s32.totalorder %s14, 1
    %p116 = por %p114, %p115
    %p118 = scmp.ne.s32.totalorder %s101, %s117
    %p119 = scmp.eq.s32.totalorder %s14, 0
    %p120 = por %p118, %p119
    %p121 = scmp.le.s32.totalorder 1, %s8
    %p122 = scmp.lt.s32.totalorder %s8, 3
    %p123 = pnand %p121, %p122
    %p124 = pneg %p123
    // Predicated region
    $region9: #{mellin_fourier_forward.8} parent=5 // pred_check
      _
    $region10: #{mellin_fourier_forward.8} parent=5 // pred_check_branch
      %126 = sbr.rel (%p123) target = $region12
    $region11: #{mellin_fourier_forward.8} parent=5 // pred_region
      %s127 = ssub.s32 %s8, 1
    $region12: #{mellin_fourier_forward.8} parent=5 // pred_fallthru
      _
    %p128 = scmp.lt.s32.totalorder %s8, 2
    // Predicated region
    $region13: #{mellin_fourier_forward.8} parent=5 // pred_check
      %p129 = pneg %p128
    $region14: #{mellin_fourier_forward.8} parent=5 // pred_check_branch
      %131 = sbr.rel (%p129) target = $region16
    $region15: #{mellin_fourier_forward.8} parent=5 // pred_region
      // Predicated region
      $region17: #{mellin_fourier_forward.8} parent=15 // pred_check
        %p132 = pneg %p49
      $region18: #{mellin_fourier_forward.8} parent=15 // pred_check_branch
        %134 = sbr.rel (%p132) target = $region20
      $region19: #{mellin_fourier_forward.8} parent=15 // pred_region
        %s135 = smul.u32 2, %s17
        %p136 = scmp.lt.s32.totalorder %s15, 1
        %s137 = scalar_select %p136, %s15, 1
        %p138 = scmp.lt.s32.totalorder %s135, 1
        %s139 = scalar_select %p138, %s135, 1
        %s140 = smul.addr %s137, 2
        %s141 = sadd.s32 %s139, %s140
        %s142 = smul.addr %s141, 4
        %s143 = scalar_lea.vmem %s0, %s142
        %s144 = smul.u32 2, %s17
      $region20: #{mellin_fourier_forward.8} parent=15 // pred_fallthru
        _
      // Predicated region
      $region21: #{mellin_fourier_forward.8} parent=15 // pred_check
        %p145 = pneg %p79
      $region22: #{mellin_fourier_forward.8} parent=15 // pred_check_branch
        %147 = sbr.rel (%p145) target = $region24
      $region23: #{mellin_fourier_forward.8} parent=15 // pred_region
        %s148 = smul.u32 32, %s17
        %s149 = smul.u32 2, %s16
        %p150 = scmp.lt.s32.totalorder %s15, 1
        %s151 = scalar_select %p150, %s15, 1
        %p152 = scmp.lt.s32.totalorder %s148, 31
        %s153 = scalar_select %p152, %s148, 31
        %p154 = scmp.lt.s32.totalorder %s149, 1
        %s155 = scalar_select %p154, %s149, 1
        %s156 = smul.addr %s153, 2
        %s157 = sadd.s32 %s155, %s156
        %s158 = smul.addr %s151, 64
        %s159 = sadd.s32 %s157, %s158
        %s160 = smul.addr %s159, 4
        %s161 = scalar_lea.vmem %s1, %s160
        %s162 = smul.u32 32, %s17
        %s163 = smul.u32 2, %s16
      $region24: #{mellin_fourier_forward.8} parent=15 // pred_fallthru
        _
    $region16: #{mellin_fourier_forward.8} parent=5 // pred_fallthru
      _
    %p164 = scmp.le.s32.totalorder 1, %s8
    %p165 = scmp.lt.s32.totalorder %s8, 3
    %p166 = pnand %p164, %p165
    %p167 = pneg %p166
    // Predicated region
    $region25: #{mellin_fourier_forward.8} parent=5 // pred_check
      _
    $region26: #{mellin_fourier_forward.8} parent=5 // pred_check_branch
      %169 = sbr.rel (%p166) target = $region28
    $region27: #{mellin_fourier_forward.8} parent=5 // pred_region
      %s170 = ssub.s32 %s8, 1
      %s171 = smul.u32 2, %s20
      %p172 = scmp.lt.s32.totalorder %s18, 1
      %s173 = scalar_select %p172, %s18, 1
      %p174 = scmp.lt.s32.totalorder %s171, 1
      %s175 = scalar_select %p174, %s171, 1
      %s176 = smul.addr %s173, 2
      %s177 = sadd.s32 %s175, %s176
      %s178 = smul.addr %s177, 4
      %s179 = scalar_lea.vmem %s0, %s178
      %p180 = pneg %p55
      %p181 = pneg %p52
      %s182 = smul.u32 32, %s20
      %s183 = smul.u32 2, %s19
      %p184 = scmp.lt.s32.totalorder %s18, 1
      %s185 = scalar_select %p184, %s18, 1
      %p186 = scmp.lt.s32.totalorder %s182, 31
      %s187 = scalar_select %p186, %s182, 31
      %p188 = scmp.lt.s32.totalorder %s183, 1
      %s189 = scalar_select %p188, %s183, 1
      %s190 = smul.addr %s187, 2
      %s191 = sadd.s32 %s189, %s190
      %s192 = smul.addr %s185, 64
      %s193 = sadd.s32 %s191, %s192
      %s194 = smul.addr %s193, 4
      %s195 = scalar_lea.vmem %s1, %s194
      %p196 = pneg %p85
      %p197 = pneg %p82
      %p198 = pneg %p113
      %p199 = pneg %p110
      %s200 = smul.u32 2, %s19
      %p201 = scmp.lt.s32.totalorder %s18, 1
      %s202 = scalar_select %p201, %s18, 1
      %p203 = scmp.lt.s32.totalorder %s200, 1
      %s204 = scalar_select %p203, %s200, 1
      %s205 = smul.addr %s202, 2
      %s206 = sadd.s32 %s204, %s205
      %s207 = smul.addr %s206, 4
      %s208 = scalar_lea.vmem %s2, %s207
      %s209 = smul.u32 2, %s20
      %p210 = scmp.lt.s32.totalorder %s18, 1
      %s211 = scalar_select %p210, %s18, 1
      %p212 = scmp.lt.s32.totalorder %s209, 1
      %s213 = scalar_select %p212, %s209, 1
      %s214 = smul.addr %s211, 2
      %s215 = sadd.s32 %s213, %s214
      %s216 = smul.addr %s215, 4
      %s217 = scalar_lea.vmem %s0, %s216
      %s218 = smul.u32 2, %s20
      %s219 = smul.u32 32, %s20
      %s220 = smul.u32 2, %s19
      %p221 = scmp.lt.s32.totalorder %s18, 1
      %s222 = scalar_select %p221, %s18, 1
      %p223 = scmp.lt.s32.totalorder %s219, 31
      %s224 = scalar_select %p223, %s219, 31
      %p225 = scmp.lt.s32.totalorder %s220, 1
      %s226 = scalar_select %p225, %s220, 1
      %s227 = smul.addr %s224, 2
      %s228 = sadd.s32 %s226, %s227
      %s229 = smul.addr %s222, 64
      %s230 = sadd.s32 %s228, %s229
      %s231 = smul.addr %s230, 4
      %s232 = scalar_lea.vmem %s1, %s231
      %s233 = smul.u32 32, %s20
      %s234 = smul.u32 2, %s19
      %s235 = smul.u32 2, %s19
      %p236 = scmp.lt.s32.totalorder %s18, 1
      %s237 = scalar_select %p236, %s18, 1
      %p238 = scmp.lt.s32.totalorder %s235, 1
      %s239 = scalar_select %p238, %s235, 1
      %s240 = smul.addr %s237, 2
      %s241 = sadd.s32 %s239, %s240
      %s242 = smul.addr %s241, 4
      %s243 = scalar_lea.vmem %s2, %s242
      %s244 = smul.u32 2, %s19
      %p245 = scmp.eq.s32.totalorder %s20, 0
      // Predicated region
      $region29: #{mellin_fourier_forward.8} parent=27 // pred_check
        %p246 = pneg %p245
      $region30: #{mellin_fourier_forward.8} parent=27 // pred_check_branch
        %248 = sbr.rel (%p246) target = $region32
      $region31: #{mellin_fourier_forward.8} parent=27 // pred_region
        %249 = vst [vmem:[%s243] sm:$0xff] 0.0
      $region32: #{mellin_fourier_forward.8} parent=27 // pred_fallthru
        _
      %v250 = vld [vmem:[%s243] sm:$0xff]
      %v251 = vld [vmem:[%s217] sm:$0xff]
      %v253 = vcombine.high %v251, %v251
      %v255 = vpack.c.bf16 %v251, %v251
      %v256 = vpack.c.bf16 %v253, %v253
      %v257 = vld [vmem:[%s232] sm:$0xff]
      %v258 = vld [vmem:[%s232 + $0x8] sm:$0xff]
      %v259 = vld [vmem:[%s232 + $0x10] sm:$0xff]
      %v260 = vld [vmem:[%s232 + $0x18] sm:$0xff]
      %v261 = vld [vmem:[%s232 + $0x20] sm:$0xff]
      %v262 = vld [vmem:[%s232 + $0x28] sm:$0xff]
      %v263 = vld [vmem:[%s232 + $0x30] sm:$0xff]
      %v264 = vld [vmem:[%s232 + $0x38] sm:$0xff]
      %v265 = vld [vmem:[%s232 + $0x40] sm:$0xff]
      %v266 = vld [vmem:[%s232 + $0x48] sm:$0xff]
      %v267 = vld [vmem:[%s232 + $0x50] sm:$0xff]
      %v268 = vld [vmem:[%s232 + $0x58] sm:$0xff]
      %v269 = vld [vmem:[%s232 + $0x60] sm:$0xff]
      %v270 = vld [vmem:[%s232 + $0x68] sm:$0xff]
      %v271 = vld [vmem:[%s232 + $0x70] sm:$0xff]
      %v272 = vld [vmem:[%s232 + $0x78] sm:$0xff]
      %v273 = vld [vmem:[%s232 + $0x80] sm:$0xff]
      %v274 = vld [vmem:[%s232 + $0x88] sm:$0xff]
      %v275 = vld [vmem:[%s232 + $0x90] sm:$0xff]
      %v276 = vld [vmem:[%s232 + $0x98] sm:$0xff]
      %v277 = vld [vmem:[%s232 + $0xa0] sm:$0xff]
      %v278 = vld [vmem:[%s232 + $0xa8] sm:$0xff]
      %v279 = vld [vmem:[%s232 + $0xb0] sm:$0xff]
      %v280 = vld [vmem:[%s232 + $0xb8] sm:$0xff]
      %v281 = vld [vmem:[%s232 + $0xc0] sm:$0xff]
      %v282 = vld [vmem:[%s232 + $0xc8] sm:$0xff]
      %v283 = vld [vmem:[%s232 + $0xd0] sm:$0xff]
      %v284 = vld [vmem:[%s232 + $0xd8] sm:$0xff]
      %v285 = vld [vmem:[%s232 + $0xe0] sm:$0xff]
      %v286 = vld [vmem:[%s232 + $0xe8] sm:$0xff]
      %v287 = vld [vmem:[%s232 + $0xf0] sm:$0xff]
      %v288 = vld [vmem:[%s232 + $0xf8] sm:$0xff]
      %v321 = vunpack.c.l.b16 %v257
      %v322 = vunpack.c.h.b16 %v257
      %v323 = vunpack.c.l.b16 %v258
      %v324 = vunpack.c.h.b16 %v258
      %v325 = vunpack.c.l.b16 %v259
      %v326 = vunpack.c.h.b16 %v259
      %v327 = vunpack.c.l.b16 %v260
      %v328 = vunpack.c.h.b16 %v260
      %v329 = vunpack.c.l.b16 %v261
      %v330 = vunpack.c.h.b16 %v261
      %v331 = vunpack.c.l.b16 %v262
      %v332 = vunpack.c.h.b16 %v262
      %v333 = vunpack.c.l.b16 %v263
      %v334 = vunpack.c.h.b16 %v263
      %v335 = vunpack.c.l.b16 %v264
      %v336 = vunpack.c.h.b16 %v264
      %v337 = vunpack.c.l.b16 %v265
      %v338 = vunpack.c.h.b16 %v265
      %v339 = vunpack.c.l.b16 %v266
      %v340 = vunpack.c.h.b16 %v266
      %v341 = vunpack.c.l.b16 %v267
      %v342 = vunpack.c.h.b16 %v267
      %v343 = vunpack.c.l.b16 %v268
      %v344 = vunpack.c.h.b16 %v268
      %v345 = vunpack.c.l.b16 %v269
      %v346 = vunpack.c.h.b16 %v269
      %v347 = vunpack.c.l.b16 %v270
      %v348 = vunpack.c.h.b16 %v270
      %v349 = vunpack.c.l.b16 %v271
      %v350 = vunpack.c.h.b16 %v271
      %v351 = vunpack.c.l.b16 %v272
      %v352 = vunpack.c.h.b16 %v272
      %v353 = vunpack.c.l.b16 %v273
      %v354 = vunpack.c.h.b16 %v273
      %v355 = vunpack.c.l.b16 %v274
      %v356 = vunpack.c.h.b16 %v274
      %v357 = vunpack.c.l.b16 %v275
      %v358 = vunpack.c.h.b16 %v275
      %v359 = vunpack.c.l.b16 %v276
      %v360 = vunpack.c.h.b16 %v276
      %v361 = vunpack.c.l.b16 %v277
      %v362 = vunpack.c.h.b16 %v277
      %v363 = vunpack.c.l.b16 %v278
      %v364 = vunpack.c.h.b16 %v278
      %v365 = vunpack.c.l.b16 %v279
      %v366 = vunpack.c.h.b16 %v279
      %v367 = vunpack.c.l.b16 %v280
      %v368 = vunpack.c.h.b16 %v280
      %v369 = vunpack.c.l.b16 %v281
      %v370 = vunpack.c.h.b16 %v281
      %v371 = vunpack.c.l.b16 %v282
      %v372 = vunpack.c.h.b16 %v282
      %v373 = vunpack.c.l.b16 %v283
      %v374 = vunpack.c.h.b16 %v283
      %v375 = vunpack.c.l.b16 %v284
      %v376 = vunpack.c.h.b16 %v284
      %v377 = vunpack.c.l.b16 %v285
      %v378 = vunpack.c.h.b16 %v285
      %v379 = vunpack.c.l.b16 %v286
      %v380 = vunpack.c.h.b16 %v286
      %v381 = vunpack.c.l.b16 %v287
      %v382 = vunpack.c.h.b16 %v287
      %v383 = vunpack.c.l.b16 %v288
      %v384 = vunpack.c.h.b16 %v288
      %v385 = vpack.c.b16 %v323, %v321
      %v386 = vpack.c.b16 %v324, %v322
      %v387 = vpack.c.b16 %v327, %v325
      %v388 = vpack.c.b16 %v328, %v326
      %v389 = vpack.c.b16 %v331, %v329
      %v390 = vpack.c.b16 %v332, %v330
      %v391 = vpack.c.b16 %v335, %v333
      %v392 = vpack.c.b16 %v336, %v334
      %v393 = vpack.c.b16 %v339, %v337
      %v394 = vpack.c.b16 %v340, %v338
      %v395 = vpack.c.b16 %v343, %v341
      %v396 = vpack.c.b16 %v344, %v342
      %v397 = vpack.c.b16 %v347, %v345
      %v398 = vpack.c.b16 %v348, %v346
      %v399 = vpack.c.b16 %v351, %v349
      %v400 = vpack.c.b16 %v352, %v350
      %v401 = vpack.c.b16 %v355, %v353
      %v402 = vpack.c.b16 %v356, %v354
      %v403 = vpack.c.b16 %v359, %v357
      %v404 = vpack.c.b16 %v360, %v358
      %v405 = vpack.c.b16 %v363, %v361
      %v406 = vpack.c.b16 %v364, %v362
      %v407 = vpack.c.b16 %v367, %v365
      %v408 = vpack.c.b16 %v368, %v366
      %v409 = vpack.c.b16 %v371, %v369
      %v410 = vpack.c.b16 %v372, %v370
      %v411 = vpack.c.b16 %v375, %v373
      %v412 = vpack.c.b16 %v376, %v374
      %v413 = vpack.c.b16 %v379, %v377
      %v414 = vpack.c.b16 %v380, %v378
      %v415 = vpack.c.b16 %v383, %v381
      %v416 = vpack.c.b16 %v384, %v382
      %449 = vmatprep.subr.bf16.mxu0 %v400
      %450 = vmatpush1.bf16.msra.mxu0 %v399
      %451 = vmatprep.subr.bf16.mxu0 %v398
      %452 = vmatpush1.bf16.msra.mxu0 %v397
      %453 = vmatprep.subr.bf16.mxu0 %v396
      %454 = vmatpush1.bf16.msra.mxu0 %v395
      %455 = vmatprep.subr.bf16.mxu0 %v394
      %456 = vmatpush1.bf16.msra.mxu0 %v393
      %457 = vmatprep.subr.bf16.mxu0 %v392
      %458 = vmatpush1.bf16.msra.mxu0 %v391
      %459 = vmatprep.subr.bf16.mxu0 %v390
      %460 = vmatpush1.bf16.msra.mxu0 %v389
      %461 = vmatprep.subr.bf16.mxu0 %v388
      %462 = vmatpush1.bf16.msra.mxu0 %v387
      %463 = vmatprep.subr.bf16.mxu0 %v386
      %464 = vmatpush1.bf16.msra.mxu0 %v385
      %465 = vmatprep.subr.bf16.mxu0 %v416
      %466 = vmatpush2.bf16.msra.mxu0 %v415
      %467 = vmatprep.subr.bf16.mxu0 %v414
      %468 = vmatpush2.bf16.msra.mxu0 %v413
      %469 = vmatprep.subr.bf16.mxu0 %v412
      %470 = vmatpush2.bf16.msra.mxu0 %v411
      %471 = vmatprep.subr.bf16.mxu0 %v410
      %472 = vmatpush2.bf16.msra.mxu0 %v409
      %473 = vmatprep.subr.bf16.mxu0 %v408
      %474 = vmatpush2.bf16.msra.mxu0 %v407
      %475 = vmatprep.subr.bf16.mxu0 %v406
      %476 = vmatpush2.bf16.msra.mxu0 %v405
      %477 = vmatprep.subr.bf16.mxu0 %v404
      %478 = vmatpush2.bf16.msra.mxu0 %v403
      %479 = vmatprep.subr.bf16.mxu0 %v402
      %480 = vmatpush2.bf16.msra.mxu0 %v401
      %481 = vmatprep.mubr.bf16.mxu0 %v256
      %482 = vmatmul.mubr.bf16.gmra.mxu0 %v255
      %v483 = vpop.f32.mrf.mxu0
      %v484 = vadd.f32 0.0, %v483
      %v485 = vpop.f32.mrf.mxu0
      %v486 = vadd.f32 0.0, %v485
      %v487 = vpop.f32.mrf.mxu0
      %v488 = vpop.f32.mrf.mxu0
      %489 = vdwg.mxu0
      %v492 = vcombine.low %v484, %v486
      %v494 = vadd.f32 %v250, %v492
      %495 = vst [vmem:[%s243] sm:$0xff] %v494
      %s496 = smul.u32 2, %s19
      %p497 = scmp.lt.s32.totalorder %s18, 1
      %s498 = scalar_select %p497, %s18, 1
      %p499 = scmp.lt.s32.totalorder %s496, 1
      %s500 = scalar_select %p499, %s496, 1
      %s501 = smul.addr %s498, 2
      %s502 = sadd.s32 %s500, %s501
      %s503 = smul.addr %s502, 4
      %s504 = scalar_lea.vmem %s2, %s503
      // Predicated region
      $region33: #{mellin_fourier_forward.8} parent=27 // pred_check
        %p505 = pneg %p110
      $region34: #{mellin_fourier_forward.8} parent=27 // pred_check_branch
        %507 = sbr.rel (%p505) target = $region36
      $region35: #{mellin_fourier_forward.8} parent=27 // pred_region
        %s508 = smul.u32 2, %s19
      $region36: #{mellin_fourier_forward.8} parent=27 // pred_fallthru
        _
    $region28: #{mellin_fourier_forward.8} parent=5 // pred_fallthru
      _
    %p509 = scmp.le.s32.totalorder 2, %s8
    // Predicated region
    $region37: #{mellin_fourier_forward.8} parent=5 // pred_check
      %p510 = pneg %p509
    $region38: #{mellin_fourier_forward.8} parent=5 // pred_check_branch
      %512 = sbr.rel (%p510) target = $region40
    $region39: #{mellin_fourier_forward.8} parent=5 // pred_region
      %s513 = ssub.s32 %s8, 2
      // Predicated region
      $region41: #{mellin_fourier_forward.8} parent=39 // pred_check
        %p514 = pneg %p116
      $region42: #{mellin_fourier_forward.8} parent=39 // pred_check_branch
        %516 = sbr.rel (%p514) target = $region44
      $region43: #{mellin_fourier_forward.8} parent=39 // pred_region
        %s517 = smul.u32 2, %s22
        %p518 = scmp.lt.s32.totalorder %s21, 1
        %s519 = scalar_select %p518, %s21, 1
        %p520 = scmp.lt.s32.totalorder %s517, 1
        %s521 = scalar_select %p520, %s517, 1
        %s522 = smul.addr %s519, 2
        %s523 = sadd.s32 %s521, %s522
        %s524 = smul.addr %s523, 4
        %s525 = scalar_lea.vmem %s2, %s524
      $region44: #{mellin_fourier_forward.8} parent=39 // pred_fallthru
        _
    $region40: #{mellin_fourier_forward.8} parent=5 // pred_fallthru
      _
  $region6: #{mellin_fourier_forward.8} parent=0 // loop_footer
    %s12 = sadd.s32 1, %s8
  $region7: #{mellin_fourier_forward.8} parent=0 // loop_footer_branch
    %7 = sbr.rel target = $region3
  $region8: #{mellin_fourier_forward.8} parent=0 // loop_exit
    _

// kernel: mellin_fourier_forward.9
$region0: #{mellin_fourier_forward.9}
  #allocation0 [shape = 'u32[]', space=smem, size = 0x4, offset = 0x4, fixed_abs, tag = 'smem constant byte address 0x4 - core index']
  #allocation1 [shape = 'u32[144,128]{1,0:T(1,128)}', space=vmem, size = 0x12000, scoped, tag = 'internal scratch']
  %s0 = inlined_call_operand.vmem [shape: f32[1,16,256], index: 0, kind: input, shape index: {}]
  %s1 = inlined_call_operand.vmem [shape: bf16[16,16], index: 1, kind: input, shape index: {}]
  %s2 = inlined_call_operand.vmem [shape: bf16[16,16], index: 2, kind: input, shape index: {}]
  %s3 = inlined_call_operand.vmem [shape: bf16[256,256], index: 3, kind: input, shape index: {}]
  %s4 = inlined_call_operand.vmem [shape: bf16[256,256], index: 4, kind: input, shape index: {}]
  %s5 = inlined_call_operand.vmem [shape: bf16[256,256], index: 5, kind: input, shape index: {}]
  %s6 = inlined_call_operand.vmem [shape: bf16[16,16], index: 6, kind: input, shape index: {}]
  %s7 = inlined_call_operand.vmem [shape: bf16[16,16], index: 7, kind: input, shape index: {}]
  %s8 = inlined_call_operand.vmem [shape: bf16[16,16], index: 8, kind: input, shape index: {}]
  %s9 = inlined_call_operand.vmem [shape: bf16[128,128], index: 9, kind: input, shape index: {}]
  %s10 = inlined_call_operand.vmem [shape: bf16[128,128], index: 10, kind: input, shape index: {}]
  %s11 = inlined_call_operand.vmem [shape: f32[1,16,128], index: 11, kind: output, shape index: {}]
  %s12 = sld [smem:[#allocation0]]
  $region54: #{mellin_fourier_forward.9} parent=0
    _
  %s14 = ssub.s32 1, %s12
  %s15 = scalar_select 0, %s14, %s12
  // Predicated region
  $region2: #{mellin_fourier_forward.9} parent=0 // pred_check
    _
  $region3: #{mellin_fourier_forward.9} parent=0 // pred_check_branch
    %17 = sbr.rel (0) target = $region5
  $region4: #{mellin_fourier_forward.9} parent=0 // pred_region
    _
  $region5: #{mellin_fourier_forward.9} parent=0 // pred_fallthru
    _
  // Predicated region
  $region6: #{mellin_fourier_forward.9} parent=0 // pred_check
    _
  $region7: #{mellin_fourier_forward.9} parent=0 // pred_check_branch
    %19 = sbr.rel (0) target = $region9
  $region8: #{mellin_fourier_forward.9} parent=0 // pred_region
    _
  $region9: #{mellin_fourier_forward.9} parent=0 // pred_fallthru
    _
  // Predicated region
  $region10: #{mellin_fourier_forward.9} parent=0 // pred_check
    _
  $region11: #{mellin_fourier_forward.9} parent=0 // pred_check_branch
    %21 = sbr.rel (0) target = $region13
  $region12: #{mellin_fourier_forward.9} parent=0 // pred_region
    _
  $region13: #{mellin_fourier_forward.9} parent=0 // pred_fallthru
    _
  // Predicated region
  $region14: #{mellin_fourier_forward.9} parent=0 // pred_check
    _
  $region15: #{mellin_fourier_forward.9} parent=0 // pred_check_branch
    %23 = sbr.rel (0) target = $region17
  $region16: #{mellin_fourier_forward.9} parent=0 // pred_region
    _
  $region17: #{mellin_fourier_forward.9} parent=0 // pred_fallthru
    _
  // Predicated region
  $region18: #{mellin_fourier_forward.9} parent=0 // pred_check
    _
  $region19: #{mellin_fourier_forward.9} parent=0 // pred_check_branch
    %25 = sbr.rel (0) target = $region21
  $region20: #{mellin_fourier_forward.9} parent=0 // pred_region
    _
  $region21: #{mellin_fourier_forward.9} parent=0 // pred_fallthru
    _
  // Predicated region
  $region22: #{mellin_fourier_forward.9} parent=0 // pred_check
    _
  $region23: #{mellin_fourier_forward.9} parent=0 // pred_check_branch
    %27 = sbr.rel (0) target = $region25
  $region24: #{mellin_fourier_forward.9} parent=0 // pred_region
    _
  $region25: #{mellin_fourier_forward.9} parent=0 // pred_fallthru
    _
  // Predicated region
  $region26: #{mellin_fourier_forward.9} parent=0 // pred_check
    _
  $region27: #{mellin_fourier_forward.9} parent=0 // pred_check_branch
    %29 = sbr.rel (0) target = $region29
  $region28: #{mellin_fourier_forward.9} parent=0 // pred_region
    _
  $region29: #{mellin_fourier_forward.9} parent=0 // pred_fallthru
    _
  // Predicated region
  $region30: #{mellin_fourier_forward.9} parent=0 // pred_check
    _
  $region31: #{mellin_fourier_forward.9} parent=0 // pred_check_branch
    %31 = sbr.rel (0) target = $region33
  $region32: #{mellin_fourier_forward.9} parent=0 // pred_region
    _
  $region33: #{mellin_fourier_forward.9} parent=0 // pred_fallthru
    _
  // Predicated region
  $region34: #{mellin_fourier_forward.9} parent=0 // pred_check
    _
  $region35: #{mellin_fourier_forward.9} parent=0 // pred_check_branch
    %33 = sbr.rel (0) target = $region37
  $region36: #{mellin_fourier_forward.9} parent=0 // pred_region
    _
  $region37: #{mellin_fourier_forward.9} parent=0 // pred_fallthru
    _
  // Predicated region
  $region38: #{mellin_fourier_forward.9} parent=0 // pred_check
    _
  $region39: #{mellin_fourier_forward.9} parent=0 // pred_check_branch
    %35 = sbr.rel (0) target = $region41
  $region40: #{mellin_fourier_forward.9} parent=0 // pred_region
    _
  $region41: #{mellin_fourier_forward.9} parent=0 // pred_fallthru
    _
  // Predicated region
  $region42: #{mellin_fourier_forward.9} parent=0 // pred_check
    _
  $region43: #{mellin_fourier_forward.9} parent=0 // pred_check_branch
    %37 = sbr.rel (0) target = $region45
  $region44: #{mellin_fourier_forward.9} parent=0 // pred_region
    _
  $region45: #{mellin_fourier_forward.9} parent=0 // pred_fallthru
    _
  %v39 = vld [vmem:[%s0] sm:$0xff]
  %v40 = vld [vmem:[%s0 + $0x8] sm:$0xff]
  %v41 = vld [vmem:[%s0 + $0x10] sm:$0xff]
  %v42 = vld [vmem:[%s0 + $0x18] sm:$0xff]
  %v43 = vpack.c.bf16 %v41, %v39
  %v44 = vpack.c.bf16 %v42, %v40
  %v45 = vld [vmem:[%s1] sm:$0xf]
  %v46 = vld [vmem:[%s1 + $0x4] sm:$0xf]
  %v49 = vunpack.c.l.b16 %v45
  %v50 = vunpack.c.l.b16 %v46
  %v51 = vpack.c.b16 %v50, %v49
  %vm52 = vcmask 130048
  %v54 = vsel %vm52, %v51, 0
  %56 = vmatprep.subr.bf16.mxu0 0
  %57 = vmatpush1.bf16.msra.mxu0 0
  %58 = vmatprep.subr.bf16.mxu0 0
  %59 = vmatpush1.bf16.msra.mxu0 0
  %60 = vmatprep.subr.bf16.mxu0 0
  %61 = vmatpush1.bf16.msra.mxu0 0
  %62 = vmatprep.subr.bf16.mxu0 0
  %63 = vmatpush1.bf16.msra.mxu0 0
  %64 = vmatprep.subr.bf16.mxu0 0
  %65 = vmatpush1.bf16.msra.mxu0 0
  %66 = vmatprep.subr.bf16.mxu0 0
  %67 = vmatpush1.bf16.msra.mxu0 0
  %68 = vmatprep.subr.bf16.mxu0 0
  %69 = vmatpush1.bf16.msra.mxu0 0
  %70 = vmatprep.subr.bf16.mxu0 %v44
  %71 = vmatpush1.bf16.msra.mxu0 %v43
  %72 = vmatprep.subr.bf16.mxu0 0
  %73 = vmatpush2.bf16.msra.mxu0 0
  %74 = vmatprep.subr.bf16.mxu0 0
  %75 = vmatpush2.bf16.msra.mxu0 0
  %76 = vmatprep.subr.bf16.mxu0 0
  %77 = vmatpush2.bf16.msra.mxu0 0
  %78 = vmatprep.subr.bf16.mxu0 0
  %79 = vmatpush2.bf16.msra.mxu0 0
  %80 = vmatprep.subr.bf16.mxu0 0
  %81 = vmatpush2.bf16.msra.mxu0 0
  %82 = vmatprep.subr.bf16.mxu0 0
  %83 = vmatpush2.bf16.msra.mxu0 0
  %84 = vmatprep.subr.bf16.mxu0 0
  %85 = vmatpush2.bf16.msra.mxu0 0
  %86 = vmatprep.subr.bf16.mxu0 0
  %87 = vmatpush2.bf16.msra.mxu0 0
  %88 = vmatprep.mubr.bf16.mxu0 0
  %89 = vmatmul.mubr.bf16.gmra.mxu0 %v54
  %v90 = vpop.f32.mrf.mxu0
  %v91 = vadd.f32 0.0, %v90
  %v92 = vpop.f32.mrf.mxu0
  %v93 = vadd.f32 0.0, %v92
  %v94 = vpop.f32.mrf.mxu0
  %v95 = vadd.f32 0.0, %v94
  %v96 = vpop.f32.mrf.mxu0
  %v97 = vadd.f32 0.0, %v96
  %98 = vdwg.mxu0
  %v99 = vld [vmem:[%s2] sm:$0xf]
  %v100 = vld [vmem:[%s2 + $0x4] sm:$0xf]
  %v103 = vunpack.c.l.b16 %v99
  %v104 = vunpack.c.l.b16 %v100
  %v105 = vpack.c.b16 %v104, %v103
  %v107 = vsel %vm52, %v105, 0
  %109 = vmatprep.subr.bf16.mxu0 0
  %110 = vmatpush1.bf16.msra.mxu0 0
  %111 = vmatprep.subr.bf16.mxu0 0
  %112 = vmatpush1.bf16.msra.mxu0 0
  %113 = vmatprep.subr.bf16.mxu0 0
  %114 = vmatpush1.bf16.msra.mxu0 0
  %115 = vmatprep.subr.bf16.mxu0 0
  %116 = vmatpush1.bf16.msra.mxu0 0
  %117 = vmatprep.subr.bf16.mxu0 0
  %118 = vmatpush1.bf16.msra.mxu0 0
  %119 = vmatprep.subr.bf16.mxu0 0
  %120 = vmatpush1.bf16.msra.mxu0 0
  %121 = vmatprep.subr.bf16.mxu0 0
  %122 = vmatpush1.bf16.msra.mxu0 0
  %123 = vmatprep.subr.bf16.mxu0 %v44
  %124 = vmatpush1.bf16.msra.mxu0 %v43
  %125 = vmatprep.subr.bf16.mxu0 0
  %126 = vmatpush2.bf16.msra.mxu0 0
  %127 = vmatprep.subr.bf16.mxu0 0
  %128 = vmatpush2.bf16.msra.mxu0 0
  %129 = vmatprep.subr.bf16.mxu0 0
  %130 = vmatpush2.bf16.msra.mxu0 0
  %131 = vmatprep.subr.bf16.mxu0 0
  %132 = vmatpush2.bf16.msra.mxu0 0
  %133 = vmatprep.subr.bf16.mxu0 0
  %134 = vmatpush2.bf16.msra.mxu0 0
  %135 = vmatprep.subr.bf16.mxu0 0
  %136 = vmatpush2.bf16.msra.mxu0 0
  %137 = vmatprep.subr.bf16.mxu0 0
  %138 = vmatpush2.bf16.msra.mxu0 0
  %139 = vmatprep.subr.bf16.mxu0 0
  %140 = vmatpush2.bf16.msra.mxu0 0
  %141 = vmatprep.mubr.bf16.mxu0 0
  %142 = vmatmul.mubr.bf16.gmra.mxu0 %v107
  %v143 = vpop.f32.mrf.mxu0
  %v144 = vadd.f32 0.0, %v143
  %v145 = vpop.f32.mrf.mxu0
  %v146 = vadd.f32 0.0, %v145
  %v147 = vpop.f32.mrf.mxu0
  %v148 = vadd.f32 0.0, %v147
  %v149 = vpop.f32.mrf.mxu0
  %v150 = vadd.f32 0.0, %v149
  %151 = vdwg.mxu0
  %v152 = vpack.c.bf16 %v95, %v91
  %v153 = vpack.c.bf16 %v97, %v93
  %v154 = vld [vmem:[%s3] sm:$0xff]
  %v155 = vld [vmem:[%s3 + $0x8] sm:$0xff]
  %v156 = vld [vmem:[%s3 + $0x10] sm:$0xff]
  %v157 = vld [vmem:[%s3 + $0x18] sm:$0xff]
  %v158 = vld [vmem:[%s3 + $0x20] sm:$0xff]
  %v159 = vld [vmem:[%s3 + $0x28] sm:$0xff]
  %v160 = vld [vmem:[%s3 + $0x30] sm:$0xff]
  %v161 = vld [vmem:[%s3 + $0x38] sm:$0xff]
  %v162 = vld [vmem:[%s3 + $0x40] sm:$0xff]
  %v163 = vld [vmem:[%s3 + $0x48] sm:$0xff]
  %v164 = vld [vmem:[%s3 + $0x50] sm:$0xff]
  %v165 = vld [vmem:[%s3 + $0x58] sm:$0xff]
  %v166 = vld [vmem:[%s3 + $0x60] sm:$0xff]
  %v167 = vld [vmem:[%s3 + $0x68] sm:$0xff]
  %v168 = vld [vmem:[%s3 + $0x70] sm:$0xff]
  %v169 = vld [vmem:[%s3 + $0x78] sm:$0xff]
  %v170 = vld [vmem:[%s3 + $0x80] sm:$0xff]
  %v171 = vld [vmem:[%s3 + $0x88] sm:$0xff]
  %v172 = vld [vmem:[%s3 + $0x90] sm:$0xff]
  %v173 = vld [vmem:[%s3 + $0x98] sm:$0xff]
  %v174 = vld [vmem:[%s3 + $0xa0] sm:$0xff]
  %v175 = vld [vmem:[%s3 + $0xa8] sm:$0xff]
  %v176 = vld [vmem:[%s3 + $0xb0] sm:$0xff]
  %v177 = vld [vmem:[%s3 + $0xb8] sm:$0xff]
  %v178 = vld [vmem:[%s3 + $0xc0] sm:$0xff]
  %v179 = vld [vmem:[%s3 + $0xc8] sm:$0xff]
  %v180 = vld [vmem:[%s3 + $0xd0] sm:$0xff]
  %v181 = vld [vmem:[%s3 + $0xd8] sm:$0xff]
  %v182 = vld [vmem:[%s3 + $0xe0] sm:$0xff]
  %v183 = vld [vmem:[%s3 + $0xe8] sm:$0xff]
  %v184 = vld [vmem:[%s3 + $0xf0] sm:$0xff]
  %v185 = vld [vmem:[%s3 + $0xf8] sm:$0xff]
  %v218 = vunpack.c.l.b16 %v154
  %v219 = vunpack.c.h.b16 %v154
  %v220 = vunpack.c.l.b16 %v155
  %v221 = vunpack.c.h.b16 %v155
  %v222 = vunpack.c.l.b16 %v156
  %v223 = vunpack.c.h.b16 %v156
  %v224 = vunpack.c.l.b16 %v157
  %v225 = vunpack.c.h.b16 %v157
  %v226 = vunpack.c.l.b16 %v158
  %v227 = vunpack.c.h.b16 %v158
  %v228 = vunpack.c.l.b16 %v159
  %v229 = vunpack.c.h.b16 %v159
  %v230 = vunpack.c.l.b16 %v160
  %v231 = vunpack.c.h.b16 %v160
  %v232 = vunpack.c.l.b16 %v161
  %v233 = vunpack.c.h.b16 %v161
  %v234 = vunpack.c.l.b16 %v162
  %v235 = vunpack.c.h.b16 %v162
  %v236 = vunpack.c.l.b16 %v163
  %v237 = vunpack.c.h.b16 %v163
  %v238 = vunpack.c.l.b16 %v164
  %v239 = vunpack.c.h.b16 %v164
  %v240 = vunpack.c.l.b16 %v165
  %v241 = vunpack.c.h.b16 %v165
  %v242 = vunpack.c.l.b16 %v166
  %v243 = vunpack.c.h.b16 %v166
  %v244 = vunpack.c.l.b16 %v167
  %v245 = vunpack.c.h.b16 %v167
  %v246 = vunpack.c.l.b16 %v168
  %v247 = vunpack.c.h.b16 %v168
  %v248 = vunpack.c.l.b16 %v169
  %v249 = vunpack.c.h.b16 %v169
  %v250 = vunpack.c.l.b16 %v170
  %v251 = vunpack.c.h.b16 %v170
  %v252 = vunpack.c.l.b16 %v171
  %v253 = vunpack.c.h.b16 %v171
  %v254 = vunpack.c.l.b16 %v172
  %v255 = vunpack.c.h.b16 %v172
  %v256 = vunpack.c.l.b16 %v173
  %v257 = vunpack.c.h.b16 %v173
  %v258 = vunpack.c.l.b16 %v174
  %v259 = vunpack.c.h.b16 %v174
  %v260 = vunpack.c.l.b16 %v175
  %v261 = vunpack.c.h.b16 %v175
  %v262 = vunpack.c.l.b16 %v176
  %v263 = vunpack.c.h.b16 %v176
  %v264 = vunpack.c.l.b16 %v177
  %v265 = vunpack.c.h.b16 %v177
  %v266 = vunpack.c.l.b16 %v178
  %v267 = vunpack.c.h.b16 %v178
  %v268 = vunpack.c.l.b16 %v179
  %v269 = vunpack.c.h.b16 %v179
  %v270 = vunpack.c.l.b16 %v180
  %v271 = vunpack.c.h.b16 %v180
  %v272 = vunpack.c.l.b16 %v181
  %v273 = vunpack.c.h.b16 %v181
  %v274 = vunpack.c.l.b16 %v182
  %v275 = vunpack.c.h.b16 %v182
  %v276 = vunpack.c.l.b16 %v183
  %v277 = vunpack.c.h.b16 %v183
  %v278 = vunpack.c.l.b16 %v184
  %v279 = vunpack.c.h.b16 %v184
  %v280 = vunpack.c.l.b16 %v185
  %v281 = vunpack.c.h.b16 %v185
  %v282 = vpack.c.b16 %v220, %v218
  %v283 = vpack.c.b16 %v221, %v219
  %v284 = vpack.c.b16 %v224, %v222
  %v285 = vpack.c.b16 %v225, %v223
  %v286 = vpack.c.b16 %v228, %v226
  %v287 = vpack.c.b16 %v229, %v227
  %v288 = vpack.c.b16 %v232, %v230
  %v289 = vpack.c.b16 %v233, %v231
  %v290 = vpack.c.b16 %v236, %v234
  %v291 = vpack.c.b16 %v237, %v235
  %v292 = vpack.c.b16 %v240, %v238
  %v293 = vpack.c.b16 %v241, %v239
  %v294 = vpack.c.b16 %v244, %v242
  %v295 = vpack.c.b16 %v245, %v243
  %v296 = vpack.c.b16 %v248, %v246
  %v297 = vpack.c.b16 %v249, %v247
  %v298 = vpack.c.b16 %v252, %v250
  %v299 = vpack.c.b16 %v253, %v251
  %v300 = vpack.c.b16 %v256, %v254
  %v301 = vpack.c.b16 %v257, %v255
  %v302 = vpack.c.b16 %v260, %v258
  %v303 = vpack.c.b16 %v261, %v259
  %v304 = vpack.c.b16 %v264, %v262
  %v305 = vpack.c.b16 %v265, %v263
  %v306 = vpack.c.b16 %v268, %v266
  %v307 = vpack.c.b16 %v269, %v267
  %v308 = vpack.c.b16 %v272, %v270
  %v309 = vpack.c.b16 %v273, %v271
  %v310 = vpack.c.b16 %v276, %v274
  %v311 = vpack.c.b16 %v277, %v275
  %v312 = vpack.c.b16 %v280, %v278
  %v313 = vpack.c.b16 %v281, %v279
  %346 = vmatprep.subr.bf16.mxu0 %v297
  %347 = vmatpush1.bf16.msra.mxu0 %v296
  %348 = vmatprep.subr.bf16.mxu0 %v295
  %349 = vmatpush1.bf16.msra.mxu0 %v294
  %350 = vmatprep.subr.bf16.mxu0 %v293
  %351 = vmatpush1.bf16.msra.mxu0 %v292
  %352 = vmatprep.subr.bf16.mxu0 %v291
  %353 = vmatpush1.bf16.msra.mxu0 %v290
  %354 = vmatprep.subr.bf16.mxu0 %v289
  %355 = vmatpush1.bf16.msra.mxu0 %v288
  %356 = vmatprep.subr.bf16.mxu0 %v287
  %357 = vmatpush1.bf16.msra.mxu0 %v286
  %358 = vmatprep.subr.bf16.mxu0 %v285
  %359 = vmatpush1.bf16.msra.mxu0 %v284
  %360 = vmatprep.subr.bf16.mxu0 %v283
  %361 = vmatpush1.bf16.msra.mxu0 %v282
  %362 = vmatprep.subr.bf16.mxu0 %v313
  %363 = vmatpush2.bf16.msra.mxu0 %v312
  %364 = vmatprep.subr.bf16.mxu0 %v311
  %365 = vmatpush2.bf16.msra.mxu0 %v310
  %366 = vmatprep.subr.bf16.mxu0 %v309
  %367 = vmatpush2.bf16.msra.mxu0 %v308
  %368 = vmatprep.subr.bf16.mxu0 %v307
  %369 = vmatpush2.bf16.msra.mxu0 %v306
  %370 = vmatprep.subr.bf16.mxu0 %v305
  %371 = vmatpush2.bf16.msra.mxu0 %v304
  %372 = vmatprep.subr.bf16.mxu0 %v303
  %373 = vmatpush2.bf16.msra.mxu0 %v302
  %374 = vmatprep.subr.bf16.mxu0 %v301
  %375 = vmatpush2.bf16.msra.mxu0 %v300
  %376 = vmatprep.subr.bf16.mxu0 %v299
  %377 = vmatpush2.bf16.msra.mxu0 %v298
  %378 = vmatprep.mubr.bf16.mxu0 %v153
  %379 = vmatmul.mubr.bf16.gmra.mxu0 %v152
  %v380 = vpop.f32.mrf.mxu0
  %v381 = vadd.f32 0.0, %v380
  %v382 = vpop.f32.mrf.mxu0
  %v383 = vadd.f32 0.0, %v382
  %v384 = vpop.f32.mrf.mxu0
  %v385 = vadd.f32 0.0, %v384
  %v386 = vpop.f32.mrf.mxu0
  %v387 = vadd.f32 0.0, %v386
  %388 = vdwg.mxu0
  %v389 = vpack.c.bf16 %v148, %v144
  %v390 = vpack.c.bf16 %v150, %v146
  %v391 = vld [vmem:[%s4] sm:$0xff]
  %v392 = vld [vmem:[%s4 + $0x8] sm:$0xff]
  %v393 = vld [vmem:[%s4 + $0x10] sm:$0xff]
  %v394 = vld [vmem:[%s4 + $0x18] sm:$0xff]
  %v395 = vld [vmem:[%s4 + $0x20] sm:$0xff]
  %v396 = vld [vmem:[%s4 + $0x28] sm:$0xff]
  %v397 = vld [vmem:[%s4 + $0x30] sm:$0xff]
  %v398 = vld [vmem:[%s4 + $0x38] sm:$0xff]
  %v399 = vld [vmem:[%s4 + $0x40] sm:$0xff]
  %v400 = vld [vmem:[%s4 + $0x48] sm:$0xff]
  %v401 = vld [vmem:[%s4 + $0x50] sm:$0xff]
  %v402 = vld [vmem:[%s4 + $0x58] sm:$0xff]
  %v403 = vld [vmem:[%s4 + $0x60] sm:$0xff]
  %v404 = vld [vmem:[%s4 + $0x68] sm:$0xff]
  %v405 = vld [vmem:[%s4 + $0x70] sm:$0xff]
  %v406 = vld [vmem:[%s4 + $0x78] sm:$0xff]
  %v407 = vld [vmem:[%s4 + $0x80] sm:$0xff]
  %v408 = vld [vmem:[%s4 + $0x88] sm:$0xff]
  %v409 = vld [vmem:[%s4 + $0x90] sm:$0xff]
  %v410 = vld [vmem:[%s4 + $0x98] sm:$0xff]
  %v411 = vld [vmem:[%s4 + $0xa0] sm:$0xff]
  %v412 = vld [vmem:[%s4 + $0xa8] sm:$0xff]
  %v413 = vld [vmem:[%s4 + $0xb0] sm:$0xff]
  %v414 = vld [vmem:[%s4 + $0xb8] sm:$0xff]
  %v415 = vld [vmem:[%s4 + $0xc0] sm:$0xff]
  %v416 = vld [vmem:[%s4 + $0xc8] sm:$0xff]
  %v417 = vld [vmem:[%s4 + $0xd0] sm:$0xff]
  %v418 = vld [vmem:[%s4 + $0xd8] sm:$0xff]
  %v419 = vld [vmem:[%s4 + $0xe0] sm:$0xff]
  %v420 = vld [vmem:[%s4 + $0xe8] sm:$0xff]
  %v421 = vld [vmem:[%s4 + $0xf0] sm:$0xff]
  %v422 = vld [vmem:[%s4 + $0xf8] sm:$0xff]
  %v455 = vunpack.c.l.b16 %v391
  %v456 = vunpack.c.h.b16 %v391
  %v457 = vunpack.c.l.b16 %v392
  %v458 = vunpack.c.h.b16 %v392
  %v459 = vunpack.c.l.b16 %v393
  %v460 = vunpack.c.h.b16 %v393
  %v461 = vunpack.c.l.b16 %v394
  %v462 = vunpack.c.h.b16 %v394
  %v463 = vunpack.c.l.b16 %v395
  %v464 = vunpack.c.h.b16 %v395
  %v465 = vunpack.c.l.b16 %v396
  %v466 = vunpack.c.h.b16 %v396
  %v467 = vunpack.c.l.b16 %v397
  %v468 = vunpack.c.h.b16 %v397
  %v469 = vunpack.c.l.b16 %v398
  %v470 = vunpack.c.h.b16 %v398
  %v471 = vunpack.c.l.b16 %v399
  %v472 = vunpack.c.h.b16 %v399
  %v473 = vunpack.c.l.b16 %v400
  %v474 = vunpack.c.h.b16 %v400
  %v475 = vunpack.c.l.b16 %v401
  %v476 = vunpack.c.h.b16 %v401
  %v477 = vunpack.c.l.b16 %v402
  %v478 = vunpack.c.h.b16 %v402
  %v479 = vunpack.c.l.b16 %v403
  %v480 = vunpack.c.h.b16 %v403
  %v481 = vunpack.c.l.b16 %v404
  %v482 = vunpack.c.h.b16 %v404
  %v483 = vunpack.c.l.b16 %v405
  %v484 = vunpack.c.h.b16 %v405
  %v485 = vunpack.c.l.b16 %v406
  %v486 = vunpack.c.h.b16 %v406
  %v487 = vunpack.c.l.b16 %v407
  %v488 = vunpack.c.h.b16 %v407
  %v489 = vunpack.c.l.b16 %v408
  %v490 = vunpack.c.h.b16 %v408
  %v491 = vunpack.c.l.b16 %v409
  %v492 = vunpack.c.h.b16 %v409
  %v493 = vunpack.c.l.b16 %v410
  %v494 = vunpack.c.h.b16 %v410
  %v495 = vunpack.c.l.b16 %v411
  %v496 = vunpack.c.h.b16 %v411
  %v497 = vunpack.c.l.b16 %v412
  %v498 = vunpack.c.h.b16 %v412
  %v499 = vunpack.c.l.b16 %v413
  %v500 = vunpack.c.h.b16 %v413
  %v501 = vunpack.c.l.b16 %v414
  %v502 = vunpack.c.h.b16 %v414
  %v503 = vunpack.c.l.b16 %v415
  %v504 = vunpack.c.h.b16 %v415
  %v505 = vunpack.c.l.b16 %v416
  %v506 = vunpack.c.h.b16 %v416
  %v507 = vunpack.c.l.b16 %v417
  %v508 = vunpack.c.h.b16 %v417
  %v509 = vunpack.c.l.b16 %v418
  %v510 = vunpack.c.h.b16 %v418
  %v511 = vunpack.c.l.b16 %v419
  %v512 = vunpack.c.h.b16 %v419
  %v513 = vunpack.c.l.b16 %v420
  %v514 = vunpack.c.h.b16 %v420
  %v515 = vunpack.c.l.b16 %v421
  %v516 = vunpack.c.h.b16 %v421
  %v517 = vunpack.c.l.b16 %v422
  %v518 = vunpack.c.h.b16 %v422
  %v519 = vpack.c.b16 %v457, %v455
  %v520 = vpack.c.b16 %v458, %v456
  %v521 = vpack.c.b16 %v461, %v459
  %v522 = vpack.c.b16 %v462, %v460
  %v523 = vpack.c.b16 %v465, %v463
  %v524 = vpack.c.b16 %v466, %v464
  %v525 = vpack.c.b16 %v469, %v467
  %v526 = vpack.c.b16 %v470, %v468
  %v527 = vpack.c.b16 %v473, %v471
  %v528 = vpack.c.b16 %v474, %v472
  %v529 = vpack.c.b16 %v477, %v475
  %v530 = vpack.c.b16 %v478, %v476
  %v531 = vpack.c.b16 %v481, %v479
  %v532 = vpack.c.b16 %v482, %v480
  %v533 = vpack.c.b16 %v485, %v483
  %v534 = vpack.c.b16 %v486, %v484
  %v535 = vpack.c.b16 %v489, %v487
  %v536 = vpack.c.b16 %v490, %v488
  %v537 = vpack.c.b16 %v493, %v491
  %v538 = vpack.c.b16 %v494, %v492
  %v539 = vpack.c.b16 %v497, %v495
  %v540 = vpack.c.b16 %v498, %v496
  %v541 = vpack.c.b16 %v501, %v499
  %v542 = vpack.c.b16 %v502, %v500
  %v543 = vpack.c.b16 %v505, %v503
  %v544 = vpack.c.b16 %v506, %v504
  %v545 = vpack.c.b16 %v509, %v507
  %v546 = vpack.c.b16 %v510, %v508
  %v547 = vpack.c.b16 %v513, %v511
  %v548 = vpack.c.b16 %v514, %v512
  %v549 = vpack.c.b16 %v517, %v515
  %v550 = vpack.c.b16 %v518, %v516
  %583 = vmatprep.subr.bf16.mxu0 %v534
  %584 = vmatpush1.bf16.msra.mxu0 %v533
  %585 = vmatprep.subr.bf16.mxu0 %v532
  %586 = vmatpush1.bf16.msra.mxu0 %v531
  %587 = vmatprep.subr.bf16.mxu0 %v530
  %588 = vmatpush1.bf16.msra.mxu0 %v529
  %589 = vmatprep.subr.bf16.mxu0 %v528
  %590 = vmatpush1.bf16.msra.mxu0 %v527
  %591 = vmatprep.subr.bf16.mxu0 %v526
  %592 = vmatpush1.bf16.msra.mxu0 %v525
  %593 = vmatprep.subr.bf16.mxu0 %v524
  %594 = vmatpush1.bf16.msra.mxu0 %v523
  %595 = vmatprep.subr.bf16.mxu0 %v522
  %596 = vmatpush1.bf16.msra.mxu0 %v521
  %597 = vmatprep.subr.bf16.mxu0 %v520
  %598 = vmatpush1.bf16.msra.mxu0 %v519
  %599 = vmatprep.subr.bf16.mxu0 %v550
  %600 = vmatpush2.bf16.msra.mxu0 %v549
  %601 = vmatprep.subr.bf16.mxu0 %v548
  %602 = vmatpush2.bf16.msra.mxu0 %v547
  %603 = vmatprep.subr.bf16.mxu0 %v546
  %604 = vmatpush2.bf16.msra.mxu0 %v545
  %605 = vmatprep.subr.bf16.mxu0 %v544
  %606 = vmatpush2.bf16.msra.mxu0 %v543
  %607 = vmatprep.subr.bf16.mxu0 %v542
  %608 = vmatpush2.bf16.msra.mxu0 %v541
  %609 = vmatprep.subr.bf16.mxu0 %v540
  %610 = vmatpush2.bf16.msra.mxu0 %v539
  %611 = vmatprep.subr.bf16.mxu0 %v538
  %612 = vmatpush2.bf16.msra.mxu0 %v537
  %613 = vmatprep.subr.bf16.mxu0 %v536
  %614 = vmatpush2.bf16.msra.mxu0 %v535
  %615 = vmatprep.mubr.bf16.mxu0 %v390
  %616 = vmatmul.mubr.bf16.gmra.mxu0 %v389
  %v617 = vpop.f32.mrf.mxu0
  %v618 = vadd.f32 0.0, %v617
  %v619 = vpop.f32.mrf.mxu0
  %v620 = vadd.f32 0.0, %v619
  %v621 = vpop.f32.mrf.mxu0
  %v622 = vadd.f32 0.0, %v621
  %v623 = vpop.f32.mrf.mxu0
  %v624 = vadd.f32 0.0, %v623
  %625 = vdwg.mxu0
  %v626 = vadd.f32 %v91, %v144
  %v627 = vadd.f32 %v93, %v146
  %v628 = vadd.f32 %v95, %v148
  %v629 = vadd.f32 %v97, %v150
  %v630 = vpack.c.bf16 %v628, %v626
  %v631 = vpack.c.bf16 %v629, %v627
  %v632 = vld [vmem:[%s5] sm:$0xff]
  %v633 = vld [vmem:[%s5 + $0x8] sm:$0xff]
  %v634 = vld [vmem:[%s5 + $0x10] sm:$0xff]
  %v635 = vld [vmem:[%s5 + $0x18] sm:$0xff]
  %v636 = vld [vmem:[%s5 + $0x20] sm:$0xff]
  %v637 = vld [vmem:[%s5 + $0x28] sm:$0xff]
  %v638 = vld [vmem:[%s5 + $0x30] sm:$0xff]
  %v639 = vld [vmem:[%s5 + $0x38] sm:$0xff]
  %v640 = vld [vmem:[%s5 + $0x40] sm:$0xff]
  %v641 = vld [vmem:[%s5 + $0x48] sm:$0xff]
  %v642 = vld [vmem:[%s5 + $0x50] sm:$0xff]
  %v643 = vld [vmem:[%s5 + $0x58] sm:$0xff]
  %v644 = vld [vmem:[%s5 + $0x60] sm:$0xff]
  %v645 = vld [vmem:[%s5 + $0x68] sm:$0xff]
  %v646 = vld [vmem:[%s5 + $0x70] sm:$0xff]
  %v647 = vld [vmem:[%s5 + $0x78] sm:$0xff]
  %v648 = vld [vmem:[%s5 + $0x80] sm:$0xff]
  %v649 = vld [vmem:[%s5 + $0x88] sm:$0xff]
  %v650 = vld [vmem:[%s5 + $0x90] sm:$0xff]
  %v651 = vld [vmem:[%s5 + $0x98] sm:$0xff]
  %v652 = vld [vmem:[%s5 + $0xa0] sm:$0xff]
  %v653 = vld [vmem:[%s5 + $0xa8] sm:$0xff]
  %v654 = vld [vmem:[%s5 + $0xb0] sm:$0xff]
  %v655 = vld [vmem:[%s5 + $0xb8] sm:$0xff]
  %v656 = vld [vmem:[%s5 + $0xc0] sm:$0xff]
  %v657 = vld [vmem:[%s5 + $0xc8] sm:$0xff]
  %v658 = vld [vmem:[%s5 + $0xd0] sm:$0xff]
  %v659 = vld [vmem:[%s5 + $0xd8] sm:$0xff]
  %v660 = vld [vmem:[%s5 + $0xe0] sm:$0xff]
  %v661 = vld [vmem:[%s5 + $0xe8] sm:$0xff]
  %v662 = vld [vmem:[%s5 + $0xf0] sm:$0xff]
  %v663 = vld [vmem:[%s5 + $0xf8] sm:$0xff]
  %v696 = vunpack.c.l.b16 %v632
  %v697 = vunpack.c.h.b16 %v632
  %v698 = vunpack.c.l.b16 %v633
  %v699 = vunpack.c.h.b16 %v633
  %v700 = vunpack.c.l.b16 %v634
  %v701 = vunpack.c.h.b16 %v634
  %v702 = vunpack.c.l.b16 %v635
  %v703 = vunpack.c.h.b16 %v635
  %v704 = vunpack.c.l.b16 %v636
  %v705 = vunpack.c.h.b16 %v636
  %v706 = vunpack.c.l.b16 %v637
  %v707 = vunpack.c.h.b16 %v637
  %v708 = vunpack.c.l.b16 %v638
  %v709 = vunpack.c.h.b16 %v638
  %v710 = vunpack.c.l.b16 %v639
  %v711 = vunpack.c.h.b16 %v639
  %v712 = vunpack.c.l.b16 %v640
  %v713 = vunpack.c.h.b16 %v640
  %v714 = vunpack.c.l.b16 %v641
  %v715 = vunpack.c.h.b16 %v641
  %v716 = vunpack.c.l.b16 %v642
  %v717 = vunpack.c.h.b16 %v642
  %v718 = vunpack.c.l.b16 %v643
  %v719 = vunpack.c.h.b16 %v643
  %v720 = vunpack.c.l.b16 %v644
  %v721 = vunpack.c.h.b16 %v644
  %v722 = vunpack.c.l.b16 %v645
  %v723 = vunpack.c.h.b16 %v645
  %v724 = vunpack.c.l.b16 %v646
  %v725 = vunpack.c.h.b16 %v646
  %v726 = vunpack.c.l.b16 %v647
  %v727 = vunpack.c.h.b16 %v647
  %v728 = vunpack.c.l.b16 %v648
  %v729 = vunpack.c.h.b16 %v648
  %v730 = vunpack.c.l.b16 %v649
  %v731 = vunpack.c.h.b16 %v649
  %v732 = vunpack.c.l.b16 %v650
  %v733 = vunpack.c.h.b16 %v650
  %v734 = vunpack.c.l.b16 %v651
  %v735 = vunpack.c.h.b16 %v651
  %v736 = vunpack.c.l.b16 %v652
  %v737 = vunpack.c.h.b16 %v652
  %v738 = vunpack.c.l.b16 %v653
  %v739 = vunpack.c.h.b16 %v653
  %v740 = vunpack.c.l.b16 %v654
  %v741 = vunpack.c.h.b16 %v654
  %v742 = vunpack.c.l.b16 %v655
  %v743 = vunpack.c.h.b16 %v655
  %v744 = vunpack.c.l.b16 %v656
  %v745 = vunpack.c.h.b16 %v656
  %v746 = vunpack.c.l.b16 %v657
  %v747 = vunpack.c.h.b16 %v657
  %v748 = vunpack.c.l.b16 %v658
  %v749 = vunpack.c.h.b16 %v658
  %v750 = vunpack.c.l.b16 %v659
  %v751 = vunpack.c.h.b16 %v659
  %v752 = vunpack.c.l.b16 %v660
  %v753 = vunpack.c.h.b16 %v660
  %v754 = vunpack.c.l.b16 %v661
  %v755 = vunpack.c.h.b16 %v661
  %v756 = vunpack.c.l.b16 %v662
  %v757 = vunpack.c.h.b16 %v662
  %v758 = vunpack.c.l.b16 %v663
  %v759 = vunpack.c.h.b16 %v663
  %v760 = vpack.c.b16 %v698, %v696
  %v761 = vpack.c.b16 %v699, %v697
  %v762 = vpack.c.b16 %v702, %v700
  %v763 = vpack.c.b16 %v703, %v701
  %v764 = vpack.c.b16 %v706, %v704
  %v765 = vpack.c.b16 %v707, %v705
  %v766 = vpack.c.b16 %v710, %v708
  %v767 = vpack.c.b16 %v711, %v709
  %v768 = vpack.c.b16 %v714, %v712
  %v769 = vpack.c.b16 %v715, %v713
  %v770 = vpack.c.b16 %v718, %v716
  %v771 = vpack.c.b16 %v719, %v717
  %v772 = vpack.c.b16 %v722, %v720
  %v773 = vpack.c.b16 %v723, %v721
  %v774 = vpack.c.b16 %v726, %v724
  %v775 = vpack.c.b16 %v727, %v725
  %v776 = vpack.c.b16 %v730, %v728
  %v777 = vpack.c.b16 %v731, %v729
  %v778 = vpack.c.b16 %v734, %v732
  %v779 = vpack.c.b16 %v735, %v733
  %v780 = vpack.c.b16 %v738, %v736
  %v781 = vpack.c.b16 %v739, %v737
  %v782 = vpack.c.b16 %v742, %v740
  %v783 = vpack.c.b16 %v743, %v741
  %v784 = vpack.c.b16 %v746, %v744
  %v785 = vpack.c.b16 %v747, %v745
  %v786 = vpack.c.b16 %v750, %v748
  %v787 = vpack.c.b16 %v751, %v749
  %v788 = vpack.c.b16 %v754, %v752
  %v789 = vpack.c.b16 %v755, %v753
  %v790 = vpack.c.b16 %v758, %v756
  %v791 = vpack.c.b16 %v759, %v757
  %824 = vmatprep.subr.bf16.mxu0 %v775
  %825 = vmatpush1.bf16.msra.mxu0 %v774
  %826 = vmatprep.subr.bf16.mxu0 %v773
  %827 = vmatpush1.bf16.msra.mxu0 %v772
  %828 = vmatprep.subr.bf16.mxu0 %v771
  %829 = vmatpush1.bf16.msra.mxu0 %v770
  %830 = vmatprep.subr.bf16.mxu0 %v769
  %831 = vmatpush1.bf16.msra.mxu0 %v768
  %832 = vmatprep.subr.bf16.mxu0 %v767
  %833 = vmatpush1.bf16.msra.mxu0 %v766
  %834 = vmatprep.subr.bf16.mxu0 %v765
  %835 = vmatpush1.bf16.msra.mxu0 %v764
  %836 = vmatprep.subr.bf16.mxu0 %v763
  %837 = vmatpush1.bf16.msra.mxu0 %v762
  %838 = vmatprep.subr.bf16.mxu0 %v761
  %839 = vmatpush1.bf16.msra.mxu0 %v760
  %840 = vmatprep.subr.bf16.mxu0 %v791
  %841 = vmatpush2.bf16.msra.mxu0 %v790
  %842 = vmatprep.subr.bf16.mxu0 %v789
  %843 = vmatpush2.bf16.msra.mxu0 %v788
  %844 = vmatprep.subr.bf16.mxu0 %v787
  %845 = vmatpush2.bf16.msra.mxu0 %v786
  %846 = vmatprep.subr.bf16.mxu0 %v785
  %847 = vmatpush2.bf16.msra.mxu0 %v784
  %848 = vmatprep.subr.bf16.mxu0 %v783
  %849 = vmatpush2.bf16.msra.mxu0 %v782
  %850 = vmatprep.subr.bf16.mxu0 %v781
  %851 = vmatpush2.bf16.msra.mxu0 %v780
  %852 = vmatprep.subr.bf16.mxu0 %v779
  %853 = vmatpush2.bf16.msra.mxu0 %v778
  %854 = vmatprep.subr.bf16.mxu0 %v777
  %855 = vmatpush2.bf16.msra.mxu0 %v776
  %856 = vmatprep.mubr.bf16.mxu0 %v631
  %857 = vmatmul.mubr.bf16.gmra.mxu0 %v630
  %v858 = vpop.f32.mrf.mxu0
  %v859 = vadd.f32 0.0, %v858
  %v860 = vpop.f32.mrf.mxu0
  %v861 = vadd.f32 0.0, %v860
  %v862 = vpop.f32.mrf.mxu0
  %v863 = vadd.f32 0.0, %v862
  %v864 = vpop.f32.mrf.mxu0
  %v865 = vadd.f32 0.0, %v864
  %866 = vdwg.mxu0
  %v867 = vsub.f32 %v381, %v618
  %v868 = vsub.f32 %v383, %v620
  %v869 = vsub.f32 %v385, %v622
  %v870 = vsub.f32 %v387, %v624
  %v871 = vsub.f32 %v859, %v381
  %v872 = vsub.f32 %v861, %v383
  %v873 = vsub.f32 %v863, %v385
  %v874 = vsub.f32 %v865, %v387
  %v875 = vsub.f32 %v871, %v618
  %v876 = vsub.f32 %v872, %v620
  %v877 = vsub.f32 %v873, %v622
  %v878 = vsub.f32 %v874, %v624
  %v879 = vmul.f32 %v867, %v868
  %v880 = vmul.f32 %v869, %v870
  %v881 = vmul.f32 %v875, %v876
  %v882 = vmul.f32 %v877, %v878
  %v883 = vadd.f32 %v879, %v881
  %v884 = vadd.f32 %v880, %v882
  %v885 = vmul.f32 %v875, %v868
  %v886 = vmul.f32 %v877, %v870
  %v887 = vmul.f32 %v867, %v876
  %v888 = vmul.f32 %v869, %v878
  %v889 = vsub.f32 %v885, %v887
  %v890 = vsub.f32 %v886, %v888
  %v891 = vmul.f32 %v883, %v883
  %v892 = vmul.f32 %v884, %v884
  %v893 = vmul.f32 %v889, %v889
  %v894 = vmul.f32 %v890, %v890
  %v895 = vadd.f32 %v891, %v893
  %v896 = vadd.f32 %v892, %v894
  %v897 = vadd.f32 %v895, 1e-16
  %v898 = vadd.f32 %v896, 1e-16
  %v899 = vrsqrt.pop %v897
  %v900 = vrsqrt.pop %v898
  %v901 = vmul.f32 %v883, %v899
  %v902 = vmul.f32 %v884, %v900
  %v903 = vmul.f32 %v889, %v899
  %v904 = vmul.f32 %v890, %v900
  %v905 = vld [vmem:[%s6] sm:$0xf]
  %v906 = vld [vmem:[%s6 + $0x4] sm:$0xf]
  %v907 = vpack.c.bf16 %v902, %v901
  %v910 = vunpack.c.l.b16 %v905
  %v911 = vunpack.c.l.b16 %v906
  %v912 = vpack.c.b16 %v911, %v910
  %v914 = vsel %vm52, %v912, 0
  %916 = vmatprep.subr.bf16.mxu0 0
  %917 = vmatpush1.bf16.msra.mxu0 0
  %918 = vmatprep.subr.bf16.mxu0 0
  %919 = vmatpush1.bf16.msra.mxu0 0
  %920 = vmatprep.subr.bf16.mxu0 0
  %921 = vmatpush1.bf16.msra.mxu0 0
  %922 = vmatprep.subr.bf16.mxu0 0
  %923 = vmatpush1.bf16.msra.mxu0 0
  %924 = vmatprep.subr.bf16.mxu0 0
  %925 = vmatpush1.bf16.msra.mxu0 0
  %926 = vmatprep.subr.bf16.mxu0 0
  %927 = vmatpush1.bf16.msra.mxu0 0
  %928 = vmatprep.subr.bf16.mxu0 0
  %929 = vmatpush1.bf16.msra.mxu0 0
  %930 = vmatprep.subr.bf16.mxu0 0
  %931 = vmatpush1.bf16.msra.mxu0 %v907
  %932 = vmatprep.subr.bf16.mxu0 0
  %933 = vmatpush2.bf16.msra.mxu0 0
  %934 = vmatprep.subr.bf16.mxu0 0
  %935 = vmatpush2.bf16.msra.mxu0 0
  %936 = vmatprep.subr.bf16.mxu0 0
  %937 = vmatpush2.bf16.msra.mxu0 0
  %938 = vmatprep.subr.bf16.mxu0 0
  %939 = vmatpush2.bf16.msra.mxu0 0
  %940 = vmatprep.subr.bf16.mxu0 0
  %941 = vmatpush2.bf16.msra.mxu0 0
  %942 = vmatprep.subr.bf16.mxu0 0
  %943 = vmatpush2.bf16.msra.mxu0 0
  %944 = vmatprep.subr.bf16.mxu0 0
  %945 = vmatpush2.bf16.msra.mxu0 0
  %946 = vmatprep.subr.bf16.mxu0 0
  %947 = vmatpush2.bf16.msra.mxu0 0
  %948 = vmatprep.mubr.bf16.mxu0 0
  %949 = vmatmul.mubr.bf16.gmra.mxu0 %v914
  %v950 = vpop.f32.mrf.mxu0
  %v951 = vadd.f32 0.0, %v950
  %v952 = vpop.f32.mrf.mxu0
  %v953 = vpop.f32.mrf.mxu0
  %v954 = vadd.f32 0.0, %v953
  %v955 = vpop.f32.mrf.mxu0
  %956 = vdwg.mxu0
  %v957 = vld [vmem:[%s7] sm:$0xf]
  %v958 = vld [vmem:[%s7 + $0x4] sm:$0xf]
  %v959 = vpack.c.bf16 %v904, %v903
  %v962 = vunpack.c.l.b16 %v957
  %v963 = vunpack.c.l.b16 %v958
  %v964 = vpack.c.b16 %v963, %v962
  %v966 = vsel %vm52, %v964, 0
  %968 = vmatprep.subr.bf16.mxu0 0
  %969 = vmatpush1.bf16.msra.mxu0 0
  %970 = vmatprep.subr.bf16.mxu0 0
  %971 = vmatpush1.bf16.msra.mxu0 0
  %972 = vmatprep.subr.bf16.mxu0 0
  %973 = vmatpush1.bf16.msra.mxu0 0
  %974 = vmatprep.subr.bf16.mxu0 0
  %975 = vmatpush1.bf16.msra.mxu0 0
  %976 = vmatprep.subr.bf16.mxu0 0
  %977 = vmatpush1.bf16.msra.mxu0 0
  %978 = vmatprep.subr.bf16.mxu0 0
  %979 = vmatpush1.bf16.msra.mxu0 0
  %980 = vmatprep.subr.bf16.mxu0 0
  %981 = vmatpush1.bf16.msra.mxu0 0
  %982 = vmatprep.subr.bf16.mxu0 0
  %983 = vmatpush1.bf16.msra.mxu0 %v959
  %984 = vmatprep.subr.bf16.mxu0 0
  %985 = vmatpush2.bf16.msra.mxu0 0
  %986 = vmatprep.subr.bf16.mxu0 0
  %987 = vmatpush2.bf16.msra.mxu0 0
  %988 = vmatprep.subr.bf16.mxu0 0
  %989 = vmatpush2.bf16.msra.mxu0 0
  %990 = vmatprep.subr.bf16.mxu0 0
  %991 = vmatpush2.bf16.msra.mxu0 0
  %992 = vmatprep.subr.bf16.mxu0 0
  %993 = vmatpush2.bf16.msra.mxu0 0
  %994 = vmatprep.subr.bf16.mxu0 0
  %995 = vmatpush2.bf16.msra.mxu0 0
  %996 = vmatprep.subr.bf16.mxu0 0
  %997 = vmatpush2.bf16.msra.mxu0 0
  %998 = vmatprep.subr.bf16.mxu0 0
  %999 = vmatpush2.bf16.msra.mxu0 0
  %1000 = vmatprep.mubr.bf16.mxu0 0
  %1001 = vmatmul.mubr.bf16.gmra.mxu0 %v966
  %v1002 = vpop.f32.mrf.mxu0
  %v1003 = vadd.f32 0.0, %v1002
  %v1004 = vpop.f32.mrf.mxu0
  %v1005 = vpop.f32.mrf.mxu0
  %v1006 = vadd.f32 0.0, %v1005
  %v1007 = vpop.f32.mrf.mxu0
  %1008 = vdwg.mxu0
  %v1009 = vld [vmem:[%s8] sm:$0xf]
  %v1010 = vld [vmem:[%s8 + $0x4] sm:$0xf]
  %v1011 = vadd.f32 %v901, %v903
  %v1012 = vadd.f32 %v902, %v904
  %v1013 = vpack.c.bf16 %v1012, %v1011
  %v1016 = vunpack.c.l.b16 %v1009
  %v1017 = vunpack.c.l.b16 %v1010
  %v1018 = vpack.c.b16 %v1017, %v1016
  %v1020 = vsel %vm52, %v1018, 0
  %1022 = vmatprep.subr.bf16.mxu0 0
  %1023 = vmatpush1.bf16.msra.mxu0 0
  %1024 = vmatprep.subr.bf16.mxu0 0
  %1025 = vmatpush1.bf16.msra.mxu0 0
  %1026 = vmatprep.subr.bf16.mxu0 0
  %1027 = vmatpush1.bf16.msra.mxu0 0
  %1028 = vmatprep.subr.bf16.mxu0 0
  %1029 = vmatpush1.bf16.msra.mxu0 0
  %1030 = vmatprep.subr.bf16.mxu0 0
  %1031 = vmatpush1.bf16.msra.mxu0 0
  %1032 = vmatprep.subr.bf16.mxu0 0
  %1033 = vmatpush1.bf16.msra.mxu0 0
  %1034 = vmatprep.subr.bf16.mxu0 0
  %1035 = vmatpush1.bf16.msra.mxu0 0
  %1036 = vmatprep.subr.bf16.mxu0 0
  %1037 = vmatpush1.bf16.msra.mxu0 %v1013
  %1038 = vmatprep.subr.bf16.mxu0 0
  %1039 = vmatpush2.bf16.msra.mxu0 0
  %1040 = vmatprep.subr.bf16.mxu0 0
  %1041 = vmatpush2.bf16.msra.mxu0 0
  %1042 = vmatprep.subr.bf16.mxu0 0
  %1043 = vmatpush2.bf16.msra.mxu0 0
  %1044 = vmatprep.subr.bf16.mxu0 0
  %1045 = vmatpush2.bf16.msra.mxu0 0
  %1046 = vmatprep.subr.bf16.mxu0 0
  %1047 = vmatpush2.bf16.msra.mxu0 0
  %1048 = vmatprep.subr.bf16.mxu0 0
  %1049 = vmatpush2.bf16.msra.mxu0 0
  %1050 = vmatprep.subr.bf16.mxu0 0
  %1051 = vmatpush2.bf16.msra.mxu0 0
  %1052 = vmatprep.subr.bf16.mxu0 0
  %1053 = vmatpush2.bf16.msra.mxu0 0
  %1054 = vmatprep.mubr.bf16.mxu0 0
  %1055 = vmatmul.mubr.bf16.gmra.mxu0 %v1020
  %v1056 = vpop.f32.mrf.mxu0
  %v1057 = vadd.f32 0.0, %v1056
  %v1058 = vpop.f32.mrf.mxu0
  %v1059 = vpop.f32.mrf.mxu0
  %v1060 = vadd.f32 0.0, %v1059
  %v1061 = vpop.f32.mrf.mxu0
  %1062 = vdwg.mxu0
  %v1063 = vsub.f32 %v951, %v1003
  %v1064 = vsub.f32 %v954, %v1006
  %v1065 = vsub.f32 %v1057, %v951
  %v1066 = vsub.f32 %v1060, %v954
  %v1067 = vsub.f32 %v1065, %v1003
  %v1068 = vsub.f32 %v1066, %v1006
  %v1069 = vpack.c.bf16 %v1064, %v1063
  %v1070 = vld [vmem:[%s9] sm:$0xf]
  %v1071 = vld [vmem:[%s9 + $0x4] sm:$0xf]
  %v1072 = vld [vmem:[%s9 + $0x8] sm:$0xf]
  %v1073 = vld [vmem:[%s9 + $0xc] sm:$0xf]
  %v1074 = vld [vmem:[%s9 + $0x10] sm:$0xf]
  %v1075 = vld [vmem:[%s9 + $0x14] sm:$0xf]
  %v1076 = vld [vmem:[%s9 + $0x18] sm:$0xf]
  %v1077 = vld [vmem:[%s9 + $0x1c] sm:$0xf]
  %v1078 = vld [vmem:[%s9 + $0x20] sm:$0xf]
  %v1079 = vld [vmem:[%s9 + $0x24] sm:$0xf]
  %v1080 = vld [vmem:[%s9 + $0x28] sm:$0xf]
  %v1081 = vld [vmem:[%s9 + $0x2c] sm:$0xf]
  %v1082 = vld [vmem:[%s9 + $0x30] sm:$0xf]
  %v1083 = vld [vmem:[%s9 + $0x34] sm:$0xf]
  %v1084 = vld [vmem:[%s9 + $0x38] sm:$0xf]
  %v1085 = vld [vmem:[%s9 + $0x3c] sm:$0xf]
  %v1102 = vunpack.c.l.b16 %v1070
  %v1103 = vunpack.c.l.b16 %v1071
  %v1104 = vunpack.c.l.b16 %v1072
  %v1105 = vunpack.c.l.b16 %v1073
  %v1106 = vunpack.c.l.b16 %v1074
  %v1107 = vunpack.c.l.b16 %v1075
  %v1108 = vunpack.c.l.b16 %v1076
  %v1109 = vunpack.c.l.b16 %v1077
  %v1110 = vunpack.c.l.b16 %v1078
  %v1111 = vunpack.c.l.b16 %v1079
  %v1112 = vunpack.c.l.b16 %v1080
  %v1113 = vunpack.c.l.b16 %v1081
  %v1114 = vunpack.c.l.b16 %v1082
  %v1115 = vunpack.c.l.b16 %v1083
  %v1116 = vunpack.c.l.b16 %v1084
  %v1117 = vunpack.c.l.b16 %v1085
  %v1118 = vpack.c.b16 %v1103, %v1102
  %v1119 = vpack.c.b16 %v1105, %v1104
  %v1120 = vpack.c.b16 %v1107, %v1106
  %v1121 = vpack.c.b16 %v1109, %v1108
  %v1122 = vpack.c.b16 %v1111, %v1110
  %v1123 = vpack.c.b16 %v1113, %v1112
  %v1124 = vpack.c.b16 %v1115, %v1114
  %v1125 = vpack.c.b16 %v1117, %v1116
  %1134 = vmatprep.subr.bf16.mxu0 0
  %1135 = vmatpush1.bf16.msra.mxu0 %v1125
  %1136 = vmatprep.subr.bf16.mxu0 0
  %1137 = vmatpush1.bf16.msra.mxu0 %v1124
  %1138 = vmatprep.subr.bf16.mxu0 0
  %1139 = vmatpush1.bf16.msra.mxu0 %v1123
  %1140 = vmatprep.subr.bf16.mxu0 0
  %1141 = vmatpush1.bf16.msra.mxu0 %v1122
  %1142 = vmatprep.subr.bf16.mxu0 0
  %1143 = vmatpush1.bf16.msra.mxu0 %v1121
  %1144 = vmatprep.subr.bf16.mxu0 0
  %1145 = vmatpush1.bf16.msra.mxu0 %v1120
  %1146 = vmatprep.subr.bf16.mxu0 0
  %1147 = vmatpush1.bf16.msra.mxu0 %v1119
  %1148 = vmatprep.subr.bf16.mxu0 0
  %1149 = vmatpush1.bf16.msra.mxu0 %v1118
  %1150 = vmatprep.subr.bf16.mxu0 0
  %1151 = vmatpush2.bf16.msra.mxu0 0
  %1152 = vmatprep.subr.bf16.mxu0 0
  %1153 = vmatpush2.bf16.msra.mxu0 0
  %1154 = vmatprep.subr.bf16.mxu0 0
  %1155 = vmatpush2.bf16.msra.mxu0 0
  %1156 = vmatprep.subr.bf16.mxu0 0
  %1157 = vmatpush2.bf16.msra.mxu0 0
  %1158 = vmatprep.subr.bf16.mxu0 0
  %1159 = vmatpush2.bf16.msra.mxu0 0
  %1160 = vmatprep.subr.bf16.mxu0 0
  %1161 = vmatpush2.bf16.msra.mxu0 0
  %1162 = vmatprep.subr.bf16.mxu0 0
  %1163 = vmatpush2.bf16.msra.mxu0 0
  %1164 = vmatprep.subr.bf16.mxu0 0
  %1165 = vmatpush2.bf16.msra.mxu0 0
  %1166 = vmatprep.mubr.bf16.mxu0 0
  %1167 = vmatmul.mubr.bf16.gmra.mxu0 %v1069
  %v1168 = vpop.f32.mrf.mxu0
  %v1169 = vadd.f32 0.0, %v1168
  %v1170 = vpop.f32.mrf.mxu0
  %v1171 = vpop.f32.mrf.mxu0
  %v1172 = vadd.f32 0.0, %v1171
  %v1173 = vpop.f32.mrf.mxu0
  %1174 = vdwg.mxu0
  %v1175 = vpack.c.bf16 %v1068, %v1067
  %v1176 = vld [vmem:[%s10] sm:$0xf]
  %v1177 = vld [vmem:[%s10 + $0x4] sm:$0xf]
  %v1178 = vld [vmem:[%s10 + $0x8] sm:$0xf]
  %v1179 = vld [vmem:[%s10 + $0xc] sm:$0xf]
  %v1180 = vld [vmem:[%s10 + $0x10] sm:$0xf]
  %v1181 = vld [vmem:[%s10 + $0x14] sm:$0xf]
  %v1182 = vld [vmem:[%s10 + $0x18] sm:$0xf]
  %v1183 = vld [vmem:[%s10 + $0x1c] sm:$0xf]
  %v1184 = vld [vmem:[%s10 + $0x20] sm:$0xf]
  %v1185 = vld [vmem:[%s10 + $0x24] sm:$0xf]
  %v1186 = vld [vmem:[%s10 + $0x28] sm:$0xf]
  %v1187 = vld [vmem:[%s10 + $0x2c] sm:$0xf]
  %v1188 = vld [vmem:[%s10 + $0x30] sm:$0xf]
  %v1189 = vld [vmem:[%s10 + $0x34] sm:$0xf]
  %v1190 = vld [vmem:[%s10 + $0x38] sm:$0xf]
  %v1191 = vld [vmem:[%s10 + $0x3c] sm:$0xf]
  %v1208 = vunpack.c.l.b16 %v1176
  %v1209 = vunpack.c.l.b16 %v1177
  %v1210 = vunpack.c.l.b16 %v1178
  %v1211 = vunpack.c.l.b16 %v1179
  %v1212 = vunpack.c.l.b16 %v1180
  %v1213 = vunpack.c.l.b16 %v1181
  %v1214 = vunpack.c.l.b16 %v1182
  %v1215 = vunpack.c.l.b16 %v1183
  %v1216 = vunpack.c.l.b16 %v1184
  %v1217 = vunpack.c.l.b16 %v1185
  %v1218 = vunpack.c.l.b16 %v1186
  %v1219 = vunpack.c.l.b16 %v1187
  %v1220 = vunpack.c.l.b16 %v1188
  %v1221 = vunpack.c.l.b16 %v1189
  %v1222 = vunpack.c.l.b16 %v1190
  %v1223 = vunpack.c.l.b16 %v1191
  %v1224 = vpack.c.b16 %v1209, %v1208
  %v1225 = vpack.c.b16 %v1211, %v1210
  %v1226 = vpack.c.b16 %v1213, %v1212
  %v1227 = vpack.c.b16 %v1215, %v1214
  %v1228 = vpack.c.b16 %v1217, %v1216
  %v1229 = vpack.c.b16 %v1219, %v1218
  %v1230 = vpack.c.b16 %v1221, %v1220
  %v1231 = vpack.c.b16 %v1223, %v1222
  %1240 = vmatprep.subr.bf16.mxu0 0
  %1241 = vmatpush1.bf16.msra.mxu0 %v1231
  %1242 = vmatprep.subr.bf16.mxu0 0
  %1243 = vmatpush1.bf16.msra.mxu0 %v1230
  %1244 = vmatprep.subr.bf16.mxu0 0
  %1245 = vmatpush1.bf16.msra.mxu0 %v1229
  %1246 = vmatprep.subr.bf16.mxu0 0
  %1247 = vmatpush1.bf16.msra.mxu0 %v1228
  %1248 = vmatprep.subr.bf16.mxu0 0
  %1249 = vmatpush1.bf16.msra.mxu0 %v1227
  %1250 = vmatprep.subr.bf16.mxu0 0
  %1251 = vmatpush1.bf16.msra.mxu0 %v1226
  %1252 = vmatprep.subr.bf16.mxu0 0
  %1253 = vmatpush1.bf16.msra.mxu0 %v1225
  %1254 = vmatprep.subr.bf16.mxu0 0
  %1255 = vmatpush1.bf16.msra.mxu0 %v1224
  %1256 = vmatprep.subr.bf16.mxu0 0
  %1257 = vmatpush2.bf16.msra.mxu0 0
  %1258 = vmatprep.subr.bf16.mxu0 0
  %1259 = vmatpush2.bf16.msra.mxu0 0
  %1260 = vmatprep.subr.bf16.mxu0 0
  %1261 = vmatpush2.bf16.msra.mxu0 0
  %1262 = vmatprep.subr.bf16.mxu0 0
  %1263 = vmatpush2.bf16.msra.mxu0 0
  %1264 = vmatprep.subr.bf16.mxu0 0
  %1265 = vmatpush2.bf16.msra.mxu0 0
  %1266 = vmatprep.subr.bf16.mxu0 0
  %1267 = vmatpush2.bf16.msra.mxu0 0
  %1268 = vmatprep.subr.bf16.mxu0 0
  %1269 = vmatpush2.bf16.msra.mxu0 0
  %1270 = vmatprep.subr.bf16.mxu0 0
  %1271 = vmatpush2.bf16.msra.mxu0 0
  %1272 = vmatprep.mubr.bf16.mxu0 0
  %1273 = vmatmul.mubr.bf16.gmra.mxu0 %v1175
  %v1274 = vpop.f32.mrf.mxu0
  %v1275 = vadd.f32 0.0, %v1274
  %v1276 = vpop.f32.mrf.mxu0
  %v1277 = vpop.f32.mrf.mxu0
  %v1278 = vadd.f32 0.0, %v1277
  %v1279 = vpop.f32.mrf.mxu0
  %1280 = vdwg.mxu0
  %v1281 = vsub.f32 %v1169, %v1275
  %v1282 = vsub.f32 %v1172, %v1278
  %1283 = vst [vmem:[%s11] sm:$0xff] %v1281
  %1284 = vst [vmem:[%s11 + $0x8] sm:$0xff] %v1282
  // Predicated region
  $region46: #{mellin_fourier_forward.9} parent=0 // pred_check
    _
  $region47: #{mellin_fourier_forward.9} parent=0 // pred_check_branch
    %1286 = sbr.rel (0) target = $region49
  $region48: #{mellin_fourier_forward.9} parent=0 // pred_region
    _
  $region49: #{mellin_fourier_forward.9} parent=0 // pred_fallthru
    _
  // Predicated region
  $region50: #{mellin_fourier_forward.9} parent=0 // pred_check
    _
  $region51: #{mellin_fourier_forward.9} parent=0 // pred_check_branch
    %1288 = sbr.rel (0) target = $region53
  $region52: #{mellin_fourier_forward.9} parent=0 // pred_region
    _
  $region53: #{mellin_fourier_forward.9} parent=0 // pred_fallthru
    _

</llo_original>
